<compile_context>
chip_gen: v7x
topology: tpu7x:2x2x1
jax: 0.10.0
libtpu: 0.0.40
codegen_flags: <defaults>
</compile_context>

<pallas_src>
import jax
import jax.numpy as jnp
from jax.experimental import pallas as pl
from jax.experimental.pallas import tpu as pltpu


HIDDEN1_PADDED = 1280  # 1200 rounded up to a multiple of 128 (lane alignment)
LANE = 128
SUBLANE16 = 16         # bf16 sublane packing granularity


def _round_up(x, m):
    return ((x + m - 1) // m) * m


def mlp_kernel(x_ref,
               w1_ref, b1_ref,
               w2_ref, b2_ref,
               w3_ref, b3_ref,
               w4_ref, b4_ref,
               o_ref):
    # x arrives f32 (no wrapper-side cast/HBM rewrite); cast to bf16 on the
    # VPU right before feeding the MXU.
    x = x_ref[...].astype(jnp.bfloat16)

    # Every matmul: bf16 operands on the MXU, f32 accumulation. Bias add /
    # ReLU / re-cast are one fused VPU expression per layer so the f32
    # activation is never separately materialized.
    h = jnp.dot(x, w1_ref[...], preferred_element_type=jnp.float32)
    h = jnp.maximum(h + b1_ref[...], 0.0).astype(jnp.bfloat16)

    h = jnp.dot(h, w2_ref[...], preferred_element_type=jnp.float32)
    h = jnp.maximum(h + b2_ref[...], 0.0).astype(jnp.bfloat16)

    h = jnp.dot(h, w3_ref[...], preferred_element_type=jnp.float32)
    h = jnp.maximum(h + b3_ref[...], 0.0).astype(jnp.bfloat16)

    h = jnp.dot(h, w4_ref[...], preferred_element_type=jnp.float32)
    o_ref[...] = (h + b4_ref[...]).astype(o_ref.dtype)


def _build_pallas_call(block_m, padded_batch, n_feat_pad, n_out_pad,
                       weights_and_biases, resident_mode):
    def resident_spec(a):
        # Constant index_map -> block stays VMEM-resident across grid steps.
        if resident_mode is None:
            return pl.BlockSpec(a.shape, lambda i: (0, 0))
        return pl.BlockSpec(a.shape, lambda i: (0, 0),
                            pipeline_mode=resident_mode)

    flops = 2 * padded_batch * (
        n_feat_pad * HIDDEN1_PADDED
        + HIDDEN1_PADDED * 512
        + 512 * 256
        + 256 * n_out_pad
    )
    bytes_accessed = (
        padded_batch * n_feat_pad * 4
        + sum(int(a.size) * a.dtype.itemsize for a in weights_and_biases)
        + padded_batch * n_out_pad * 4
    )

    return pl.pallas_call(
        mlp_kernel,
        out_shape=jax.ShapeDtypeStruct((padded_batch, n_out_pad), jnp.float32),
        grid=(padded_batch // block_m,),
        in_specs=(
            # x / out tiles stream through the pipeline over the batch grid.
            [pl.BlockSpec((block_m, n_feat_pad), lambda i: (i, 0))]
            + [resident_spec(a) for a in weights_and_biases]
        ),
        out_specs=pl.BlockSpec((block_m, n_out_pad), lambda i: (i, 0)),
        compiler_params=pltpu.CompilerParams(
            dimension_semantics=("parallel",),
            vmem_limit_bytes=48 * 1024 * 1024,
        ),
        cost_estimate=pl.CostEstimate(
            flops=flops, transcendentals=0, bytes_accessed=bytes_accessed),
    )


def net_forward(x, prepared, tm=512):
    """x: (batch, n_feature) f32. prepared: output of prepare_params()."""
    tensors = prepared["tensors"]
    n_feature = prepared["n_feature"]
    n_output = prepared["n_output"]
    w1 = tensors[0]
    w4 = tensors[6]
    n_feat_pad = w1.shape[0]
    n_out_pad = w4.shape[1]

    batch = x.shape[0]
    assert x.shape[1] == n_feature, (x.shape, n_feature)

    # Batch tile: multiple of 16 (bf16 packing), capped at `tm`.
    block_m = min(_round_up(tm, SUBLANE16), _round_up(batch, SUBLANE16))
    # v7x has 2 TensorCores; "parallel" only helps with >= 2 grid steps, so
    # split the tile when the batch is big enough but would give grid=(1,).
    if _round_up(batch, block_m) // block_m < 2 and block_m >= 256:
        block_m = _round_up(block_m // 2, SUBLANE16)
    padded_batch = _round_up(batch, block_m)

    # Single wrapper-side pad (zeros are exact); the bf16 cast happens inside
    # the kernel, so x is not rewritten in HBM when shapes are already aligned.
    if padded_batch != batch or n_feat_pad != n_feature:
        x = jnp.pad(x, ((0, padded_batch - batch),
                        (0, n_feat_pad - n_feature)))

    call_args = (x,) + tensors
    try:
        # Weights/biases never change across grid steps: a single pipeline
        # buffer is enough (halves resident-weight VMEM).
        out = _build_pallas_call(block_m, padded_batch, n_feat_pad, n_out_pad,
                                 tensors, pl.Buffered(1))(*call_args)
    except Exception:
        # Fallback for JAX versions that reject single-buffered pipeline_mode.
        out = _build_pallas_call(block_m, padded_batch, n_feat_pad, n_out_pad,
                                 tensors, None)(*call_args)

    return out[:batch, :n_output]


def init_params(key, n_feature, n_output):
    """Deterministic init mirroring PyTorch Linear default U(-1/sqrt(in), 1/sqrt(in))."""
    dims = [n_feature, 1200, 512, 256, n_output]
    params = []
    for i in range(4):
        fan_in, fan_out = dims[i], dims[i + 1]
        key, kw, kb = jax.random.split(key, 3)
        bound = 1.0 / (fan_in ** 0.5)
        w = jax.random.uniform(kw, (fan_in, fan_out), jnp.float32, -bound, bound)
        b = jax.random.uniform(kb, (1, fan_out), jnp.float32, -bound, bound)
        params.append((w, b))
    return params


def prepare_params(params):
    """Zero-pad to lane-aligned shapes (exact) and cast weights to bf16.

    - hidden-1: 1200 -> 1280 (w1 cols, b1, w2 rows)
    - n_feature -> multiple of 128 (w1 rows; x cols padded in net_forward)
    - n_output  -> multiple of 128 (w4 cols, b4); wrapper slices it back
    Biases stay f32 (added post-accumulation).
    """
    (w1, b1), (w2, b2), (w3, b3), (w4, b4) = params
    n_feature = w1.shape[0]
    n_output = w4.shape[1]
    n_feat_pad = _round_up(n_feature, LANE)
    n_out_pad = _round_up(n_output, LANE)

    w1 = jnp.pad(w1, ((0, n_feat_pad - n_feature),
                      (0, HIDDEN1_PADDED - w1.shape[1])))
    b1 = jnp.pad(b1, ((0, 0), (0, HIDDEN1_PADDED - b1.shape[1])))
    w2 = jnp.pad(w2, ((0, HIDDEN1_PADDED - w2.shape[0]), (0, 0)))
    w4 = jnp.pad(w4, ((0, 0), (0, n_out_pad - n_output)))
    b4 = jnp.pad(b4, ((0, 0), (0, n_out_pad - n_output)))

    bf16 = lambda w: w.astype(jnp.bfloat16)
    tensors = (bf16(w1), b1, bf16(w2), b2, bf16(w3), b3, bf16(w4), b4)
    return {"tensors": tensors, "n_feature": n_feature, "n_output": n_output}


def reference_forward(x, prepared):
    """Pure-JAX reference emulating the kernel's bf16-weight / f32-accum math."""
    w1, b1, w2, b2, w3, b3, w4, b4 = prepared["tensors"]
    n_feature = prepared["n_feature"]
    n_output = prepared["n_output"]
    h = jnp.pad(x, ((0, 0), (0, w1.shape[0] - n_feature)))
    h = h.astype(jnp.bfloat16).astype(jnp.float32)
    for i, (w, b) in enumerate(((w1, b1), (w2, b2), (w3, b3), (w4, b4))):
        h = h @ w.astype(jnp.float32) + b
        if i < 3:
            h = jnp.maximum(h, 0.0).astype(jnp.bfloat16).astype(jnp.float32)
    return h[:, :n_output]


if __name__ == "__main__":
    key = jax.random.PRNGKey(0)
    batch, n_feature, n_output = 20, 32, 10

    k_x, k_p = jax.random.split(key)
    x = jax.random.normal(k_x, (batch, n_feature), jnp.float32)
    params = init_params(k_p, n_feature, n_output)
    prepared = prepare_params(params)

    # tm=16 at this toy size exercises a 2-step batch grid (block_m=16,
    # 20 -> 32 rows), plus the feature (32 -> 128) and output (10 -> 128)
    # lane-padding paths. Real workloads use the default tm=512.
    out = net_forward(x, prepared, tm=16)
    jax.block_until_ready(out)

    ref = reference_forward(x, prepared)
    assert out.shape == (batch, n_output), out.shape
    max_err = float(jnp.max(jnp.abs(out - ref)))
    assert jnp.allclose(out, ref, atol=1e-2, rtol=1e-2), max_err

    print("KERNEL_OK")
</pallas_src>

<mosaic_0001>
module attributes {stable_mosaic.version = 11 : i64} {
  func.func @mlp_kernel(%arg0: i32, %arg1: memref<16x128xf32, #tpu.memory_space<vmem>>, %arg2: memref<128x1280xbf16, #tpu.memory_space<vmem>>, %arg3: memref<1x1280xf32, #tpu.memory_space<vmem>>, %arg4: memref<1280x512xbf16, #tpu.memory_space<vmem>>, %arg5: memref<1x512xf32, #tpu.memory_space<vmem>>, %arg6: memref<512x256xbf16, #tpu.memory_space<vmem>>, %arg7: memref<1x256xf32, #tpu.memory_space<vmem>>, %arg8: memref<256x128xbf16, #tpu.memory_space<vmem>>, %arg9: memref<1x128xf32, #tpu.memory_space<vmem>>, %arg10: memref<16x128xf32, #tpu.memory_space<vmem>>) attributes {dimension_semantics = [#tpu.dimension_semantics<parallel>], iteration_bounds = array<i64: 2>, scalar_prefetch = 0 : i64, scratch_operands = 0 : i64, tpu.core_type = #tpu.core_type<tc>, window_params = [{transform_indices = @transform_0, window_bounds = array<i64: 16, 128>}, {pipeline_mode = #tpu.pipeline_mode<synchronous>, transform_indices = @transform_1, window_bounds = array<i64: 128, 1280>}, {pipeline_mode = #tpu.pipeline_mode<synchronous>, transform_indices = @transform_2, window_bounds = array<i64: 1, 1280>}, {pipeline_mode = #tpu.pipeline_mode<synchronous>, transform_indices = @transform_3, window_bounds = array<i64: 1280, 512>}, {pipeline_mode = #tpu.pipeline_mode<synchronous>, transform_indices = @transform_4, window_bounds = array<i64: 1, 512>}, {pipeline_mode = #tpu.pipeline_mode<synchronous>, transform_indices = @transform_5, window_bounds = array<i64: 512, 256>}, {pipeline_mode = #tpu.pipeline_mode<synchronous>, transform_indices = @transform_6, window_bounds = array<i64: 1, 256>}, {pipeline_mode = #tpu.pipeline_mode<synchronous>, transform_indices = @transform_7, window_bounds = array<i64: 256, 128>}, {pipeline_mode = #tpu.pipeline_mode<synchronous>, transform_indices = @transform_8, window_bounds = array<i64: 1, 128>}, {transform_indices = @transform_9, window_bounds = array<i64: 16, 128>}]} {
    %c0 = arith.constant 0 : index
    %c0_0 = arith.constant 0 : index
    %0 = vector.load %arg1[%c0, %c0_0] : memref<16x128xf32, #tpu.memory_space<vmem>>, vector<16x128xf32>
    %1 = arith.truncf %0 : vector<16x128xf32> to vector<16x128xbf16>
    %c0_1 = arith.constant 0 : index
    %c0_2 = arith.constant 0 : index
    %2 = vector.load %arg2[%c0_1, %c0_2] : memref<128x1280xbf16, #tpu.memory_space<vmem>>, vector<128x1280xbf16>
    %cst = arith.constant dense<0.000000e+00> : vector<16x1280xf32>
    %3 = tpu.matmul %1, %2, %cst {dimension_numbers = #tpu.dot_dimension_numbers<[1], [0], [0], [1], [0, 0, 1, 1], [], []>} : vector<16x128xbf16>, vector<128x1280xbf16>, vector<16x1280xf32> -> vector<16x1280xf32>
    %c0_3 = arith.constant 0 : index
    %c0_4 = arith.constant 0 : index
    %4 = vector.load %arg3[%c0_3, %c0_4] : memref<1x1280xf32, #tpu.memory_space<vmem>>, vector<1x1280xf32>
    %5 = vector.broadcast %4 : vector<1x1280xf32> to vector<16x1280xf32>
    %6 = arith.addf %3, %5 : vector<16x1280xf32>
    %cst_5 = arith.constant 0.000000e+00 : f32
    %7 = vector.broadcast %cst_5 : f32 to vector<16x1280xf32>
    %8 = arith.maximumf %6, %7 : vector<16x1280xf32>
    %9 = arith.truncf %8 : vector<16x1280xf32> to vector<16x1280xbf16>
    %c0_6 = arith.constant 0 : index
    %c0_7 = arith.constant 0 : index
    %10 = vector.load %arg4[%c0_6, %c0_7] : memref<1280x512xbf16, #tpu.memory_space<vmem>>, vector<1280x512xbf16>
    %cst_8 = arith.constant dense<0.000000e+00> : vector<16x512xf32>
    %11 = tpu.matmul %9, %10, %cst_8 {dimension_numbers = #tpu.dot_dimension_numbers<[1], [0], [0], [1], [0, 0, 1, 1], [], []>} : vector<16x1280xbf16>, vector<1280x512xbf16>, vector<16x512xf32> -> vector<16x512xf32>
    %c0_9 = arith.constant 0 : index
    %c0_10 = arith.constant 0 : index
    %12 = vector.load %arg5[%c0_9, %c0_10] : memref<1x512xf32, #tpu.memory_space<vmem>>, vector<1x512xf32>
    %13 = vector.broadcast %12 : vector<1x512xf32> to vector<16x512xf32>
    %14 = arith.addf %11, %13 : vector<16x512xf32>
    %cst_11 = arith.constant 0.000000e+00 : f32
    %15 = vector.broadcast %cst_11 : f32 to vector<16x512xf32>
    %16 = arith.maximumf %14, %15 : vector<16x512xf32>
    %17 = arith.truncf %16 : vector<16x512xf32> to vector<16x512xbf16>
    %c0_12 = arith.constant 0 : index
    %c0_13 = arith.constant 0 : index
    %18 = vector.load %arg6[%c0_12, %c0_13] : memref<512x256xbf16, #tpu.memory_space<vmem>>, vector<512x256xbf16>
    %cst_14 = arith.constant dense<0.000000e+00> : vector<16x256xf32>
    %19 = tpu.matmul %17, %18, %cst_14 {dimension_numbers = #tpu.dot_dimension_numbers<[1], [0], [0], [1], [0, 0, 1, 1], [], []>} : vector<16x512xbf16>, vector<512x256xbf16>, vector<16x256xf32> -> vector<16x256xf32>
    %c0_15 = arith.constant 0 : index
    %c0_16 = arith.constant 0 : index
    %20 = vector.load %arg7[%c0_15, %c0_16] : memref<1x256xf32, #tpu.memory_space<vmem>>, vector<1x256xf32>
    %21 = vector.broadcast %20 : vector<1x256xf32> to vector<16x256xf32>
    %22 = arith.addf %19, %21 : vector<16x256xf32>
    %cst_17 = arith.constant 0.000000e+00 : f32
    %23 = vector.broadcast %cst_17 : f32 to vector<16x256xf32>
    %24 = arith.maximumf %22, %23 : vector<16x256xf32>
    %25 = arith.truncf %24 : vector<16x256xf32> to vector<16x256xbf16>
    %c0_18 = arith.constant 0 : index
    %c0_19 = arith.constant 0 : index
    %26 = vector.load %arg8[%c0_18, %c0_19] : memref<256x128xbf16, #tpu.memory_space<vmem>>, vector<256x128xbf16>
    %cst_20 = arith.constant dense<0.000000e+00> : vector<16x128xf32>
    %27 = tpu.matmul %25, %26, %cst_20 {dimension_numbers = #tpu.dot_dimension_numbers<[1], [0], [0], [1], [0, 0, 1, 1], [], []>} : vector<16x256xbf16>, vector<256x128xbf16>, vector<16x128xf32> -> vector<16x128xf32>
    %c0_21 = arith.constant 0 : index
    %c0_22 = arith.constant 0 : index
    %28 = vector.load %arg9[%c0_21, %c0_22] : memref<1x128xf32, #tpu.memory_space<vmem>>, vector<1x128xf32>
    %29 = vector.broadcast %28 : vector<1x128xf32> to vector<16x128xf32>
    %30 = arith.addf %27, %29 : vector<16x128xf32>
    %c0_23 = arith.constant 0 : index
    %c0_24 = arith.constant 0 : index
    %31 = vector.load %arg10[%c0_23, %c0_24] : memref<16x128xf32, #tpu.memory_space<vmem>>, vector<16x128xf32>
    tpu.vector_store %arg10[%c0_23, %c0_24], %30 {strides = array<i32>} : memref<16x128xf32, #tpu.memory_space<vmem>>, vector<16x128xf32>,
    return
  }
  func.func @transform_0(%arg0: i32) -> (i32, i32) {
    %c0_i32 = arith.constant 0 : i32
    %c0_i32_0 = arith.constant 0 : i32
    return %arg0, %c0_i32 : i32, i32
  }
  func.func @transform_1(%arg0: i32) -> (i32, i32) {
    %c0_i32 = arith.constant 0 : i32
    %c0_i32_0 = arith.constant 0 : i32
    %c0_i32_1 = arith.constant 0 : i32
    return %c0_i32, %c0_i32_0 : i32, i32
  }
  func.func @transform_2(%arg0: i32) -> (i32, i32) {
    %c0_i32 = arith.constant 0 : i32
    %c0_i32_0 = arith.constant 0 : i32
    %c0_i32_1 = arith.constant 0 : i32
    return %c0_i32, %c0_i32_0 : i32, i32
  }
  func.func @transform_3(%arg0: i32) -> (i32, i32) {
    %c0_i32 = arith.constant 0 : i32
    %c0_i32_0 = arith.constant 0 : i32
    %c0_i32_1 = arith.constant 0 : i32
    return %c0_i32, %c0_i32_0 : i32, i32
  }
  func.func @transform_4(%arg0: i32) -> (i32, i32) {
    %c0_i32 = arith.constant 0 : i32
    %c0_i32_0 = arith.constant 0 : i32
    %c0_i32_1 = arith.constant 0 : i32
    return %c0_i32, %c0_i32_0 : i32, i32
  }
  func.func @transform_5(%arg0: i32) -> (i32, i32) {
    %c0_i32 = arith.constant 0 : i32
    %c0_i32_0 = arith.constant 0 : i32
    %c0_i32_1 = arith.constant 0 : i32
    return %c0_i32, %c0_i32_0 : i32, i32
  }
  func.func @transform_6(%arg0: i32) -> (i32, i32) {
    %c0_i32 = arith.constant 0 : i32
    %c0_i32_0 = arith.constant 0 : i32
    %c0_i32_1 = arith.constant 0 : i32
    return %c0_i32, %c0_i32_0 : i32, i32
  }
  func.func @transform_7(%arg0: i32) -> (i32, i32) {
    %c0_i32 = arith.constant 0 : i32
    %c0_i32_0 = arith.constant 0 : i32
    %c0_i32_1 = arith.constant 0 : i32
    return %c0_i32, %c0_i32_0 : i32, i32
  }
  func.func @transform_8(%arg0: i32) -> (i32, i32) {
    %c0_i32 = arith.constant 0 : i32
    %c0_i32_0 = arith.constant 0 : i32
    %c0_i32_1 = arith.constant 0 : i32
    return %c0_i32, %c0_i32_0 : i32, i32
  }
  func.func @transform_9(%arg0: i32) -> (i32, i32) {
    %c0_i32 = arith.constant 0 : i32
    %c0_i32_0 = arith.constant 0 : i32
    return %arg0, %c0_i32 : i32, i32
  }
}

module attributes {stable_mosaic.version = 11 : i64} {
  func.func @mlp_kernel(%arg0: i32, %arg1: memref<16x128xf32, #tpu.memory_space<vmem>>, %arg2: memref<128x1280xbf16, #tpu.memory_space<vmem>>, %arg3: memref<1x1280xf32, #tpu.memory_space<vmem>>, %arg4: memref<1280x512xbf16, #tpu.memory_space<vmem>>, %arg5: memref<1x512xf32, #tpu.memory_space<vmem>>, %arg6: memref<512x256xbf16, #tpu.memory_space<vmem>>, %arg7: memref<1x256xf32, #tpu.memory_space<vmem>>, %arg8: memref<256x128xbf16, #tpu.memory_space<vmem>>, %arg9: memref<1x128xf32, #tpu.memory_space<vmem>>, %arg10: memref<16x128xf32, #tpu.memory_space<vmem>>) attributes {dimension_semantics = [#tpu.dimension_semantics<parallel>], iteration_bounds = array<i64: 2>, scalar_prefetch = 0 : i64, scratch_operands = 0 : i64, tpu.core_type = #tpu.core_type<tc>, window_params = [{transform_indices = @transform_0, window_bounds = array<i64: 16, 128>}, {pipeline_mode = #tpu.pipeline_mode<synchronous>, transform_indices = @transform_1, window_bounds = array<i64: 128, 1280>}, {pipeline_mode = #tpu.pipeline_mode<synchronous>, transform_indices = @transform_2, window_bounds = array<i64: 1, 1280>}, {pipeline_mode = #tpu.pipeline_mode<synchronous>, transform_indices = @transform_3, window_bounds = array<i64: 1280, 512>}, {pipeline_mode = #tpu.pipeline_mode<synchronous>, transform_indices = @transform_4, window_bounds = array<i64: 1, 512>}, {pipeline_mode = #tpu.pipeline_mode<synchronous>, transform_indices = @transform_5, window_bounds = array<i64: 512, 256>}, {pipeline_mode = #tpu.pipeline_mode<synchronous>, transform_indices = @transform_6, window_bounds = array<i64: 1, 256>}, {pipeline_mode = #tpu.pipeline_mode<synchronous>, transform_indices = @transform_7, window_bounds = array<i64: 256, 128>}, {pipeline_mode = #tpu.pipeline_mode<synchronous>, transform_indices = @transform_8, window_bounds = array<i64: 1, 128>}, {transform_indices = @transform_9, window_bounds = array<i64: 16, 128>}]} {
    %c0 = arith.constant 0 : index
    %c0_0 = arith.constant 0 : index
    %0 = vector.load %arg1[%c0, %c0_0] : memref<16x128xf32, #tpu.memory_space<vmem>>, vector<16x128xf32>
    %1 = arith.truncf %0 : vector<16x128xf32> to vector<16x128xbf16>
    %c0_1 = arith.constant 0 : index
    %c0_2 = arith.constant 0 : index
    %2 = vector.load %arg2[%c0_1, %c0_2] : memref<128x1280xbf16, #tpu.memory_space<vmem>>, vector<128x1280xbf16>
    %cst = arith.constant dense<0.000000e+00> : vector<16x1280xf32>
    %3 = tpu.matmul %1, %2, %cst {dimension_numbers = #tpu.dot_dimension_numbers<[1], [0], [0], [1], [0, 0, 1, 1], [], []>} : vector<16x128xbf16>, vector<128x1280xbf16>, vector<16x1280xf32> -> vector<16x1280xf32>
    %c0_3 = arith.constant 0 : index
    %c0_4 = arith.constant 0 : index
    %4 = vector.load %arg3[%c0_3, %c0_4] : memref<1x1280xf32, #tpu.memory_space<vmem>>, vector<1x1280xf32>
    %5 = vector.broadcast %4 : vector<1x1280xf32> to vector<16x1280xf32>
    %6 = arith.addf %3, %5 : vector<16x1280xf32>
    %cst_5 = arith.constant 0.000000e+00 : f32
    %7 = vector.broadcast %cst_5 : f32 to vector<16x1280xf32>
    %8 = arith.maximumf %6, %7 : vector<16x1280xf32>
    %9 = arith.truncf %8 : vector<16x1280xf32> to vector<16x1280xbf16>
    %c0_6 = arith.constant 0 : index
    %c0_7 = arith.constant 0 : index
    %10 = vector.load %arg4[%c0_6, %c0_7] : memref<1280x512xbf16, #tpu.memory_space<vmem>>, vector<1280x512xbf16>
    %cst_8 = arith.constant dense<0.000000e+00> : vector<16x512xf32>
    %11 = tpu.matmul %9, %10, %cst_8 {dimension_numbers = #tpu.dot_dimension_numbers<[1], [0], [0], [1], [0, 0, 1, 1], [], []>} : vector<16x1280xbf16>, vector<1280x512xbf16>, vector<16x512xf32> -> vector<16x512xf32>
    %c0_9 = arith.constant 0 : index
    %c0_10 = arith.constant 0 : index
    %12 = vector.load %arg5[%c0_9, %c0_10] : memref<1x512xf32, #tpu.memory_space<vmem>>, vector<1x512xf32>
    %13 = vector.broadcast %12 : vector<1x512xf32> to vector<16x512xf32>
    %14 = arith.addf %11, %13 : vector<16x512xf32>
    %cst_11 = arith.constant 0.000000e+00 : f32
    %15 = vector.broadcast %cst_11 : f32 to vector<16x512xf32>
    %16 = arith.maximumf %14, %15 : vector<16x512xf32>
    %17 = arith.truncf %16 : vector<16x512xf32> to vector<16x512xbf16>
    %c0_12 = arith.constant 0 : index
    %c0_13 = arith.constant 0 : index
    %18 = vector.load %arg6[%c0_12, %c0_13] : memref<512x256xbf16, #tpu.memory_space<vmem>>, vector<512x256xbf16>
    %cst_14 = arith.constant dense<0.000000e+00> : vector<16x256xf32>
    %19 = tpu.matmul %17, %18, %cst_14 {dimension_numbers = #tpu.dot_dimension_numbers<[1], [0], [0], [1], [0, 0, 1, 1], [], []>} : vector<16x512xbf16>, vector<512x256xbf16>, vector<16x256xf32> -> vector<16x256xf32>
    %c0_15 = arith.constant 0 : index
    %c0_16 = arith.constant 0 : index
    %20 = vector.load %arg7[%c0_15, %c0_16] : memref<1x256xf32, #tpu.memory_space<vmem>>, vector<1x256xf32>
    %21 = vector.broadcast %20 : vector<1x256xf32> to vector<16x256xf32>
    %22 = arith.addf %19, %21 : vector<16x256xf32>
    %cst_17 = arith.constant 0.000000e+00 : f32
    %23 = vector.broadcast %cst_17 : f32 to vector<16x256xf32>
    %24 = arith.maximumf %22, %23 : vector<16x256xf32>
    %25 = arith.truncf %24 : vector<16x256xf32> to vector<16x256xbf16>
    %c0_18 = arith.constant 0 : index
    %c0_19 = arith.constant 0 : index
    %26 = vector.load %arg8[%c0_18, %c0_19] : memref<256x128xbf16, #tpu.memory_space<vmem>>, vector<256x128xbf16>
    %cst_20 = arith.constant dense<0.000000e+00> : vector<16x128xf32>
    %27 = tpu.matmul %25, %26, %cst_20 {dimension_numbers = #tpu.dot_dimension_numbers<[1], [0], [0], [1], [0, 0, 1, 1], [], []>} : vector<16x256xbf16>, vector<256x128xbf16>, vector<16x128xf32> -> vector<16x128xf32>
    %c0_21 = arith.constant 0 : index
    %c0_22 = arith.constant 0 : index
    %28 = vector.load %arg9[%c0_21, %c0_22] : memref<1x128xf32, #tpu.memory_space<vmem>>, vector<1x128xf32>
    %29 = vector.broadcast %28 : vector<1x128xf32> to vector<16x128xf32>
    %30 = arith.addf %27, %29 : vector<16x128xf32>
    %c0_23 = arith.constant 0 : index
    %c0_24 = arith.constant 0 : index
    %31 = vector.load %arg10[%c0_23, %c0_24] : memref<16x128xf32, #tpu.memory_space<vmem>>, vector<16x128xf32>
    tpu.vector_store %arg10[%c0_23, %c0_24], %30 {strides = array<i32>} : memref<16x128xf32, #tpu.memory_space<vmem>>, vector<16x128xf32>,
    return
  }
  func.func @transform_0(%arg0: i32) -> (i32, i32) {
    %c0_i32 = arith.constant 0 : i32
    %c0_i32_0 = arith.constant 0 : i32
    return %arg0, %c0_i32 : i32, i32
  }
  func.func @transform_1(%arg0: i32) -> (i32, i32) {
    %c0_i32 = arith.constant 0 : i32
    %c0_i32_0 = arith.constant 0 : i32
    %c0_i32_1 = arith.constant 0 : i32
    return %c0_i32, %c0_i32_0 : i32, i32
  }
  func.func @transform_2(%arg0: i32) -> (i32, i32) {
    %c0_i32 = arith.constant 0 : i32
    %c0_i32_0 = arith.constant 0 : i32
    %c0_i32_1 = arith.constant 0 : i32
    return %c0_i32, %c0_i32_0 : i32, i32
  }
  func.func @transform_3(%arg0: i32) -> (i32, i32) {
    %c0_i32 = arith.constant 0 : i32
    %c0_i32_0 = arith.constant 0 : i32
    %c0_i32_1 = arith.constant 0 : i32
    return %c0_i32, %c0_i32_0 : i32, i32
  }
  func.func @transform_4(%arg0: i32) -> (i32, i32) {
    %c0_i32 = arith.constant 0 : i32
    %c0_i32_0 = arith.constant 0 : i32
    %c0_i32_1 = arith.constant 0 : i32
    return %c0_i32, %c0_i32_0 : i32, i32
  }
  func.func @transform_5(%arg0: i32) -> (i32, i32) {
    %c0_i32 = arith.constant 0 : i32
    %c0_i32_0 = arith.constant 0 : i32
    %c0_i32_1 = arith.constant 0 : i32
    return %c0_i32, %c0_i32_0 : i32, i32
  }
  func.func @transform_6(%arg0: i32) -> (i32, i32) {
    %c0_i32 = arith.constant 0 : i32
    %c0_i32_0 = arith.constant 0 : i32
    %c0_i32_1 = arith.constant 0 : i32
    return %c0_i32, %c0_i32_0 : i32, i32
  }
  func.func @transform_7(%arg0: i32) -> (i32, i32) {
    %c0_i32 = arith.constant 0 : i32
    %c0_i32_0 = arith.constant 0 : i32
    %c0_i32_1 = arith.constant 0 : i32
    return %c0_i32, %c0_i32_0 : i32, i32
  }
  func.func @transform_8(%arg0: i32) -> (i32, i32) {
    %c0_i32 = arith.constant 0 : i32
    %c0_i32_0 = arith.constant 0 : i32
    %c0_i32_1 = arith.constant 0 : i32
    return %c0_i32, %c0_i32_0 : i32, i32
  }
  func.func @transform_9(%arg0: i32) -> (i32, i32) {
    %c0_i32 = arith.constant 0 : i32
    %c0_i32_0 = arith.constant 0 : i32
    return %arg0, %c0_i32 : i32, i32
  }
}

</mosaic_0001>

<llo_original>
// kernel: tpu_custom_call.1
$region0: #{tpu_custom_call.1}
  #allocation0 [shape = 'u32[]', space=smem, size = 0x4, offset = 0x4, fixed_abs, tag = 'smem constant byte address 0x4 - core index']
  #allocation1 [shape = 'u32[144,128]{1,0:T(1,128)}', space=vmem, size = 0x12000, scoped, tag = 'internal scratch']
  %s0 = inlined_call_operand.hbm [shape: f32[32,128], index: 0, kind: input, shape index: {}]
  %s1 = inlined_call_operand.hbm [shape: bf16[128,1280], index: 1, kind: input, shape index: {}]
  %s2 = inlined_call_operand.hbm [shape: f32[1,1280], index: 2, kind: input, shape index: {}]
  %s3 = inlined_call_operand.hbm [shape: bf16[1280,512], index: 3, kind: input, shape index: {}]
  %s4 = inlined_call_operand.hbm [shape: f32[1,512], index: 4, kind: input, shape index: {}]
  %s5 = inlined_call_operand.hbm [shape: bf16[512,256], index: 5, kind: input, shape index: {}]
  %s6 = inlined_call_operand.hbm [shape: f32[1,256], index: 6, kind: input, shape index: {}]
  %s7 = inlined_call_operand.hbm [shape: bf16[256,128], index: 7, kind: input, shape index: {}]
  %s8 = inlined_call_operand.hbm [shape: f32[1,128], index: 8, kind: input, shape index: {}]
  %s9 = inlined_call_operand.hbm [shape: f32[32,128], index: 9, kind: output, shape index: {}]
  %s10 = sld [smem:[#allocation0]]
  $region105: #{tpu_custom_call.1} parent=0
    _
  %s12 = ssub.s32 1, %s10
  %s13 = scalar_select 0, %s12, %s10
  $region1: #{tpu_custom_call.1} parent=0
    #allocation2 [shape = 'u8[16384]{0}', space=vmem, size = 0x4000, scoped, tag = 'input window, operand 0']
    #allocation3 [shape = 's32[2]{0}', space=sflag, size = 0x8, scoped, tag = 'scoped memory for tpu_custom_call.1']
    #allocation4 [shape = 's32[2]{0}', space=sflag, size = 0x8, scoped, tag = 'scoped memory for tpu_custom_call.1']
    #allocation5 [shape = 'u8[327680]{0}', space=vmem, size = 0x50000, scoped, tag = 'input window, operand 1, single buffered']
    #allocation6 [shape = 's32[1]{0}', space=sflag, size = 0x4, scoped, tag = 'scoped memory for tpu_custom_call.1']
    #allocation7 [shape = 'u8[5120]{0}', space=vmem, size = 0x1400, scoped, tag = 'input window, operand 2, single buffered']
    #allocation8 [shape = 'u8[1310720]{0}', space=vmem, size = 0x140000, scoped, tag = 'input window, operand 3, single buffered']
    #allocation9 [shape = 's32[1]{0}', space=sflag, size = 0x4, scoped, tag = 'scoped memory for tpu_custom_call.1']
    #allocation10 [shape = 'u8[2048]{0}', space=vmem, size = 0x800, scoped, tag = 'input window, operand 4, single buffered']
    #allocation11 [shape = 'u8[262144]{0}', space=vmem, size = 0x40000, scoped, tag = 'input window, operand 5, single buffered']
    #allocation12 [shape = 's32[1]{0}', space=sflag, size = 0x4, scoped, tag = 'scoped memory for tpu_custom_call.1']
    #allocation13 [shape = 'u8[1024]{0}', space=vmem, size = 0x400, scoped, tag = 'input window, operand 6, single buffered']
    #allocation14 [shape = 'u8[65536]{0}', space=vmem, size = 0x10000, scoped, tag = 'input window, operand 7, single buffered']
    #allocation15 [shape = 's32[1]{0}', space=sflag, size = 0x4, scoped, tag = 'scoped memory for tpu_custom_call.1']
    #allocation16 [shape = 'u8[512]{0}', space=vmem, size = 0x400, scoped, tag = 'input window, operand 8, single buffered']
    #allocation17 [shape = 'u8[16384]{0}', space=vmem, size = 0x4000, scoped, tag = 'output window, operand 0']
    %14 = vsyncpa [#allocation3], 0
    %s15 = scalar_lea.sflag [#allocation3], 1
    %16 = vsyncpa %s15, 0
    %17 = vsyncpa [#allocation6], 0
    %18 = vsyncpa [#allocation9], 0
    %19 = vsyncpa [#allocation12], 0
    %20 = vsyncpa [#allocation15], 0
    %21 = vsyncpa [#allocation4], 0
    %s22 = scalar_lea.sflag [#allocation4], 1
    %23 = vsyncpa %s22, 0
    loop: start=0, step=1, limit=4
    $region2: #{tpu_custom_call.1} parent=1 // loop_pre_header
      _
    $region3: #{tpu_custom_call.1} parent=1 // loop_header
      %s25 = sphi 0, %s29
      %p26 = scmp.ge.s32.totalorder %s25, 4
      %s35 = sphi 0, %s37
      %s38 = sphi 0, %s35
      %s39 = sphi 0, %s38
      %s55 = sphi 0, %s39
      %s59 = sphi 0, %s59
      %s61 = sphi 0, %s59
      %s62 = sphi 0, %s61
      %s76 = sphi 0, %s62
      %s80 = sphi 0, %s80
      %s82 = sphi 0, %s80
      %s83 = sphi 0, %s82
      %s97 = sphi 0, %s83
      %s101 = sphi 0, %s101
      %s103 = sphi 0, %s101
      %s104 = sphi 0, %s103
      %s118 = sphi 0, %s104
      %s122 = sphi 0, %s122
      %s124 = sphi 0, %s122
      %s125 = sphi 0, %s124
      %s139 = sphi 0, %s125
      %s143 = sphi 0, %s143
      %s145 = sphi 0, %s143
      %s146 = sphi 0, %s145
      %s160 = sphi 0, %s146
      %s164 = sphi 0, %s164
      %s166 = sphi 0, %s164
      %s167 = sphi 0, %s166
      %s181 = sphi 0, %s167
      %s185 = sphi 0, %s185
      %s187 = sphi 0, %s185
      %s188 = sphi 0, %s187
      %s202 = sphi 0, %s188
      %s206 = sphi 0, %s206
      %s208 = sphi 0, %s206
      %s209 = sphi 0, %s208
      %s223 = sphi 0, %s209
      %s229 = sphi 0, %s231
      %s232 = sphi 0, %s229
      %s233 = sphi 0, %s232
      %s249 = sphi 0, %s233
    $region4: #{tpu_custom_call.1} parent=1 // loop_header_branch
      %28 = sbr.rel (%p26) target = $region8
    $region5: #{tpu_custom_call.1} parent=1 // loop_body
      %s30 = ssub.s32 %s25, 1
      %s31 = ssub.s32 %s25, 2
      %s32 = sadd.s32 %s25, 1
      %s33 = ssub.s32 %s25, %s32
      %p34 = scmp.eq.s32.totalorder %s33, 0
      %s36 = sadd.s32 %s35, 1
      %s37 = scalar_select %p34, %s35, %s36
      %p40 = pneg %p34
      %p41 = scmp.eq.s32.totalorder %s25, 1
      %p42 = por %p40, %p41
      %p43 = scmp.ne.s32.totalorder %s35, %s38
      %p44 = scmp.eq.s32.totalorder %s25, 0
      %p45 = por %p43, %p44
      %p46 = scmp.ne.s32.totalorder %s35, %s38
      %p47 = scmp.eq.s32.totalorder %s30, 1
      %p48 = por %p46, %p47
      %p49 = scmp.ne.s32.totalorder %s38, %s39
      %p50 = scmp.eq.s32.totalorder %s30, 0
      %p51 = por %p49, %p50
      %p52 = scmp.ne.s32.totalorder %s38, %s39
      %p53 = scmp.eq.s32.totalorder %s31, 1
      %p54 = por %p52, %p53
      %p56 = scmp.ne.s32.totalorder %s39, %s55
      %p57 = scmp.eq.s32.totalorder %s31, 0
      %p58 = por %p56, %p57
      %s60 = sadd.s32 %s59, 1
      %p63 = scmp.eq.s32.totalorder %s25, 1
      %p64 = scmp.ne.s32.totalorder %s59, %s61
      %p65 = scmp.eq.s32.totalorder %s25, 0
      %p66 = por %p64, %p65
      %p67 = scmp.ne.s32.totalorder %s59, %s61
      %p68 = scmp.eq.s32.totalorder %s30, 1
      %p69 = por %p67, %p68
      %p70 = scmp.ne.s32.totalorder %s61, %s62
      %p71 = scmp.eq.s32.totalorder %s30, 0
      %p72 = por %p70, %p71
      %p73 = scmp.ne.s32.totalorder %s61, %s62
      %p74 = scmp.eq.s32.totalorder %s31, 1
      %p75 = por %p73, %p74
      %p77 = scmp.ne.s32.totalorder %s62, %s76
      %p78 = scmp.eq.s32.totalorder %s31, 0
      %p79 = por %p77, %p78
      %s81 = sadd.s32 %s80, 1
      %p84 = scmp.eq.s32.totalorder %s25, 1
      %p85 = scmp.ne.s32.totalorder %s80, %s82
      %p86 = scmp.eq.s32.totalorder %s25, 0
      %p87 = por %p85, %p86
      %p88 = scmp.ne.s32.totalorder %s80, %s82
      %p89 = scmp.eq.s32.totalorder %s30, 1
      %p90 = por %p88, %p89
      %p91 = scmp.ne.s32.totalorder %s82, %s83
      %p92 = scmp.eq.s32.totalorder %s30, 0
      %p93 = por %p91, %p92
      %p94 = scmp.ne.s32.totalorder %s82, %s83
      %p95 = scmp.eq.s32.totalorder %s31, 1
      %p96 = por %p94, %p95
      %p98 = scmp.ne.s32.totalorder %s83, %s97
      %p99 = scmp.eq.s32.totalorder %s31, 0
      %p100 = por %p98, %p99
      %s102 = sadd.s32 %s101, 1
      %p105 = scmp.eq.s32.totalorder %s25, 1
      %p106 = scmp.ne.s32.totalorder %s101, %s103
      %p107 = scmp.eq.s32.totalorder %s25, 0
      %p108 = por %p106, %p107
      %p109 = scmp.ne.s32.totalorder %s101, %s103
      %p110 = scmp.eq.s32.totalorder %s30, 1
      %p111 = por %p109, %p110
      %p112 = scmp.ne.s32.totalorder %s103, %s104
      %p113 = scmp.eq.s32.totalorder %s30, 0
      %p114 = por %p112, %p113
      %p115 = scmp.ne.s32.totalorder %s103, %s104
      %p116 = scmp.eq.s32.totalorder %s31, 1
      %p117 = por %p115, %p116
      %p119 = scmp.ne.s32.totalorder %s104, %s118
      %p120 = scmp.eq.s32.totalorder %s31, 0
      %p121 = por %p119, %p120
      %s123 = sadd.s32 %s122, 1
      %p126 = scmp.eq.s32.totalorder %s25, 1
      %p127 = scmp.ne.s32.totalorder %s122, %s124
      %p128 = scmp.eq.s32.totalorder %s25, 0
      %p129 = por %p127, %p128
      %p130 = scmp.ne.s32.totalorder %s122, %s124
      %p131 = scmp.eq.s32.totalorder %s30, 1
      %p132 = por %p130, %p131
      %p133 = scmp.ne.s32.totalorder %s124, %s125
      %p134 = scmp.eq.s32.totalorder %s30, 0
      %p135 = por %p133, %p134
      %p136 = scmp.ne.s32.totalorder %s124, %s125
      %p137 = scmp.eq.s32.totalorder %s31, 1
      %p138 = por %p136, %p137
      %p140 = scmp.ne.s32.totalorder %s125, %s139
      %p141 = scmp.eq.s32.totalorder %s31, 0
      %p142 = por %p140, %p141
      %s144 = sadd.s32 %s143, 1
      %p147 = scmp.eq.s32.totalorder %s25, 1
      %p148 = scmp.ne.s32.totalorder %s143, %s145
      %p149 = scmp.eq.s32.totalorder %s25, 0
      %p150 = por %p148, %p149
      %p151 = scmp.ne.s32.totalorder %s143, %s145
      %p152 = scmp.eq.s32.totalorder %s30, 1
      %p153 = por %p151, %p152
      %p154 = scmp.ne.s32.totalorder %s145, %s146
      %p155 = scmp.eq.s32.totalorder %s30, 0
      %p156 = por %p154, %p155
      %p157 = scmp.ne.s32.totalorder %s145, %s146
      %p158 = scmp.eq.s32.totalorder %s31, 1
      %p159 = por %p157, %p158
      %p161 = scmp.ne.s32.totalorder %s146, %s160
      %p162 = scmp.eq.s32.totalorder %s31, 0
      %p163 = por %p161, %p162
      %s165 = sadd.s32 %s164, 1
      %p168 = scmp.eq.s32.totalorder %s25, 1
      %p169 = scmp.ne.s32.totalorder %s164, %s166
      %p170 = scmp.eq.s32.totalorder %s25, 0
      %p171 = por %p169, %p170
      %p172 = scmp.ne.s32.totalorder %s164, %s166
      %p173 = scmp.eq.s32.totalorder %s30, 1
      %p174 = por %p172, %p173
      %p175 = scmp.ne.s32.totalorder %s166, %s167
      %p176 = scmp.eq.s32.totalorder %s30, 0
      %p177 = por %p175, %p176
      %p178 = scmp.ne.s32.totalorder %s166, %s167
      %p179 = scmp.eq.s32.totalorder %s31, 1
      %p180 = por %p178, %p179
      %p182 = scmp.ne.s32.totalorder %s167, %s181
      %p183 = scmp.eq.s32.totalorder %s31, 0
      %p184 = por %p182, %p183
      %s186 = sadd.s32 %s185, 1
      %p189 = scmp.eq.s32.totalorder %s25, 1
      %p190 = scmp.ne.s32.totalorder %s185, %s187
      %p191 = scmp.eq.s32.totalorder %s25, 0
      %p192 = por %p190, %p191
      %p193 = scmp.ne.s32.totalorder %s185, %s187
      %p194 = scmp.eq.s32.totalorder %s30, 1
      %p195 = por %p193, %p194
      %p196 = scmp.ne.s32.totalorder %s187, %s188
      %p197 = scmp.eq.s32.totalorder %s30, 0
      %p198 = por %p196, %p197
      %p199 = scmp.ne.s32.totalorder %s187, %s188
      %p200 = scmp.eq.s32.totalorder %s31, 1
      %p201 = por %p199, %p200
      %p203 = scmp.ne.s32.totalorder %s188, %s202
      %p204 = scmp.eq.s32.totalorder %s31, 0
      %p205 = por %p203, %p204
      %s207 = sadd.s32 %s206, 1
      %p210 = scmp.eq.s32.totalorder %s25, 1
      %p211 = scmp.ne.s32.totalorder %s206, %s208
      %p212 = scmp.eq.s32.totalorder %s25, 0
      %p213 = por %p211, %p212
      %p214 = scmp.ne.s32.totalorder %s206, %s208
      %p215 = scmp.eq.s32.totalorder %s30, 1
      %p216 = por %p214, %p215
      %p217 = scmp.ne.s32.totalorder %s208, %s209
      %p218 = scmp.eq.s32.totalorder %s30, 0
      %p219 = por %p217, %p218
      %p220 = scmp.ne.s32.totalorder %s208, %s209
      %p221 = scmp.eq.s32.totalorder %s31, 1
      %p222 = por %p220, %p221
      %p224 = scmp.ne.s32.totalorder %s209, %s223
      %p225 = scmp.eq.s32.totalorder %s31, 0
      %p226 = por %p224, %p225
      %s227 = ssub.s32 %s25, %s32
      %p228 = scmp.eq.s32.totalorder %s227, 0
      %s230 = sadd.s32 %s229, 1
      %s231 = scalar_select %p228, %s229, %s230
      %p234 = pneg %p228
      %p235 = scmp.eq.s32.totalorder %s25, 1
      %p236 = por %p234, %p235
      %p237 = scmp.ne.s32.totalorder %s229, %s232
      %p238 = scmp.eq.s32.totalorder %s25, 0
      %p239 = por %p237, %p238
      %p240 = scmp.ne.s32.totalorder %s229, %s232
      %p241 = scmp.eq.s32.totalorder %s30, 1
      %p242 = por %p240, %p241
      %p243 = scmp.ne.s32.totalorder %s232, %s233
      %p244 = scmp.eq.s32.totalorder %s30, 0
      %p245 = por %p243, %p244
      %p246 = scmp.ne.s32.totalorder %s232, %s233
      %p247 = scmp.eq.s32.totalorder %s31, 1
      %p248 = por %p246, %p247
      %p250 = scmp.ne.s32.totalorder %s233, %s249
      %p251 = scmp.eq.s32.totalorder %s31, 0
      %p252 = por %p250, %p251
      %p253 = scmp.le.s32.totalorder 1, %s25
      %p254 = scmp.lt.s32.totalorder %s25, 3
      %p255 = pnand %p253, %p254
      %p256 = pneg %p255
      // Predicated region
      $region9: #{tpu_custom_call.1} parent=5 // pred_check
        _
      $region10: #{tpu_custom_call.1} parent=5 // pred_check_branch
        %258 = sbr.rel (%p255) target = $region12
      $region11: #{tpu_custom_call.1} parent=5 // pred_region
        %s259 = ssub.s32 %s25, 1
        // Predicated region
        $region13: #{tpu_custom_call.1} parent=11 // pred_check
          %p260 = pneg %p72
        $region14: #{tpu_custom_call.1} parent=11 // pred_check_branch
          %262 = sbr.rel (%p260) target = $region16
        $region15: #{tpu_custom_call.1} parent=11 // pred_region
          %s264 = ssub.s32 10240, 10240
          %265 = vsyncadd [#allocation6], %s264
          %s266 = sshll.u32 [#allocation5], 4
          %s267 = int_to_ptr.vmem [resolvable:$true] %s266
          %272 = dma.hbm_to_vmem [thread:$0]  %s1, 10240, %s267, [#allocation6], 640, 640, 40
        $region16: #{tpu_custom_call.1} parent=11 // pred_fallthru
          _
        // Predicated region
        $region17: #{tpu_custom_call.1} parent=11 // pred_check
          %p273 = pneg %p93
        $region18: #{tpu_custom_call.1} parent=11 // pred_check_branch
          %275 = sbr.rel (%p273) target = $region20
        $region19: #{tpu_custom_call.1} parent=11 // pred_region
          %s277 = ssub.s32 160, 160
          %278 = vsyncadd [#allocation6], %s277
          %s280 = sshll.u32 [#allocation7], 4
          %s281 = int_to_ptr.vmem [resolvable:$true] %s280
          %283 = dma.hbm_to_vmem [thread:$0]  %s2, 160, %s281, [#allocation6]
        $region20: #{tpu_custom_call.1} parent=11 // pred_fallthru
          _
        // Predicated region
        $region21: #{tpu_custom_call.1} parent=11 // pred_check
          %p284 = pneg %p114
        $region22: #{tpu_custom_call.1} parent=11 // pred_check_branch
          %286 = sbr.rel (%p284) target = $region24
        $region23: #{tpu_custom_call.1} parent=11 // pred_region
          %s288 = ssub.s32 40960, 40960
          %289 = vsyncadd [#allocation9], %s288
          %s290 = sshll.u32 [#allocation8], 4
          %s291 = int_to_ptr.vmem [resolvable:$true] %s290
          %296 = dma.hbm_to_vmem [thread:$0]  %s3, 40960, %s291, [#allocation9], 256, 256, 16
        $region24: #{tpu_custom_call.1} parent=11 // pred_fallthru
          _
        // Predicated region
        $region25: #{tpu_custom_call.1} parent=11 // pred_check
          %p297 = pneg %p135
        $region26: #{tpu_custom_call.1} parent=11 // pred_check_branch
          %299 = sbr.rel (%p297) target = $region28
        $region27: #{tpu_custom_call.1} parent=11 // pred_region
          %s301 = ssub.s32 64, 64
          %302 = vsyncadd [#allocation9], %s301
          %s304 = sshll.u32 [#allocation10], 4
          %s305 = int_to_ptr.vmem [resolvable:$true] %s304
          %307 = dma.hbm_to_vmem [thread:$0]  %s4, 64, %s305, [#allocation9]
        $region28: #{tpu_custom_call.1} parent=11 // pred_fallthru
          _
        // Predicated region
        $region29: #{tpu_custom_call.1} parent=11 // pred_check
          %p308 = pneg %p156
        $region30: #{tpu_custom_call.1} parent=11 // pred_check_branch
          %310 = sbr.rel (%p308) target = $region32
        $region31: #{tpu_custom_call.1} parent=11 // pred_region
          %s312 = ssub.s32 8192, 8192
          %313 = vsyncadd [#allocation12], %s312
          %s314 = sshll.u32 [#allocation11], 4
          %s315 = int_to_ptr.vmem [resolvable:$true] %s314
          %320 = dma.hbm_to_vmem [thread:$0]  %s5, 8192, %s315, [#allocation12], 128, 128, 8
        $region32: #{tpu_custom_call.1} parent=11 // pred_fallthru
          _
        // Predicated region
        $region33: #{tpu_custom_call.1} parent=11 // pred_check
          %p321 = pneg %p177
        $region34: #{tpu_custom_call.1} parent=11 // pred_check_branch
          %323 = sbr.rel (%p321) target = $region36
        $region35: #{tpu_custom_call.1} parent=11 // pred_region
          %s325 = ssub.s32 32, 32
          %326 = vsyncadd [#allocation12], %s325
          %s328 = sshll.u32 [#allocation13], 4
          %s329 = int_to_ptr.vmem [resolvable:$true] %s328
          %331 = dma.hbm_to_vmem [thread:$0]  %s6, 32, %s329, [#allocation12]
        $region36: #{tpu_custom_call.1} parent=11 // pred_fallthru
          _
        // Predicated region
        $region37: #{tpu_custom_call.1} parent=11 // pred_check
          %p332 = pneg %p198
        $region38: #{tpu_custom_call.1} parent=11 // pred_check_branch
          %334 = sbr.rel (%p332) target = $region40
        $region39: #{tpu_custom_call.1} parent=11 // pred_region
          %s336 = ssub.s32 2048, 2048
          %337 = vsyncadd [#allocation15], %s336
          %s338 = sshll.u32 [#allocation14], 4
          %s339 = int_to_ptr.vmem [resolvable:$true] %s338
          %344 = dma.hbm_to_vmem [thread:$0]  %s7, 2048, %s339, [#allocation15], 64, 64, 4
        $region40: #{tpu_custom_call.1} parent=11 // pred_fallthru
          _
        // Predicated region
        $region41: #{tpu_custom_call.1} parent=11 // pred_check
          %p345 = pneg %p219
        $region42: #{tpu_custom_call.1} parent=11 // pred_check_branch
          %347 = sbr.rel (%p345) target = $region44
        $region43: #{tpu_custom_call.1} parent=11 // pred_region
          %s349 = ssub.s32 16, 16
          %350 = vsyncadd [#allocation15], %s349
          %s352 = sshll.u32 [#allocation16], 4
          %s353 = int_to_ptr.vmem [resolvable:$true] %s352
          %355 = dma.hbm_to_vmem [thread:$0]  %s8, 16, %s353, [#allocation15]
        $region44: #{tpu_custom_call.1} parent=11 // pred_fallthru
          _
      $region12: #{tpu_custom_call.1} parent=5 // pred_fallthru
        _
      %p356 = scmp.lt.s32.totalorder %s25, 2
      // Predicated region
      $region45: #{tpu_custom_call.1} parent=5 // pred_check
        %p357 = pneg %p356
      $region46: #{tpu_custom_call.1} parent=5 // pred_check_branch
        %359 = sbr.rel (%p357) target = $region48
      $region47: #{tpu_custom_call.1} parent=5 // pred_region
        // Predicated region
        $region49: #{tpu_custom_call.1} parent=47 // pred_check
          %p360 = pneg %p45
        $region50: #{tpu_custom_call.1} parent=47 // pred_check_branch
          %362 = sbr.rel (%p360) target = $region52
        $region51: #{tpu_custom_call.1} parent=47 // pred_region
          %s363 = sand.u32 %s35, 1
          %s364 = scalar_lea.sflag [#allocation3], %s363
          %s365 = sand.u32 %s35, 1
          %s366 = smul.addr %s365, 16
          %s367 = scalar_lea.vmem [#allocation2], %s366
          %s368 = smul.u32 2, %s25
          %s370 = ssub.s32 256, 256
          %371 = vsyncadd %s364, %s370
          %s372 = smul.addr %s368, 128
          %s373 = scalar_lea.hbm %s0, %s372
          %s374 = sshll.u32 %s367, 4
          %s375 = int_to_ptr.vmem [resolvable:$true] %s374
          %380 = dma.hbm_to_vmem [thread:$0]  %s373, 256, %s375, %s364, 128, 128, 8
        $region52: #{tpu_custom_call.1} parent=47 // pred_fallthru
          _
      $region48: #{tpu_custom_call.1} parent=5 // pred_fallthru
        _
      %p381 = scmp.le.s32.totalorder 1, %s25
      %p382 = scmp.lt.s32.totalorder %s25, 3
      %p383 = pnand %p381, %p382
      %p384 = pneg %p383
      // Predicated region
      $region53: #{tpu_custom_call.1} parent=5 // pred_check
        _
      $region54: #{tpu_custom_call.1} parent=5 // pred_check_branch
        %386 = sbr.rel (%p383) target = $region56
      $region55: #{tpu_custom_call.1} parent=5 // pred_region
        %s387 = ssub.s32 %s25, 1
        %s388 = sand.u32 %s38, 1
        %s389 = scalar_lea.sflag [#allocation3], %s388
        %s390 = sand.u32 %s38, 1
        %s391 = smul.addr %s390, 16
        %s392 = scalar_lea.vmem [#allocation2], %s391
        // Predicated region
        $region57: #{tpu_custom_call.1} parent=55 // pred_check
          %p393 = pneg %p51
        $region58: #{tpu_custom_call.1} parent=55 // pred_check_branch
          %395 = sbr.rel (%p393) target = $region60
        $region59: #{tpu_custom_call.1} parent=55 // pred_region
          %396 = dma.done %s389, 256
        $region60: #{tpu_custom_call.1} parent=55 // pred_fallthru
          _
        // Predicated region
        $region61: #{tpu_custom_call.1} parent=55 // pred_check
          %p397 = pneg %p72
        $region62: #{tpu_custom_call.1} parent=55 // pred_check_branch
          %399 = sbr.rel (%p397) target = $region64
        $region63: #{tpu_custom_call.1} parent=55 // pred_region
          %400 = dma.done [#allocation6], 10240
        $region64: #{tpu_custom_call.1} parent=55 // pred_fallthru
          _
        // Predicated region
        $region65: #{tpu_custom_call.1} parent=55 // pred_check
          %p401 = pneg %p93
        $region66: #{tpu_custom_call.1} parent=55 // pred_check_branch
          %403 = sbr.rel (%p401) target = $region68
        $region67: #{tpu_custom_call.1} parent=55 // pred_region
          %404 = dma.done [#allocation6], 160
        $region68: #{tpu_custom_call.1} parent=55 // pred_fallthru
          _
        // Predicated region
        $region69: #{tpu_custom_call.1} parent=55 // pred_check
          %p405 = pneg %p114
        $region70: #{tpu_custom_call.1} parent=55 // pred_check_branch
          %407 = sbr.rel (%p405) target = $region72
        $region71: #{tpu_custom_call.1} parent=55 // pred_region
          %408 = dma.done [#allocation9], 40960
        $region72: #{tpu_custom_call.1} parent=55 // pred_fallthru
          _
        // Predicated region
        $region73: #{tpu_custom_call.1} parent=55 // pred_check
          %p409 = pneg %p135
        $region74: #{tpu_custom_call.1} parent=55 // pred_check_branch
          %411 = sbr.rel (%p409) target = $region76
        $region75: #{tpu_custom_call.1} parent=55 // pred_region
          %412 = dma.done [#allocation9], 64
        $region76: #{tpu_custom_call.1} parent=55 // pred_fallthru
          _
        // Predicated region
        $region77: #{tpu_custom_call.1} parent=55 // pred_check
          %p413 = pneg %p156
        $region78: #{tpu_custom_call.1} parent=55 // pred_check_branch
          %415 = sbr.rel (%p413) target = $region80
        $region79: #{tpu_custom_call.1} parent=55 // pred_region
          %416 = dma.done [#allocation12], 8192
        $region80: #{tpu_custom_call.1} parent=55 // pred_fallthru
          _
        // Predicated region
        $region81: #{tpu_custom_call.1} parent=55 // pred_check
          %p417 = pneg %p177
        $region82: #{tpu_custom_call.1} parent=55 // pred_check_branch
          %419 = sbr.rel (%p417) target = $region84
        $region83: #{tpu_custom_call.1} parent=55 // pred_region
          %420 = dma.done [#allocation12], 32
        $region84: #{tpu_custom_call.1} parent=55 // pred_fallthru
          _
        // Predicated region
        $region85: #{tpu_custom_call.1} parent=55 // pred_check
          %p421 = pneg %p198
        $region86: #{tpu_custom_call.1} parent=55 // pred_check_branch
          %423 = sbr.rel (%p421) target = $region88
        $region87: #{tpu_custom_call.1} parent=55 // pred_region
          %424 = dma.done [#allocation15], 2048
        $region88: #{tpu_custom_call.1} parent=55 // pred_fallthru
          _
        // Predicated region
        $region89: #{tpu_custom_call.1} parent=55 // pred_check
          %p425 = pneg %p219
        $region90: #{tpu_custom_call.1} parent=55 // pred_check_branch
          %427 = sbr.rel (%p425) target = $region92
        $region91: #{tpu_custom_call.1} parent=55 // pred_region
          %428 = dma.done [#allocation15], 16
        $region92: #{tpu_custom_call.1} parent=55 // pred_fallthru
          _
        %s429 = sand.u32 %s38, 1
        %s430 = scalar_lea.sflag [#allocation3], %s429
        %s431 = sand.u32 %s38, 1
        %s432 = smul.addr %s431, 16
        %s433 = scalar_lea.vmem [#allocation2], %s432
        %p434 = pneg %p51
        %p435 = pneg %p48
        %p436 = pneg %p72
        %p437 = pneg %p69
        %p438 = pneg %p93
        %p439 = pneg %p90
        %p440 = pneg %p114
        %p441 = pneg %p111
        %p442 = pneg %p135
        %p443 = pneg %p132
        %p444 = pneg %p156
        %p445 = pneg %p153
        %p446 = pneg %p177
        %p447 = pneg %p174
        %p448 = pneg %p198
        %p449 = pneg %p195
        %p450 = pneg %p219
        %p451 = pneg %p216
        %p452 = pneg %p245
        %p453 = pneg %p242
        %s454 = sand.u32 %s232, 1
        %s455 = scalar_lea.sflag [#allocation4], %s454
        %s456 = sand.u32 %s232, 1
        %s457 = smul.addr %s456, 16
        %s458 = scalar_lea.vmem [#allocation17], %s457
        %s459 = smul.u32 2, %s30
        %s460 = smul.u32 2, %s30
        %v462 = vld [vmem:[%s392] sm:$0xff]
        %v463 = vld [vmem:[%s392 + $0x8] sm:$0xff]
        %v464 = vpack.c.bf16 %v463, %v462
        %v465 = vld [vmem:[#allocation5] sm:$0xff]
        %v466 = vld [vmem:[#allocation5 + $0x8] sm:$0xff]
        %v467 = vld [vmem:[#allocation5 + $0x10] sm:$0xff]
        %v468 = vld [vmem:[#allocation5 + $0x18] sm:$0xff]
        %v469 = vld [vmem:[#allocation5 + $0x20] sm:$0xff]
        %v470 = vld [vmem:[#allocation5 + $0x28] sm:$0xff]
        %v471 = vld [vmem:[#allocation5 + $0x30] sm:$0xff]
        %v472 = vld [vmem:[#allocation5 + $0x38] sm:$0xff]
        %v473 = vld [vmem:[#allocation5 + $0x40] sm:$0xff]
        %v474 = vld [vmem:[#allocation5 + $0x48] sm:$0xff]
        %v475 = vld [vmem:[#allocation5 + $0x50] sm:$0xff]
        %v476 = vld [vmem:[#allocation5 + $0x58] sm:$0xff]
        %v477 = vld [vmem:[#allocation5 + $0x60] sm:$0xff]
        %v478 = vld [vmem:[#allocation5 + $0x68] sm:$0xff]
        %v479 = vld [vmem:[#allocation5 + $0x70] sm:$0xff]
        %v480 = vld [vmem:[#allocation5 + $0x78] sm:$0xff]
        %v481 = vld [vmem:[#allocation5 + $0x80] sm:$0xff]
        %v482 = vld [vmem:[#allocation5 + $0x88] sm:$0xff]
        %v483 = vld [vmem:[#allocation5 + $0x90] sm:$0xff]
        %v484 = vld [vmem:[#allocation5 + $0x98] sm:$0xff]
        %v485 = vld [vmem:[#allocation5 + $0xa0] sm:$0xff]
        %v486 = vld [vmem:[#allocation5 + $0xa8] sm:$0xff]
        %v487 = vld [vmem:[#allocation5 + $0xb0] sm:$0xff]
        %v488 = vld [vmem:[#allocation5 + $0xb8] sm:$0xff]
        %v489 = vld [vmem:[#allocation5 + $0xc0] sm:$0xff]
        %v490 = vld [vmem:[#allocation5 + $0xc8] sm:$0xff]
        %v491 = vld [vmem:[#allocation5 + $0xd0] sm:$0xff]
        %v492 = vld [vmem:[#allocation5 + $0xd8] sm:$0xff]
        %v493 = vld [vmem:[#allocation5 + $0xe0] sm:$0xff]
        %v494 = vld [vmem:[#allocation5 + $0xe8] sm:$0xff]
        %v495 = vld [vmem:[#allocation5 + $0xf0] sm:$0xff]
        %v496 = vld [vmem:[#allocation5 + $0xf8] sm:$0xff]
        %v497 = vld [vmem:[#allocation5 + $0x100] sm:$0xff]
        %v498 = vld [vmem:[#allocation5 + $0x108] sm:$0xff]
        %v499 = vld [vmem:[#allocation5 + $0x110] sm:$0xff]
        %v500 = vld [vmem:[#allocation5 + $0x118] sm:$0xff]
        %v501 = vld [vmem:[#allocation5 + $0x120] sm:$0xff]
        %v502 = vld [vmem:[#allocation5 + $0x128] sm:$0xff]
        %v503 = vld [vmem:[#allocation5 + $0x130] sm:$0xff]
        %v504 = vld [vmem:[#allocation5 + $0x138] sm:$0xff]
        %v505 = vld [vmem:[#allocation5 + $0x140] sm:$0xff]
        %v506 = vld [vmem:[#allocation5 + $0x148] sm:$0xff]
        %v507 = vld [vmem:[#allocation5 + $0x150] sm:$0xff]
        %v508 = vld [vmem:[#allocation5 + $0x158] sm:$0xff]
        %v509 = vld [vmem:[#allocation5 + $0x160] sm:$0xff]
        %v510 = vld [vmem:[#allocation5 + $0x168] sm:$0xff]
        %v511 = vld [vmem:[#allocation5 + $0x170] sm:$0xff]
        %v512 = vld [vmem:[#allocation5 + $0x178] sm:$0xff]
        %v513 = vld [vmem:[#allocation5 + $0x180] sm:$0xff]
        %v514 = vld [vmem:[#allocation5 + $0x188] sm:$0xff]
        %v515 = vld [vmem:[#allocation5 + $0x190] sm:$0xff]
        %v516 = vld [vmem:[#allocation5 + $0x198] sm:$0xff]
        %v517 = vld [vmem:[#allocation5 + $0x1a0] sm:$0xff]
        %v518 = vld [vmem:[#allocation5 + $0x1a8] sm:$0xff]
        %v519 = vld [vmem:[#allocation5 + $0x1b0] sm:$0xff]
        %v520 = vld [vmem:[#allocation5 + $0x1b8] sm:$0xff]
        %v521 = vld [vmem:[#allocation5 + $0x1c0] sm:$0xff]
        %v522 = vld [vmem:[#allocation5 + $0x1c8] sm:$0xff]
        %v523 = vld [vmem:[#allocation5 + $0x1d0] sm:$0xff]
        %v524 = vld [vmem:[#allocation5 + $0x1d8] sm:$0xff]
        %v525 = vld [vmem:[#allocation5 + $0x1e0] sm:$0xff]
        %v526 = vld [vmem:[#allocation5 + $0x1e8] sm:$0xff]
        %v527 = vld [vmem:[#allocation5 + $0x1f0] sm:$0xff]
        %v528 = vld [vmem:[#allocation5 + $0x1f8] sm:$0xff]
        %v529 = vld [vmem:[#allocation5 + $0x200] sm:$0xff]
        %v530 = vld [vmem:[#allocation5 + $0x208] sm:$0xff]
        %v531 = vld [vmem:[#allocation5 + $0x210] sm:$0xff]
        %v532 = vld [vmem:[#allocation5 + $0x218] sm:$0xff]
        %v533 = vld [vmem:[#allocation5 + $0x220] sm:$0xff]
        %v534 = vld [vmem:[#allocation5 + $0x228] sm:$0xff]
        %v535 = vld [vmem:[#allocation5 + $0x230] sm:$0xff]
        %v536 = vld [vmem:[#allocation5 + $0x238] sm:$0xff]
        %v537 = vld [vmem:[#allocation5 + $0x240] sm:$0xff]
        %v538 = vld [vmem:[#allocation5 + $0x248] sm:$0xff]
        %v539 = vld [vmem:[#allocation5 + $0x250] sm:$0xff]
        %v540 = vld [vmem:[#allocation5 + $0x258] sm:$0xff]
        %v541 = vld [vmem:[#allocation5 + $0x260] sm:$0xff]
        %v542 = vld [vmem:[#allocation5 + $0x268] sm:$0xff]
        %v543 = vld [vmem:[#allocation5 + $0x270] sm:$0xff]
        %v544 = vld [vmem:[#allocation5 + $0x278] sm:$0xff]
        %v545 = vld [vmem:[#allocation7] sm:$0xff]
        %v546 = vld [vmem:[#allocation7 + $0x8] sm:$0x3]
        %v549 = vlaneseq
        %v550 = vshrl.u32 %v549, 7
        %v551 = vsub.s32 0, %v550
        %v552 = vrot.slane %v545, %v551
        %v553 = vlaneseq
        %v554 = vshrl.u32 %v553, 7
        %v555 = vsub.s32 1, %v554
        %v556 = vrot.slane %v545, %v555
        %v557 = vlaneseq
        %v558 = vshrl.u32 %v557, 7
        %v559 = vsub.s32 2, %v558
        %v560 = vrot.slane %v545, %v559
        %v561 = vlaneseq
        %v562 = vshrl.u32 %v561, 7
        %v563 = vsub.s32 3, %v562
        %v564 = vrot.slane %v545, %v563
        %v565 = vlaneseq
        %v566 = vshrl.u32 %v565, 7
        %v567 = vsub.s32 4, %v566
        %v568 = vrot.slane %v545, %v567
        %v569 = vlaneseq
        %v570 = vshrl.u32 %v569, 7
        %v571 = vsub.s32 5, %v570
        %v572 = vrot.slane %v545, %v571
        %v573 = vlaneseq
        %v574 = vshrl.u32 %v573, 7
        %v575 = vsub.s32 6, %v574
        %v576 = vrot.slane %v545, %v575
        %v577 = vlaneseq
        %v578 = vshrl.u32 %v577, 7
        %v579 = vsub.s32 7, %v578
        %v580 = vrot.slane %v545, %v579
        %v581 = vlaneseq
        %v582 = vshrl.u32 %v581, 7
        %v583 = vsub.s32 0, %v582
        %v584 = vrot.slane %v546, %v583
        %v585 = vlaneseq
        %v586 = vshrl.u32 %v585, 7
        %v587 = vsub.s32 1, %v586
        %v588 = vrot.slane %v546, %v587
        %v679 = vunpack.c.l.b16 %v465
        %v680 = vunpack.c.h.b16 %v465
        %v681 = vunpack.c.l.b16 %v466
        %v682 = vunpack.c.h.b16 %v466
        %v683 = vunpack.c.l.b16 %v467
        %v684 = vunpack.c.h.b16 %v467
        %v685 = vunpack.c.l.b16 %v468
        %v686 = vunpack.c.h.b16 %v468
        %v687 = vunpack.c.l.b16 %v469
        %v688 = vunpack.c.h.b16 %v469
        %v689 = vunpack.c.l.b16 %v470
        %v690 = vunpack.c.h.b16 %v470
        %v691 = vunpack.c.l.b16 %v471
        %v692 = vunpack.c.h.b16 %v471
        %v693 = vunpack.c.l.b16 %v472
        %v694 = vunpack.c.h.b16 %v472
        %v695 = vunpack.c.l.b16 %v473
        %v696 = vunpack.c.h.b16 %v473
        %v697 = vunpack.c.l.b16 %v474
        %v698 = vunpack.c.h.b16 %v474
        %v699 = vunpack.c.l.b16 %v475
        %v700 = vunpack.c.h.b16 %v475
        %v701 = vunpack.c.l.b16 %v476
        %v702 = vunpack.c.h.b16 %v476
        %v703 = vunpack.c.l.b16 %v477
        %v704 = vunpack.c.h.b16 %v477
        %v705 = vunpack.c.l.b16 %v478
        %v706 = vunpack.c.h.b16 %v478
        %v707 = vunpack.c.l.b16 %v479
        %v708 = vunpack.c.h.b16 %v479
        %v709 = vunpack.c.l.b16 %v480
        %v710 = vunpack.c.h.b16 %v480
        %v711 = vunpack.c.l.b16 %v481
        %v712 = vunpack.c.h.b16 %v481
        %v713 = vunpack.c.l.b16 %v482
        %v714 = vunpack.c.h.b16 %v482
        %v715 = vunpack.c.l.b16 %v483
        %v716 = vunpack.c.h.b16 %v483
        %v717 = vunpack.c.l.b16 %v484
        %v718 = vunpack.c.h.b16 %v484
        %v719 = vunpack.c.l.b16 %v485
        %v720 = vunpack.c.h.b16 %v485
        %v721 = vunpack.c.l.b16 %v486
        %v722 = vunpack.c.h.b16 %v486
        %v723 = vunpack.c.l.b16 %v487
        %v724 = vunpack.c.h.b16 %v487
        %v725 = vunpack.c.l.b16 %v488
        %v726 = vunpack.c.h.b16 %v488
        %v727 = vunpack.c.l.b16 %v489
        %v728 = vunpack.c.h.b16 %v489
        %v729 = vunpack.c.l.b16 %v490
        %v730 = vunpack.c.h.b16 %v490
        %v731 = vunpack.c.l.b16 %v491
        %v732 = vunpack.c.h.b16 %v491
        %v733 = vunpack.c.l.b16 %v492
        %v734 = vunpack.c.h.b16 %v492
        %v735 = vunpack.c.l.b16 %v493
        %v736 = vunpack.c.h.b16 %v493
        %v737 = vunpack.c.l.b16 %v494
        %v738 = vunpack.c.h.b16 %v494
        %v739 = vunpack.c.l.b16 %v495
        %v740 = vunpack.c.h.b16 %v495
        %v741 = vunpack.c.l.b16 %v496
        %v742 = vunpack.c.h.b16 %v496
        %v743 = vunpack.c.l.b16 %v497
        %v744 = vunpack.c.h.b16 %v497
        %v745 = vunpack.c.l.b16 %v498
        %v746 = vunpack.c.h.b16 %v498
        %v747 = vunpack.c.l.b16 %v499
        %v748 = vunpack.c.h.b16 %v499
        %v749 = vunpack.c.l.b16 %v500
        %v750 = vunpack.c.h.b16 %v500
        %v751 = vunpack.c.l.b16 %v501
        %v752 = vunpack.c.h.b16 %v501
        %v753 = vunpack.c.l.b16 %v502
        %v754 = vunpack.c.h.b16 %v502
        %v755 = vunpack.c.l.b16 %v503
        %v756 = vunpack.c.h.b16 %v503
        %v757 = vunpack.c.l.b16 %v504
        %v758 = vunpack.c.h.b16 %v504
        %v759 = vunpack.c.l.b16 %v505
        %v760 = vunpack.c.h.b16 %v505
        %v761 = vunpack.c.l.b16 %v506
        %v762 = vunpack.c.h.b16 %v506
        %v763 = vunpack.c.l.b16 %v507
        %v764 = vunpack.c.h.b16 %v507
        %v765 = vunpack.c.l.b16 %v508
        %v766 = vunpack.c.h.b16 %v508
        %v767 = vunpack.c.l.b16 %v509
        %v768 = vunpack.c.h.b16 %v509
        %v769 = vunpack.c.l.b16 %v510
        %v770 = vunpack.c.h.b16 %v510
        %v771 = vunpack.c.l.b16 %v511
        %v772 = vunpack.c.h.b16 %v511
        %v773 = vunpack.c.l.b16 %v512
        %v774 = vunpack.c.h.b16 %v512
        %v775 = vunpack.c.l.b16 %v513
        %v776 = vunpack.c.h.b16 %v513
        %v777 = vunpack.c.l.b16 %v514
        %v778 = vunpack.c.h.b16 %v514
        %v779 = vunpack.c.l.b16 %v515
        %v780 = vunpack.c.h.b16 %v515
        %v781 = vunpack.c.l.b16 %v516
        %v782 = vunpack.c.h.b16 %v516
        %v783 = vunpack.c.l.b16 %v517
        %v784 = vunpack.c.h.b16 %v517
        %v785 = vunpack.c.l.b16 %v518
        %v786 = vunpack.c.h.b16 %v518
        %v787 = vunpack.c.l.b16 %v519
        %v788 = vunpack.c.h.b16 %v519
        %v789 = vunpack.c.l.b16 %v520
        %v790 = vunpack.c.h.b16 %v520
        %v791 = vunpack.c.l.b16 %v521
        %v792 = vunpack.c.h.b16 %v521
        %v793 = vunpack.c.l.b16 %v522
        %v794 = vunpack.c.h.b16 %v522
        %v795 = vunpack.c.l.b16 %v523
        %v796 = vunpack.c.h.b16 %v523
        %v797 = vunpack.c.l.b16 %v524
        %v798 = vunpack.c.h.b16 %v524
        %v799 = vunpack.c.l.b16 %v525
        %v800 = vunpack.c.h.b16 %v525
        %v801 = vunpack.c.l.b16 %v526
        %v802 = vunpack.c.h.b16 %v526
        %v803 = vunpack.c.l.b16 %v527
        %v804 = vunpack.c.h.b16 %v527
        %v805 = vunpack.c.l.b16 %v528
        %v806 = vunpack.c.h.b16 %v528
        %v807 = vunpack.c.l.b16 %v529
        %v808 = vunpack.c.h.b16 %v529
        %v809 = vunpack.c.l.b16 %v530
        %v810 = vunpack.c.h.b16 %v530
        %v811 = vunpack.c.l.b16 %v531
        %v812 = vunpack.c.h.b16 %v531
        %v813 = vunpack.c.l.b16 %v532
        %v814 = vunpack.c.h.b16 %v532
        %v815 = vunpack.c.l.b16 %v533
        %v816 = vunpack.c.h.b16 %v533
        %v817 = vunpack.c.l.b16 %v534
        %v818 = vunpack.c.h.b16 %v534
        %v819 = vunpack.c.l.b16 %v535
        %v820 = vunpack.c.h.b16 %v535
        %v821 = vunpack.c.l.b16 %v536
        %v822 = vunpack.c.h.b16 %v536
        %v823 = vunpack.c.l.b16 %v537
        %v824 = vunpack.c.h.b16 %v537
        %v825 = vunpack.c.l.b16 %v538
        %v826 = vunpack.c.h.b16 %v538
        %v827 = vunpack.c.l.b16 %v539
        %v828 = vunpack.c.h.b16 %v539
        %v829 = vunpack.c.l.b16 %v540
        %v830 = vunpack.c.h.b16 %v540
        %v831 = vunpack.c.l.b16 %v541
        %v832 = vunpack.c.h.b16 %v541
        %v833 = vunpack.c.l.b16 %v542
        %v834 = vunpack.c.h.b16 %v542
        %v835 = vunpack.c.l.b16 %v543
        %v836 = vunpack.c.h.b16 %v543
        %v837 = vunpack.c.l.b16 %v544
        %v838 = vunpack.c.h.b16 %v544
        %v839 = vpack.c.b16 %v689, %v679
        %v840 = vpack.c.b16 %v690, %v680
        %v841 = vpack.c.b16 %v691, %v681
        %v842 = vpack.c.b16 %v692, %v682
        %v843 = vpack.c.b16 %v693, %v683
        %v844 = vpack.c.b16 %v694, %v684
        %v845 = vpack.c.b16 %v695, %v685
        %v846 = vpack.c.b16 %v696, %v686
        %v847 = vpack.c.b16 %v697, %v687
        %v848 = vpack.c.b16 %v698, %v688
        %v849 = vpack.c.b16 %v709, %v699
        %v850 = vpack.c.b16 %v710, %v700
        %v851 = vpack.c.b16 %v711, %v701
        %v852 = vpack.c.b16 %v712, %v702
        %v853 = vpack.c.b16 %v713, %v703
        %v854 = vpack.c.b16 %v714, %v704
        %v855 = vpack.c.b16 %v715, %v705
        %v856 = vpack.c.b16 %v716, %v706
        %v857 = vpack.c.b16 %v717, %v707
        %v858 = vpack.c.b16 %v718, %v708
        %v859 = vpack.c.b16 %v729, %v719
        %v860 = vpack.c.b16 %v730, %v720
        %v861 = vpack.c.b16 %v731, %v721
        %v862 = vpack.c.b16 %v732, %v722
        %v863 = vpack.c.b16 %v733, %v723
        %v864 = vpack.c.b16 %v734, %v724
        %v865 = vpack.c.b16 %v735, %v725
        %v866 = vpack.c.b16 %v736, %v726
        %v867 = vpack.c.b16 %v737, %v727
        %v868 = vpack.c.b16 %v738, %v728
        %v869 = vpack.c.b16 %v749, %v739
        %v870 = vpack.c.b16 %v750, %v740
        %v871 = vpack.c.b16 %v751, %v741
        %v872 = vpack.c.b16 %v752, %v742
        %v873 = vpack.c.b16 %v753, %v743
        %v874 = vpack.c.b16 %v754, %v744
        %v875 = vpack.c.b16 %v755, %v745
        %v876 = vpack.c.b16 %v756, %v746
        %v877 = vpack.c.b16 %v757, %v747
        %v878 = vpack.c.b16 %v758, %v748
        %v879 = vpack.c.b16 %v769, %v759
        %v880 = vpack.c.b16 %v770, %v760
        %v881 = vpack.c.b16 %v771, %v761
        %v882 = vpack.c.b16 %v772, %v762
        %v883 = vpack.c.b16 %v773, %v763
        %v884 = vpack.c.b16 %v774, %v764
        %v885 = vpack.c.b16 %v775, %v765
        %v886 = vpack.c.b16 %v776, %v766
        %v887 = vpack.c.b16 %v777, %v767
        %v888 = vpack.c.b16 %v778, %v768
        %v889 = vpack.c.b16 %v789, %v779
        %v890 = vpack.c.b16 %v790, %v780
        %v891 = vpack.c.b16 %v791, %v781
        %v892 = vpack.c.b16 %v792, %v782
        %v893 = vpack.c.b16 %v793, %v783
        %v894 = vpack.c.b16 %v794, %v784
        %v895 = vpack.c.b16 %v795, %v785
        %v896 = vpack.c.b16 %v796, %v786
        %v897 = vpack.c.b16 %v797, %v787
        %v898 = vpack.c.b16 %v798, %v788
        %v899 = vpack.c.b16 %v809, %v799
        %v900 = vpack.c.b16 %v810, %v800
        %v901 = vpack.c.b16 %v811, %v801
        %v902 = vpack.c.b16 %v812, %v802
        %v903 = vpack.c.b16 %v813, %v803
        %v904 = vpack.c.b16 %v814, %v804
        %v905 = vpack.c.b16 %v815, %v805
        %v906 = vpack.c.b16 %v816, %v806
        %v907 = vpack.c.b16 %v817, %v807
        %v908 = vpack.c.b16 %v818, %v808
        %v909 = vpack.c.b16 %v829, %v819
        %v910 = vpack.c.b16 %v830, %v820
        %v911 = vpack.c.b16 %v831, %v821
        %v912 = vpack.c.b16 %v832, %v822
        %v913 = vpack.c.b16 %v833, %v823
        %v914 = vpack.c.b16 %v834, %v824
        %v915 = vpack.c.b16 %v835, %v825
        %v916 = vpack.c.b16 %v836, %v826
        %v917 = vpack.c.b16 %v837, %v827
        %v918 = vpack.c.b16 %v838, %v828
        %999 = vmatprep.subr.bf16.mxu0 %v840
        %1000 = vmatpush1.bf16.msra.mxu0 %v839
        %1001 = vmatprep.subr.bf16.mxu0 %v850
        %1002 = vmatpush1.bf16.msra.mxu0 %v849
        %1003 = vmatprep.subr.bf16.mxu0 %v860
        %1004 = vmatpush1.bf16.msra.mxu0 %v859
        %1005 = vmatprep.subr.bf16.mxu0 %v870
        %1006 = vmatpush1.bf16.msra.mxu0 %v869
        %1007 = vmatprep.subr.bf16.mxu0 %v880
        %1008 = vmatpush1.bf16.msra.mxu0 %v879
        %1009 = vmatprep.subr.bf16.mxu0 %v890
        %1010 = vmatpush1.bf16.msra.mxu0 %v889
        %1011 = vmatprep.subr.bf16.mxu0 %v900
        %1012 = vmatpush1.bf16.msra.mxu0 %v899
        %1013 = vmatprep.subr.bf16.mxu0 %v910
        %1014 = vmatpush1.bf16.msra.mxu0 %v909
        %1015 = vmatprep.subr.bf16.mxu0 0
        %1016 = vmatpush1.bf16.msra.mxu0 0
        %1017 = vmatprep.subr.bf16.mxu0 0
        %1018 = vmatpush1.bf16.msra.mxu0 0
        %1019 = vmatprep.subr.bf16.mxu0 0
        %1020 = vmatpush1.bf16.msra.mxu0 0
        %1021 = vmatprep.subr.bf16.mxu0 0
        %1022 = vmatpush1.bf16.msra.mxu0 0
        %1023 = vmatprep.subr.bf16.mxu0 0
        %1024 = vmatpush1.bf16.msra.mxu0 0
        %1025 = vmatprep.subr.bf16.mxu0 0
        %1026 = vmatpush1.bf16.msra.mxu0 0
        %1027 = vmatprep.subr.bf16.mxu0 0
        %1028 = vmatpush1.bf16.msra.mxu0 0
        %1029 = vmatprep.subr.bf16.mxu0 0
        %1030 = vmatpush1.bf16.msra.mxu0 0
        %1031 = vmatprep.mubr.bf16.mxu0 0
        %1032 = vmatmul.mubr.bf16.gmra.mrb[0].mxu0 %v464
        %v1033 = vpop.f32.mrb[0].mxu0
        %v1034 = vadd.f32 %v552, %v1033
        %v1035 = vpop.f32.mrb[0].mxu0
        %v1036 = vadd.f32 %v556, %v1035
        %v1037 = vpop.f32.mrb[0].mxu0
        %v1038 = vadd.f32 %v552, %v1037
        %v1039 = vpop.f32.mrb[0].mxu0
        %v1040 = vadd.f32 %v556, %v1039
        %1041 = vdwg.mxu0
        %1042 = vmatprep.subr.bf16.mxu0 %v842
        %1043 = vmatpush1.bf16.msra.mxu0 %v841
        %1044 = vmatprep.subr.bf16.mxu0 %v852
        %1045 = vmatpush1.bf16.msra.mxu0 %v851
        %1046 = vmatprep.subr.bf16.mxu0 %v862
        %1047 = vmatpush1.bf16.msra.mxu0 %v861
        %1048 = vmatprep.subr.bf16.mxu0 %v872
        %1049 = vmatpush1.bf16.msra.mxu0 %v871
        %1050 = vmatprep.subr.bf16.mxu0 %v882
        %1051 = vmatpush1.bf16.msra.mxu0 %v881
        %1052 = vmatprep.subr.bf16.mxu0 %v892
        %1053 = vmatpush1.bf16.msra.mxu0 %v891
        %1054 = vmatprep.subr.bf16.mxu0 %v902
        %1055 = vmatpush1.bf16.msra.mxu0 %v901
        %1056 = vmatprep.subr.bf16.mxu0 %v912
        %1057 = vmatpush1.bf16.msra.mxu0 %v911
        %1058 = vmatprep.subr.bf16.mxu0 0
        %1059 = vmatpush1.bf16.msra.mxu0 0
        %1060 = vmatprep.subr.bf16.mxu0 0
        %1061 = vmatpush1.bf16.msra.mxu0 0
        %1062 = vmatprep.subr.bf16.mxu0 0
        %1063 = vmatpush1.bf16.msra.mxu0 0
        %1064 = vmatprep.subr.bf16.mxu0 0
        %1065 = vmatpush1.bf16.msra.mxu0 0
        %1066 = vmatprep.subr.bf16.mxu0 0
        %1067 = vmatpush1.bf16.msra.mxu0 0
        %1068 = vmatprep.subr.bf16.mxu0 0
        %1069 = vmatpush1.bf16.msra.mxu0 0
        %1070 = vmatprep.subr.bf16.mxu0 0
        %1071 = vmatpush1.bf16.msra.mxu0 0
        %1072 = vmatprep.subr.bf16.mxu0 0
        %1073 = vmatpush1.bf16.msra.mxu0 0
        %1074 = vmatprep.mubr.bf16.mxu0 0
        %1075 = vmatmul.mubr.bf16.gmra.mrb[0].mxu0 %v464
        %v1076 = vpop.f32.mrb[0].mxu0
        %v1077 = vadd.f32 %v560, %v1076
        %v1078 = vpop.f32.mrb[0].mxu0
        %v1079 = vadd.f32 %v564, %v1078
        %v1080 = vpop.f32.mrb[0].mxu0
        %v1081 = vadd.f32 %v560, %v1080
        %v1082 = vpop.f32.mrb[0].mxu0
        %v1083 = vadd.f32 %v564, %v1082
        %1084 = vdwg.mxu0
        %1085 = vmatprep.subr.bf16.mxu0 %v844
        %1086 = vmatpush1.bf16.msra.mxu0 %v843
        %1087 = vmatprep.subr.bf16.mxu0 %v854
        %1088 = vmatpush1.bf16.msra.mxu0 %v853
        %1089 = vmatprep.subr.bf16.mxu0 %v864
        %1090 = vmatpush1.bf16.msra.mxu0 %v863
        %1091 = vmatprep.subr.bf16.mxu0 %v874
        %1092 = vmatpush1.bf16.msra.mxu0 %v873
        %1093 = vmatprep.subr.bf16.mxu0 %v884
        %1094 = vmatpush1.bf16.msra.mxu0 %v883
        %1095 = vmatprep.subr.bf16.mxu0 %v894
        %1096 = vmatpush1.bf16.msra.mxu0 %v893
        %1097 = vmatprep.subr.bf16.mxu0 %v904
        %1098 = vmatpush1.bf16.msra.mxu0 %v903
        %1099 = vmatprep.subr.bf16.mxu0 %v914
        %1100 = vmatpush1.bf16.msra.mxu0 %v913
        %1101 = vmatprep.subr.bf16.mxu0 0
        %1102 = vmatpush1.bf16.msra.mxu0 0
        %1103 = vmatprep.subr.bf16.mxu0 0
        %1104 = vmatpush1.bf16.msra.mxu0 0
        %1105 = vmatprep.subr.bf16.mxu0 0
        %1106 = vmatpush1.bf16.msra.mxu0 0
        %1107 = vmatprep.subr.bf16.mxu0 0
        %1108 = vmatpush1.bf16.msra.mxu0 0
        %1109 = vmatprep.subr.bf16.mxu0 0
        %1110 = vmatpush1.bf16.msra.mxu0 0
        %1111 = vmatprep.subr.bf16.mxu0 0
        %1112 = vmatpush1.bf16.msra.mxu0 0
        %1113 = vmatprep.subr.bf16.mxu0 0
        %1114 = vmatpush1.bf16.msra.mxu0 0
        %1115 = vmatprep.subr.bf16.mxu0 0
        %1116 = vmatpush1.bf16.msra.mxu0 0
        %1117 = vmatprep.mubr.bf16.mxu0 0
        %1118 = vmatmul.mubr.bf16.gmra.mrb[0].mxu0 %v464
        %v1119 = vpop.f32.mrb[0].mxu0
        %v1120 = vadd.f32 %v568, %v1119
        %v1121 = vpop.f32.mrb[0].mxu0
        %v1122 = vadd.f32 %v572, %v1121
        %v1123 = vpop.f32.mrb[0].mxu0
        %v1124 = vadd.f32 %v568, %v1123
        %v1125 = vpop.f32.mrb[0].mxu0
        %v1126 = vadd.f32 %v572, %v1125
        %1127 = vdwg.mxu0
        %1128 = vmatprep.subr.bf16.mxu0 %v846
        %1129 = vmatpush1.bf16.msra.mxu0 %v845
        %1130 = vmatprep.subr.bf16.mxu0 %v856
        %1131 = vmatpush1.bf16.msra.mxu0 %v855
        %1132 = vmatprep.subr.bf16.mxu0 %v866
        %1133 = vmatpush1.bf16.msra.mxu0 %v865
        %1134 = vmatprep.subr.bf16.mxu0 %v876
        %1135 = vmatpush1.bf16.msra.mxu0 %v875
        %1136 = vmatprep.subr.bf16.mxu0 %v886
        %1137 = vmatpush1.bf16.msra.mxu0 %v885
        %1138 = vmatprep.subr.bf16.mxu0 %v896
        %1139 = vmatpush1.bf16.msra.mxu0 %v895
        %1140 = vmatprep.subr.bf16.mxu0 %v906
        %1141 = vmatpush1.bf16.msra.mxu0 %v905
        %1142 = vmatprep.subr.bf16.mxu0 %v916
        %1143 = vmatpush1.bf16.msra.mxu0 %v915
        %1144 = vmatprep.subr.bf16.mxu0 0
        %1145 = vmatpush1.bf16.msra.mxu0 0
        %1146 = vmatprep.subr.bf16.mxu0 0
        %1147 = vmatpush1.bf16.msra.mxu0 0
        %1148 = vmatprep.subr.bf16.mxu0 0
        %1149 = vmatpush1.bf16.msra.mxu0 0
        %1150 = vmatprep.subr.bf16.mxu0 0
        %1151 = vmatpush1.bf16.msra.mxu0 0
        %1152 = vmatprep.subr.bf16.mxu0 0
        %1153 = vmatpush1.bf16.msra.mxu0 0
        %1154 = vmatprep.subr.bf16.mxu0 0
        %1155 = vmatpush1.bf16.msra.mxu0 0
        %1156 = vmatprep.subr.bf16.mxu0 0
        %1157 = vmatpush1.bf16.msra.mxu0 0
        %1158 = vmatprep.subr.bf16.mxu0 0
        %1159 = vmatpush1.bf16.msra.mxu0 0
        %1160 = vmatprep.mubr.bf16.mxu0 0
        %1161 = vmatmul.mubr.bf16.gmra.mrb[0].mxu0 %v464
        %v1162 = vpop.f32.mrb[0].mxu0
        %v1163 = vadd.f32 %v576, %v1162
        %v1164 = vpop.f32.mrb[0].mxu0
        %v1165 = vadd.f32 %v580, %v1164
        %v1166 = vpop.f32.mrb[0].mxu0
        %v1167 = vadd.f32 %v576, %v1166
        %v1168 = vpop.f32.mrb[0].mxu0
        %v1169 = vadd.f32 %v580, %v1168
        %1170 = vdwg.mxu0
        %1171 = vmatprep.subr.bf16.mxu0 %v848
        %1172 = vmatpush1.bf16.msra.mxu0 %v847
        %1173 = vmatprep.subr.bf16.mxu0 %v858
        %1174 = vmatpush1.bf16.msra.mxu0 %v857
        %1175 = vmatprep.subr.bf16.mxu0 %v868
        %1176 = vmatpush1.bf16.msra.mxu0 %v867
        %1177 = vmatprep.subr.bf16.mxu0 %v878
        %1178 = vmatpush1.bf16.msra.mxu0 %v877
        %1179 = vmatprep.subr.bf16.mxu0 %v888
        %1180 = vmatpush1.bf16.msra.mxu0 %v887
        %1181 = vmatprep.subr.bf16.mxu0 %v898
        %1182 = vmatpush1.bf16.msra.mxu0 %v897
        %1183 = vmatprep.subr.bf16.mxu0 %v908
        %1184 = vmatpush1.bf16.msra.mxu0 %v907
        %1185 = vmatprep.subr.bf16.mxu0 %v918
        %1186 = vmatpush1.bf16.msra.mxu0 %v917
        %1187 = vmatprep.subr.bf16.mxu0 0
        %1188 = vmatpush1.bf16.msra.mxu0 0
        %1189 = vmatprep.subr.bf16.mxu0 0
        %1190 = vmatpush1.bf16.msra.mxu0 0
        %1191 = vmatprep.subr.bf16.mxu0 0
        %1192 = vmatpush1.bf16.msra.mxu0 0
        %1193 = vmatprep.subr.bf16.mxu0 0
        %1194 = vmatpush1.bf16.msra.mxu0 0
        %1195 = vmatprep.subr.bf16.mxu0 0
        %1196 = vmatpush1.bf16.msra.mxu0 0
        %1197 = vmatprep.subr.bf16.mxu0 0
        %1198 = vmatpush1.bf16.msra.mxu0 0
        %1199 = vmatprep.subr.bf16.mxu0 0
        %1200 = vmatpush1.bf16.msra.mxu0 0
        %1201 = vmatprep.subr.bf16.mxu0 0
        %1202 = vmatpush1.bf16.msra.mxu0 0
        %1203 = vmatprep.mubr.bf16.mxu0 0
        %1204 = vmatmul.mubr.bf16.gmra.mrb[0].mxu0 %v464
        %v1205 = vpop.f32.mrb[0].mxu0
        %v1206 = vadd.f32 %v584, %v1205
        %v1207 = vpop.f32.mrb[0].mxu0
        %v1208 = vadd.f32 %v588, %v1207
        %v1209 = vpop.f32.mrb[0].mxu0
        %v1210 = vadd.f32 %v584, %v1209
        %v1211 = vpop.f32.mrb[0].mxu0
        %v1212 = vadd.f32 %v588, %v1211
        %1213 = vdwg.mxu0
        %v1214 = vmax.f32 %v1034, 0.0
        %v1215 = vmax.f32 %v1036, 0.0
        %v1216 = vmax.f32 %v1077, 0.0
        %v1217 = vmax.f32 %v1079, 0.0
        %v1218 = vmax.f32 %v1120, 0.0
        %v1219 = vmax.f32 %v1122, 0.0
        %v1220 = vmax.f32 %v1163, 0.0
        %v1221 = vmax.f32 %v1165, 0.0
        %v1222 = vmax.f32 %v1206, 0.0
        %v1223 = vmax.f32 %v1208, 0.0
        %v1224 = vmax.f32 %v1038, 0.0
        %v1225 = vmax.f32 %v1040, 0.0
        %v1226 = vmax.f32 %v1081, 0.0
        %v1227 = vmax.f32 %v1083, 0.0
        %v1228 = vmax.f32 %v1124, 0.0
        %v1229 = vmax.f32 %v1126, 0.0
        %v1230 = vmax.f32 %v1167, 0.0
        %v1231 = vmax.f32 %v1169, 0.0
        %v1232 = vmax.f32 %v1210, 0.0
        %v1233 = vmax.f32 %v1212, 0.0
        %v1234 = vpack.c.bf16 %v1224, %v1214
        %v1235 = vpack.c.bf16 %v1225, %v1215
        %v1236 = vpack.c.bf16 %v1226, %v1216
        %v1237 = vpack.c.bf16 %v1227, %v1217
        %v1238 = vpack.c.bf16 %v1228, %v1218
        %v1239 = vpack.c.bf16 %v1229, %v1219
        %v1240 = vpack.c.bf16 %v1230, %v1220
        %v1241 = vpack.c.bf16 %v1231, %v1221
        %v1242 = vpack.c.bf16 %v1232, %v1222
        %v1243 = vpack.c.bf16 %v1233, %v1223
        %v1244 = vld [vmem:[#allocation8] sm:$0xff]
        %v1245 = vld [vmem:[#allocation8 + $0x8] sm:$0xff]
        %v1246 = vld [vmem:[#allocation8 + $0x10] sm:$0xff]
        %v1247 = vld [vmem:[#allocation8 + $0x18] sm:$0xff]
        %v1248 = vld [vmem:[#allocation8 + $0x20] sm:$0xff]
        %v1249 = vld [vmem:[#allocation8 + $0x28] sm:$0xff]
        %v1250 = vld [vmem:[#allocation8 + $0x30] sm:$0xff]
        %v1251 = vld [vmem:[#allocation8 + $0x38] sm:$0xff]
        %v1252 = vld [vmem:[#allocation8 + $0x40] sm:$0xff]
        %v1253 = vld [vmem:[#allocation8 + $0x48] sm:$0xff]
        %v1254 = vld [vmem:[#allocation8 + $0x50] sm:$0xff]
        %v1255 = vld [vmem:[#allocation8 + $0x58] sm:$0xff]
        %v1256 = vld [vmem:[#allocation8 + $0x60] sm:$0xff]
        %v1257 = vld [vmem:[#allocation8 + $0x68] sm:$0xff]
        %v1258 = vld [vmem:[#allocation8 + $0x70] sm:$0xff]
        %v1259 = vld [vmem:[#allocation8 + $0x78] sm:$0xff]
        %v1260 = vld [vmem:[#allocation8 + $0x80] sm:$0xff]
        %v1261 = vld [vmem:[#allocation8 + $0x88] sm:$0xff]
        %v1262 = vld [vmem:[#allocation8 + $0x90] sm:$0xff]
        %v1263 = vld [vmem:[#allocation8 + $0x98] sm:$0xff]
        %v1264 = vld [vmem:[#allocation8 + $0xa0] sm:$0xff]
        %v1265 = vld [vmem:[#allocation8 + $0xa8] sm:$0xff]
        %v1266 = vld [vmem:[#allocation8 + $0xb0] sm:$0xff]
        %v1267 = vld [vmem:[#allocation8 + $0xb8] sm:$0xff]
        %v1268 = vld [vmem:[#allocation8 + $0xc0] sm:$0xff]
        %v1269 = vld [vmem:[#allocation8 + $0xc8] sm:$0xff]
        %v1270 = vld [vmem:[#allocation8 + $0xd0] sm:$0xff]
        %v1271 = vld [vmem:[#allocation8 + $0xd8] sm:$0xff]
        %v1272 = vld [vmem:[#allocation8 + $0xe0] sm:$0xff]
        %v1273 = vld [vmem:[#allocation8 + $0xe8] sm:$0xff]
        %v1274 = vld [vmem:[#allocation8 + $0xf0] sm:$0xff]
        %v1275 = vld [vmem:[#allocation8 + $0xf8] sm:$0xff]
        %v1276 = vld [vmem:[#allocation8 + $0x100] sm:$0xff]
        %v1277 = vld [vmem:[#allocation8 + $0x108] sm:$0xff]
        %v1278 = vld [vmem:[#allocation8 + $0x110] sm:$0xff]
        %v1279 = vld [vmem:[#allocation8 + $0x118] sm:$0xff]
        %v1280 = vld [vmem:[#allocation8 + $0x120] sm:$0xff]
        %v1281 = vld [vmem:[#allocation8 + $0x128] sm:$0xff]
        %v1282 = vld [vmem:[#allocation8 + $0x130] sm:$0xff]
        %v1283 = vld [vmem:[#allocation8 + $0x138] sm:$0xff]
        %v1284 = vld [vmem:[#allocation8 + $0x140] sm:$0xff]
        %v1285 = vld [vmem:[#allocation8 + $0x148] sm:$0xff]
        %v1286 = vld [vmem:[#allocation8 + $0x150] sm:$0xff]
        %v1287 = vld [vmem:[#allocation8 + $0x158] sm:$0xff]
        %v1288 = vld [vmem:[#allocation8 + $0x160] sm:$0xff]
        %v1289 = vld [vmem:[#allocation8 + $0x168] sm:$0xff]
        %v1290 = vld [vmem:[#allocation8 + $0x170] sm:$0xff]
        %v1291 = vld [vmem:[#allocation8 + $0x178] sm:$0xff]
        %v1292 = vld [vmem:[#allocation8 + $0x180] sm:$0xff]
        %v1293 = vld [vmem:[#allocation8 + $0x188] sm:$0xff]
        %v1294 = vld [vmem:[#allocation8 + $0x190] sm:$0xff]
        %v1295 = vld [vmem:[#allocation8 + $0x198] sm:$0xff]
        %v1296 = vld [vmem:[#allocation8 + $0x1a0] sm:$0xff]
        %v1297 = vld [vmem:[#allocation8 + $0x1a8] sm:$0xff]
        %v1298 = vld [vmem:[#allocation8 + $0x1b0] sm:$0xff]
        %v1299 = vld [vmem:[#allocation8 + $0x1b8] sm:$0xff]
        %v1300 = vld [vmem:[#allocation8 + $0x1c0] sm:$0xff]
        %v1301 = vld [vmem:[#allocation8 + $0x1c8] sm:$0xff]
        %v1302 = vld [vmem:[#allocation8 + $0x1d0] sm:$0xff]
        %v1303 = vld [vmem:[#allocation8 + $0x1d8] sm:$0xff]
        %v1304 = vld [vmem:[#allocation8 + $0x1e0] sm:$0xff]
        %v1305 = vld [vmem:[#allocation8 + $0x1e8] sm:$0xff]
        %v1306 = vld [vmem:[#allocation8 + $0x1f0] sm:$0xff]
        %v1307 = vld [vmem:[#allocation8 + $0x1f8] sm:$0xff]
        %v1308 = vld [vmem:[#allocation8 + $0x200] sm:$0xff]
        %v1309 = vld [vmem:[#allocation8 + $0x208] sm:$0xff]
        %v1310 = vld [vmem:[#allocation8 + $0x210] sm:$0xff]
        %v1311 = vld [vmem:[#allocation8 + $0x218] sm:$0xff]
        %v1312 = vld [vmem:[#allocation8 + $0x220] sm:$0xff]
        %v1313 = vld [vmem:[#allocation8 + $0x228] sm:$0xff]
        %v1314 = vld [vmem:[#allocation8 + $0x230] sm:$0xff]
        %v1315 = vld [vmem:[#allocation8 + $0x238] sm:$0xff]
        %v1316 = vld [vmem:[#allocation8 + $0x240] sm:$0xff]
        %v1317 = vld [vmem:[#allocation8 + $0x248] sm:$0xff]
        %v1318 = vld [vmem:[#allocation8 + $0x250] sm:$0xff]
        %v1319 = vld [vmem:[#allocation8 + $0x258] sm:$0xff]
        %v1320 = vld [vmem:[#allocation8 + $0x260] sm:$0xff]
        %v1321 = vld [vmem:[#allocation8 + $0x268] sm:$0xff]
        %v1322 = vld [vmem:[#allocation8 + $0x270] sm:$0xff]
        %v1323 = vld [vmem:[#allocation8 + $0x278] sm:$0xff]
        %v1324 = vld [vmem:[#allocation8 + $0x280] sm:$0xff]
        %v1325 = vld [vmem:[#allocation8 + $0x288] sm:$0xff]
        %v1326 = vld [vmem:[#allocation8 + $0x290] sm:$0xff]
        %v1327 = vld [vmem:[#allocation8 + $0x298] sm:$0xff]
        %v1328 = vld [vmem:[#allocation8 + $0x2a0] sm:$0xff]
        %v1329 = vld [vmem:[#allocation8 + $0x2a8] sm:$0xff]
        %v1330 = vld [vmem:[#allocation8 + $0x2b0] sm:$0xff]
        %v1331 = vld [vmem:[#allocation8 + $0x2b8] sm:$0xff]
        %v1332 = vld [vmem:[#allocation8 + $0x2c0] sm:$0xff]
        %v1333 = vld [vmem:[#allocation8 + $0x2c8] sm:$0xff]
        %v1334 = vld [vmem:[#allocation8 + $0x2d0] sm:$0xff]
        %v1335 = vld [vmem:[#allocation8 + $0x2d8] sm:$0xff]
        %v1336 = vld [vmem:[#allocation8 + $0x2e0] sm:$0xff]
        %v1337 = vld [vmem:[#allocation8 + $0x2e8] sm:$0xff]
        %v1338 = vld [vmem:[#allocation8 + $0x2f0] sm:$0xff]
        %v1339 = vld [vmem:[#allocation8 + $0x2f8] sm:$0xff]
        %v1340 = vld [vmem:[#allocation8 + $0x300] sm:$0xff]
        %v1341 = vld [vmem:[#allocation8 + $0x308] sm:$0xff]
        %v1342 = vld [vmem:[#allocation8 + $0x310] sm:$0xff]
        %v1343 = vld [vmem:[#allocation8 + $0x318] sm:$0xff]
        %v1344 = vld [vmem:[#allocation8 + $0x320] sm:$0xff]
        %v1345 = vld [vmem:[#allocation8 + $0x328] sm:$0xff]
        %v1346 = vld [vmem:[#allocation8 + $0x330] sm:$0xff]
        %v1347 = vld [vmem:[#allocation8 + $0x338] sm:$0xff]
        %v1348 = vld [vmem:[#allocation8 + $0x340] sm:$0xff]
        %v1349 = vld [vmem:[#allocation8 + $0x348] sm:$0xff]
        %v1350 = vld [vmem:[#allocation8 + $0x350] sm:$0xff]
        %v1351 = vld [vmem:[#allocation8 + $0x358] sm:$0xff]
        %v1352 = vld [vmem:[#allocation8 + $0x360] sm:$0xff]
        %v1353 = vld [vmem:[#allocation8 + $0x368] sm:$0xff]
        %v1354 = vld [vmem:[#allocation8 + $0x370] sm:$0xff]
        %v1355 = vld [vmem:[#allocation8 + $0x378] sm:$0xff]
        %v1356 = vld [vmem:[#allocation8 + $0x380] sm:$0xff]
        %v1357 = vld [vmem:[#allocation8 + $0x388] sm:$0xff]
        %v1358 = vld [vmem:[#allocation8 + $0x390] sm:$0xff]
        %v1359 = vld [vmem:[#allocation8 + $0x398] sm:$0xff]
        %v1360 = vld [vmem:[#allocation8 + $0x3a0] sm:$0xff]
        %v1361 = vld [vmem:[#allocation8 + $0x3a8] sm:$0xff]
        %v1362 = vld [vmem:[#allocation8 + $0x3b0] sm:$0xff]
        %v1363 = vld [vmem:[#allocation8 + $0x3b8] sm:$0xff]
        %v1364 = vld [vmem:[#allocation8 + $0x3c0] sm:$0xff]
        %v1365 = vld [vmem:[#allocation8 + $0x3c8] sm:$0xff]
        %v1366 = vld [vmem:[#allocation8 + $0x3d0] sm:$0xff]
        %v1367 = vld [vmem:[#allocation8 + $0x3d8] sm:$0xff]
        %v1368 = vld [vmem:[#allocation8 + $0x3e0] sm:$0xff]
        %v1369 = vld [vmem:[#allocation8 + $0x3e8] sm:$0xff]
        %v1370 = vld [vmem:[#allocation8 + $0x3f0] sm:$0xff]
        %v1371 = vld [vmem:[#allocation8 + $0x3f8] sm:$0xff]
        %v1372 = vld [vmem:[#allocation8 + $0x400] sm:$0xff]
        %v1373 = vld [vmem:[#allocation8 + $0x408] sm:$0xff]
        %v1374 = vld [vmem:[#allocation8 + $0x410] sm:$0xff]
        %v1375 = vld [vmem:[#allocation8 + $0x418] sm:$0xff]
        %v1376 = vld [vmem:[#allocation8 + $0x420] sm:$0xff]
        %v1377 = vld [vmem:[#allocation8 + $0x428] sm:$0xff]
        %v1378 = vld [vmem:[#allocation8 + $0x430] sm:$0xff]
        %v1379 = vld [vmem:[#allocation8 + $0x438] sm:$0xff]
        %v1380 = vld [vmem:[#allocation8 + $0x440] sm:$0xff]
        %v1381 = vld [vmem:[#allocation8 + $0x448] sm:$0xff]
        %v1382 = vld [vmem:[#allocation8 + $0x450] sm:$0xff]
        %v1383 = vld [vmem:[#allocation8 + $0x458] sm:$0xff]
        %v1384 = vld [vmem:[#allocation8 + $0x460] sm:$0xff]
        %v1385 = vld [vmem:[#allocation8 + $0x468] sm:$0xff]
        %v1386 = vld [vmem:[#allocation8 + $0x470] sm:$0xff]
        %v1387 = vld [vmem:[#allocation8 + $0x478] sm:$0xff]
        %v1388 = vld [vmem:[#allocation8 + $0x480] sm:$0xff]
        %v1389 = vld [vmem:[#allocation8 + $0x488] sm:$0xff]
        %v1390 = vld [vmem:[#allocation8 + $0x490] sm:$0xff]
        %v1391 = vld [vmem:[#allocation8 + $0x498] sm:$0xff]
        %v1392 = vld [vmem:[#allocation8 + $0x4a0] sm:$0xff]
        %v1393 = vld [vmem:[#allocation8 + $0x4a8] sm:$0xff]
        %v1394 = vld [vmem:[#allocation8 + $0x4b0] sm:$0xff]
        %v1395 = vld [vmem:[#allocation8 + $0x4b8] sm:$0xff]
        %v1396 = vld [vmem:[#allocation8 + $0x4c0] sm:$0xff]
        %v1397 = vld [vmem:[#allocation8 + $0x4c8] sm:$0xff]
        %v1398 = vld [vmem:[#allocation8 + $0x4d0] sm:$0xff]
        %v1399 = vld [vmem:[#allocation8 + $0x4d8] sm:$0xff]
        %v1400 = vld [vmem:[#allocation8 + $0x4e0] sm:$0xff]
        %v1401 = vld [vmem:[#allocation8 + $0x4e8] sm:$0xff]
        %v1402 = vld [vmem:[#allocation8 + $0x4f0] sm:$0xff]
        %v1403 = vld [vmem:[#allocation8 + $0x4f8] sm:$0xff]
        %v1404 = vld [vmem:[#allocation8 + $0x500] sm:$0xff]
        %v1405 = vld [vmem:[#allocation8 + $0x508] sm:$0xff]
        %v1406 = vld [vmem:[#allocation8 + $0x510] sm:$0xff]
        %v1407 = vld [vmem:[#allocation8 + $0x518] sm:$0xff]
        %v1408 = vld [vmem:[#allocation8 + $0x520] sm:$0xff]
        %v1409 = vld [vmem:[#allocation8 + $0x528] sm:$0xff]
        %v1410 = vld [vmem:[#allocation8 + $0x530] sm:$0xff]
        %v1411 = vld [vmem:[#allocation8 + $0x538] sm:$0xff]
        %v1412 = vld [vmem:[#allocation8 + $0x540] sm:$0xff]
        %v1413 = vld [vmem:[#allocation8 + $0x548] sm:$0xff]
        %v1414 = vld [vmem:[#allocation8 + $0x550] sm:$0xff]
        %v1415 = vld [vmem:[#allocation8 + $0x558] sm:$0xff]
        %v1416 = vld [vmem:[#allocation8 + $0x560] sm:$0xff]
        %v1417 = vld [vmem:[#allocation8 + $0x568] sm:$0xff]
        %v1418 = vld [vmem:[#allocation8 + $0x570] sm:$0xff]
        %v1419 = vld [vmem:[#allocation8 + $0x578] sm:$0xff]
        %v1420 = vld [vmem:[#allocation8 + $0x580] sm:$0xff]
        %v1421 = vld [vmem:[#allocation8 + $0x588] sm:$0xff]
        %v1422 = vld [vmem:[#allocation8 + $0x590] sm:$0xff]
        %v1423 = vld [vmem:[#allocation8 + $0x598] sm:$0xff]
        %v1424 = vld [vmem:[#allocation8 + $0x5a0] sm:$0xff]
        %v1425 = vld [vmem:[#allocation8 + $0x5a8] sm:$0xff]
        %v1426 = vld [vmem:[#allocation8 + $0x5b0] sm:$0xff]
        %v1427 = vld [vmem:[#allocation8 + $0x5b8] sm:$0xff]
        %v1428 = vld [vmem:[#allocation8 + $0x5c0] sm:$0xff]
        %v1429 = vld [vmem:[#allocation8 + $0x5c8] sm:$0xff]
        %v1430 = vld [vmem:[#allocation8 + $0x5d0] sm:$0xff]
        %v1431 = vld [vmem:[#allocation8 + $0x5d8] sm:$0xff]
        %v1432 = vld [vmem:[#allocation8 + $0x5e0] sm:$0xff]
        %v1433 = vld [vmem:[#allocation8 + $0x5e8] sm:$0xff]
        %v1434 = vld [vmem:[#allocation8 + $0x5f0] sm:$0xff]
        %v1435 = vld [vmem:[#allocation8 + $0x5f8] sm:$0xff]
        %v1436 = vld [vmem:[#allocation8 + $0x600] sm:$0xff]
        %v1437 = vld [vmem:[#allocation8 + $0x608] sm:$0xff]
        %v1438 = vld [vmem:[#allocation8 + $0x610] sm:$0xff]
        %v1439 = vld [vmem:[#allocation8 + $0x618] sm:$0xff]
        %v1440 = vld [vmem:[#allocation8 + $0x620] sm:$0xff]
        %v1441 = vld [vmem:[#allocation8 + $0x628] sm:$0xff]
        %v1442 = vld [vmem:[#allocation8 + $0x630] sm:$0xff]
        %v1443 = vld [vmem:[#allocation8 + $0x638] sm:$0xff]
        %v1444 = vld [vmem:[#allocation8 + $0x640] sm:$0xff]
        %v1445 = vld [vmem:[#allocation8 + $0x648] sm:$0xff]
        %v1446 = vld [vmem:[#allocation8 + $0x650] sm:$0xff]
        %v1447 = vld [vmem:[#allocation8 + $0x658] sm:$0xff]
        %v1448 = vld [vmem:[#allocation8 + $0x660] sm:$0xff]
        %v1449 = vld [vmem:[#allocation8 + $0x668] sm:$0xff]
        %v1450 = vld [vmem:[#allocation8 + $0x670] sm:$0xff]
        %v1451 = vld [vmem:[#allocation8 + $0x678] sm:$0xff]
        %v1452 = vld [vmem:[#allocation8 + $0x680] sm:$0xff]
        %v1453 = vld [vmem:[#allocation8 + $0x688] sm:$0xff]
        %v1454 = vld [vmem:[#allocation8 + $0x690] sm:$0xff]
        %v1455 = vld [vmem:[#allocation8 + $0x698] sm:$0xff]
        %v1456 = vld [vmem:[#allocation8 + $0x6a0] sm:$0xff]
        %v1457 = vld [vmem:[#allocation8 + $0x6a8] sm:$0xff]
        %v1458 = vld [vmem:[#allocation8 + $0x6b0] sm:$0xff]
        %v1459 = vld [vmem:[#allocation8 + $0x6b8] sm:$0xff]
        %v1460 = vld [vmem:[#allocation8 + $0x6c0] sm:$0xff]
        %v1461 = vld [vmem:[#allocation8 + $0x6c8] sm:$0xff]
        %v1462 = vld [vmem:[#allocation8 + $0x6d0] sm:$0xff]
        %v1463 = vld [vmem:[#allocation8 + $0x6d8] sm:$0xff]
        %v1464 = vld [vmem:[#allocation8 + $0x6e0] sm:$0xff]
        %v1465 = vld [vmem:[#allocation8 + $0x6e8] sm:$0xff]
        %v1466 = vld [vmem:[#allocation8 + $0x6f0] sm:$0xff]
        %v1467 = vld [vmem:[#allocation8 + $0x6f8] sm:$0xff]
        %v1468 = vld [vmem:[#allocation8 + $0x700] sm:$0xff]
        %v1469 = vld [vmem:[#allocation8 + $0x708] sm:$0xff]
        %v1470 = vld [vmem:[#allocation8 + $0x710] sm:$0xff]
        %v1471 = vld [vmem:[#allocation8 + $0x718] sm:$0xff]
        %v1472 = vld [vmem:[#allocation8 + $0x720] sm:$0xff]
        %v1473 = vld [vmem:[#allocation8 + $0x728] sm:$0xff]
        %v1474 = vld [vmem:[#allocation8 + $0x730] sm:$0xff]
        %v1475 = vld [vmem:[#allocation8 + $0x738] sm:$0xff]
        %v1476 = vld [vmem:[#allocation8 + $0x740] sm:$0xff]
        %v1477 = vld [vmem:[#allocation8 + $0x748] sm:$0xff]
        %v1478 = vld [vmem:[#allocation8 + $0x750] sm:$0xff]
        %v1479 = vld [vmem:[#allocation8 + $0x758] sm:$0xff]
        %v1480 = vld [vmem:[#allocation8 + $0x760] sm:$0xff]
        %v1481 = vld [vmem:[#allocation8 + $0x768] sm:$0xff]
        %v1482 = vld [vmem:[#allocation8 + $0x770] sm:$0xff]
        %v1483 = vld [vmem:[#allocation8 + $0x778] sm:$0xff]
        %v1484 = vld [vmem:[#allocation8 + $0x780] sm:$0xff]
        %v1485 = vld [vmem:[#allocation8 + $0x788] sm:$0xff]
        %v1486 = vld [vmem:[#allocation8 + $0x790] sm:$0xff]
        %v1487 = vld [vmem:[#allocation8 + $0x798] sm:$0xff]
        %v1488 = vld [vmem:[#allocation8 + $0x7a0] sm:$0xff]
        %v1489 = vld [vmem:[#allocation8 + $0x7a8] sm:$0xff]
        %v1490 = vld [vmem:[#allocation8 + $0x7b0] sm:$0xff]
        %v1491 = vld [vmem:[#allocation8 + $0x7b8] sm:$0xff]
        %v1492 = vld [vmem:[#allocation8 + $0x7c0] sm:$0xff]
        %v1493 = vld [vmem:[#allocation8 + $0x7c8] sm:$0xff]
        %v1494 = vld [vmem:[#allocation8 + $0x7d0] sm:$0xff]
        %v1495 = vld [vmem:[#allocation8 + $0x7d8] sm:$0xff]
        %v1496 = vld [vmem:[#allocation8 + $0x7e0] sm:$0xff]
        %v1497 = vld [vmem:[#allocation8 + $0x7e8] sm:$0xff]
        %v1498 = vld [vmem:[#allocation8 + $0x7f0] sm:$0xff]
        %v1499 = vld [vmem:[#allocation8 + $0x7f8] sm:$0xff]
        %v1500 = vld [vmem:[#allocation8 + $0x800] sm:$0xff]
        %v1501 = vld [vmem:[#allocation8 + $0x808] sm:$0xff]
        %v1502 = vld [vmem:[#allocation8 + $0x810] sm:$0xff]
        %v1503 = vld [vmem:[#allocation8 + $0x818] sm:$0xff]
        %v1504 = vld [vmem:[#allocation8 + $0x820] sm:$0xff]
        %v1505 = vld [vmem:[#allocation8 + $0x828] sm:$0xff]
        %v1506 = vld [vmem:[#allocation8 + $0x830] sm:$0xff]
        %v1507 = vld [vmem:[#allocation8 + $0x838] sm:$0xff]
        %v1508 = vld [vmem:[#allocation8 + $0x840] sm:$0xff]
        %v1509 = vld [vmem:[#allocation8 + $0x848] sm:$0xff]
        %v1510 = vld [vmem:[#allocation8 + $0x850] sm:$0xff]
        %v1511 = vld [vmem:[#allocation8 + $0x858] sm:$0xff]
        %v1512 = vld [vmem:[#allocation8 + $0x860] sm:$0xff]
        %v1513 = vld [vmem:[#allocation8 + $0x868] sm:$0xff]
        %v1514 = vld [vmem:[#allocation8 + $0x870] sm:$0xff]
        %v1515 = vld [vmem:[#allocation8 + $0x878] sm:$0xff]
        %v1516 = vld [vmem:[#allocation8 + $0x880] sm:$0xff]
        %v1517 = vld [vmem:[#allocation8 + $0x888] sm:$0xff]
        %v1518 = vld [vmem:[#allocation8 + $0x890] sm:$0xff]
        %v1519 = vld [vmem:[#allocation8 + $0x898] sm:$0xff]
        %v1520 = vld [vmem:[#allocation8 + $0x8a0] sm:$0xff]
        %v1521 = vld [vmem:[#allocation8 + $0x8a8] sm:$0xff]
        %v1522 = vld [vmem:[#allocation8 + $0x8b0] sm:$0xff]
        %v1523 = vld [vmem:[#allocation8 + $0x8b8] sm:$0xff]
        %v1524 = vld [vmem:[#allocation8 + $0x8c0] sm:$0xff]
        %v1525 = vld [vmem:[#allocation8 + $0x8c8] sm:$0xff]
        %v1526 = vld [vmem:[#allocation8 + $0x8d0] sm:$0xff]
        %v1527 = vld [vmem:[#allocation8 + $0x8d8] sm:$0xff]
        %v1528 = vld [vmem:[#allocation8 + $0x8e0] sm:$0xff]
        %v1529 = vld [vmem:[#allocation8 + $0x8e8] sm:$0xff]
        %v1530 = vld [vmem:[#allocation8 + $0x8f0] sm:$0xff]
        %v1531 = vld [vmem:[#allocation8 + $0x8f8] sm:$0xff]
        %v1532 = vld [vmem:[#allocation8 + $0x900] sm:$0xff]
        %v1533 = vld [vmem:[#allocation8 + $0x908] sm:$0xff]
        %v1534 = vld [vmem:[#allocation8 + $0x910] sm:$0xff]
        %v1535 = vld [vmem:[#allocation8 + $0x918] sm:$0xff]
        %v1536 = vld [vmem:[#allocation8 + $0x920] sm:$0xff]
        %v1537 = vld [vmem:[#allocation8 + $0x928] sm:$0xff]
        %v1538 = vld [vmem:[#allocation8 + $0x930] sm:$0xff]
        %v1539 = vld [vmem:[#allocation8 + $0x938] sm:$0xff]
        %v1540 = vld [vmem:[#allocation8 + $0x940] sm:$0xff]
        %v1541 = vld [vmem:[#allocation8 + $0x948] sm:$0xff]
        %v1542 = vld [vmem:[#allocation8 + $0x950] sm:$0xff]
        %v1543 = vld [vmem:[#allocation8 + $0x958] sm:$0xff]
        %v1544 = vld [vmem:[#allocation8 + $0x960] sm:$0xff]
        %v1545 = vld [vmem:[#allocation8 + $0x968] sm:$0xff]
        %v1546 = vld [vmem:[#allocation8 + $0x970] sm:$0xff]
        %v1547 = vld [vmem:[#allocation8 + $0x978] sm:$0xff]
        %v1548 = vld [vmem:[#allocation8 + $0x980] sm:$0xff]
        %v1549 = vld [vmem:[#allocation8 + $0x988] sm:$0xff]
        %v1550 = vld [vmem:[#allocation8 + $0x990] sm:$0xff]
        %v1551 = vld [vmem:[#allocation8 + $0x998] sm:$0xff]
        %v1552 = vld [vmem:[#allocation8 + $0x9a0] sm:$0xff]
        %v1553 = vld [vmem:[#allocation8 + $0x9a8] sm:$0xff]
        %v1554 = vld [vmem:[#allocation8 + $0x9b0] sm:$0xff]
        %v1555 = vld [vmem:[#allocation8 + $0x9b8] sm:$0xff]
        %v1556 = vld [vmem:[#allocation8 + $0x9c0] sm:$0xff]
        %v1557 = vld [vmem:[#allocation8 + $0x9c8] sm:$0xff]
        %v1558 = vld [vmem:[#allocation8 + $0x9d0] sm:$0xff]
        %v1559 = vld [vmem:[#allocation8 + $0x9d8] sm:$0xff]
        %v1560 = vld [vmem:[#allocation8 + $0x9e0] sm:$0xff]
        %v1561 = vld [vmem:[#allocation8 + $0x9e8] sm:$0xff]
        %v1562 = vld [vmem:[#allocation8 + $0x9f0] sm:$0xff]
        %v1563 = vld [vmem:[#allocation8 + $0x9f8] sm:$0xff]
        %v1564 = vld [vmem:[#allocation10] sm:$0xf]
        %v1566 = vlaneseq
        %v1567 = vshrl.u32 %v1566, 7
        %v1568 = vsub.s32 0, %v1567
        %v1569 = vrot.slane %v1564, %v1568
        %v1570 = vlaneseq
        %v1571 = vshrl.u32 %v1570, 7
        %v1572 = vsub.s32 1, %v1571
        %v1573 = vrot.slane %v1564, %v1572
        %v1574 = vlaneseq
        %v1575 = vshrl.u32 %v1574, 7
        %v1576 = vsub.s32 2, %v1575
        %v1577 = vrot.slane %v1564, %v1576
        %v1578 = vlaneseq
        %v1579 = vshrl.u32 %v1578, 7
        %v1580 = vsub.s32 3, %v1579
        %v1581 = vrot.slane %v1564, %v1580
        %v1906 = vunpack.c.l.b16 %v1244
        %v1907 = vunpack.c.h.b16 %v1244
        %v1908 = vunpack.c.l.b16 %v1245
        %v1909 = vunpack.c.h.b16 %v1245
        %v1910 = vunpack.c.l.b16 %v1246
        %v1911 = vunpack.c.h.b16 %v1246
        %v1912 = vunpack.c.l.b16 %v1247
        %v1913 = vunpack.c.h.b16 %v1247
        %v1914 = vunpack.c.l.b16 %v1248
        %v1915 = vunpack.c.h.b16 %v1248
        %v1916 = vunpack.c.l.b16 %v1249
        %v1917 = vunpack.c.h.b16 %v1249
        %v1918 = vunpack.c.l.b16 %v1250
        %v1919 = vunpack.c.h.b16 %v1250
        %v1920 = vunpack.c.l.b16 %v1251
        %v1921 = vunpack.c.h.b16 %v1251
        %v1922 = vunpack.c.l.b16 %v1252
        %v1923 = vunpack.c.h.b16 %v1252
        %v1924 = vunpack.c.l.b16 %v1253
        %v1925 = vunpack.c.h.b16 %v1253
        %v1926 = vunpack.c.l.b16 %v1254
        %v1927 = vunpack.c.h.b16 %v1254
        %v1928 = vunpack.c.l.b16 %v1255
        %v1929 = vunpack.c.h.b16 %v1255
        %v1930 = vunpack.c.l.b16 %v1256
        %v1931 = vunpack.c.h.b16 %v1256
        %v1932 = vunpack.c.l.b16 %v1257
        %v1933 = vunpack.c.h.b16 %v1257
        %v1934 = vunpack.c.l.b16 %v1258
        %v1935 = vunpack.c.h.b16 %v1258
        %v1936 = vunpack.c.l.b16 %v1259
        %v1937 = vunpack.c.h.b16 %v1259
        %v1938 = vunpack.c.l.b16 %v1260
        %v1939 = vunpack.c.h.b16 %v1260
        %v1940 = vunpack.c.l.b16 %v1261
        %v1941 = vunpack.c.h.b16 %v1261
        %v1942 = vunpack.c.l.b16 %v1262
        %v1943 = vunpack.c.h.b16 %v1262
        %v1944 = vunpack.c.l.b16 %v1263
        %v1945 = vunpack.c.h.b16 %v1263
        %v1946 = vunpack.c.l.b16 %v1264
        %v1947 = vunpack.c.h.b16 %v1264
        %v1948 = vunpack.c.l.b16 %v1265
        %v1949 = vunpack.c.h.b16 %v1265
        %v1950 = vunpack.c.l.b16 %v1266
        %v1951 = vunpack.c.h.b16 %v1266
        %v1952 = vunpack.c.l.b16 %v1267
        %v1953 = vunpack.c.h.b16 %v1267
        %v1954 = vunpack.c.l.b16 %v1268
        %v1955 = vunpack.c.h.b16 %v1268
        %v1956 = vunpack.c.l.b16 %v1269
        %v1957 = vunpack.c.h.b16 %v1269
        %v1958 = vunpack.c.l.b16 %v1270
        %v1959 = vunpack.c.h.b16 %v1270
        %v1960 = vunpack.c.l.b16 %v1271
        %v1961 = vunpack.c.h.b16 %v1271
        %v1962 = vunpack.c.l.b16 %v1272
        %v1963 = vunpack.c.h.b16 %v1272
        %v1964 = vunpack.c.l.b16 %v1273
        %v1965 = vunpack.c.h.b16 %v1273
        %v1966 = vunpack.c.l.b16 %v1274
        %v1967 = vunpack.c.h.b16 %v1274
        %v1968 = vunpack.c.l.b16 %v1275
        %v1969 = vunpack.c.h.b16 %v1275
        %v1970 = vunpack.c.l.b16 %v1276
        %v1971 = vunpack.c.h.b16 %v1276
        %v1972 = vunpack.c.l.b16 %v1277
        %v1973 = vunpack.c.h.b16 %v1277
        %v1974 = vunpack.c.l.b16 %v1278
        %v1975 = vunpack.c.h.b16 %v1278
        %v1976 = vunpack.c.l.b16 %v1279
        %v1977 = vunpack.c.h.b16 %v1279
        %v1978 = vunpack.c.l.b16 %v1280
        %v1979 = vunpack.c.h.b16 %v1280
        %v1980 = vunpack.c.l.b16 %v1281
        %v1981 = vunpack.c.h.b16 %v1281
        %v1982 = vunpack.c.l.b16 %v1282
        %v1983 = vunpack.c.h.b16 %v1282
        %v1984 = vunpack.c.l.b16 %v1283
        %v1985 = vunpack.c.h.b16 %v1283
        %v1986 = vunpack.c.l.b16 %v1284
        %v1987 = vunpack.c.h.b16 %v1284
        %v1988 = vunpack.c.l.b16 %v1285
        %v1989 = vunpack.c.h.b16 %v1285
        %v1990 = vunpack.c.l.b16 %v1286
        %v1991 = vunpack.c.h.b16 %v1286
        %v1992 = vunpack.c.l.b16 %v1287
        %v1993 = vunpack.c.h.b16 %v1287
        %v1994 = vunpack.c.l.b16 %v1288
        %v1995 = vunpack.c.h.b16 %v1288
        %v1996 = vunpack.c.l.b16 %v1289
        %v1997 = vunpack.c.h.b16 %v1289
        %v1998 = vunpack.c.l.b16 %v1290
        %v1999 = vunpack.c.h.b16 %v1290
        %v2000 = vunpack.c.l.b16 %v1291
        %v2001 = vunpack.c.h.b16 %v1291
        %v2002 = vunpack.c.l.b16 %v1292
        %v2003 = vunpack.c.h.b16 %v1292
        %v2004 = vunpack.c.l.b16 %v1293
        %v2005 = vunpack.c.h.b16 %v1293
        %v2006 = vunpack.c.l.b16 %v1294
        %v2007 = vunpack.c.h.b16 %v1294
        %v2008 = vunpack.c.l.b16 %v1295
        %v2009 = vunpack.c.h.b16 %v1295
        %v2010 = vunpack.c.l.b16 %v1296
        %v2011 = vunpack.c.h.b16 %v1296
        %v2012 = vunpack.c.l.b16 %v1297
        %v2013 = vunpack.c.h.b16 %v1297
        %v2014 = vunpack.c.l.b16 %v1298
        %v2015 = vunpack.c.h.b16 %v1298
        %v2016 = vunpack.c.l.b16 %v1299
        %v2017 = vunpack.c.h.b16 %v1299
        %v2018 = vunpack.c.l.b16 %v1300
        %v2019 = vunpack.c.h.b16 %v1300
        %v2020 = vunpack.c.l.b16 %v1301
        %v2021 = vunpack.c.h.b16 %v1301
        %v2022 = vunpack.c.l.b16 %v1302
        %v2023 = vunpack.c.h.b16 %v1302
        %v2024 = vunpack.c.l.b16 %v1303
        %v2025 = vunpack.c.h.b16 %v1303
        %v2026 = vunpack.c.l.b16 %v1304
        %v2027 = vunpack.c.h.b16 %v1304
        %v2028 = vunpack.c.l.b16 %v1305
        %v2029 = vunpack.c.h.b16 %v1305
        %v2030 = vunpack.c.l.b16 %v1306
        %v2031 = vunpack.c.h.b16 %v1306
        %v2032 = vunpack.c.l.b16 %v1307
        %v2033 = vunpack.c.h.b16 %v1307
        %v2034 = vunpack.c.l.b16 %v1308
        %v2035 = vunpack.c.h.b16 %v1308
        %v2036 = vunpack.c.l.b16 %v1309
        %v2037 = vunpack.c.h.b16 %v1309
        %v2038 = vunpack.c.l.b16 %v1310
        %v2039 = vunpack.c.h.b16 %v1310
        %v2040 = vunpack.c.l.b16 %v1311
        %v2041 = vunpack.c.h.b16 %v1311
        %v2042 = vunpack.c.l.b16 %v1312
        %v2043 = vunpack.c.h.b16 %v1312
        %v2044 = vunpack.c.l.b16 %v1313
        %v2045 = vunpack.c.h.b16 %v1313
        %v2046 = vunpack.c.l.b16 %v1314
        %v2047 = vunpack.c.h.b16 %v1314
        %v2048 = vunpack.c.l.b16 %v1315
        %v2049 = vunpack.c.h.b16 %v1315
        %v2050 = vunpack.c.l.b16 %v1316
        %v2051 = vunpack.c.h.b16 %v1316
        %v2052 = vunpack.c.l.b16 %v1317
        %v2053 = vunpack.c.h.b16 %v1317
        %v2054 = vunpack.c.l.b16 %v1318
        %v2055 = vunpack.c.h.b16 %v1318
        %v2056 = vunpack.c.l.b16 %v1319
        %v2057 = vunpack.c.h.b16 %v1319
        %v2058 = vunpack.c.l.b16 %v1320
        %v2059 = vunpack.c.h.b16 %v1320
        %v2060 = vunpack.c.l.b16 %v1321
        %v2061 = vunpack.c.h.b16 %v1321
        %v2062 = vunpack.c.l.b16 %v1322
        %v2063 = vunpack.c.h.b16 %v1322
        %v2064 = vunpack.c.l.b16 %v1323
        %v2065 = vunpack.c.h.b16 %v1323
        %v2066 = vunpack.c.l.b16 %v1324
        %v2067 = vunpack.c.h.b16 %v1324
        %v2068 = vunpack.c.l.b16 %v1325
        %v2069 = vunpack.c.h.b16 %v1325
        %v2070 = vunpack.c.l.b16 %v1326
        %v2071 = vunpack.c.h.b16 %v1326
        %v2072 = vunpack.c.l.b16 %v1327
        %v2073 = vunpack.c.h.b16 %v1327
        %v2074 = vunpack.c.l.b16 %v1328
        %v2075 = vunpack.c.h.b16 %v1328
        %v2076 = vunpack.c.l.b16 %v1329
        %v2077 = vunpack.c.h.b16 %v1329
        %v2078 = vunpack.c.l.b16 %v1330
        %v2079 = vunpack.c.h.b16 %v1330
        %v2080 = vunpack.c.l.b16 %v1331
        %v2081 = vunpack.c.h.b16 %v1331
        %v2082 = vunpack.c.l.b16 %v1332
        %v2083 = vunpack.c.h.b16 %v1332
        %v2084 = vunpack.c.l.b16 %v1333
        %v2085 = vunpack.c.h.b16 %v1333
        %v2086 = vunpack.c.l.b16 %v1334
        %v2087 = vunpack.c.h.b16 %v1334
        %v2088 = vunpack.c.l.b16 %v1335
        %v2089 = vunpack.c.h.b16 %v1335
        %v2090 = vunpack.c.l.b16 %v1336
        %v2091 = vunpack.c.h.b16 %v1336
        %v2092 = vunpack.c.l.b16 %v1337
        %v2093 = vunpack.c.h.b16 %v1337
        %v2094 = vunpack.c.l.b16 %v1338
        %v2095 = vunpack.c.h.b16 %v1338
        %v2096 = vunpack.c.l.b16 %v1339
        %v2097 = vunpack.c.h.b16 %v1339
        %v2098 = vunpack.c.l.b16 %v1340
        %v2099 = vunpack.c.h.b16 %v1340
        %v2100 = vunpack.c.l.b16 %v1341
        %v2101 = vunpack.c.h.b16 %v1341
        %v2102 = vunpack.c.l.b16 %v1342
        %v2103 = vunpack.c.h.b16 %v1342
        %v2104 = vunpack.c.l.b16 %v1343
        %v2105 = vunpack.c.h.b16 %v1343
        %v2106 = vunpack.c.l.b16 %v1344
        %v2107 = vunpack.c.h.b16 %v1344
        %v2108 = vunpack.c.l.b16 %v1345
        %v2109 = vunpack.c.h.b16 %v1345
        %v2110 = vunpack.c.l.b16 %v1346
        %v2111 = vunpack.c.h.b16 %v1346
        %v2112 = vunpack.c.l.b16 %v1347
        %v2113 = vunpack.c.h.b16 %v1347
        %v2114 = vunpack.c.l.b16 %v1348
        %v2115 = vunpack.c.h.b16 %v1348
        %v2116 = vunpack.c.l.b16 %v1349
        %v2117 = vunpack.c.h.b16 %v1349
        %v2118 = vunpack.c.l.b16 %v1350
        %v2119 = vunpack.c.h.b16 %v1350
        %v2120 = vunpack.c.l.b16 %v1351
        %v2121 = vunpack.c.h.b16 %v1351
        %v2122 = vunpack.c.l.b16 %v1352
        %v2123 = vunpack.c.h.b16 %v1352
        %v2124 = vunpack.c.l.b16 %v1353
        %v2125 = vunpack.c.h.b16 %v1353
        %v2126 = vunpack.c.l.b16 %v1354
        %v2127 = vunpack.c.h.b16 %v1354
        %v2128 = vunpack.c.l.b16 %v1355
        %v2129 = vunpack.c.h.b16 %v1355
        %v2130 = vunpack.c.l.b16 %v1356
        %v2131 = vunpack.c.h.b16 %v1356
        %v2132 = vunpack.c.l.b16 %v1357
        %v2133 = vunpack.c.h.b16 %v1357
        %v2134 = vunpack.c.l.b16 %v1358
        %v2135 = vunpack.c.h.b16 %v1358
        %v2136 = vunpack.c.l.b16 %v1359
        %v2137 = vunpack.c.h.b16 %v1359
        %v2138 = vunpack.c.l.b16 %v1360
        %v2139 = vunpack.c.h.b16 %v1360
        %v2140 = vunpack.c.l.b16 %v1361
        %v2141 = vunpack.c.h.b16 %v1361
        %v2142 = vunpack.c.l.b16 %v1362
        %v2143 = vunpack.c.h.b16 %v1362
        %v2144 = vunpack.c.l.b16 %v1363
        %v2145 = vunpack.c.h.b16 %v1363
        %v2146 = vunpack.c.l.b16 %v1364
        %v2147 = vunpack.c.h.b16 %v1364
        %v2148 = vunpack.c.l.b16 %v1365
        %v2149 = vunpack.c.h.b16 %v1365
        %v2150 = vunpack.c.l.b16 %v1366
        %v2151 = vunpack.c.h.b16 %v1366
        %v2152 = vunpack.c.l.b16 %v1367
        %v2153 = vunpack.c.h.b16 %v1367
        %v2154 = vunpack.c.l.b16 %v1368
        %v2155 = vunpack.c.h.b16 %v1368
        %v2156 = vunpack.c.l.b16 %v1369
        %v2157 = vunpack.c.h.b16 %v1369
        %v2158 = vunpack.c.l.b16 %v1370
        %v2159 = vunpack.c.h.b16 %v1370
        %v2160 = vunpack.c.l.b16 %v1371
        %v2161 = vunpack.c.h.b16 %v1371
        %v2162 = vunpack.c.l.b16 %v1372
        %v2163 = vunpack.c.h.b16 %v1372
        %v2164 = vunpack.c.l.b16 %v1373
        %v2165 = vunpack.c.h.b16 %v1373
        %v2166 = vunpack.c.l.b16 %v1374
        %v2167 = vunpack.c.h.b16 %v1374
        %v2168 = vunpack.c.l.b16 %v1375
        %v2169 = vunpack.c.h.b16 %v1375
        %v2170 = vunpack.c.l.b16 %v1376
        %v2171 = vunpack.c.h.b16 %v1376
        %v2172 = vunpack.c.l.b16 %v1377
        %v2173 = vunpack.c.h.b16 %v1377
        %v2174 = vunpack.c.l.b16 %v1378
        %v2175 = vunpack.c.h.b16 %v1378
        %v2176 = vunpack.c.l.b16 %v1379
        %v2177 = vunpack.c.h.b16 %v1379
        %v2178 = vunpack.c.l.b16 %v1380
        %v2179 = vunpack.c.h.b16 %v1380
        %v2180 = vunpack.c.l.b16 %v1381
        %v2181 = vunpack.c.h.b16 %v1381
        %v2182 = vunpack.c.l.b16 %v1382
        %v2183 = vunpack.c.h.b16 %v1382
        %v2184 = vunpack.c.l.b16 %v1383
        %v2185 = vunpack.c.h.b16 %v1383
        %v2186 = vunpack.c.l.b16 %v1384
        %v2187 = vunpack.c.h.b16 %v1384
        %v2188 = vunpack.c.l.b16 %v1385
        %v2189 = vunpack.c.h.b16 %v1385
        %v2190 = vunpack.c.l.b16 %v1386
        %v2191 = vunpack.c.h.b16 %v1386
        %v2192 = vunpack.c.l.b16 %v1387
        %v2193 = vunpack.c.h.b16 %v1387
        %v2194 = vunpack.c.l.b16 %v1388
        %v2195 = vunpack.c.h.b16 %v1388
        %v2196 = vunpack.c.l.b16 %v1389
        %v2197 = vunpack.c.h.b16 %v1389
        %v2198 = vunpack.c.l.b16 %v1390
        %v2199 = vunpack.c.h.b16 %v1390
        %v2200 = vunpack.c.l.b16 %v1391
        %v2201 = vunpack.c.h.b16 %v1391
        %v2202 = vunpack.c.l.b16 %v1392
        %v2203 = vunpack.c.h.b16 %v1392
        %v2204 = vunpack.c.l.b16 %v1393
        %v2205 = vunpack.c.h.b16 %v1393
        %v2206 = vunpack.c.l.b16 %v1394
        %v2207 = vunpack.c.h.b16 %v1394
        %v2208 = vunpack.c.l.b16 %v1395
        %v2209 = vunpack.c.h.b16 %v1395
        %v2210 = vunpack.c.l.b16 %v1396
        %v2211 = vunpack.c.h.b16 %v1396
        %v2212 = vunpack.c.l.b16 %v1397
        %v2213 = vunpack.c.h.b16 %v1397
        %v2214 = vunpack.c.l.b16 %v1398
        %v2215 = vunpack.c.h.b16 %v1398
        %v2216 = vunpack.c.l.b16 %v1399
        %v2217 = vunpack.c.h.b16 %v1399
        %v2218 = vunpack.c.l.b16 %v1400
        %v2219 = vunpack.c.h.b16 %v1400
        %v2220 = vunpack.c.l.b16 %v1401
        %v2221 = vunpack.c.h.b16 %v1401
        %v2222 = vunpack.c.l.b16 %v1402
        %v2223 = vunpack.c.h.b16 %v1402
        %v2224 = vunpack.c.l.b16 %v1403
        %v2225 = vunpack.c.h.b16 %v1403
        %v2226 = vunpack.c.l.b16 %v1404
        %v2227 = vunpack.c.h.b16 %v1404
        %v2228 = vunpack.c.l.b16 %v1405
        %v2229 = vunpack.c.h.b16 %v1405
        %v2230 = vunpack.c.l.b16 %v1406
        %v2231 = vunpack.c.h.b16 %v1406
        %v2232 = vunpack.c.l.b16 %v1407
        %v2233 = vunpack.c.h.b16 %v1407
        %v2234 = vunpack.c.l.b16 %v1408
        %v2235 = vunpack.c.h.b16 %v1408
        %v2236 = vunpack.c.l.b16 %v1409
        %v2237 = vunpack.c.h.b16 %v1409
        %v2238 = vunpack.c.l.b16 %v1410
        %v2239 = vunpack.c.h.b16 %v1410
        %v2240 = vunpack.c.l.b16 %v1411
        %v2241 = vunpack.c.h.b16 %v1411
        %v2242 = vunpack.c.l.b16 %v1412
        %v2243 = vunpack.c.h.b16 %v1412
        %v2244 = vunpack.c.l.b16 %v1413
        %v2245 = vunpack.c.h.b16 %v1413
        %v2246 = vunpack.c.l.b16 %v1414
        %v2247 = vunpack.c.h.b16 %v1414
        %v2248 = vunpack.c.l.b16 %v1415
        %v2249 = vunpack.c.h.b16 %v1415
        %v2250 = vunpack.c.l.b16 %v1416
        %v2251 = vunpack.c.h.b16 %v1416
        %v2252 = vunpack.c.l.b16 %v1417
        %v2253 = vunpack.c.h.b16 %v1417
        %v2254 = vunpack.c.l.b16 %v1418
        %v2255 = vunpack.c.h.b16 %v1418
        %v2256 = vunpack.c.l.b16 %v1419
        %v2257 = vunpack.c.h.b16 %v1419
        %v2258 = vunpack.c.l.b16 %v1420
        %v2259 = vunpack.c.h.b16 %v1420
        %v2260 = vunpack.c.l.b16 %v1421
        %v2261 = vunpack.c.h.b16 %v1421
        %v2262 = vunpack.c.l.b16 %v1422
        %v2263 = vunpack.c.h.b16 %v1422
        %v2264 = vunpack.c.l.b16 %v1423
        %v2265 = vunpack.c.h.b16 %v1423
        %v2266 = vunpack.c.l.b16 %v1424
        %v2267 = vunpack.c.h.b16 %v1424
        %v2268 = vunpack.c.l.b16 %v1425
        %v2269 = vunpack.c.h.b16 %v1425
        %v2270 = vunpack.c.l.b16 %v1426
        %v2271 = vunpack.c.h.b16 %v1426
        %v2272 = vunpack.c.l.b16 %v1427
        %v2273 = vunpack.c.h.b16 %v1427
        %v2274 = vunpack.c.l.b16 %v1428
        %v2275 = vunpack.c.h.b16 %v1428
        %v2276 = vunpack.c.l.b16 %v1429
        %v2277 = vunpack.c.h.b16 %v1429
        %v2278 = vunpack.c.l.b16 %v1430
        %v2279 = vunpack.c.h.b16 %v1430
        %v2280 = vunpack.c.l.b16 %v1431
        %v2281 = vunpack.c.h.b16 %v1431
        %v2282 = vunpack.c.l.b16 %v1432
        %v2283 = vunpack.c.h.b16 %v1432
        %v2284 = vunpack.c.l.b16 %v1433
        %v2285 = vunpack.c.h.b16 %v1433
        %v2286 = vunpack.c.l.b16 %v1434
        %v2287 = vunpack.c.h.b16 %v1434
        %v2288 = vunpack.c.l.b16 %v1435
        %v2289 = vunpack.c.h.b16 %v1435
        %v2290 = vunpack.c.l.b16 %v1436
        %v2291 = vunpack.c.h.b16 %v1436
        %v2292 = vunpack.c.l.b16 %v1437
        %v2293 = vunpack.c.h.b16 %v1437
        %v2294 = vunpack.c.l.b16 %v1438
        %v2295 = vunpack.c.h.b16 %v1438
        %v2296 = vunpack.c.l.b16 %v1439
        %v2297 = vunpack.c.h.b16 %v1439
        %v2298 = vunpack.c.l.b16 %v1440
        %v2299 = vunpack.c.h.b16 %v1440
        %v2300 = vunpack.c.l.b16 %v1441
        %v2301 = vunpack.c.h.b16 %v1441
        %v2302 = vunpack.c.l.b16 %v1442
        %v2303 = vunpack.c.h.b16 %v1442
        %v2304 = vunpack.c.l.b16 %v1443
        %v2305 = vunpack.c.h.b16 %v1443
        %v2306 = vunpack.c.l.b16 %v1444
        %v2307 = vunpack.c.h.b16 %v1444
        %v2308 = vunpack.c.l.b16 %v1445
        %v2309 = vunpack.c.h.b16 %v1445
        %v2310 = vunpack.c.l.b16 %v1446
        %v2311 = vunpack.c.h.b16 %v1446
        %v2312 = vunpack.c.l.b16 %v1447
        %v2313 = vunpack.c.h.b16 %v1447
        %v2314 = vunpack.c.l.b16 %v1448
        %v2315 = vunpack.c.h.b16 %v1448
        %v2316 = vunpack.c.l.b16 %v1449
        %v2317 = vunpack.c.h.b16 %v1449
        %v2318 = vunpack.c.l.b16 %v1450
        %v2319 = vunpack.c.h.b16 %v1450
        %v2320 = vunpack.c.l.b16 %v1451
        %v2321 = vunpack.c.h.b16 %v1451
        %v2322 = vunpack.c.l.b16 %v1452
        %v2323 = vunpack.c.h.b16 %v1452
        %v2324 = vunpack.c.l.b16 %v1453
        %v2325 = vunpack.c.h.b16 %v1453
        %v2326 = vunpack.c.l.b16 %v1454
        %v2327 = vunpack.c.h.b16 %v1454
        %v2328 = vunpack.c.l.b16 %v1455
        %v2329 = vunpack.c.h.b16 %v1455
        %v2330 = vunpack.c.l.b16 %v1456
        %v2331 = vunpack.c.h.b16 %v1456
        %v2332 = vunpack.c.l.b16 %v1457
        %v2333 = vunpack.c.h.b16 %v1457
        %v2334 = vunpack.c.l.b16 %v1458
        %v2335 = vunpack.c.h.b16 %v1458
        %v2336 = vunpack.c.l.b16 %v1459
        %v2337 = vunpack.c.h.b16 %v1459
        %v2338 = vunpack.c.l.b16 %v1460
        %v2339 = vunpack.c.h.b16 %v1460
        %v2340 = vunpack.c.l.b16 %v1461
        %v2341 = vunpack.c.h.b16 %v1461
        %v2342 = vunpack.c.l.b16 %v1462
        %v2343 = vunpack.c.h.b16 %v1462
        %v2344 = vunpack.c.l.b16 %v1463
        %v2345 = vunpack.c.h.b16 %v1463
        %v2346 = vunpack.c.l.b16 %v1464
        %v2347 = vunpack.c.h.b16 %v1464
        %v2348 = vunpack.c.l.b16 %v1465
        %v2349 = vunpack.c.h.b16 %v1465
        %v2350 = vunpack.c.l.b16 %v1466
        %v2351 = vunpack.c.h.b16 %v1466
        %v2352 = vunpack.c.l.b16 %v1467
        %v2353 = vunpack.c.h.b16 %v1467
        %v2354 = vunpack.c.l.b16 %v1468
        %v2355 = vunpack.c.h.b16 %v1468
        %v2356 = vunpack.c.l.b16 %v1469
        %v2357 = vunpack.c.h.b16 %v1469
        %v2358 = vunpack.c.l.b16 %v1470
        %v2359 = vunpack.c.h.b16 %v1470
        %v2360 = vunpack.c.l.b16 %v1471
        %v2361 = vunpack.c.h.b16 %v1471
        %v2362 = vunpack.c.l.b16 %v1472
        %v2363 = vunpack.c.h.b16 %v1472
        %v2364 = vunpack.c.l.b16 %v1473
        %v2365 = vunpack.c.h.b16 %v1473
        %v2366 = vunpack.c.l.b16 %v1474
        %v2367 = vunpack.c.h.b16 %v1474
        %v2368 = vunpack.c.l.b16 %v1475
        %v2369 = vunpack.c.h.b16 %v1475
        %v2370 = vunpack.c.l.b16 %v1476
        %v2371 = vunpack.c.h.b16 %v1476
        %v2372 = vunpack.c.l.b16 %v1477
        %v2373 = vunpack.c.h.b16 %v1477
        %v2374 = vunpack.c.l.b16 %v1478
        %v2375 = vunpack.c.h.b16 %v1478
        %v2376 = vunpack.c.l.b16 %v1479
        %v2377 = vunpack.c.h.b16 %v1479
        %v2378 = vunpack.c.l.b16 %v1480
        %v2379 = vunpack.c.h.b16 %v1480
        %v2380 = vunpack.c.l.b16 %v1481
        %v2381 = vunpack.c.h.b16 %v1481
        %v2382 = vunpack.c.l.b16 %v1482
        %v2383 = vunpack.c.h.b16 %v1482
        %v2384 = vunpack.c.l.b16 %v1483
        %v2385 = vunpack.c.h.b16 %v1483
        %v2386 = vunpack.c.l.b16 %v1484
        %v2387 = vunpack.c.h.b16 %v1484
        %v2388 = vunpack.c.l.b16 %v1485
        %v2389 = vunpack.c.h.b16 %v1485
        %v2390 = vunpack.c.l.b16 %v1486
        %v2391 = vunpack.c.h.b16 %v1486
        %v2392 = vunpack.c.l.b16 %v1487
        %v2393 = vunpack.c.h.b16 %v1487
        %v2394 = vunpack.c.l.b16 %v1488
        %v2395 = vunpack.c.h.b16 %v1488
        %v2396 = vunpack.c.l.b16 %v1489
        %v2397 = vunpack.c.h.b16 %v1489
        %v2398 = vunpack.c.l.b16 %v1490
        %v2399 = vunpack.c.h.b16 %v1490
        %v2400 = vunpack.c.l.b16 %v1491
        %v2401 = vunpack.c.h.b16 %v1491
        %v2402 = vunpack.c.l.b16 %v1492
        %v2403 = vunpack.c.h.b16 %v1492
        %v2404 = vunpack.c.l.b16 %v1493
        %v2405 = vunpack.c.h.b16 %v1493
        %v2406 = vunpack.c.l.b16 %v1494
        %v2407 = vunpack.c.h.b16 %v1494
        %v2408 = vunpack.c.l.b16 %v1495
        %v2409 = vunpack.c.h.b16 %v1495
        %v2410 = vunpack.c.l.b16 %v1496
        %v2411 = vunpack.c.h.b16 %v1496
        %v2412 = vunpack.c.l.b16 %v1497
        %v2413 = vunpack.c.h.b16 %v1497
        %v2414 = vunpack.c.l.b16 %v1498
        %v2415 = vunpack.c.h.b16 %v1498
        %v2416 = vunpack.c.l.b16 %v1499
        %v2417 = vunpack.c.h.b16 %v1499
        %v2418 = vunpack.c.l.b16 %v1500
        %v2419 = vunpack.c.h.b16 %v1500
        %v2420 = vunpack.c.l.b16 %v1501
        %v2421 = vunpack.c.h.b16 %v1501
        %v2422 = vunpack.c.l.b16 %v1502
        %v2423 = vunpack.c.h.b16 %v1502
        %v2424 = vunpack.c.l.b16 %v1503
        %v2425 = vunpack.c.h.b16 %v1503
        %v2426 = vunpack.c.l.b16 %v1504
        %v2427 = vunpack.c.h.b16 %v1504
        %v2428 = vunpack.c.l.b16 %v1505
        %v2429 = vunpack.c.h.b16 %v1505
        %v2430 = vunpack.c.l.b16 %v1506
        %v2431 = vunpack.c.h.b16 %v1506
        %v2432 = vunpack.c.l.b16 %v1507
        %v2433 = vunpack.c.h.b16 %v1507
        %v2434 = vunpack.c.l.b16 %v1508
        %v2435 = vunpack.c.h.b16 %v1508
        %v2436 = vunpack.c.l.b16 %v1509
        %v2437 = vunpack.c.h.b16 %v1509
        %v2438 = vunpack.c.l.b16 %v1510
        %v2439 = vunpack.c.h.b16 %v1510
        %v2440 = vunpack.c.l.b16 %v1511
        %v2441 = vunpack.c.h.b16 %v1511
        %v2442 = vunpack.c.l.b16 %v1512
        %v2443 = vunpack.c.h.b16 %v1512
        %v2444 = vunpack.c.l.b16 %v1513
        %v2445 = vunpack.c.h.b16 %v1513
        %v2446 = vunpack.c.l.b16 %v1514
        %v2447 = vunpack.c.h.b16 %v1514
        %v2448 = vunpack.c.l.b16 %v1515
        %v2449 = vunpack.c.h.b16 %v1515
        %v2450 = vunpack.c.l.b16 %v1516
        %v2451 = vunpack.c.h.b16 %v1516
        %v2452 = vunpack.c.l.b16 %v1517
        %v2453 = vunpack.c.h.b16 %v1517
        %v2454 = vunpack.c.l.b16 %v1518
        %v2455 = vunpack.c.h.b16 %v1518
        %v2456 = vunpack.c.l.b16 %v1519
        %v2457 = vunpack.c.h.b16 %v1519
        %v2458 = vunpack.c.l.b16 %v1520
        %v2459 = vunpack.c.h.b16 %v1520
        %v2460 = vunpack.c.l.b16 %v1521
        %v2461 = vunpack.c.h.b16 %v1521
        %v2462 = vunpack.c.l.b16 %v1522
        %v2463 = vunpack.c.h.b16 %v1522
        %v2464 = vunpack.c.l.b16 %v1523
        %v2465 = vunpack.c.h.b16 %v1523
        %v2466 = vunpack.c.l.b16 %v1524
        %v2467 = vunpack.c.h.b16 %v1524
        %v2468 = vunpack.c.l.b16 %v1525
        %v2469 = vunpack.c.h.b16 %v1525
        %v2470 = vunpack.c.l.b16 %v1526
        %v2471 = vunpack.c.h.b16 %v1526
        %v2472 = vunpack.c.l.b16 %v1527
        %v2473 = vunpack.c.h.b16 %v1527
        %v2474 = vunpack.c.l.b16 %v1528
        %v2475 = vunpack.c.h.b16 %v1528
        %v2476 = vunpack.c.l.b16 %v1529
        %v2477 = vunpack.c.h.b16 %v1529
        %v2478 = vunpack.c.l.b16 %v1530
        %v2479 = vunpack.c.h.b16 %v1530
        %v2480 = vunpack.c.l.b16 %v1531
        %v2481 = vunpack.c.h.b16 %v1531
        %v2482 = vunpack.c.l.b16 %v1532
        %v2483 = vunpack.c.h.b16 %v1532
        %v2484 = vunpack.c.l.b16 %v1533
        %v2485 = vunpack.c.h.b16 %v1533
        %v2486 = vunpack.c.l.b16 %v1534
        %v2487 = vunpack.c.h.b16 %v1534
        %v2488 = vunpack.c.l.b16 %v1535
        %v2489 = vunpack.c.h.b16 %v1535
        %v2490 = vunpack.c.l.b16 %v1536
        %v2491 = vunpack.c.h.b16 %v1536
        %v2492 = vunpack.c.l.b16 %v1537
        %v2493 = vunpack.c.h.b16 %v1537
        %v2494 = vunpack.c.l.b16 %v1538
        %v2495 = vunpack.c.h.b16 %v1538
        %v2496 = vunpack.c.l.b16 %v1539
        %v2497 = vunpack.c.h.b16 %v1539
        %v2498 = vunpack.c.l.b16 %v1540
        %v2499 = vunpack.c.h.b16 %v1540
        %v2500 = vunpack.c.l.b16 %v1541
        %v2501 = vunpack.c.h.b16 %v1541
        %v2502 = vunpack.c.l.b16 %v1542
        %v2503 = vunpack.c.h.b16 %v1542
        %v2504 = vunpack.c.l.b16 %v1543
        %v2505 = vunpack.c.h.b16 %v1543
        %v2506 = vunpack.c.l.b16 %v1544
        %v2507 = vunpack.c.h.b16 %v1544
        %v2508 = vunpack.c.l.b16 %v1545
        %v2509 = vunpack.c.h.b16 %v1545
        %v2510 = vunpack.c.l.b16 %v1546
        %v2511 = vunpack.c.h.b16 %v1546
        %v2512 = vunpack.c.l.b16 %v1547
        %v2513 = vunpack.c.h.b16 %v1547
        %v2514 = vunpack.c.l.b16 %v1548
        %v2515 = vunpack.c.h.b16 %v1548
        %v2516 = vunpack.c.l.b16 %v1549
        %v2517 = vunpack.c.h.b16 %v1549
        %v2518 = vunpack.c.l.b16 %v1550
        %v2519 = vunpack.c.h.b16 %v1550
        %v2520 = vunpack.c.l.b16 %v1551
        %v2521 = vunpack.c.h.b16 %v1551
        %v2522 = vunpack.c.l.b16 %v1552
        %v2523 = vunpack.c.h.b16 %v1552
        %v2524 = vunpack.c.l.b16 %v1553
        %v2525 = vunpack.c.h.b16 %v1553
        %v2526 = vunpack.c.l.b16 %v1554
        %v2527 = vunpack.c.h.b16 %v1554
        %v2528 = vunpack.c.l.b16 %v1555
        %v2529 = vunpack.c.h.b16 %v1555
        %v2530 = vunpack.c.l.b16 %v1556
        %v2531 = vunpack.c.h.b16 %v1556
        %v2532 = vunpack.c.l.b16 %v1557
        %v2533 = vunpack.c.h.b16 %v1557
        %v2534 = vunpack.c.l.b16 %v1558
        %v2535 = vunpack.c.h.b16 %v1558
        %v2536 = vunpack.c.l.b16 %v1559
        %v2537 = vunpack.c.h.b16 %v1559
        %v2538 = vunpack.c.l.b16 %v1560
        %v2539 = vunpack.c.h.b16 %v1560
        %v2540 = vunpack.c.l.b16 %v1561
        %v2541 = vunpack.c.h.b16 %v1561
        %v2542 = vunpack.c.l.b16 %v1562
        %v2543 = vunpack.c.h.b16 %v1562
        %v2544 = vunpack.c.l.b16 %v1563
        %v2545 = vunpack.c.h.b16 %v1563
        %v2546 = vpack.c.b16 %v1910, %v1906
        %v2547 = vpack.c.b16 %v1911, %v1907
        %v2548 = vpack.c.b16 %v1912, %v1908
        %v2549 = vpack.c.b16 %v1913, %v1909
        %v2550 = vpack.c.b16 %v1918, %v1914
        %v2551 = vpack.c.b16 %v1919, %v1915
        %v2552 = vpack.c.b16 %v1920, %v1916
        %v2553 = vpack.c.b16 %v1921, %v1917
        %v2554 = vpack.c.b16 %v1926, %v1922
        %v2555 = vpack.c.b16 %v1927, %v1923
        %v2556 = vpack.c.b16 %v1928, %v1924
        %v2557 = vpack.c.b16 %v1929, %v1925
        %v2558 = vpack.c.b16 %v1934, %v1930
        %v2559 = vpack.c.b16 %v1935, %v1931
        %v2560 = vpack.c.b16 %v1936, %v1932
        %v2561 = vpack.c.b16 %v1937, %v1933
        %v2562 = vpack.c.b16 %v1942, %v1938
        %v2563 = vpack.c.b16 %v1943, %v1939
        %v2564 = vpack.c.b16 %v1944, %v1940
        %v2565 = vpack.c.b16 %v1945, %v1941
        %v2566 = vpack.c.b16 %v1950, %v1946
        %v2567 = vpack.c.b16 %v1951, %v1947
        %v2568 = vpack.c.b16 %v1952, %v1948
        %v2569 = vpack.c.b16 %v1953, %v1949
        %v2570 = vpack.c.b16 %v1958, %v1954
        %v2571 = vpack.c.b16 %v1959, %v1955
        %v2572 = vpack.c.b16 %v1960, %v1956
        %v2573 = vpack.c.b16 %v1961, %v1957
        %v2574 = vpack.c.b16 %v1966, %v1962
        %v2575 = vpack.c.b16 %v1967, %v1963
        %v2576 = vpack.c.b16 %v1968, %v1964
        %v2577 = vpack.c.b16 %v1969, %v1965
        %v2578 = vpack.c.b16 %v1974, %v1970
        %v2579 = vpack.c.b16 %v1975, %v1971
        %v2580 = vpack.c.b16 %v1976, %v1972
        %v2581 = vpack.c.b16 %v1977, %v1973
        %v2582 = vpack.c.b16 %v1982, %v1978
        %v2583 = vpack.c.b16 %v1983, %v1979
        %v2584 = vpack.c.b16 %v1984, %v1980
        %v2585 = vpack.c.b16 %v1985, %v1981
        %v2586 = vpack.c.b16 %v1990, %v1986
        %v2587 = vpack.c.b16 %v1991, %v1987
        %v2588 = vpack.c.b16 %v1992, %v1988
        %v2589 = vpack.c.b16 %v1993, %v1989
        %v2590 = vpack.c.b16 %v1998, %v1994
        %v2591 = vpack.c.b16 %v1999, %v1995
        %v2592 = vpack.c.b16 %v2000, %v1996
        %v2593 = vpack.c.b16 %v2001, %v1997
        %v2594 = vpack.c.b16 %v2006, %v2002
        %v2595 = vpack.c.b16 %v2007, %v2003
        %v2596 = vpack.c.b16 %v2008, %v2004
        %v2597 = vpack.c.b16 %v2009, %v2005
        %v2598 = vpack.c.b16 %v2014, %v2010
        %v2599 = vpack.c.b16 %v2015, %v2011
        %v2600 = vpack.c.b16 %v2016, %v2012
        %v2601 = vpack.c.b16 %v2017, %v2013
        %v2602 = vpack.c.b16 %v2022, %v2018
        %v2603 = vpack.c.b16 %v2023, %v2019
        %v2604 = vpack.c.b16 %v2024, %v2020
        %v2605 = vpack.c.b16 %v2025, %v2021
        %v2606 = vpack.c.b16 %v2030, %v2026
        %v2607 = vpack.c.b16 %v2031, %v2027
        %v2608 = vpack.c.b16 %v2032, %v2028
        %v2609 = vpack.c.b16 %v2033, %v2029
        %v2610 = vpack.c.b16 %v2038, %v2034
        %v2611 = vpack.c.b16 %v2039, %v2035
        %v2612 = vpack.c.b16 %v2040, %v2036
        %v2613 = vpack.c.b16 %v2041, %v2037
        %v2614 = vpack.c.b16 %v2046, %v2042
        %v2615 = vpack.c.b16 %v2047, %v2043
        %v2616 = vpack.c.b16 %v2048, %v2044
        %v2617 = vpack.c.b16 %v2049, %v2045
        %v2618 = vpack.c.b16 %v2054, %v2050
        %v2619 = vpack.c.b16 %v2055, %v2051
        %v2620 = vpack.c.b16 %v2056, %v2052
        %v2621 = vpack.c.b16 %v2057, %v2053
        %v2622 = vpack.c.b16 %v2062, %v2058
        %v2623 = vpack.c.b16 %v2063, %v2059
        %v2624 = vpack.c.b16 %v2064, %v2060
        %v2625 = vpack.c.b16 %v2065, %v2061
        %v2626 = vpack.c.b16 %v2070, %v2066
        %v2627 = vpack.c.b16 %v2071, %v2067
        %v2628 = vpack.c.b16 %v2072, %v2068
        %v2629 = vpack.c.b16 %v2073, %v2069
        %v2630 = vpack.c.b16 %v2078, %v2074
        %v2631 = vpack.c.b16 %v2079, %v2075
        %v2632 = vpack.c.b16 %v2080, %v2076
        %v2633 = vpack.c.b16 %v2081, %v2077
        %v2634 = vpack.c.b16 %v2086, %v2082
        %v2635 = vpack.c.b16 %v2087, %v2083
        %v2636 = vpack.c.b16 %v2088, %v2084
        %v2637 = vpack.c.b16 %v2089, %v2085
        %v2638 = vpack.c.b16 %v2094, %v2090
        %v2639 = vpack.c.b16 %v2095, %v2091
        %v2640 = vpack.c.b16 %v2096, %v2092
        %v2641 = vpack.c.b16 %v2097, %v2093
        %v2642 = vpack.c.b16 %v2102, %v2098
        %v2643 = vpack.c.b16 %v2103, %v2099
        %v2644 = vpack.c.b16 %v2104, %v2100
        %v2645 = vpack.c.b16 %v2105, %v2101
        %v2646 = vpack.c.b16 %v2110, %v2106
        %v2647 = vpack.c.b16 %v2111, %v2107
        %v2648 = vpack.c.b16 %v2112, %v2108
        %v2649 = vpack.c.b16 %v2113, %v2109
        %v2650 = vpack.c.b16 %v2118, %v2114
        %v2651 = vpack.c.b16 %v2119, %v2115
        %v2652 = vpack.c.b16 %v2120, %v2116
        %v2653 = vpack.c.b16 %v2121, %v2117
        %v2654 = vpack.c.b16 %v2126, %v2122
        %v2655 = vpack.c.b16 %v2127, %v2123
        %v2656 = vpack.c.b16 %v2128, %v2124
        %v2657 = vpack.c.b16 %v2129, %v2125
        %v2658 = vpack.c.b16 %v2134, %v2130
        %v2659 = vpack.c.b16 %v2135, %v2131
        %v2660 = vpack.c.b16 %v2136, %v2132
        %v2661 = vpack.c.b16 %v2137, %v2133
        %v2662 = vpack.c.b16 %v2142, %v2138
        %v2663 = vpack.c.b16 %v2143, %v2139
        %v2664 = vpack.c.b16 %v2144, %v2140
        %v2665 = vpack.c.b16 %v2145, %v2141
        %v2666 = vpack.c.b16 %v2150, %v2146
        %v2667 = vpack.c.b16 %v2151, %v2147
        %v2668 = vpack.c.b16 %v2152, %v2148
        %v2669 = vpack.c.b16 %v2153, %v2149
        %v2670 = vpack.c.b16 %v2158, %v2154
        %v2671 = vpack.c.b16 %v2159, %v2155
        %v2672 = vpack.c.b16 %v2160, %v2156
        %v2673 = vpack.c.b16 %v2161, %v2157
        %v2674 = vpack.c.b16 %v2166, %v2162
        %v2675 = vpack.c.b16 %v2167, %v2163
        %v2676 = vpack.c.b16 %v2168, %v2164
        %v2677 = vpack.c.b16 %v2169, %v2165
        %v2678 = vpack.c.b16 %v2174, %v2170
        %v2679 = vpack.c.b16 %v2175, %v2171
        %v2680 = vpack.c.b16 %v2176, %v2172
        %v2681 = vpack.c.b16 %v2177, %v2173
        %v2682 = vpack.c.b16 %v2182, %v2178
        %v2683 = vpack.c.b16 %v2183, %v2179
        %v2684 = vpack.c.b16 %v2184, %v2180
        %v2685 = vpack.c.b16 %v2185, %v2181
        %v2686 = vpack.c.b16 %v2190, %v2186
        %v2687 = vpack.c.b16 %v2191, %v2187
        %v2688 = vpack.c.b16 %v2192, %v2188
        %v2689 = vpack.c.b16 %v2193, %v2189
        %v2690 = vpack.c.b16 %v2198, %v2194
        %v2691 = vpack.c.b16 %v2199, %v2195
        %v2692 = vpack.c.b16 %v2200, %v2196
        %v2693 = vpack.c.b16 %v2201, %v2197
        %v2694 = vpack.c.b16 %v2206, %v2202
        %v2695 = vpack.c.b16 %v2207, %v2203
        %v2696 = vpack.c.b16 %v2208, %v2204
        %v2697 = vpack.c.b16 %v2209, %v2205
        %v2698 = vpack.c.b16 %v2214, %v2210
        %v2699 = vpack.c.b16 %v2215, %v2211
        %v2700 = vpack.c.b16 %v2216, %v2212
        %v2701 = vpack.c.b16 %v2217, %v2213
        %v2702 = vpack.c.b16 %v2222, %v2218
        %v2703 = vpack.c.b16 %v2223, %v2219
        %v2704 = vpack.c.b16 %v2224, %v2220
        %v2705 = vpack.c.b16 %v2225, %v2221
        %v2706 = vpack.c.b16 %v2230, %v2226
        %v2707 = vpack.c.b16 %v2231, %v2227
        %v2708 = vpack.c.b16 %v2232, %v2228
        %v2709 = vpack.c.b16 %v2233, %v2229
        %v2710 = vpack.c.b16 %v2238, %v2234
        %v2711 = vpack.c.b16 %v2239, %v2235
        %v2712 = vpack.c.b16 %v2240, %v2236
        %v2713 = vpack.c.b16 %v2241, %v2237
        %v2714 = vpack.c.b16 %v2246, %v2242
        %v2715 = vpack.c.b16 %v2247, %v2243
        %v2716 = vpack.c.b16 %v2248, %v2244
        %v2717 = vpack.c.b16 %v2249, %v2245
        %v2718 = vpack.c.b16 %v2254, %v2250
        %v2719 = vpack.c.b16 %v2255, %v2251
        %v2720 = vpack.c.b16 %v2256, %v2252
        %v2721 = vpack.c.b16 %v2257, %v2253
        %v2722 = vpack.c.b16 %v2262, %v2258
        %v2723 = vpack.c.b16 %v2263, %v2259
        %v2724 = vpack.c.b16 %v2264, %v2260
        %v2725 = vpack.c.b16 %v2265, %v2261
        %v2726 = vpack.c.b16 %v2270, %v2266
        %v2727 = vpack.c.b16 %v2271, %v2267
        %v2728 = vpack.c.b16 %v2272, %v2268
        %v2729 = vpack.c.b16 %v2273, %v2269
        %v2730 = vpack.c.b16 %v2278, %v2274
        %v2731 = vpack.c.b16 %v2279, %v2275
        %v2732 = vpack.c.b16 %v2280, %v2276
        %v2733 = vpack.c.b16 %v2281, %v2277
        %v2734 = vpack.c.b16 %v2286, %v2282
        %v2735 = vpack.c.b16 %v2287, %v2283
        %v2736 = vpack.c.b16 %v2288, %v2284
        %v2737 = vpack.c.b16 %v2289, %v2285
        %v2738 = vpack.c.b16 %v2294, %v2290
        %v2739 = vpack.c.b16 %v2295, %v2291
        %v2740 = vpack.c.b16 %v2296, %v2292
        %v2741 = vpack.c.b16 %v2297, %v2293
        %v2742 = vpack.c.b16 %v2302, %v2298
        %v2743 = vpack.c.b16 %v2303, %v2299
        %v2744 = vpack.c.b16 %v2304, %v2300
        %v2745 = vpack.c.b16 %v2305, %v2301
        %v2746 = vpack.c.b16 %v2310, %v2306
        %v2747 = vpack.c.b16 %v2311, %v2307
        %v2748 = vpack.c.b16 %v2312, %v2308
        %v2749 = vpack.c.b16 %v2313, %v2309
        %v2750 = vpack.c.b16 %v2318, %v2314
        %v2751 = vpack.c.b16 %v2319, %v2315
        %v2752 = vpack.c.b16 %v2320, %v2316
        %v2753 = vpack.c.b16 %v2321, %v2317
        %v2754 = vpack.c.b16 %v2326, %v2322
        %v2755 = vpack.c.b16 %v2327, %v2323
        %v2756 = vpack.c.b16 %v2328, %v2324
        %v2757 = vpack.c.b16 %v2329, %v2325
        %v2758 = vpack.c.b16 %v2334, %v2330
        %v2759 = vpack.c.b16 %v2335, %v2331
        %v2760 = vpack.c.b16 %v2336, %v2332
        %v2761 = vpack.c.b16 %v2337, %v2333
        %v2762 = vpack.c.b16 %v2342, %v2338
        %v2763 = vpack.c.b16 %v2343, %v2339
        %v2764 = vpack.c.b16 %v2344, %v2340
        %v2765 = vpack.c.b16 %v2345, %v2341
        %v2766 = vpack.c.b16 %v2350, %v2346
        %v2767 = vpack.c.b16 %v2351, %v2347
        %v2768 = vpack.c.b16 %v2352, %v2348
        %v2769 = vpack.c.b16 %v2353, %v2349
        %v2770 = vpack.c.b16 %v2358, %v2354
        %v2771 = vpack.c.b16 %v2359, %v2355
        %v2772 = vpack.c.b16 %v2360, %v2356
        %v2773 = vpack.c.b16 %v2361, %v2357
        %v2774 = vpack.c.b16 %v2366, %v2362
        %v2775 = vpack.c.b16 %v2367, %v2363
        %v2776 = vpack.c.b16 %v2368, %v2364
        %v2777 = vpack.c.b16 %v2369, %v2365
        %v2778 = vpack.c.b16 %v2374, %v2370
        %v2779 = vpack.c.b16 %v2375, %v2371
        %v2780 = vpack.c.b16 %v2376, %v2372
        %v2781 = vpack.c.b16 %v2377, %v2373
        %v2782 = vpack.c.b16 %v2382, %v2378
        %v2783 = vpack.c.b16 %v2383, %v2379
        %v2784 = vpack.c.b16 %v2384, %v2380
        %v2785 = vpack.c.b16 %v2385, %v2381
        %v2786 = vpack.c.b16 %v2390, %v2386
        %v2787 = vpack.c.b16 %v2391, %v2387
        %v2788 = vpack.c.b16 %v2392, %v2388
        %v2789 = vpack.c.b16 %v2393, %v2389
        %v2790 = vpack.c.b16 %v2398, %v2394
        %v2791 = vpack.c.b16 %v2399, %v2395
        %v2792 = vpack.c.b16 %v2400, %v2396
        %v2793 = vpack.c.b16 %v2401, %v2397
        %v2794 = vpack.c.b16 %v2406, %v2402
        %v2795 = vpack.c.b16 %v2407, %v2403
        %v2796 = vpack.c.b16 %v2408, %v2404
        %v2797 = vpack.c.b16 %v2409, %v2405
        %v2798 = vpack.c.b16 %v2414, %v2410
        %v2799 = vpack.c.b16 %v2415, %v2411
        %v2800 = vpack.c.b16 %v2416, %v2412
        %v2801 = vpack.c.b16 %v2417, %v2413
        %v2802 = vpack.c.b16 %v2422, %v2418
        %v2803 = vpack.c.b16 %v2423, %v2419
        %v2804 = vpack.c.b16 %v2424, %v2420
        %v2805 = vpack.c.b16 %v2425, %v2421
        %v2806 = vpack.c.b16 %v2430, %v2426
        %v2807 = vpack.c.b16 %v2431, %v2427
        %v2808 = vpack.c.b16 %v2432, %v2428
        %v2809 = vpack.c.b16 %v2433, %v2429
        %v2810 = vpack.c.b16 %v2438, %v2434
        %v2811 = vpack.c.b16 %v2439, %v2435
        %v2812 = vpack.c.b16 %v2440, %v2436
        %v2813 = vpack.c.b16 %v2441, %v2437
        %v2814 = vpack.c.b16 %v2446, %v2442
        %v2815 = vpack.c.b16 %v2447, %v2443
        %v2816 = vpack.c.b16 %v2448, %v2444
        %v2817 = vpack.c.b16 %v2449, %v2445
        %v2818 = vpack.c.b16 %v2454, %v2450
        %v2819 = vpack.c.b16 %v2455, %v2451
        %v2820 = vpack.c.b16 %v2456, %v2452
        %v2821 = vpack.c.b16 %v2457, %v2453
        %v2822 = vpack.c.b16 %v2462, %v2458
        %v2823 = vpack.c.b16 %v2463, %v2459
        %v2824 = vpack.c.b16 %v2464, %v2460
        %v2825 = vpack.c.b16 %v2465, %v2461
        %v2826 = vpack.c.b16 %v2470, %v2466
        %v2827 = vpack.c.b16 %v2471, %v2467
        %v2828 = vpack.c.b16 %v2472, %v2468
        %v2829 = vpack.c.b16 %v2473, %v2469
        %v2830 = vpack.c.b16 %v2478, %v2474
        %v2831 = vpack.c.b16 %v2479, %v2475
        %v2832 = vpack.c.b16 %v2480, %v2476
        %v2833 = vpack.c.b16 %v2481, %v2477
        %v2834 = vpack.c.b16 %v2486, %v2482
        %v2835 = vpack.c.b16 %v2487, %v2483
        %v2836 = vpack.c.b16 %v2488, %v2484
        %v2837 = vpack.c.b16 %v2489, %v2485
        %v2838 = vpack.c.b16 %v2494, %v2490
        %v2839 = vpack.c.b16 %v2495, %v2491
        %v2840 = vpack.c.b16 %v2496, %v2492
        %v2841 = vpack.c.b16 %v2497, %v2493
        %v2842 = vpack.c.b16 %v2502, %v2498
        %v2843 = vpack.c.b16 %v2503, %v2499
        %v2844 = vpack.c.b16 %v2504, %v2500
        %v2845 = vpack.c.b16 %v2505, %v2501
        %v2846 = vpack.c.b16 %v2510, %v2506
        %v2847 = vpack.c.b16 %v2511, %v2507
        %v2848 = vpack.c.b16 %v2512, %v2508
        %v2849 = vpack.c.b16 %v2513, %v2509
        %v2850 = vpack.c.b16 %v2518, %v2514
        %v2851 = vpack.c.b16 %v2519, %v2515
        %v2852 = vpack.c.b16 %v2520, %v2516
        %v2853 = vpack.c.b16 %v2521, %v2517
        %v2854 = vpack.c.b16 %v2526, %v2522
        %v2855 = vpack.c.b16 %v2527, %v2523
        %v2856 = vpack.c.b16 %v2528, %v2524
        %v2857 = vpack.c.b16 %v2529, %v2525
        %v2858 = vpack.c.b16 %v2534, %v2530
        %v2859 = vpack.c.b16 %v2535, %v2531
        %v2860 = vpack.c.b16 %v2536, %v2532
        %v2861 = vpack.c.b16 %v2537, %v2533
        %v2862 = vpack.c.b16 %v2542, %v2538
        %v2863 = vpack.c.b16 %v2543, %v2539
        %v2864 = vpack.c.b16 %v2544, %v2540
        %v2865 = vpack.c.b16 %v2545, %v2541
        %3186 = vmatprep.subr.bf16.mxu0 %v2547
        %3187 = vmatpush1.bf16.msra.mxu0 %v2546
        %3188 = vmatprep.subr.bf16.mxu0 %v2551
        %3189 = vmatpush1.bf16.msra.mxu0 %v2550
        %3190 = vmatprep.subr.bf16.mxu0 %v2555
        %3191 = vmatpush1.bf16.msra.mxu0 %v2554
        %3192 = vmatprep.subr.bf16.mxu0 %v2559
        %3193 = vmatpush1.bf16.msra.mxu0 %v2558
        %3194 = vmatprep.subr.bf16.mxu0 %v2563
        %3195 = vmatpush1.bf16.msra.mxu0 %v2562
        %3196 = vmatprep.subr.bf16.mxu0 %v2567
        %3197 = vmatpush1.bf16.msra.mxu0 %v2566
        %3198 = vmatprep.subr.bf16.mxu0 %v2571
        %3199 = vmatpush1.bf16.msra.mxu0 %v2570
        %3200 = vmatprep.subr.bf16.mxu0 %v2575
        %3201 = vmatpush1.bf16.msra.mxu0 %v2574
        %3202 = vmatprep.subr.bf16.mxu0 %v2579
        %3203 = vmatpush1.bf16.msra.mxu0 %v2578
        %3204 = vmatprep.subr.bf16.mxu0 %v2583
        %3205 = vmatpush1.bf16.msra.mxu0 %v2582
        %3206 = vmatprep.subr.bf16.mxu0 %v2587
        %3207 = vmatpush1.bf16.msra.mxu0 %v2586
        %3208 = vmatprep.subr.bf16.mxu0 %v2591
        %3209 = vmatpush1.bf16.msra.mxu0 %v2590
        %3210 = vmatprep.subr.bf16.mxu0 %v2595
        %3211 = vmatpush1.bf16.msra.mxu0 %v2594
        %3212 = vmatprep.subr.bf16.mxu0 %v2599
        %3213 = vmatpush1.bf16.msra.mxu0 %v2598
        %3214 = vmatprep.subr.bf16.mxu0 %v2603
        %3215 = vmatpush1.bf16.msra.mxu0 %v2602
        %3216 = vmatprep.subr.bf16.mxu0 %v2607
        %3217 = vmatpush1.bf16.msra.mxu0 %v2606
        %3218 = vmatprep.mubr.bf16.mxu0 %v1235
        %3219 = vmatmul.mubr.bf16.gmra.mrb[0].mxu0 %v1234
        %v3220 = vpop.f32.mrb[0].mxu0
        %v3221 = vadd.f32 %v1569, %v3220
        %v3222 = vpop.f32.mrb[0].mxu0
        %v3223 = vadd.f32 %v1573, %v3222
        %v3224 = vpop.f32.mrb[0].mxu0
        %v3225 = vadd.f32 %v1569, %v3224
        %v3226 = vpop.f32.mrb[0].mxu0
        %v3227 = vadd.f32 %v1573, %v3226
        %3228 = vdwg.mxu0
        %3229 = vmatprep.subr.bf16.mxu0 %v2611
        %3230 = vmatpush1.bf16.msra.mxu0 %v2610
        %3231 = vmatprep.subr.bf16.mxu0 %v2615
        %3232 = vmatpush1.bf16.msra.mxu0 %v2614
        %3233 = vmatprep.subr.bf16.mxu0 %v2619
        %3234 = vmatpush1.bf16.msra.mxu0 %v2618
        %3235 = vmatprep.subr.bf16.mxu0 %v2623
        %3236 = vmatpush1.bf16.msra.mxu0 %v2622
        %3237 = vmatprep.subr.bf16.mxu0 %v2627
        %3238 = vmatpush1.bf16.msra.mxu0 %v2626
        %3239 = vmatprep.subr.bf16.mxu0 %v2631
        %3240 = vmatpush1.bf16.msra.mxu0 %v2630
        %3241 = vmatprep.subr.bf16.mxu0 %v2635
        %3242 = vmatpush1.bf16.msra.mxu0 %v2634
        %3243 = vmatprep.subr.bf16.mxu0 %v2639
        %3244 = vmatpush1.bf16.msra.mxu0 %v2638
        %3245 = vmatprep.subr.bf16.mxu0 %v2643
        %3246 = vmatpush1.bf16.msra.mxu0 %v2642
        %3247 = vmatprep.subr.bf16.mxu0 %v2647
        %3248 = vmatpush1.bf16.msra.mxu0 %v2646
        %3249 = vmatprep.subr.bf16.mxu0 %v2651
        %3250 = vmatpush1.bf16.msra.mxu0 %v2650
        %3251 = vmatprep.subr.bf16.mxu0 %v2655
        %3252 = vmatpush1.bf16.msra.mxu0 %v2654
        %3253 = vmatprep.subr.bf16.mxu0 %v2659
        %3254 = vmatpush1.bf16.msra.mxu0 %v2658
        %3255 = vmatprep.subr.bf16.mxu0 %v2663
        %3256 = vmatpush1.bf16.msra.mxu0 %v2662
        %3257 = vmatprep.subr.bf16.mxu0 %v2667
        %3258 = vmatpush1.bf16.msra.mxu0 %v2666
        %3259 = vmatprep.subr.bf16.mxu0 %v2671
        %3260 = vmatpush1.bf16.msra.mxu0 %v2670
        %3261 = vmatprep.mubr.bf16.mxu0 %v1237
        %3262 = vmatmul.mubr.bf16.gmra.mrb[0].mxu0 %v1236
        %v3263 = vpop.f32.mrb[0].mxu0
        %v3264 = vadd.f32 %v3221, %v3263
        %v3265 = vpop.f32.mrb[0].mxu0
        %v3266 = vadd.f32 %v3223, %v3265
        %v3267 = vpop.f32.mrb[0].mxu0
        %v3268 = vadd.f32 %v3225, %v3267
        %v3269 = vpop.f32.mrb[0].mxu0
        %v3270 = vadd.f32 %v3227, %v3269
        %3271 = vdwg.mxu0
        %3272 = vmatprep.subr.bf16.mxu0 %v2675
        %3273 = vmatpush1.bf16.msra.mxu0 %v2674
        %3274 = vmatprep.subr.bf16.mxu0 %v2679
        %3275 = vmatpush1.bf16.msra.mxu0 %v2678
        %3276 = vmatprep.subr.bf16.mxu0 %v2683
        %3277 = vmatpush1.bf16.msra.mxu0 %v2682
        %3278 = vmatprep.subr.bf16.mxu0 %v2687
        %3279 = vmatpush1.bf16.msra.mxu0 %v2686
        %3280 = vmatprep.subr.bf16.mxu0 %v2691
        %3281 = vmatpush1.bf16.msra.mxu0 %v2690
        %3282 = vmatprep.subr.bf16.mxu0 %v2695
        %3283 = vmatpush1.bf16.msra.mxu0 %v2694
        %3284 = vmatprep.subr.bf16.mxu0 %v2699
        %3285 = vmatpush1.bf16.msra.mxu0 %v2698
        %3286 = vmatprep.subr.bf16.mxu0 %v2703
        %3287 = vmatpush1.bf16.msra.mxu0 %v2702
        %3288 = vmatprep.subr.bf16.mxu0 %v2707
        %3289 = vmatpush1.bf16.msra.mxu0 %v2706
        %3290 = vmatprep.subr.bf16.mxu0 %v2711
        %3291 = vmatpush1.bf16.msra.mxu0 %v2710
        %3292 = vmatprep.subr.bf16.mxu0 %v2715
        %3293 = vmatpush1.bf16.msra.mxu0 %v2714
        %3294 = vmatprep.subr.bf16.mxu0 %v2719
        %3295 = vmatpush1.bf16.msra.mxu0 %v2718
        %3296 = vmatprep.subr.bf16.mxu0 %v2723
        %3297 = vmatpush1.bf16.msra.mxu0 %v2722
        %3298 = vmatprep.subr.bf16.mxu0 %v2727
        %3299 = vmatpush1.bf16.msra.mxu0 %v2726
        %3300 = vmatprep.subr.bf16.mxu0 %v2731
        %3301 = vmatpush1.bf16.msra.mxu0 %v2730
        %3302 = vmatprep.subr.bf16.mxu0 %v2735
        %3303 = vmatpush1.bf16.msra.mxu0 %v2734
        %3304 = vmatprep.mubr.bf16.mxu0 %v1239
        %3305 = vmatmul.mubr.bf16.gmra.mrb[0].mxu0 %v1238
        %v3306 = vpop.f32.mrb[0].mxu0
        %v3307 = vadd.f32 %v3264, %v3306
        %v3308 = vpop.f32.mrb[0].mxu0
        %v3309 = vadd.f32 %v3266, %v3308
        %v3310 = vpop.f32.mrb[0].mxu0
        %v3311 = vadd.f32 %v3268, %v3310
        %v3312 = vpop.f32.mrb[0].mxu0
        %v3313 = vadd.f32 %v3270, %v3312
        %3314 = vdwg.mxu0
        %3315 = vmatprep.subr.bf16.mxu0 %v2739
        %3316 = vmatpush1.bf16.msra.mxu0 %v2738
        %3317 = vmatprep.subr.bf16.mxu0 %v2743
        %3318 = vmatpush1.bf16.msra.mxu0 %v2742
        %3319 = vmatprep.subr.bf16.mxu0 %v2747
        %3320 = vmatpush1.bf16.msra.mxu0 %v2746
        %3321 = vmatprep.subr.bf16.mxu0 %v2751
        %3322 = vmatpush1.bf16.msra.mxu0 %v2750
        %3323 = vmatprep.subr.bf16.mxu0 %v2755
        %3324 = vmatpush1.bf16.msra.mxu0 %v2754
        %3325 = vmatprep.subr.bf16.mxu0 %v2759
        %3326 = vmatpush1.bf16.msra.mxu0 %v2758
        %3327 = vmatprep.subr.bf16.mxu0 %v2763
        %3328 = vmatpush1.bf16.msra.mxu0 %v2762
        %3329 = vmatprep.subr.bf16.mxu0 %v2767
        %3330 = vmatpush1.bf16.msra.mxu0 %v2766
        %3331 = vmatprep.subr.bf16.mxu0 %v2771
        %3332 = vmatpush1.bf16.msra.mxu0 %v2770
        %3333 = vmatprep.subr.bf16.mxu0 %v2775
        %3334 = vmatpush1.bf16.msra.mxu0 %v2774
        %3335 = vmatprep.subr.bf16.mxu0 %v2779
        %3336 = vmatpush1.bf16.msra.mxu0 %v2778
        %3337 = vmatprep.subr.bf16.mxu0 %v2783
        %3338 = vmatpush1.bf16.msra.mxu0 %v2782
        %3339 = vmatprep.subr.bf16.mxu0 %v2787
        %3340 = vmatpush1.bf16.msra.mxu0 %v2786
        %3341 = vmatprep.subr.bf16.mxu0 %v2791
        %3342 = vmatpush1.bf16.msra.mxu0 %v2790
        %3343 = vmatprep.subr.bf16.mxu0 %v2795
        %3344 = vmatpush1.bf16.msra.mxu0 %v2794
        %3345 = vmatprep.subr.bf16.mxu0 %v2799
        %3346 = vmatpush1.bf16.msra.mxu0 %v2798
        %3347 = vmatprep.mubr.bf16.mxu0 %v1241
        %3348 = vmatmul.mubr.bf16.gmra.mrb[0].mxu0 %v1240
        %v3349 = vpop.f32.mrb[0].mxu0
        %v3350 = vadd.f32 %v3307, %v3349
        %v3351 = vpop.f32.mrb[0].mxu0
        %v3352 = vadd.f32 %v3309, %v3351
        %v3353 = vpop.f32.mrb[0].mxu0
        %v3354 = vadd.f32 %v3311, %v3353
        %v3355 = vpop.f32.mrb[0].mxu0
        %v3356 = vadd.f32 %v3313, %v3355
        %3357 = vdwg.mxu0
        %3358 = vmatprep.subr.bf16.mxu0 %v2803
        %3359 = vmatpush1.bf16.msra.mxu0 %v2802
        %3360 = vmatprep.subr.bf16.mxu0 %v2807
        %3361 = vmatpush1.bf16.msra.mxu0 %v2806
        %3362 = vmatprep.subr.bf16.mxu0 %v2811
        %3363 = vmatpush1.bf16.msra.mxu0 %v2810
        %3364 = vmatprep.subr.bf16.mxu0 %v2815
        %3365 = vmatpush1.bf16.msra.mxu0 %v2814
        %3366 = vmatprep.subr.bf16.mxu0 %v2819
        %3367 = vmatpush1.bf16.msra.mxu0 %v2818
        %3368 = vmatprep.subr.bf16.mxu0 %v2823
        %3369 = vmatpush1.bf16.msra.mxu0 %v2822
        %3370 = vmatprep.subr.bf16.mxu0 %v2827
        %3371 = vmatpush1.bf16.msra.mxu0 %v2826
        %3372 = vmatprep.subr.bf16.mxu0 %v2831
        %3373 = vmatpush1.bf16.msra.mxu0 %v2830
        %3374 = vmatprep.subr.bf16.mxu0 %v2835
        %3375 = vmatpush1.bf16.msra.mxu0 %v2834
        %3376 = vmatprep.subr.bf16.mxu0 %v2839
        %3377 = vmatpush1.bf16.msra.mxu0 %v2838
        %3378 = vmatprep.subr.bf16.mxu0 %v2843
        %3379 = vmatpush1.bf16.msra.mxu0 %v2842
        %3380 = vmatprep.subr.bf16.mxu0 %v2847
        %3381 = vmatpush1.bf16.msra.mxu0 %v2846
        %3382 = vmatprep.subr.bf16.mxu0 %v2851
        %3383 = vmatpush1.bf16.msra.mxu0 %v2850
        %3384 = vmatprep.subr.bf16.mxu0 %v2855
        %3385 = vmatpush1.bf16.msra.mxu0 %v2854
        %3386 = vmatprep.subr.bf16.mxu0 %v2859
        %3387 = vmatpush1.bf16.msra.mxu0 %v2858
        %3388 = vmatprep.subr.bf16.mxu0 %v2863
        %3389 = vmatpush1.bf16.msra.mxu0 %v2862
        %3390 = vmatprep.mubr.bf16.mxu0 %v1243
        %3391 = vmatmul.mubr.bf16.gmra.mrb[0].mxu0 %v1242
        %v3392 = vpop.f32.mrb[0].mxu0
        %v3393 = vadd.f32 %v3350, %v3392
        %v3394 = vpop.f32.mrb[0].mxu0
        %v3395 = vadd.f32 %v3352, %v3394
        %v3396 = vpop.f32.mrb[0].mxu0
        %v3397 = vadd.f32 %v3354, %v3396
        %v3398 = vpop.f32.mrb[0].mxu0
        %v3399 = vadd.f32 %v3356, %v3398
        %3400 = vdwg.mxu0
        %3401 = vmatprep.subr.bf16.mxu0 %v2549
        %3402 = vmatpush1.bf16.msra.mxu0 %v2548
        %3403 = vmatprep.subr.bf16.mxu0 %v2553
        %3404 = vmatpush1.bf16.msra.mxu0 %v2552
        %3405 = vmatprep.subr.bf16.mxu0 %v2557
        %3406 = vmatpush1.bf16.msra.mxu0 %v2556
        %3407 = vmatprep.subr.bf16.mxu0 %v2561
        %3408 = vmatpush1.bf16.msra.mxu0 %v2560
        %3409 = vmatprep.subr.bf16.mxu0 %v2565
        %3410 = vmatpush1.bf16.msra.mxu0 %v2564
        %3411 = vmatprep.subr.bf16.mxu0 %v2569
        %3412 = vmatpush1.bf16.msra.mxu0 %v2568
        %3413 = vmatprep.subr.bf16.mxu0 %v2573
        %3414 = vmatpush1.bf16.msra.mxu0 %v2572
        %3415 = vmatprep.subr.bf16.mxu0 %v2577
        %3416 = vmatpush1.bf16.msra.mxu0 %v2576
        %3417 = vmatprep.subr.bf16.mxu0 %v2581
        %3418 = vmatpush1.bf16.msra.mxu0 %v2580
        %3419 = vmatprep.subr.bf16.mxu0 %v2585
        %3420 = vmatpush1.bf16.msra.mxu0 %v2584
        %3421 = vmatprep.subr.bf16.mxu0 %v2589
        %3422 = vmatpush1.bf16.msra.mxu0 %v2588
        %3423 = vmatprep.subr.bf16.mxu0 %v2593
        %3424 = vmatpush1.bf16.msra.mxu0 %v2592
        %3425 = vmatprep.subr.bf16.mxu0 %v2597
        %3426 = vmatpush1.bf16.msra.mxu0 %v2596
        %3427 = vmatprep.subr.bf16.mxu0 %v2601
        %3428 = vmatpush1.bf16.msra.mxu0 %v2600
        %3429 = vmatprep.subr.bf16.mxu0 %v2605
        %3430 = vmatpush1.bf16.msra.mxu0 %v2604
        %3431 = vmatprep.subr.bf16.mxu0 %v2609
        %3432 = vmatpush1.bf16.msra.mxu0 %v2608
        %3433 = vmatprep.mubr.bf16.mxu0 %v1235
        %3434 = vmatmul.mubr.bf16.gmra.mrb[0].mxu0 %v1234
        %v3435 = vpop.f32.mrb[0].mxu0
        %v3436 = vadd.f32 %v1577, %v3435
        %v3437 = vpop.f32.mrb[0].mxu0
        %v3438 = vadd.f32 %v1581, %v3437
        %v3439 = vpop.f32.mrb[0].mxu0
        %v3440 = vadd.f32 %v1577, %v3439
        %v3441 = vpop.f32.mrb[0].mxu0
        %v3442 = vadd.f32 %v1581, %v3441
        %3443 = vdwg.mxu0
        %3444 = vmatprep.subr.bf16.mxu0 %v2613
        %3445 = vmatpush1.bf16.msra.mxu0 %v2612
        %3446 = vmatprep.subr.bf16.mxu0 %v2617
        %3447 = vmatpush1.bf16.msra.mxu0 %v2616
        %3448 = vmatprep.subr.bf16.mxu0 %v2621
        %3449 = vmatpush1.bf16.msra.mxu0 %v2620
        %3450 = vmatprep.subr.bf16.mxu0 %v2625
        %3451 = vmatpush1.bf16.msra.mxu0 %v2624
        %3452 = vmatprep.subr.bf16.mxu0 %v2629
        %3453 = vmatpush1.bf16.msra.mxu0 %v2628
        %3454 = vmatprep.subr.bf16.mxu0 %v2633
        %3455 = vmatpush1.bf16.msra.mxu0 %v2632
        %3456 = vmatprep.subr.bf16.mxu0 %v2637
        %3457 = vmatpush1.bf16.msra.mxu0 %v2636
        %3458 = vmatprep.subr.bf16.mxu0 %v2641
        %3459 = vmatpush1.bf16.msra.mxu0 %v2640
        %3460 = vmatprep.subr.bf16.mxu0 %v2645
        %3461 = vmatpush1.bf16.msra.mxu0 %v2644
        %3462 = vmatprep.subr.bf16.mxu0 %v2649
        %3463 = vmatpush1.bf16.msra.mxu0 %v2648
        %3464 = vmatprep.subr.bf16.mxu0 %v2653
        %3465 = vmatpush1.bf16.msra.mxu0 %v2652
        %3466 = vmatprep.subr.bf16.mxu0 %v2657
        %3467 = vmatpush1.bf16.msra.mxu0 %v2656
        %3468 = vmatprep.subr.bf16.mxu0 %v2661
        %3469 = vmatpush1.bf16.msra.mxu0 %v2660
        %3470 = vmatprep.subr.bf16.mxu0 %v2665
        %3471 = vmatpush1.bf16.msra.mxu0 %v2664
        %3472 = vmatprep.subr.bf16.mxu0 %v2669
        %3473 = vmatpush1.bf16.msra.mxu0 %v2668
        %3474 = vmatprep.subr.bf16.mxu0 %v2673
        %3475 = vmatpush1.bf16.msra.mxu0 %v2672
        %3476 = vmatprep.mubr.bf16.mxu0 %v1237
        %3477 = vmatmul.mubr.bf16.gmra.mrb[0].mxu0 %v1236
        %v3478 = vpop.f32.mrb[0].mxu0
        %v3479 = vadd.f32 %v3436, %v3478
        %v3480 = vpop.f32.mrb[0].mxu0
        %v3481 = vadd.f32 %v3438, %v3480
        %v3482 = vpop.f32.mrb[0].mxu0
        %v3483 = vadd.f32 %v3440, %v3482
        %v3484 = vpop.f32.mrb[0].mxu0
        %v3485 = vadd.f32 %v3442, %v3484
        %3486 = vdwg.mxu0
        %3487 = vmatprep.subr.bf16.mxu0 %v2677
        %3488 = vmatpush1.bf16.msra.mxu0 %v2676
        %3489 = vmatprep.subr.bf16.mxu0 %v2681
        %3490 = vmatpush1.bf16.msra.mxu0 %v2680
        %3491 = vmatprep.subr.bf16.mxu0 %v2685
        %3492 = vmatpush1.bf16.msra.mxu0 %v2684
        %3493 = vmatprep.subr.bf16.mxu0 %v2689
        %3494 = vmatpush1.bf16.msra.mxu0 %v2688
        %3495 = vmatprep.subr.bf16.mxu0 %v2693
        %3496 = vmatpush1.bf16.msra.mxu0 %v2692
        %3497 = vmatprep.subr.bf16.mxu0 %v2697
        %3498 = vmatpush1.bf16.msra.mxu0 %v2696
        %3499 = vmatprep.subr.bf16.mxu0 %v2701
        %3500 = vmatpush1.bf16.msra.mxu0 %v2700
        %3501 = vmatprep.subr.bf16.mxu0 %v2705
        %3502 = vmatpush1.bf16.msra.mxu0 %v2704
        %3503 = vmatprep.subr.bf16.mxu0 %v2709
        %3504 = vmatpush1.bf16.msra.mxu0 %v2708
        %3505 = vmatprep.subr.bf16.mxu0 %v2713
        %3506 = vmatpush1.bf16.msra.mxu0 %v2712
        %3507 = vmatprep.subr.bf16.mxu0 %v2717
        %3508 = vmatpush1.bf16.msra.mxu0 %v2716
        %3509 = vmatprep.subr.bf16.mxu0 %v2721
        %3510 = vmatpush1.bf16.msra.mxu0 %v2720
        %3511 = vmatprep.subr.bf16.mxu0 %v2725
        %3512 = vmatpush1.bf16.msra.mxu0 %v2724
        %3513 = vmatprep.subr.bf16.mxu0 %v2729
        %3514 = vmatpush1.bf16.msra.mxu0 %v2728
        %3515 = vmatprep.subr.bf16.mxu0 %v2733
        %3516 = vmatpush1.bf16.msra.mxu0 %v2732
        %3517 = vmatprep.subr.bf16.mxu0 %v2737
        %3518 = vmatpush1.bf16.msra.mxu0 %v2736
        %3519 = vmatprep.mubr.bf16.mxu0 %v1239
        %3520 = vmatmul.mubr.bf16.gmra.mrb[0].mxu0 %v1238
        %v3521 = vpop.f32.mrb[0].mxu0
        %v3522 = vadd.f32 %v3479, %v3521
        %v3523 = vpop.f32.mrb[0].mxu0
        %v3524 = vadd.f32 %v3481, %v3523
        %v3525 = vpop.f32.mrb[0].mxu0
        %v3526 = vadd.f32 %v3483, %v3525
        %v3527 = vpop.f32.mrb[0].mxu0
        %v3528 = vadd.f32 %v3485, %v3527
        %3529 = vdwg.mxu0
        %3530 = vmatprep.subr.bf16.mxu0 %v2741
        %3531 = vmatpush1.bf16.msra.mxu0 %v2740
        %3532 = vmatprep.subr.bf16.mxu0 %v2745
        %3533 = vmatpush1.bf16.msra.mxu0 %v2744
        %3534 = vmatprep.subr.bf16.mxu0 %v2749
        %3535 = vmatpush1.bf16.msra.mxu0 %v2748
        %3536 = vmatprep.subr.bf16.mxu0 %v2753
        %3537 = vmatpush1.bf16.msra.mxu0 %v2752
        %3538 = vmatprep.subr.bf16.mxu0 %v2757
        %3539 = vmatpush1.bf16.msra.mxu0 %v2756
        %3540 = vmatprep.subr.bf16.mxu0 %v2761
        %3541 = vmatpush1.bf16.msra.mxu0 %v2760
        %3542 = vmatprep.subr.bf16.mxu0 %v2765
        %3543 = vmatpush1.bf16.msra.mxu0 %v2764
        %3544 = vmatprep.subr.bf16.mxu0 %v2769
        %3545 = vmatpush1.bf16.msra.mxu0 %v2768
        %3546 = vmatprep.subr.bf16.mxu0 %v2773
        %3547 = vmatpush1.bf16.msra.mxu0 %v2772
        %3548 = vmatprep.subr.bf16.mxu0 %v2777
        %3549 = vmatpush1.bf16.msra.mxu0 %v2776
        %3550 = vmatprep.subr.bf16.mxu0 %v2781
        %3551 = vmatpush1.bf16.msra.mxu0 %v2780
        %3552 = vmatprep.subr.bf16.mxu0 %v2785
        %3553 = vmatpush1.bf16.msra.mxu0 %v2784
        %3554 = vmatprep.subr.bf16.mxu0 %v2789
        %3555 = vmatpush1.bf16.msra.mxu0 %v2788
        %3556 = vmatprep.subr.bf16.mxu0 %v2793
        %3557 = vmatpush1.bf16.msra.mxu0 %v2792
        %3558 = vmatprep.subr.bf16.mxu0 %v2797
        %3559 = vmatpush1.bf16.msra.mxu0 %v2796
        %3560 = vmatprep.subr.bf16.mxu0 %v2801
        %3561 = vmatpush1.bf16.msra.mxu0 %v2800
        %3562 = vmatprep.mubr.bf16.mxu0 %v1241
        %3563 = vmatmul.mubr.bf16.gmra.mrb[0].mxu0 %v1240
        %v3564 = vpop.f32.mrb[0].mxu0
        %v3565 = vadd.f32 %v3522, %v3564
        %v3566 = vpop.f32.mrb[0].mxu0
        %v3567 = vadd.f32 %v3524, %v3566
        %v3568 = vpop.f32.mrb[0].mxu0
        %v3569 = vadd.f32 %v3526, %v3568
        %v3570 = vpop.f32.mrb[0].mxu0
        %v3571 = vadd.f32 %v3528, %v3570
        %3572 = vdwg.mxu0
        %3573 = vmatprep.subr.bf16.mxu0 %v2805
        %3574 = vmatpush1.bf16.msra.mxu0 %v2804
        %3575 = vmatprep.subr.bf16.mxu0 %v2809
        %3576 = vmatpush1.bf16.msra.mxu0 %v2808
        %3577 = vmatprep.subr.bf16.mxu0 %v2813
        %3578 = vmatpush1.bf16.msra.mxu0 %v2812
        %3579 = vmatprep.subr.bf16.mxu0 %v2817
        %3580 = vmatpush1.bf16.msra.mxu0 %v2816
        %3581 = vmatprep.subr.bf16.mxu0 %v2821
        %3582 = vmatpush1.bf16.msra.mxu0 %v2820
        %3583 = vmatprep.subr.bf16.mxu0 %v2825
        %3584 = vmatpush1.bf16.msra.mxu0 %v2824
        %3585 = vmatprep.subr.bf16.mxu0 %v2829
        %3586 = vmatpush1.bf16.msra.mxu0 %v2828
        %3587 = vmatprep.subr.bf16.mxu0 %v2833
        %3588 = vmatpush1.bf16.msra.mxu0 %v2832
        %3589 = vmatprep.subr.bf16.mxu0 %v2837
        %3590 = vmatpush1.bf16.msra.mxu0 %v2836
        %3591 = vmatprep.subr.bf16.mxu0 %v2841
        %3592 = vmatpush1.bf16.msra.mxu0 %v2840
        %3593 = vmatprep.subr.bf16.mxu0 %v2845
        %3594 = vmatpush1.bf16.msra.mxu0 %v2844
        %3595 = vmatprep.subr.bf16.mxu0 %v2849
        %3596 = vmatpush1.bf16.msra.mxu0 %v2848
        %3597 = vmatprep.subr.bf16.mxu0 %v2853
        %3598 = vmatpush1.bf16.msra.mxu0 %v2852
        %3599 = vmatprep.subr.bf16.mxu0 %v2857
        %3600 = vmatpush1.bf16.msra.mxu0 %v2856
        %3601 = vmatprep.subr.bf16.mxu0 %v2861
        %3602 = vmatpush1.bf16.msra.mxu0 %v2860
        %3603 = vmatprep.subr.bf16.mxu0 %v2865
        %3604 = vmatpush1.bf16.msra.mxu0 %v2864
        %3605 = vmatprep.mubr.bf16.mxu0 %v1243
        %3606 = vmatmul.mubr.bf16.gmra.mrb[0].mxu0 %v1242
        %v3607 = vpop.f32.mrb[0].mxu0
        %v3608 = vadd.f32 %v3565, %v3607
        %v3609 = vpop.f32.mrb[0].mxu0
        %v3610 = vadd.f32 %v3567, %v3609
        %v3611 = vpop.f32.mrb[0].mxu0
        %v3612 = vadd.f32 %v3569, %v3611
        %v3613 = vpop.f32.mrb[0].mxu0
        %v3614 = vadd.f32 %v3571, %v3613
        %3615 = vdwg.mxu0
        %v3616 = vmax.f32 %v3393, 0.0
        %v3617 = vmax.f32 %v3395, 0.0
        %v3618 = vmax.f32 %v3608, 0.0
        %v3619 = vmax.f32 %v3610, 0.0
        %v3620 = vmax.f32 %v3397, 0.0
        %v3621 = vmax.f32 %v3399, 0.0
        %v3622 = vmax.f32 %v3612, 0.0
        %v3623 = vmax.f32 %v3614, 0.0
        %v3624 = vpack.c.bf16 %v3620, %v3616
        %v3625 = vpack.c.bf16 %v3621, %v3617
        %v3626 = vpack.c.bf16 %v3622, %v3618
        %v3627 = vpack.c.bf16 %v3623, %v3619
        %v3628 = vld [vmem:[#allocation11] sm:$0xff]
        %v3629 = vld [vmem:[#allocation11 + $0x8] sm:$0xff]
        %v3630 = vld [vmem:[#allocation11 + $0x10] sm:$0xff]
        %v3631 = vld [vmem:[#allocation11 + $0x18] sm:$0xff]
        %v3632 = vld [vmem:[#allocation11 + $0x20] sm:$0xff]
        %v3633 = vld [vmem:[#allocation11 + $0x28] sm:$0xff]
        %v3634 = vld [vmem:[#allocation11 + $0x30] sm:$0xff]
        %v3635 = vld [vmem:[#allocation11 + $0x38] sm:$0xff]
        %v3636 = vld [vmem:[#allocation11 + $0x40] sm:$0xff]
        %v3637 = vld [vmem:[#allocation11 + $0x48] sm:$0xff]
        %v3638 = vld [vmem:[#allocation11 + $0x50] sm:$0xff]
        %v3639 = vld [vmem:[#allocation11 + $0x58] sm:$0xff]
        %v3640 = vld [vmem:[#allocation11 + $0x60] sm:$0xff]
        %v3641 = vld [vmem:[#allocation11 + $0x68] sm:$0xff]
        %v3642 = vld [vmem:[#allocation11 + $0x70] sm:$0xff]
        %v3643 = vld [vmem:[#allocation11 + $0x78] sm:$0xff]
        %v3644 = vld [vmem:[#allocation11 + $0x80] sm:$0xff]
        %v3645 = vld [vmem:[#allocation11 + $0x88] sm:$0xff]
        %v3646 = vld [vmem:[#allocation11 + $0x90] sm:$0xff]
        %v3647 = vld [vmem:[#allocation11 + $0x98] sm:$0xff]
        %v3648 = vld [vmem:[#allocation11 + $0xa0] sm:$0xff]
        %v3649 = vld [vmem:[#allocation11 + $0xa8] sm:$0xff]
        %v3650 = vld [vmem:[#allocation11 + $0xb0] sm:$0xff]
        %v3651 = vld [vmem:[#allocation11 + $0xb8] sm:$0xff]
        %v3652 = vld [vmem:[#allocation11 + $0xc0] sm:$0xff]
        %v3653 = vld [vmem:[#allocation11 + $0xc8] sm:$0xff]
        %v3654 = vld [vmem:[#allocation11 + $0xd0] sm:$0xff]
        %v3655 = vld [vmem:[#allocation11 + $0xd8] sm:$0xff]
        %v3656 = vld [vmem:[#allocation11 + $0xe0] sm:$0xff]
        %v3657 = vld [vmem:[#allocation11 + $0xe8] sm:$0xff]
        %v3658 = vld [vmem:[#allocation11 + $0xf0] sm:$0xff]
        %v3659 = vld [vmem:[#allocation11 + $0xf8] sm:$0xff]
        %v3660 = vld [vmem:[#allocation11 + $0x100] sm:$0xff]
        %v3661 = vld [vmem:[#allocation11 + $0x108] sm:$0xff]
        %v3662 = vld [vmem:[#allocation11 + $0x110] sm:$0xff]
        %v3663 = vld [vmem:[#allocation11 + $0x118] sm:$0xff]
        %v3664 = vld [vmem:[#allocation11 + $0x120] sm:$0xff]
        %v3665 = vld [vmem:[#allocation11 + $0x128] sm:$0xff]
        %v3666 = vld [vmem:[#allocation11 + $0x130] sm:$0xff]
        %v3667 = vld [vmem:[#allocation11 + $0x138] sm:$0xff]
        %v3668 = vld [vmem:[#allocation11 + $0x140] sm:$0xff]
        %v3669 = vld [vmem:[#allocation11 + $0x148] sm:$0xff]
        %v3670 = vld [vmem:[#allocation11 + $0x150] sm:$0xff]
        %v3671 = vld [vmem:[#allocation11 + $0x158] sm:$0xff]
        %v3672 = vld [vmem:[#allocation11 + $0x160] sm:$0xff]
        %v3673 = vld [vmem:[#allocation11 + $0x168] sm:$0xff]
        %v3674 = vld [vmem:[#allocation11 + $0x170] sm:$0xff]
        %v3675 = vld [vmem:[#allocation11 + $0x178] sm:$0xff]
        %v3676 = vld [vmem:[#allocation11 + $0x180] sm:$0xff]
        %v3677 = vld [vmem:[#allocation11 + $0x188] sm:$0xff]
        %v3678 = vld [vmem:[#allocation11 + $0x190] sm:$0xff]
        %v3679 = vld [vmem:[#allocation11 + $0x198] sm:$0xff]
        %v3680 = vld [vmem:[#allocation11 + $0x1a0] sm:$0xff]
        %v3681 = vld [vmem:[#allocation11 + $0x1a8] sm:$0xff]
        %v3682 = vld [vmem:[#allocation11 + $0x1b0] sm:$0xff]
        %v3683 = vld [vmem:[#allocation11 + $0x1b8] sm:$0xff]
        %v3684 = vld [vmem:[#allocation11 + $0x1c0] sm:$0xff]
        %v3685 = vld [vmem:[#allocation11 + $0x1c8] sm:$0xff]
        %v3686 = vld [vmem:[#allocation11 + $0x1d0] sm:$0xff]
        %v3687 = vld [vmem:[#allocation11 + $0x1d8] sm:$0xff]
        %v3688 = vld [vmem:[#allocation11 + $0x1e0] sm:$0xff]
        %v3689 = vld [vmem:[#allocation11 + $0x1e8] sm:$0xff]
        %v3690 = vld [vmem:[#allocation11 + $0x1f0] sm:$0xff]
        %v3691 = vld [vmem:[#allocation11 + $0x1f8] sm:$0xff]
        %v3692 = vld [vmem:[#allocation13] sm:$0x3]
        %v3694 = vlaneseq
        %v3695 = vshrl.u32 %v3694, 7
        %v3696 = vsub.s32 0, %v3695
        %v3697 = vrot.slane %v3692, %v3696
        %v3698 = vlaneseq
        %v3699 = vshrl.u32 %v3698, 7
        %v3700 = vsub.s32 1, %v3699
        %v3701 = vrot.slane %v3692, %v3700
        %v3768 = vunpack.c.l.b16 %v3628
        %v3769 = vunpack.c.h.b16 %v3628
        %v3770 = vunpack.c.l.b16 %v3629
        %v3771 = vunpack.c.h.b16 %v3629
        %v3772 = vunpack.c.l.b16 %v3630
        %v3773 = vunpack.c.h.b16 %v3630
        %v3774 = vunpack.c.l.b16 %v3631
        %v3775 = vunpack.c.h.b16 %v3631
        %v3776 = vunpack.c.l.b16 %v3632
        %v3777 = vunpack.c.h.b16 %v3632
        %v3778 = vunpack.c.l.b16 %v3633
        %v3779 = vunpack.c.h.b16 %v3633
        %v3780 = vunpack.c.l.b16 %v3634
        %v3781 = vunpack.c.h.b16 %v3634
        %v3782 = vunpack.c.l.b16 %v3635
        %v3783 = vunpack.c.h.b16 %v3635
        %v3784 = vunpack.c.l.b16 %v3636
        %v3785 = vunpack.c.h.b16 %v3636
        %v3786 = vunpack.c.l.b16 %v3637
        %v3787 = vunpack.c.h.b16 %v3637
        %v3788 = vunpack.c.l.b16 %v3638
        %v3789 = vunpack.c.h.b16 %v3638
        %v3790 = vunpack.c.l.b16 %v3639
        %v3791 = vunpack.c.h.b16 %v3639
        %v3792 = vunpack.c.l.b16 %v3640
        %v3793 = vunpack.c.h.b16 %v3640
        %v3794 = vunpack.c.l.b16 %v3641
        %v3795 = vunpack.c.h.b16 %v3641
        %v3796 = vunpack.c.l.b16 %v3642
        %v3797 = vunpack.c.h.b16 %v3642
        %v3798 = vunpack.c.l.b16 %v3643
        %v3799 = vunpack.c.h.b16 %v3643
        %v3800 = vunpack.c.l.b16 %v3644
        %v3801 = vunpack.c.h.b16 %v3644
        %v3802 = vunpack.c.l.b16 %v3645
        %v3803 = vunpack.c.h.b16 %v3645
        %v3804 = vunpack.c.l.b16 %v3646
        %v3805 = vunpack.c.h.b16 %v3646
        %v3806 = vunpack.c.l.b16 %v3647
        %v3807 = vunpack.c.h.b16 %v3647
        %v3808 = vunpack.c.l.b16 %v3648
        %v3809 = vunpack.c.h.b16 %v3648
        %v3810 = vunpack.c.l.b16 %v3649
        %v3811 = vunpack.c.h.b16 %v3649
        %v3812 = vunpack.c.l.b16 %v3650
        %v3813 = vunpack.c.h.b16 %v3650
        %v3814 = vunpack.c.l.b16 %v3651
        %v3815 = vunpack.c.h.b16 %v3651
        %v3816 = vunpack.c.l.b16 %v3652
        %v3817 = vunpack.c.h.b16 %v3652
        %v3818 = vunpack.c.l.b16 %v3653
        %v3819 = vunpack.c.h.b16 %v3653
        %v3820 = vunpack.c.l.b16 %v3654
        %v3821 = vunpack.c.h.b16 %v3654
        %v3822 = vunpack.c.l.b16 %v3655
        %v3823 = vunpack.c.h.b16 %v3655
        %v3824 = vunpack.c.l.b16 %v3656
        %v3825 = vunpack.c.h.b16 %v3656
        %v3826 = vunpack.c.l.b16 %v3657
        %v3827 = vunpack.c.h.b16 %v3657
        %v3828 = vunpack.c.l.b16 %v3658
        %v3829 = vunpack.c.h.b16 %v3658
        %v3830 = vunpack.c.l.b16 %v3659
        %v3831 = vunpack.c.h.b16 %v3659
        %v3832 = vunpack.c.l.b16 %v3660
        %v3833 = vunpack.c.h.b16 %v3660
        %v3834 = vunpack.c.l.b16 %v3661
        %v3835 = vunpack.c.h.b16 %v3661
        %v3836 = vunpack.c.l.b16 %v3662
        %v3837 = vunpack.c.h.b16 %v3662
        %v3838 = vunpack.c.l.b16 %v3663
        %v3839 = vunpack.c.h.b16 %v3663
        %v3840 = vunpack.c.l.b16 %v3664
        %v3841 = vunpack.c.h.b16 %v3664
        %v3842 = vunpack.c.l.b16 %v3665
        %v3843 = vunpack.c.h.b16 %v3665
        %v3844 = vunpack.c.l.b16 %v3666
        %v3845 = vunpack.c.h.b16 %v3666
        %v3846 = vunpack.c.l.b16 %v3667
        %v3847 = vunpack.c.h.b16 %v3667
        %v3848 = vunpack.c.l.b16 %v3668
        %v3849 = vunpack.c.h.b16 %v3668
        %v3850 = vunpack.c.l.b16 %v3669
        %v3851 = vunpack.c.h.b16 %v3669
        %v3852 = vunpack.c.l.b16 %v3670
        %v3853 = vunpack.c.h.b16 %v3670
        %v3854 = vunpack.c.l.b16 %v3671
        %v3855 = vunpack.c.h.b16 %v3671
        %v3856 = vunpack.c.l.b16 %v3672
        %v3857 = vunpack.c.h.b16 %v3672
        %v3858 = vunpack.c.l.b16 %v3673
        %v3859 = vunpack.c.h.b16 %v3673
        %v3860 = vunpack.c.l.b16 %v3674
        %v3861 = vunpack.c.h.b16 %v3674
        %v3862 = vunpack.c.l.b16 %v3675
        %v3863 = vunpack.c.h.b16 %v3675
        %v3864 = vunpack.c.l.b16 %v3676
        %v3865 = vunpack.c.h.b16 %v3676
        %v3866 = vunpack.c.l.b16 %v3677
        %v3867 = vunpack.c.h.b16 %v3677
        %v3868 = vunpack.c.l.b16 %v3678
        %v3869 = vunpack.c.h.b16 %v3678
        %v3870 = vunpack.c.l.b16 %v3679
        %v3871 = vunpack.c.h.b16 %v3679
        %v3872 = vunpack.c.l.b16 %v3680
        %v3873 = vunpack.c.h.b16 %v3680
        %v3874 = vunpack.c.l.b16 %v3681
        %v3875 = vunpack.c.h.b16 %v3681
        %v3876 = vunpack.c.l.b16 %v3682
        %v3877 = vunpack.c.h.b16 %v3682
        %v3878 = vunpack.c.l.b16 %v3683
        %v3879 = vunpack.c.h.b16 %v3683
        %v3880 = vunpack.c.l.b16 %v3684
        %v3881 = vunpack.c.h.b16 %v3684
        %v3882 = vunpack.c.l.b16 %v3685
        %v3883 = vunpack.c.h.b16 %v3685
        %v3884 = vunpack.c.l.b16 %v3686
        %v3885 = vunpack.c.h.b16 %v3686
        %v3886 = vunpack.c.l.b16 %v3687
        %v3887 = vunpack.c.h.b16 %v3687
        %v3888 = vunpack.c.l.b16 %v3688
        %v3889 = vunpack.c.h.b16 %v3688
        %v3890 = vunpack.c.l.b16 %v3689
        %v3891 = vunpack.c.h.b16 %v3689
        %v3892 = vunpack.c.l.b16 %v3690
        %v3893 = vunpack.c.h.b16 %v3690
        %v3894 = vunpack.c.l.b16 %v3691
        %v3895 = vunpack.c.h.b16 %v3691
        %v3896 = vpack.c.b16 %v3770, %v3768
        %v3897 = vpack.c.b16 %v3771, %v3769
        %v3898 = vpack.c.b16 %v3774, %v3772
        %v3899 = vpack.c.b16 %v3775, %v3773
        %v3900 = vpack.c.b16 %v3778, %v3776
        %v3901 = vpack.c.b16 %v3779, %v3777
        %v3902 = vpack.c.b16 %v3782, %v3780
        %v3903 = vpack.c.b16 %v3783, %v3781
        %v3904 = vpack.c.b16 %v3786, %v3784
        %v3905 = vpack.c.b16 %v3787, %v3785
        %v3906 = vpack.c.b16 %v3790, %v3788
        %v3907 = vpack.c.b16 %v3791, %v3789
        %v3908 = vpack.c.b16 %v3794, %v3792
        %v3909 = vpack.c.b16 %v3795, %v3793
        %v3910 = vpack.c.b16 %v3798, %v3796
        %v3911 = vpack.c.b16 %v3799, %v3797
        %v3912 = vpack.c.b16 %v3802, %v3800
        %v3913 = vpack.c.b16 %v3803, %v3801
        %v3914 = vpack.c.b16 %v3806, %v3804
        %v3915 = vpack.c.b16 %v3807, %v3805
        %v3916 = vpack.c.b16 %v3810, %v3808
        %v3917 = vpack.c.b16 %v3811, %v3809
        %v3918 = vpack.c.b16 %v3814, %v3812
        %v3919 = vpack.c.b16 %v3815, %v3813
        %v3920 = vpack.c.b16 %v3818, %v3816
        %v3921 = vpack.c.b16 %v3819, %v3817
        %v3922 = vpack.c.b16 %v3822, %v3820
        %v3923 = vpack.c.b16 %v3823, %v3821
        %v3924 = vpack.c.b16 %v3826, %v3824
        %v3925 = vpack.c.b16 %v3827, %v3825
        %v3926 = vpack.c.b16 %v3830, %v3828
        %v3927 = vpack.c.b16 %v3831, %v3829
        %v3928 = vpack.c.b16 %v3834, %v3832
        %v3929 = vpack.c.b16 %v3835, %v3833
        %v3930 = vpack.c.b16 %v3838, %v3836
        %v3931 = vpack.c.b16 %v3839, %v3837
        %v3932 = vpack.c.b16 %v3842, %v3840
        %v3933 = vpack.c.b16 %v3843, %v3841
        %v3934 = vpack.c.b16 %v3846, %v3844
        %v3935 = vpack.c.b16 %v3847, %v3845
        %v3936 = vpack.c.b16 %v3850, %v3848
        %v3937 = vpack.c.b16 %v3851, %v3849
        %v3938 = vpack.c.b16 %v3854, %v3852
        %v3939 = vpack.c.b16 %v3855, %v3853
        %v3940 = vpack.c.b16 %v3858, %v3856
        %v3941 = vpack.c.b16 %v3859, %v3857
        %v3942 = vpack.c.b16 %v3862, %v3860
        %v3943 = vpack.c.b16 %v3863, %v3861
        %v3944 = vpack.c.b16 %v3866, %v3864
        %v3945 = vpack.c.b16 %v3867, %v3865
        %v3946 = vpack.c.b16 %v3870, %v3868
        %v3947 = vpack.c.b16 %v3871, %v3869
        %v3948 = vpack.c.b16 %v3874, %v3872
        %v3949 = vpack.c.b16 %v3875, %v3873
        %v3950 = vpack.c.b16 %v3878, %v3876
        %v3951 = vpack.c.b16 %v3879, %v3877
        %v3952 = vpack.c.b16 %v3882, %v3880
        %v3953 = vpack.c.b16 %v3883, %v3881
        %v3954 = vpack.c.b16 %v3886, %v3884
        %v3955 = vpack.c.b16 %v3887, %v3885
        %v3956 = vpack.c.b16 %v3890, %v3888
        %v3957 = vpack.c.b16 %v3891, %v3889
        %v3958 = vpack.c.b16 %v3894, %v3892
        %v3959 = vpack.c.b16 %v3895, %v3893
        %4024 = vmatprep.subr.bf16.mxu0 %v3897
        %4025 = vmatpush1.bf16.msra.mxu0 %v3896
        %4026 = vmatprep.subr.bf16.mxu0 %v3899
        %4027 = vmatpush1.bf16.msra.mxu0 %v3898
        %4028 = vmatprep.subr.bf16.mxu0 %v3901
        %4029 = vmatpush1.bf16.msra.mxu0 %v3900
        %4030 = vmatprep.subr.bf16.mxu0 %v3903
        %4031 = vmatpush1.bf16.msra.mxu0 %v3902
        %4032 = vmatprep.subr.bf16.mxu0 %v3905
        %4033 = vmatpush1.bf16.msra.mxu0 %v3904
        %4034 = vmatprep.subr.bf16.mxu0 %v3907
        %4035 = vmatpush1.bf16.msra.mxu0 %v3906
        %4036 = vmatprep.subr.bf16.mxu0 %v3909
        %4037 = vmatpush1.bf16.msra.mxu0 %v3908
        %4038 = vmatprep.subr.bf16.mxu0 %v3911
        %4039 = vmatpush1.bf16.msra.mxu0 %v3910
        %4040 = vmatprep.subr.bf16.mxu0 %v3913
        %4041 = vmatpush1.bf16.msra.mxu0 %v3912
        %4042 = vmatprep.subr.bf16.mxu0 %v3915
        %4043 = vmatpush1.bf16.msra.mxu0 %v3914
        %4044 = vmatprep.subr.bf16.mxu0 %v3917
        %4045 = vmatpush1.bf16.msra.mxu0 %v3916
        %4046 = vmatprep.subr.bf16.mxu0 %v3919
        %4047 = vmatpush1.bf16.msra.mxu0 %v3918
        %4048 = vmatprep.subr.bf16.mxu0 %v3921
        %4049 = vmatpush1.bf16.msra.mxu0 %v3920
        %4050 = vmatprep.subr.bf16.mxu0 %v3923
        %4051 = vmatpush1.bf16.msra.mxu0 %v3922
        %4052 = vmatprep.subr.bf16.mxu0 %v3925
        %4053 = vmatpush1.bf16.msra.mxu0 %v3924
        %4054 = vmatprep.subr.bf16.mxu0 %v3927
        %4055 = vmatpush1.bf16.msra.mxu0 %v3926
        %4056 = vmatprep.mubr.bf16.mxu0 %v3625
        %4057 = vmatmul.mubr.bf16.gmra.mrb[0].mxu0 %v3624
        %v4058 = vpop.f32.mrb[0].mxu0
        %v4059 = vadd.f32 %v3697, %v4058
        %v4060 = vpop.f32.mrb[0].mxu0
        %v4061 = vadd.f32 %v3701, %v4060
        %v4062 = vpop.f32.mrb[0].mxu0
        %v4063 = vadd.f32 %v3697, %v4062
        %v4064 = vpop.f32.mrb[0].mxu0
        %v4065 = vadd.f32 %v3701, %v4064
        %4066 = vdwg.mxu0
        %4067 = vmatprep.subr.bf16.mxu0 %v3929
        %4068 = vmatpush1.bf16.msra.mxu0 %v3928
        %4069 = vmatprep.subr.bf16.mxu0 %v3931
        %4070 = vmatpush1.bf16.msra.mxu0 %v3930
        %4071 = vmatprep.subr.bf16.mxu0 %v3933
        %4072 = vmatpush1.bf16.msra.mxu0 %v3932
        %4073 = vmatprep.subr.bf16.mxu0 %v3935
        %4074 = vmatpush1.bf16.msra.mxu0 %v3934
        %4075 = vmatprep.subr.bf16.mxu0 %v3937
        %4076 = vmatpush1.bf16.msra.mxu0 %v3936
        %4077 = vmatprep.subr.bf16.mxu0 %v3939
        %4078 = vmatpush1.bf16.msra.mxu0 %v3938
        %4079 = vmatprep.subr.bf16.mxu0 %v3941
        %4080 = vmatpush1.bf16.msra.mxu0 %v3940
        %4081 = vmatprep.subr.bf16.mxu0 %v3943
        %4082 = vmatpush1.bf16.msra.mxu0 %v3942
        %4083 = vmatprep.subr.bf16.mxu0 %v3945
        %4084 = vmatpush1.bf16.msra.mxu0 %v3944
        %4085 = vmatprep.subr.bf16.mxu0 %v3947
        %4086 = vmatpush1.bf16.msra.mxu0 %v3946
        %4087 = vmatprep.subr.bf16.mxu0 %v3949
        %4088 = vmatpush1.bf16.msra.mxu0 %v3948
        %4089 = vmatprep.subr.bf16.mxu0 %v3951
        %4090 = vmatpush1.bf16.msra.mxu0 %v3950
        %4091 = vmatprep.subr.bf16.mxu0 %v3953
        %4092 = vmatpush1.bf16.msra.mxu0 %v3952
        %4093 = vmatprep.subr.bf16.mxu0 %v3955
        %4094 = vmatpush1.bf16.msra.mxu0 %v3954
        %4095 = vmatprep.subr.bf16.mxu0 %v3957
        %4096 = vmatpush1.bf16.msra.mxu0 %v3956
        %4097 = vmatprep.subr.bf16.mxu0 %v3959
        %4098 = vmatpush1.bf16.msra.mxu0 %v3958
        %4099 = vmatprep.mubr.bf16.mxu0 %v3627
        %4100 = vmatmul.mubr.bf16.gmra.mrb[0].mxu0 %v3626
        %v4101 = vpop.f32.mrb[0].mxu0
        %v4102 = vadd.f32 %v4059, %v4101
        %v4103 = vpop.f32.mrb[0].mxu0
        %v4104 = vadd.f32 %v4061, %v4103
        %v4105 = vpop.f32.mrb[0].mxu0
        %v4106 = vadd.f32 %v4063, %v4105
        %v4107 = vpop.f32.mrb[0].mxu0
        %v4108 = vadd.f32 %v4065, %v4107
        %4109 = vdwg.mxu0
        %v4110 = vmax.f32 %v4102, 0.0
        %v4111 = vmax.f32 %v4104, 0.0
        %v4112 = vmax.f32 %v4106, 0.0
        %v4113 = vmax.f32 %v4108, 0.0
        %v4114 = vpack.c.bf16 %v4112, %v4110
        %v4115 = vpack.c.bf16 %v4113, %v4111
        %v4116 = vld [vmem:[#allocation14] sm:$0xf]
        %v4117 = vld [vmem:[#allocation14 + $0x4] sm:$0xf]
        %v4118 = vld [vmem:[#allocation14 + $0x8] sm:$0xf]
        %v4119 = vld [vmem:[#allocation14 + $0xc] sm:$0xf]
        %v4120 = vld [vmem:[#allocation14 + $0x10] sm:$0xf]
        %v4121 = vld [vmem:[#allocation14 + $0x14] sm:$0xf]
        %v4122 = vld [vmem:[#allocation14 + $0x18] sm:$0xf]
        %v4123 = vld [vmem:[#allocation14 + $0x1c] sm:$0xf]
        %v4124 = vld [vmem:[#allocation14 + $0x20] sm:$0xf]
        %v4125 = vld [vmem:[#allocation14 + $0x24] sm:$0xf]
        %v4126 = vld [vmem:[#allocation14 + $0x28] sm:$0xf]
        %v4127 = vld [vmem:[#allocation14 + $0x2c] sm:$0xf]
        %v4128 = vld [vmem:[#allocation14 + $0x30] sm:$0xf]
        %v4129 = vld [vmem:[#allocation14 + $0x34] sm:$0xf]
        %v4130 = vld [vmem:[#allocation14 + $0x38] sm:$0xf]
        %v4131 = vld [vmem:[#allocation14 + $0x3c] sm:$0xf]
        %v4132 = vld [vmem:[#allocation14 + $0x40] sm:$0xf]
        %v4133 = vld [vmem:[#allocation14 + $0x44] sm:$0xf]
        %v4134 = vld [vmem:[#allocation14 + $0x48] sm:$0xf]
        %v4135 = vld [vmem:[#allocation14 + $0x4c] sm:$0xf]
        %v4136 = vld [vmem:[#allocation14 + $0x50] sm:$0xf]
        %v4137 = vld [vmem:[#allocation14 + $0x54] sm:$0xf]
        %v4138 = vld [vmem:[#allocation14 + $0x58] sm:$0xf]
        %v4139 = vld [vmem:[#allocation14 + $0x5c] sm:$0xf]
        %v4140 = vld [vmem:[#allocation14 + $0x60] sm:$0xf]
        %v4141 = vld [vmem:[#allocation14 + $0x64] sm:$0xf]
        %v4142 = vld [vmem:[#allocation14 + $0x68] sm:$0xf]
        %v4143 = vld [vmem:[#allocation14 + $0x6c] sm:$0xf]
        %v4144 = vld [vmem:[#allocation14 + $0x70] sm:$0xf]
        %v4145 = vld [vmem:[#allocation14 + $0x74] sm:$0xf]
        %v4146 = vld [vmem:[#allocation14 + $0x78] sm:$0xf]
        %v4147 = vld [vmem:[#allocation14 + $0x7c] sm:$0xf]
        %v4148 = vld [vmem:[#allocation16] sm:$0x1]
        %v4150 = vlaneseq
        %v4151 = vshrl.u32 %v4150, 7
        %v4152 = vsub.s32 0, %v4151
        %v4153 = vrot.slane %v4148, %v4152
        %v4187 = vunpack.c.l.b16 %v4116
        %v4188 = vunpack.c.l.b16 %v4117
        %v4189 = vunpack.c.l.b16 %v4118
        %v4190 = vunpack.c.l.b16 %v4119
        %v4191 = vunpack.c.l.b16 %v4120
        %v4192 = vunpack.c.l.b16 %v4121
        %v4193 = vunpack.c.l.b16 %v4122
        %v4194 = vunpack.c.l.b16 %v4123
        %v4195 = vunpack.c.l.b16 %v4124
        %v4196 = vunpack.c.l.b16 %v4125
        %v4197 = vunpack.c.l.b16 %v4126
        %v4198 = vunpack.c.l.b16 %v4127
        %v4199 = vunpack.c.l.b16 %v4128
        %v4200 = vunpack.c.l.b16 %v4129
        %v4201 = vunpack.c.l.b16 %v4130
        %v4202 = vunpack.c.l.b16 %v4131
        %v4203 = vunpack.c.l.b16 %v4132
        %v4204 = vunpack.c.l.b16 %v4133
        %v4205 = vunpack.c.l.b16 %v4134
        %v4206 = vunpack.c.l.b16 %v4135
        %v4207 = vunpack.c.l.b16 %v4136
        %v4208 = vunpack.c.l.b16 %v4137
        %v4209 = vunpack.c.l.b16 %v4138
        %v4210 = vunpack.c.l.b16 %v4139
        %v4211 = vunpack.c.l.b16 %v4140
        %v4212 = vunpack.c.l.b16 %v4141
        %v4213 = vunpack.c.l.b16 %v4142
        %v4214 = vunpack.c.l.b16 %v4143
        %v4215 = vunpack.c.l.b16 %v4144
        %v4216 = vunpack.c.l.b16 %v4145
        %v4217 = vunpack.c.l.b16 %v4146
        %v4218 = vunpack.c.l.b16 %v4147
        %v4219 = vpack.c.b16 %v4188, %v4187
        %v4220 = vpack.c.b16 %v4190, %v4189
        %v4221 = vpack.c.b16 %v4192, %v4191
        %v4222 = vpack.c.b16 %v4194, %v4193
        %v4223 = vpack.c.b16 %v4196, %v4195
        %v4224 = vpack.c.b16 %v4198, %v4197
        %v4225 = vpack.c.b16 %v4200, %v4199
        %v4226 = vpack.c.b16 %v4202, %v4201
        %v4227 = vpack.c.b16 %v4204, %v4203
        %v4228 = vpack.c.b16 %v4206, %v4205
        %v4229 = vpack.c.b16 %v4208, %v4207
        %v4230 = vpack.c.b16 %v4210, %v4209
        %v4231 = vpack.c.b16 %v4212, %v4211
        %v4232 = vpack.c.b16 %v4214, %v4213
        %v4233 = vpack.c.b16 %v4216, %v4215
        %v4234 = vpack.c.b16 %v4218, %v4217
        %4251 = vmatprep.subr.bf16.mxu0 0
        %4252 = vmatpush1.bf16.msra.mxu0 %v4219
        %4253 = vmatprep.subr.bf16.mxu0 0
        %4254 = vmatpush1.bf16.msra.mxu0 %v4220
        %4255 = vmatprep.subr.bf16.mxu0 0
        %4256 = vmatpush1.bf16.msra.mxu0 %v4221
        %4257 = vmatprep.subr.bf16.mxu0 0
        %4258 = vmatpush1.bf16.msra.mxu0 %v4222
        %4259 = vmatprep.subr.bf16.mxu0 0
        %4260 = vmatpush1.bf16.msra.mxu0 %v4223
        %4261 = vmatprep.subr.bf16.mxu0 0
        %4262 = vmatpush1.bf16.msra.mxu0 %v4224
        %4263 = vmatprep.subr.bf16.mxu0 0
        %4264 = vmatpush1.bf16.msra.mxu0 %v4225
        %4265 = vmatprep.subr.bf16.mxu0 0
        %4266 = vmatpush1.bf16.msra.mxu0 %v4226
        %4267 = vmatprep.subr.bf16.mxu0 0
        %4268 = vmatpush1.bf16.msra.mxu0 %v4227
        %4269 = vmatprep.subr.bf16.mxu0 0
        %4270 = vmatpush1.bf16.msra.mxu0 %v4228
        %4271 = vmatprep.subr.bf16.mxu0 0
        %4272 = vmatpush1.bf16.msra.mxu0 %v4229
        %4273 = vmatprep.subr.bf16.mxu0 0
        %4274 = vmatpush1.bf16.msra.mxu0 %v4230
        %4275 = vmatprep.subr.bf16.mxu0 0
        %4276 = vmatpush1.bf16.msra.mxu0 %v4231
        %4277 = vmatprep.subr.bf16.mxu0 0
        %4278 = vmatpush1.bf16.msra.mxu0 %v4232
        %4279 = vmatprep.subr.bf16.mxu0 0
        %4280 = vmatpush1.bf16.msra.mxu0 %v4233
        %4281 = vmatprep.subr.bf16.mxu0 0
        %4282 = vmatpush1.bf16.msra.mxu0 %v4234
        %4283 = vmatprep.mubr.bf16.mxu0 %v4115
        %4284 = vmatmul.mubr.bf16.gmra.mrb[0].mxu0 %v4114
        %v4285 = vpop.f32.mrb[0].mxu0
        %v4286 = vadd.f32 %v4153, %v4285
        %v4287 = vpop.f32.mrb[0].mxu0
        %v4288 = vpop.f32.mrb[0].mxu0
        %v4289 = vadd.f32 %v4153, %v4288
        %v4290 = vpop.f32.mrb[0].mxu0
        %4291 = vdwg.mxu0
        %4292 = vst [vmem:[%s458] sm:$0xff] %v4286
        %4293 = vst [vmem:[%s458 + $0x8] sm:$0xff] %v4289
        %s4294 = sand.u32 %s232, 1
        %s4295 = scalar_lea.sflag [#allocation4], %s4294
        %s4296 = sand.u32 %s232, 1
        %s4297 = smul.addr %s4296, 16
        %s4298 = scalar_lea.vmem [#allocation17], %s4297
        // Predicated region
        $region93: #{tpu_custom_call.1} parent=55 // pred_check
          %p4299 = pneg %p242
        $region94: #{tpu_custom_call.1} parent=55 // pred_check_branch
          %4301 = sbr.rel (%p4299) target = $region96
        $region95: #{tpu_custom_call.1} parent=55 // pred_region
          %s4302 = smul.u32 2, %s30
          %s4304 = ssub.s32 256, 256
          %4305 = vsyncadd %s4295, %s4304
          %s4306 = smul.addr %s4302, 128
          %s4307 = scalar_lea.hbm %s9, %s4306
          %s4308 = sshll.u32 %s4298, 4
          %s4309 = int_to_ptr.vmem [resolvable:$true] %s4308
          %4314 = dma.vmem_to_hbm [thread:$0]  %s4309, 256, %s4307, %s4295, 128, 128, 8
        $region96: #{tpu_custom_call.1} parent=55 // pred_fallthru
          _
      $region56: #{tpu_custom_call.1} parent=5 // pred_fallthru
        _
      %p4315 = scmp.le.s32.totalorder 2, %s25
      // Predicated region
      $region97: #{tpu_custom_call.1} parent=5 // pred_check
        %p4316 = pneg %p4315
      $region98: #{tpu_custom_call.1} parent=5 // pred_check_branch
        %4318 = sbr.rel (%p4316) target = $region100
      $region99: #{tpu_custom_call.1} parent=5 // pred_region
        %s4319 = ssub.s32 %s25, 2
        // Predicated region
        $region101: #{tpu_custom_call.1} parent=99 // pred_check
          %p4320 = pneg %p248
        $region102: #{tpu_custom_call.1} parent=99 // pred_check_branch
          %4322 = sbr.rel (%p4320) target = $region104
        $region103: #{tpu_custom_call.1} parent=99 // pred_region
          %s4323 = sand.u32 %s233, 1
          %s4324 = scalar_lea.sflag [#allocation4], %s4323
          %s4325 = sand.u32 %s233, 1
          %s4326 = smul.addr %s4325, 16
          %s4327 = scalar_lea.vmem [#allocation17], %s4326
          %4328 = dma.done %s4324, 256
        $region104: #{tpu_custom_call.1} parent=99 // pred_fallthru
          _
      $region100: #{tpu_custom_call.1} parent=5 // pred_fallthru
        _
    $region6: #{tpu_custom_call.1} parent=1 // loop_footer
      %s29 = sadd.s32 1, %s25
    $region7: #{tpu_custom_call.1} parent=1 // loop_footer_branch
      %24 = sbr.rel target = $region3
    $region8: #{tpu_custom_call.1} parent=1 // loop_exit
      _
    %4329 = vsyncpa [#allocation3], 1
    %s4330 = scalar_lea.sflag [#allocation3], 1
    %4331 = vsyncpa %s4330, 1
    %4332 = vsyncpa [#allocation6], 1
    %4333 = vsyncpa [#allocation9], 1
    %4334 = vsyncpa [#allocation12], 1
    %4335 = vsyncpa [#allocation15], 1
    %4336 = vsyncpa [#allocation4], 1
    %s4337 = scalar_lea.sflag [#allocation4], 1
    %4338 = vsyncpa %s4337, 1

// kernel: tpu_custom_call.1
$region0: #{tpu_custom_call.1}
  #allocation0 [shape = 'u32[]', space=smem, size = 0x4, offset = 0x4, fixed_abs, tag = 'smem constant byte address 0x4 - core index']
  #allocation1 [shape = 'u32[144,128]{1,0:T(1,128)}', space=vmem, size = 0x12000, scoped, tag = 'internal scratch']
  %s0 = inlined_call_operand.hbm [shape: f32[32,128], index: 0, kind: input, shape index: {}]
  %s1 = inlined_call_operand.hbm [shape: bf16[128,1280], index: 1, kind: input, shape index: {}]
  %s2 = inlined_call_operand.hbm [shape: f32[1,1280], index: 2, kind: input, shape index: {}]
  %s3 = inlined_call_operand.hbm [shape: bf16[1280,512], index: 3, kind: input, shape index: {}]
  %s4 = inlined_call_operand.hbm [shape: f32[1,512], index: 4, kind: input, shape index: {}]
  %s5 = inlined_call_operand.hbm [shape: bf16[512,256], index: 5, kind: input, shape index: {}]
  %s6 = inlined_call_operand.hbm [shape: f32[1,256], index: 6, kind: input, shape index: {}]
  %s7 = inlined_call_operand.hbm [shape: bf16[256,128], index: 7, kind: input, shape index: {}]
  %s8 = inlined_call_operand.hbm [shape: f32[1,128], index: 8, kind: input, shape index: {}]
  %s9 = inlined_call_operand.hbm [shape: f32[32,128], index: 9, kind: output, shape index: {}]
  %s10 = sld [smem:[#allocation0]]
  $region105: #{tpu_custom_call.1} parent=0
    _
  %s12 = ssub.s32 1, %s10
  %s13 = scalar_select 0, %s12, %s10
  $region1: #{tpu_custom_call.1} parent=0
    #allocation2 [shape = 'u8[16384]{0}', space=vmem, size = 0x4000, scoped, tag = 'input window, operand 0']
    #allocation3 [shape = 's32[2]{0}', space=sflag, size = 0x8, scoped, tag = 'scoped memory for tpu_custom_call.1']
    #allocation4 [shape = 's32[2]{0}', space=sflag, size = 0x8, scoped, tag = 'scoped memory for tpu_custom_call.1']
    #allocation5 [shape = 'u8[327680]{0}', space=vmem, size = 0x50000, scoped, tag = 'input window, operand 1, single buffered']
    #allocation6 [shape = 's32[1]{0}', space=sflag, size = 0x4, scoped, tag = 'scoped memory for tpu_custom_call.1']
    #allocation7 [shape = 'u8[5120]{0}', space=vmem, size = 0x1400, scoped, tag = 'input window, operand 2, single buffered']
    #allocation8 [shape = 'u8[1310720]{0}', space=vmem, size = 0x140000, scoped, tag = 'input window, operand 3, single buffered']
    #allocation9 [shape = 's32[1]{0}', space=sflag, size = 0x4, scoped, tag = 'scoped memory for tpu_custom_call.1']
    #allocation10 [shape = 'u8[2048]{0}', space=vmem, size = 0x800, scoped, tag = 'input window, operand 4, single buffered']
    #allocation11 [shape = 'u8[262144]{0}', space=vmem, size = 0x40000, scoped, tag = 'input window, operand 5, single buffered']
    #allocation12 [shape = 's32[1]{0}', space=sflag, size = 0x4, scoped, tag = 'scoped memory for tpu_custom_call.1']
    #allocation13 [shape = 'u8[1024]{0}', space=vmem, size = 0x400, scoped, tag = 'input window, operand 6, single buffered']
    #allocation14 [shape = 'u8[65536]{0}', space=vmem, size = 0x10000, scoped, tag = 'input window, operand 7, single buffered']
    #allocation15 [shape = 's32[1]{0}', space=sflag, size = 0x4, scoped, tag = 'scoped memory for tpu_custom_call.1']
    #allocation16 [shape = 'u8[512]{0}', space=vmem, size = 0x400, scoped, tag = 'input window, operand 8, single buffered']
    #allocation17 [shape = 'u8[16384]{0}', space=vmem, size = 0x4000, scoped, tag = 'output window, operand 0']
    %14 = vsyncpa [#allocation3], 0
    %s15 = scalar_lea.sflag [#allocation3], 1
    %16 = vsyncpa %s15, 0
    %17 = vsyncpa [#allocation6], 0
    %18 = vsyncpa [#allocation9], 0
    %19 = vsyncpa [#allocation12], 0
    %20 = vsyncpa [#allocation15], 0
    %21 = vsyncpa [#allocation4], 0
    %s22 = scalar_lea.sflag [#allocation4], 1
    %23 = vsyncpa %s22, 0
    loop: start=0, step=1, limit=4
    $region2: #{tpu_custom_call.1} parent=1 // loop_pre_header
      _
    $region3: #{tpu_custom_call.1} parent=1 // loop_header
      %s25 = sphi 0, %s29
      %p26 = scmp.ge.s32.totalorder %s25, 4
      %s35 = sphi 0, %s37
      %s38 = sphi 0, %s35
      %s39 = sphi 0, %s38
      %s55 = sphi 0, %s39
      %s59 = sphi 0, %s59
      %s61 = sphi 0, %s59
      %s62 = sphi 0, %s61
      %s76 = sphi 0, %s62
      %s80 = sphi 0, %s80
      %s82 = sphi 0, %s80
      %s83 = sphi 0, %s82
      %s97 = sphi 0, %s83
      %s101 = sphi 0, %s101
      %s103 = sphi 0, %s101
      %s104 = sphi 0, %s103
      %s118 = sphi 0, %s104
      %s122 = sphi 0, %s122
      %s124 = sphi 0, %s122
      %s125 = sphi 0, %s124
      %s139 = sphi 0, %s125
      %s143 = sphi 0, %s143
      %s145 = sphi 0, %s143
      %s146 = sphi 0, %s145
      %s160 = sphi 0, %s146
      %s164 = sphi 0, %s164
      %s166 = sphi 0, %s164
      %s167 = sphi 0, %s166
      %s181 = sphi 0, %s167
      %s185 = sphi 0, %s185
      %s187 = sphi 0, %s185
      %s188 = sphi 0, %s187
      %s202 = sphi 0, %s188
      %s206 = sphi 0, %s206
      %s208 = sphi 0, %s206
      %s209 = sphi 0, %s208
      %s223 = sphi 0, %s209
      %s229 = sphi 0, %s231
      %s232 = sphi 0, %s229
      %s233 = sphi 0, %s232
      %s249 = sphi 0, %s233
    $region4: #{tpu_custom_call.1} parent=1 // loop_header_branch
      %28 = sbr.rel (%p26) target = $region8
    $region5: #{tpu_custom_call.1} parent=1 // loop_body
      %s30 = ssub.s32 %s25, 1
      %s31 = ssub.s32 %s25, 2
      %s32 = sadd.s32 %s25, 1
      %s33 = ssub.s32 %s25, %s32
      %p34 = scmp.eq.s32.totalorder %s33, 0
      %s36 = sadd.s32 %s35, 1
      %s37 = scalar_select %p34, %s35, %s36
      %p40 = pneg %p34
      %p41 = scmp.eq.s32.totalorder %s25, 1
      %p42 = por %p40, %p41
      %p43 = scmp.ne.s32.totalorder %s35, %s38
      %p44 = scmp.eq.s32.totalorder %s25, 0
      %p45 = por %p43, %p44
      %p46 = scmp.ne.s32.totalorder %s35, %s38
      %p47 = scmp.eq.s32.totalorder %s30, 1
      %p48 = por %p46, %p47
      %p49 = scmp.ne.s32.totalorder %s38, %s39
      %p50 = scmp.eq.s32.totalorder %s30, 0
      %p51 = por %p49, %p50
      %p52 = scmp.ne.s32.totalorder %s38, %s39
      %p53 = scmp.eq.s32.totalorder %s31, 1
      %p54 = por %p52, %p53
      %p56 = scmp.ne.s32.totalorder %s39, %s55
      %p57 = scmp.eq.s32.totalorder %s31, 0
      %p58 = por %p56, %p57
      %s60 = sadd.s32 %s59, 1
      %p63 = scmp.eq.s32.totalorder %s25, 1
      %p64 = scmp.ne.s32.totalorder %s59, %s61
      %p65 = scmp.eq.s32.totalorder %s25, 0
      %p66 = por %p64, %p65
      %p67 = scmp.ne.s32.totalorder %s59, %s61
      %p68 = scmp.eq.s32.totalorder %s30, 1
      %p69 = por %p67, %p68
      %p70 = scmp.ne.s32.totalorder %s61, %s62
      %p71 = scmp.eq.s32.totalorder %s30, 0
      %p72 = por %p70, %p71
      %p73 = scmp.ne.s32.totalorder %s61, %s62
      %p74 = scmp.eq.s32.totalorder %s31, 1
      %p75 = por %p73, %p74
      %p77 = scmp.ne.s32.totalorder %s62, %s76
      %p78 = scmp.eq.s32.totalorder %s31, 0
      %p79 = por %p77, %p78
      %s81 = sadd.s32 %s80, 1
      %p84 = scmp.eq.s32.totalorder %s25, 1
      %p85 = scmp.ne.s32.totalorder %s80, %s82
      %p86 = scmp.eq.s32.totalorder %s25, 0
      %p87 = por %p85, %p86
      %p88 = scmp.ne.s32.totalorder %s80, %s82
      %p89 = scmp.eq.s32.totalorder %s30, 1
      %p90 = por %p88, %p89
      %p91 = scmp.ne.s32.totalorder %s82, %s83
      %p92 = scmp.eq.s32.totalorder %s30, 0
      %p93 = por %p91, %p92
      %p94 = scmp.ne.s32.totalorder %s82, %s83
      %p95 = scmp.eq.s32.totalorder %s31, 1
      %p96 = por %p94, %p95
      %p98 = scmp.ne.s32.totalorder %s83, %s97
      %p99 = scmp.eq.s32.totalorder %s31, 0
      %p100 = por %p98, %p99
      %s102 = sadd.s32 %s101, 1
      %p105 = scmp.eq.s32.totalorder %s25, 1
      %p106 = scmp.ne.s32.totalorder %s101, %s103
      %p107 = scmp.eq.s32.totalorder %s25, 0
      %p108 = por %p106, %p107
      %p109 = scmp.ne.s32.totalorder %s101, %s103
      %p110 = scmp.eq.s32.totalorder %s30, 1
      %p111 = por %p109, %p110
      %p112 = scmp.ne.s32.totalorder %s103, %s104
      %p113 = scmp.eq.s32.totalorder %s30, 0
      %p114 = por %p112, %p113
      %p115 = scmp.ne.s32.totalorder %s103, %s104
      %p116 = scmp.eq.s32.totalorder %s31, 1
      %p117 = por %p115, %p116
      %p119 = scmp.ne.s32.totalorder %s104, %s118
      %p120 = scmp.eq.s32.totalorder %s31, 0
      %p121 = por %p119, %p120
      %s123 = sadd.s32 %s122, 1
      %p126 = scmp.eq.s32.totalorder %s25, 1
      %p127 = scmp.ne.s32.totalorder %s122, %s124
      %p128 = scmp.eq.s32.totalorder %s25, 0
      %p129 = por %p127, %p128
      %p130 = scmp.ne.s32.totalorder %s122, %s124
      %p131 = scmp.eq.s32.totalorder %s30, 1
      %p132 = por %p130, %p131
      %p133 = scmp.ne.s32.totalorder %s124, %s125
      %p134 = scmp.eq.s32.totalorder %s30, 0
      %p135 = por %p133, %p134
      %p136 = scmp.ne.s32.totalorder %s124, %s125
      %p137 = scmp.eq.s32.totalorder %s31, 1
      %p138 = por %p136, %p137
      %p140 = scmp.ne.s32.totalorder %s125, %s139
      %p141 = scmp.eq.s32.totalorder %s31, 0
      %p142 = por %p140, %p141
      %s144 = sadd.s32 %s143, 1
      %p147 = scmp.eq.s32.totalorder %s25, 1
      %p148 = scmp.ne.s32.totalorder %s143, %s145
      %p149 = scmp.eq.s32.totalorder %s25, 0
      %p150 = por %p148, %p149
      %p151 = scmp.ne.s32.totalorder %s143, %s145
      %p152 = scmp.eq.s32.totalorder %s30, 1
      %p153 = por %p151, %p152
      %p154 = scmp.ne.s32.totalorder %s145, %s146
      %p155 = scmp.eq.s32.totalorder %s30, 0
      %p156 = por %p154, %p155
      %p157 = scmp.ne.s32.totalorder %s145, %s146
      %p158 = scmp.eq.s32.totalorder %s31, 1
      %p159 = por %p157, %p158
      %p161 = scmp.ne.s32.totalorder %s146, %s160
      %p162 = scmp.eq.s32.totalorder %s31, 0
      %p163 = por %p161, %p162
      %s165 = sadd.s32 %s164, 1
      %p168 = scmp.eq.s32.totalorder %s25, 1
      %p169 = scmp.ne.s32.totalorder %s164, %s166
      %p170 = scmp.eq.s32.totalorder %s25, 0
      %p171 = por %p169, %p170
      %p172 = scmp.ne.s32.totalorder %s164, %s166
      %p173 = scmp.eq.s32.totalorder %s30, 1
      %p174 = por %p172, %p173
      %p175 = scmp.ne.s32.totalorder %s166, %s167
      %p176 = scmp.eq.s32.totalorder %s30, 0
      %p177 = por %p175, %p176
      %p178 = scmp.ne.s32.totalorder %s166, %s167
      %p179 = scmp.eq.s32.totalorder %s31, 1
      %p180 = por %p178, %p179
      %p182 = scmp.ne.s32.totalorder %s167, %s181
      %p183 = scmp.eq.s32.totalorder %s31, 0
      %p184 = por %p182, %p183
      %s186 = sadd.s32 %s185, 1
      %p189 = scmp.eq.s32.totalorder %s25, 1
      %p190 = scmp.ne.s32.totalorder %s185, %s187
      %p191 = scmp.eq.s32.totalorder %s25, 0
      %p192 = por %p190, %p191
      %p193 = scmp.ne.s32.totalorder %s185, %s187
      %p194 = scmp.eq.s32.totalorder %s30, 1
      %p195 = por %p193, %p194
      %p196 = scmp.ne.s32.totalorder %s187, %s188
      %p197 = scmp.eq.s32.totalorder %s30, 0
      %p198 = por %p196, %p197
      %p199 = scmp.ne.s32.totalorder %s187, %s188
      %p200 = scmp.eq.s32.totalorder %s31, 1
      %p201 = por %p199, %p200
      %p203 = scmp.ne.s32.totalorder %s188, %s202
      %p204 = scmp.eq.s32.totalorder %s31, 0
      %p205 = por %p203, %p204
      %s207 = sadd.s32 %s206, 1
      %p210 = scmp.eq.s32.totalorder %s25, 1
      %p211 = scmp.ne.s32.totalorder %s206, %s208
      %p212 = scmp.eq.s32.totalorder %s25, 0
      %p213 = por %p211, %p212
      %p214 = scmp.ne.s32.totalorder %s206, %s208
      %p215 = scmp.eq.s32.totalorder %s30, 1
      %p216 = por %p214, %p215
      %p217 = scmp.ne.s32.totalorder %s208, %s209
      %p218 = scmp.eq.s32.totalorder %s30, 0
      %p219 = por %p217, %p218
      %p220 = scmp.ne.s32.totalorder %s208, %s209
      %p221 = scmp.eq.s32.totalorder %s31, 1
      %p222 = por %p220, %p221
      %p224 = scmp.ne.s32.totalorder %s209, %s223
      %p225 = scmp.eq.s32.totalorder %s31, 0
      %p226 = por %p224, %p225
      %s227 = ssub.s32 %s25, %s32
      %p228 = scmp.eq.s32.totalorder %s227, 0
      %s230 = sadd.s32 %s229, 1
      %s231 = scalar_select %p228, %s229, %s230
      %p234 = pneg %p228
      %p235 = scmp.eq.s32.totalorder %s25, 1
      %p236 = por %p234, %p235
      %p237 = scmp.ne.s32.totalorder %s229, %s232
      %p238 = scmp.eq.s32.totalorder %s25, 0
      %p239 = por %p237, %p238
      %p240 = scmp.ne.s32.totalorder %s229, %s232
      %p241 = scmp.eq.s32.totalorder %s30, 1
      %p242 = por %p240, %p241
      %p243 = scmp.ne.s32.totalorder %s232, %s233
      %p244 = scmp.eq.s32.totalorder %s30, 0
      %p245 = por %p243, %p244
      %p246 = scmp.ne.s32.totalorder %s232, %s233
      %p247 = scmp.eq.s32.totalorder %s31, 1
      %p248 = por %p246, %p247
      %p250 = scmp.ne.s32.totalorder %s233, %s249
      %p251 = scmp.eq.s32.totalorder %s31, 0
      %p252 = por %p250, %p251
      %p253 = scmp.le.s32.totalorder 1, %s25
      %p254 = scmp.lt.s32.totalorder %s25, 3
      %p255 = pnand %p253, %p254
      %p256 = pneg %p255
      // Predicated region
      $region9: #{tpu_custom_call.1} parent=5 // pred_check
        _
      $region10: #{tpu_custom_call.1} parent=5 // pred_check_branch
        %258 = sbr.rel (%p255) target = $region12
      $region11: #{tpu_custom_call.1} parent=5 // pred_region
        %s259 = ssub.s32 %s25, 1
        // Predicated region
        $region13: #{tpu_custom_call.1} parent=11 // pred_check
          %p260 = pneg %p72
        $region14: #{tpu_custom_call.1} parent=11 // pred_check_branch
          %262 = sbr.rel (%p260) target = $region16
        $region15: #{tpu_custom_call.1} parent=11 // pred_region
          %s264 = ssub.s32 10240, 10240
          %265 = vsyncadd [#allocation6], %s264
          %s266 = sshll.u32 [#allocation5], 4
          %s267 = int_to_ptr.vmem [resolvable:$true] %s266
          %272 = dma.hbm_to_vmem [thread:$0]  %s1, 10240, %s267, [#allocation6], 640, 640, 40
        $region16: #{tpu_custom_call.1} parent=11 // pred_fallthru
          _
        // Predicated region
        $region17: #{tpu_custom_call.1} parent=11 // pred_check
          %p273 = pneg %p93
        $region18: #{tpu_custom_call.1} parent=11 // pred_check_branch
          %275 = sbr.rel (%p273) target = $region20
        $region19: #{tpu_custom_call.1} parent=11 // pred_region
          %s277 = ssub.s32 160, 160
          %278 = vsyncadd [#allocation6], %s277
          %s280 = sshll.u32 [#allocation7], 4
          %s281 = int_to_ptr.vmem [resolvable:$true] %s280
          %283 = dma.hbm_to_vmem [thread:$0]  %s2, 160, %s281, [#allocation6]
        $region20: #{tpu_custom_call.1} parent=11 // pred_fallthru
          _
        // Predicated region
        $region21: #{tpu_custom_call.1} parent=11 // pred_check
          %p284 = pneg %p114
        $region22: #{tpu_custom_call.1} parent=11 // pred_check_branch
          %286 = sbr.rel (%p284) target = $region24
        $region23: #{tpu_custom_call.1} parent=11 // pred_region
          %s288 = ssub.s32 40960, 40960
          %289 = vsyncadd [#allocation9], %s288
          %s290 = sshll.u32 [#allocation8], 4
          %s291 = int_to_ptr.vmem [resolvable:$true] %s290
          %296 = dma.hbm_to_vmem [thread:$0]  %s3, 40960, %s291, [#allocation9], 256, 256, 16
        $region24: #{tpu_custom_call.1} parent=11 // pred_fallthru
          _
        // Predicated region
        $region25: #{tpu_custom_call.1} parent=11 // pred_check
          %p297 = pneg %p135
        $region26: #{tpu_custom_call.1} parent=11 // pred_check_branch
          %299 = sbr.rel (%p297) target = $region28
        $region27: #{tpu_custom_call.1} parent=11 // pred_region
          %s301 = ssub.s32 64, 64
          %302 = vsyncadd [#allocation9], %s301
          %s304 = sshll.u32 [#allocation10], 4
          %s305 = int_to_ptr.vmem [resolvable:$true] %s304
          %307 = dma.hbm_to_vmem [thread:$0]  %s4, 64, %s305, [#allocation9]
        $region28: #{tpu_custom_call.1} parent=11 // pred_fallthru
          _
        // Predicated region
        $region29: #{tpu_custom_call.1} parent=11 // pred_check
          %p308 = pneg %p156
        $region30: #{tpu_custom_call.1} parent=11 // pred_check_branch
          %310 = sbr.rel (%p308) target = $region32
        $region31: #{tpu_custom_call.1} parent=11 // pred_region
          %s312 = ssub.s32 8192, 8192
          %313 = vsyncadd [#allocation12], %s312
          %s314 = sshll.u32 [#allocation11], 4
          %s315 = int_to_ptr.vmem [resolvable:$true] %s314
          %320 = dma.hbm_to_vmem [thread:$0]  %s5, 8192, %s315, [#allocation12], 128, 128, 8
        $region32: #{tpu_custom_call.1} parent=11 // pred_fallthru
          _
        // Predicated region
        $region33: #{tpu_custom_call.1} parent=11 // pred_check
          %p321 = pneg %p177
        $region34: #{tpu_custom_call.1} parent=11 // pred_check_branch
          %323 = sbr.rel (%p321) target = $region36
        $region35: #{tpu_custom_call.1} parent=11 // pred_region
          %s325 = ssub.s32 32, 32
          %326 = vsyncadd [#allocation12], %s325
          %s328 = sshll.u32 [#allocation13], 4
          %s329 = int_to_ptr.vmem [resolvable:$true] %s328
          %331 = dma.hbm_to_vmem [thread:$0]  %s6, 32, %s329, [#allocation12]
        $region36: #{tpu_custom_call.1} parent=11 // pred_fallthru
          _
        // Predicated region
        $region37: #{tpu_custom_call.1} parent=11 // pred_check
          %p332 = pneg %p198
        $region38: #{tpu_custom_call.1} parent=11 // pred_check_branch
          %334 = sbr.rel (%p332) target = $region40
        $region39: #{tpu_custom_call.1} parent=11 // pred_region
          %s336 = ssub.s32 2048, 2048
          %337 = vsyncadd [#allocation15], %s336
          %s338 = sshll.u32 [#allocation14], 4
          %s339 = int_to_ptr.vmem [resolvable:$true] %s338
          %344 = dma.hbm_to_vmem [thread:$0]  %s7, 2048, %s339, [#allocation15], 64, 64, 4
        $region40: #{tpu_custom_call.1} parent=11 // pred_fallthru
          _
        // Predicated region
        $region41: #{tpu_custom_call.1} parent=11 // pred_check
          %p345 = pneg %p219
        $region42: #{tpu_custom_call.1} parent=11 // pred_check_branch
          %347 = sbr.rel (%p345) target = $region44
        $region43: #{tpu_custom_call.1} parent=11 // pred_region
          %s349 = ssub.s32 16, 16
          %350 = vsyncadd [#allocation15], %s349
          %s352 = sshll.u32 [#allocation16], 4
          %s353 = int_to_ptr.vmem [resolvable:$true] %s352
          %355 = dma.hbm_to_vmem [thread:$0]  %s8, 16, %s353, [#allocation15]
        $region44: #{tpu_custom_call.1} parent=11 // pred_fallthru
          _
      $region12: #{tpu_custom_call.1} parent=5 // pred_fallthru
        _
      %p356 = scmp.lt.s32.totalorder %s25, 2
      // Predicated region
      $region45: #{tpu_custom_call.1} parent=5 // pred_check
        %p357 = pneg %p356
      $region46: #{tpu_custom_call.1} parent=5 // pred_check_branch
        %359 = sbr.rel (%p357) target = $region48
      $region47: #{tpu_custom_call.1} parent=5 // pred_region
        // Predicated region
        $region49: #{tpu_custom_call.1} parent=47 // pred_check
          %p360 = pneg %p45
        $region50: #{tpu_custom_call.1} parent=47 // pred_check_branch
          %362 = sbr.rel (%p360) target = $region52
        $region51: #{tpu_custom_call.1} parent=47 // pred_region
          %s363 = sand.u32 %s35, 1
          %s364 = scalar_lea.sflag [#allocation3], %s363
          %s365 = sand.u32 %s35, 1
          %s366 = smul.addr %s365, 16
          %s367 = scalar_lea.vmem [#allocation2], %s366
          %s368 = smul.u32 2, %s25
          %s370 = ssub.s32 256, 256
          %371 = vsyncadd %s364, %s370
          %s372 = smul.addr %s368, 128
          %s373 = scalar_lea.hbm %s0, %s372
          %s374 = sshll.u32 %s367, 4
          %s375 = int_to_ptr.vmem [resolvable:$true] %s374
          %380 = dma.hbm_to_vmem [thread:$0]  %s373, 256, %s375, %s364, 128, 128, 8
        $region52: #{tpu_custom_call.1} parent=47 // pred_fallthru
          _
      $region48: #{tpu_custom_call.1} parent=5 // pred_fallthru
        _
      %p381 = scmp.le.s32.totalorder 1, %s25
      %p382 = scmp.lt.s32.totalorder %s25, 3
      %p383 = pnand %p381, %p382
      %p384 = pneg %p383
      // Predicated region
      $region53: #{tpu_custom_call.1} parent=5 // pred_check
        _
      $region54: #{tpu_custom_call.1} parent=5 // pred_check_branch
        %386 = sbr.rel (%p383) target = $region56
      $region55: #{tpu_custom_call.1} parent=5 // pred_region
        %s387 = ssub.s32 %s25, 1
        %s388 = sand.u32 %s38, 1
        %s389 = scalar_lea.sflag [#allocation3], %s388
        %s390 = sand.u32 %s38, 1
        %s391 = smul.addr %s390, 16
        %s392 = scalar_lea.vmem [#allocation2], %s391
        // Predicated region
        $region57: #{tpu_custom_call.1} parent=55 // pred_check
          %p393 = pneg %p51
        $region58: #{tpu_custom_call.1} parent=55 // pred_check_branch
          %395 = sbr.rel (%p393) target = $region60
        $region59: #{tpu_custom_call.1} parent=55 // pred_region
          %396 = dma.done %s389, 256
        $region60: #{tpu_custom_call.1} parent=55 // pred_fallthru
          _
        // Predicated region
        $region61: #{tpu_custom_call.1} parent=55 // pred_check
          %p397 = pneg %p72
        $region62: #{tpu_custom_call.1} parent=55 // pred_check_branch
          %399 = sbr.rel (%p397) target = $region64
        $region63: #{tpu_custom_call.1} parent=55 // pred_region
          %400 = dma.done [#allocation6], 10240
        $region64: #{tpu_custom_call.1} parent=55 // pred_fallthru
          _
        // Predicated region
        $region65: #{tpu_custom_call.1} parent=55 // pred_check
          %p401 = pneg %p93
        $region66: #{tpu_custom_call.1} parent=55 // pred_check_branch
          %403 = sbr.rel (%p401) target = $region68
        $region67: #{tpu_custom_call.1} parent=55 // pred_region
          %404 = dma.done [#allocation6], 160
        $region68: #{tpu_custom_call.1} parent=55 // pred_fallthru
          _
        // Predicated region
        $region69: #{tpu_custom_call.1} parent=55 // pred_check
          %p405 = pneg %p114
        $region70: #{tpu_custom_call.1} parent=55 // pred_check_branch
          %407 = sbr.rel (%p405) target = $region72
        $region71: #{tpu_custom_call.1} parent=55 // pred_region
          %408 = dma.done [#allocation9], 40960
        $region72: #{tpu_custom_call.1} parent=55 // pred_fallthru
          _
        // Predicated region
        $region73: #{tpu_custom_call.1} parent=55 // pred_check
          %p409 = pneg %p135
        $region74: #{tpu_custom_call.1} parent=55 // pred_check_branch
          %411 = sbr.rel (%p409) target = $region76
        $region75: #{tpu_custom_call.1} parent=55 // pred_region
          %412 = dma.done [#allocation9], 64
        $region76: #{tpu_custom_call.1} parent=55 // pred_fallthru
          _
        // Predicated region
        $region77: #{tpu_custom_call.1} parent=55 // pred_check
          %p413 = pneg %p156
        $region78: #{tpu_custom_call.1} parent=55 // pred_check_branch
          %415 = sbr.rel (%p413) target = $region80
        $region79: #{tpu_custom_call.1} parent=55 // pred_region
          %416 = dma.done [#allocation12], 8192
        $region80: #{tpu_custom_call.1} parent=55 // pred_fallthru
          _
        // Predicated region
        $region81: #{tpu_custom_call.1} parent=55 // pred_check
          %p417 = pneg %p177
        $region82: #{tpu_custom_call.1} parent=55 // pred_check_branch
          %419 = sbr.rel (%p417) target = $region84
        $region83: #{tpu_custom_call.1} parent=55 // pred_region
          %420 = dma.done [#allocation12], 32
        $region84: #{tpu_custom_call.1} parent=55 // pred_fallthru
          _
        // Predicated region
        $region85: #{tpu_custom_call.1} parent=55 // pred_check
          %p421 = pneg %p198
        $region86: #{tpu_custom_call.1} parent=55 // pred_check_branch
          %423 = sbr.rel (%p421) target = $region88
        $region87: #{tpu_custom_call.1} parent=55 // pred_region
          %424 = dma.done [#allocation15], 2048
        $region88: #{tpu_custom_call.1} parent=55 // pred_fallthru
          _
        // Predicated region
        $region89: #{tpu_custom_call.1} parent=55 // pred_check
          %p425 = pneg %p219
        $region90: #{tpu_custom_call.1} parent=55 // pred_check_branch
          %427 = sbr.rel (%p425) target = $region92
        $region91: #{tpu_custom_call.1} parent=55 // pred_region
          %428 = dma.done [#allocation15], 16
        $region92: #{tpu_custom_call.1} parent=55 // pred_fallthru
          _
        %s429 = sand.u32 %s38, 1
        %s430 = scalar_lea.sflag [#allocation3], %s429
        %s431 = sand.u32 %s38, 1
        %s432 = smul.addr %s431, 16
        %s433 = scalar_lea.vmem [#allocation2], %s432
        %p434 = pneg %p51
        %p435 = pneg %p48
        %p436 = pneg %p72
        %p437 = pneg %p69
        %p438 = pneg %p93
        %p439 = pneg %p90
        %p440 = pneg %p114
        %p441 = pneg %p111
        %p442 = pneg %p135
        %p443 = pneg %p132
        %p444 = pneg %p156
        %p445 = pneg %p153
        %p446 = pneg %p177
        %p447 = pneg %p174
        %p448 = pneg %p198
        %p449 = pneg %p195
        %p450 = pneg %p219
        %p451 = pneg %p216
        %p452 = pneg %p245
        %p453 = pneg %p242
        %s454 = sand.u32 %s232, 1
        %s455 = scalar_lea.sflag [#allocation4], %s454
        %s456 = sand.u32 %s232, 1
        %s457 = smul.addr %s456, 16
        %s458 = scalar_lea.vmem [#allocation17], %s457
        %s459 = smul.u32 2, %s30
        %s460 = smul.u32 2, %s30
        %v462 = vld [vmem:[%s392] sm:$0xff]
        %v463 = vld [vmem:[%s392 + $0x8] sm:$0xff]
        %v464 = vpack.c.bf16 %v463, %v462
        %v465 = vld [vmem:[#allocation5] sm:$0xff]
        %v466 = vld [vmem:[#allocation5 + $0x8] sm:$0xff]
        %v467 = vld [vmem:[#allocation5 + $0x10] sm:$0xff]
        %v468 = vld [vmem:[#allocation5 + $0x18] sm:$0xff]
        %v469 = vld [vmem:[#allocation5 + $0x20] sm:$0xff]
        %v470 = vld [vmem:[#allocation5 + $0x28] sm:$0xff]
        %v471 = vld [vmem:[#allocation5 + $0x30] sm:$0xff]
        %v472 = vld [vmem:[#allocation5 + $0x38] sm:$0xff]
        %v473 = vld [vmem:[#allocation5 + $0x40] sm:$0xff]
        %v474 = vld [vmem:[#allocation5 + $0x48] sm:$0xff]
        %v475 = vld [vmem:[#allocation5 + $0x50] sm:$0xff]
        %v476 = vld [vmem:[#allocation5 + $0x58] sm:$0xff]
        %v477 = vld [vmem:[#allocation5 + $0x60] sm:$0xff]
        %v478 = vld [vmem:[#allocation5 + $0x68] sm:$0xff]
        %v479 = vld [vmem:[#allocation5 + $0x70] sm:$0xff]
        %v480 = vld [vmem:[#allocation5 + $0x78] sm:$0xff]
        %v481 = vld [vmem:[#allocation5 + $0x80] sm:$0xff]
        %v482 = vld [vmem:[#allocation5 + $0x88] sm:$0xff]
        %v483 = vld [vmem:[#allocation5 + $0x90] sm:$0xff]
        %v484 = vld [vmem:[#allocation5 + $0x98] sm:$0xff]
        %v485 = vld [vmem:[#allocation5 + $0xa0] sm:$0xff]
        %v486 = vld [vmem:[#allocation5 + $0xa8] sm:$0xff]
        %v487 = vld [vmem:[#allocation5 + $0xb0] sm:$0xff]
        %v488 = vld [vmem:[#allocation5 + $0xb8] sm:$0xff]
        %v489 = vld [vmem:[#allocation5 + $0xc0] sm:$0xff]
        %v490 = vld [vmem:[#allocation5 + $0xc8] sm:$0xff]
        %v491 = vld [vmem:[#allocation5 + $0xd0] sm:$0xff]
        %v492 = vld [vmem:[#allocation5 + $0xd8] sm:$0xff]
        %v493 = vld [vmem:[#allocation5 + $0xe0] sm:$0xff]
        %v494 = vld [vmem:[#allocation5 + $0xe8] sm:$0xff]
        %v495 = vld [vmem:[#allocation5 + $0xf0] sm:$0xff]
        %v496 = vld [vmem:[#allocation5 + $0xf8] sm:$0xff]
        %v497 = vld [vmem:[#allocation5 + $0x100] sm:$0xff]
        %v498 = vld [vmem:[#allocation5 + $0x108] sm:$0xff]
        %v499 = vld [vmem:[#allocation5 + $0x110] sm:$0xff]
        %v500 = vld [vmem:[#allocation5 + $0x118] sm:$0xff]
        %v501 = vld [vmem:[#allocation5 + $0x120] sm:$0xff]
        %v502 = vld [vmem:[#allocation5 + $0x128] sm:$0xff]
        %v503 = vld [vmem:[#allocation5 + $0x130] sm:$0xff]
        %v504 = vld [vmem:[#allocation5 + $0x138] sm:$0xff]
        %v505 = vld [vmem:[#allocation5 + $0x140] sm:$0xff]
        %v506 = vld [vmem:[#allocation5 + $0x148] sm:$0xff]
        %v507 = vld [vmem:[#allocation5 + $0x150] sm:$0xff]
        %v508 = vld [vmem:[#allocation5 + $0x158] sm:$0xff]
        %v509 = vld [vmem:[#allocation5 + $0x160] sm:$0xff]
        %v510 = vld [vmem:[#allocation5 + $0x168] sm:$0xff]
        %v511 = vld [vmem:[#allocation5 + $0x170] sm:$0xff]
        %v512 = vld [vmem:[#allocation5 + $0x178] sm:$0xff]
        %v513 = vld [vmem:[#allocation5 + $0x180] sm:$0xff]
        %v514 = vld [vmem:[#allocation5 + $0x188] sm:$0xff]
        %v515 = vld [vmem:[#allocation5 + $0x190] sm:$0xff]
        %v516 = vld [vmem:[#allocation5 + $0x198] sm:$0xff]
        %v517 = vld [vmem:[#allocation5 + $0x1a0] sm:$0xff]
        %v518 = vld [vmem:[#allocation5 + $0x1a8] sm:$0xff]
        %v519 = vld [vmem:[#allocation5 + $0x1b0] sm:$0xff]
        %v520 = vld [vmem:[#allocation5 + $0x1b8] sm:$0xff]
        %v521 = vld [vmem:[#allocation5 + $0x1c0] sm:$0xff]
        %v522 = vld [vmem:[#allocation5 + $0x1c8] sm:$0xff]
        %v523 = vld [vmem:[#allocation5 + $0x1d0] sm:$0xff]
        %v524 = vld [vmem:[#allocation5 + $0x1d8] sm:$0xff]
        %v525 = vld [vmem:[#allocation5 + $0x1e0] sm:$0xff]
        %v526 = vld [vmem:[#allocation5 + $0x1e8] sm:$0xff]
        %v527 = vld [vmem:[#allocation5 + $0x1f0] sm:$0xff]
        %v528 = vld [vmem:[#allocation5 + $0x1f8] sm:$0xff]
        %v529 = vld [vmem:[#allocation5 + $0x200] sm:$0xff]
        %v530 = vld [vmem:[#allocation5 + $0x208] sm:$0xff]
        %v531 = vld [vmem:[#allocation5 + $0x210] sm:$0xff]
        %v532 = vld [vmem:[#allocation5 + $0x218] sm:$0xff]
        %v533 = vld [vmem:[#allocation5 + $0x220] sm:$0xff]
        %v534 = vld [vmem:[#allocation5 + $0x228] sm:$0xff]
        %v535 = vld [vmem:[#allocation5 + $0x230] sm:$0xff]
        %v536 = vld [vmem:[#allocation5 + $0x238] sm:$0xff]
        %v537 = vld [vmem:[#allocation5 + $0x240] sm:$0xff]
        %v538 = vld [vmem:[#allocation5 + $0x248] sm:$0xff]
        %v539 = vld [vmem:[#allocation5 + $0x250] sm:$0xff]
        %v540 = vld [vmem:[#allocation5 + $0x258] sm:$0xff]
        %v541 = vld [vmem:[#allocation5 + $0x260] sm:$0xff]
        %v542 = vld [vmem:[#allocation5 + $0x268] sm:$0xff]
        %v543 = vld [vmem:[#allocation5 + $0x270] sm:$0xff]
        %v544 = vld [vmem:[#allocation5 + $0x278] sm:$0xff]
        %v545 = vld [vmem:[#allocation7] sm:$0xff]
        %v546 = vld [vmem:[#allocation7 + $0x8] sm:$0x3]
        %v549 = vlaneseq
        %v550 = vshrl.u32 %v549, 7
        %v551 = vsub.s32 0, %v550
        %v552 = vrot.slane %v545, %v551
        %v553 = vlaneseq
        %v554 = vshrl.u32 %v553, 7
        %v555 = vsub.s32 1, %v554
        %v556 = vrot.slane %v545, %v555
        %v557 = vlaneseq
        %v558 = vshrl.u32 %v557, 7
        %v559 = vsub.s32 2, %v558
        %v560 = vrot.slane %v545, %v559
        %v561 = vlaneseq
        %v562 = vshrl.u32 %v561, 7
        %v563 = vsub.s32 3, %v562
        %v564 = vrot.slane %v545, %v563
        %v565 = vlaneseq
        %v566 = vshrl.u32 %v565, 7
        %v567 = vsub.s32 4, %v566
        %v568 = vrot.slane %v545, %v567
        %v569 = vlaneseq
        %v570 = vshrl.u32 %v569, 7
        %v571 = vsub.s32 5, %v570
        %v572 = vrot.slane %v545, %v571
        %v573 = vlaneseq
        %v574 = vshrl.u32 %v573, 7
        %v575 = vsub.s32 6, %v574
        %v576 = vrot.slane %v545, %v575
        %v577 = vlaneseq
        %v578 = vshrl.u32 %v577, 7
        %v579 = vsub.s32 7, %v578
        %v580 = vrot.slane %v545, %v579
        %v581 = vlaneseq
        %v582 = vshrl.u32 %v581, 7
        %v583 = vsub.s32 0, %v582
        %v584 = vrot.slane %v546, %v583
        %v585 = vlaneseq
        %v586 = vshrl.u32 %v585, 7
        %v587 = vsub.s32 1, %v586
        %v588 = vrot.slane %v546, %v587
        %v679 = vunpack.c.l.b16 %v465
        %v680 = vunpack.c.h.b16 %v465
        %v681 = vunpack.c.l.b16 %v466
        %v682 = vunpack.c.h.b16 %v466
        %v683 = vunpack.c.l.b16 %v467
        %v684 = vunpack.c.h.b16 %v467
        %v685 = vunpack.c.l.b16 %v468
        %v686 = vunpack.c.h.b16 %v468
        %v687 = vunpack.c.l.b16 %v469
        %v688 = vunpack.c.h.b16 %v469
        %v689 = vunpack.c.l.b16 %v470
        %v690 = vunpack.c.h.b16 %v470
        %v691 = vunpack.c.l.b16 %v471
        %v692 = vunpack.c.h.b16 %v471
        %v693 = vunpack.c.l.b16 %v472
        %v694 = vunpack.c.h.b16 %v472
        %v695 = vunpack.c.l.b16 %v473
        %v696 = vunpack.c.h.b16 %v473
        %v697 = vunpack.c.l.b16 %v474
        %v698 = vunpack.c.h.b16 %v474
        %v699 = vunpack.c.l.b16 %v475
        %v700 = vunpack.c.h.b16 %v475
        %v701 = vunpack.c.l.b16 %v476
        %v702 = vunpack.c.h.b16 %v476
        %v703 = vunpack.c.l.b16 %v477
        %v704 = vunpack.c.h.b16 %v477
        %v705 = vunpack.c.l.b16 %v478
        %v706 = vunpack.c.h.b16 %v478
        %v707 = vunpack.c.l.b16 %v479
        %v708 = vunpack.c.h.b16 %v479
        %v709 = vunpack.c.l.b16 %v480
        %v710 = vunpack.c.h.b16 %v480
        %v711 = vunpack.c.l.b16 %v481
        %v712 = vunpack.c.h.b16 %v481
        %v713 = vunpack.c.l.b16 %v482
        %v714 = vunpack.c.h.b16 %v482
        %v715 = vunpack.c.l.b16 %v483
        %v716 = vunpack.c.h.b16 %v483
        %v717 = vunpack.c.l.b16 %v484
        %v718 = vunpack.c.h.b16 %v484
        %v719 = vunpack.c.l.b16 %v485
        %v720 = vunpack.c.h.b16 %v485
        %v721 = vunpack.c.l.b16 %v486
        %v722 = vunpack.c.h.b16 %v486
        %v723 = vunpack.c.l.b16 %v487
        %v724 = vunpack.c.h.b16 %v487
        %v725 = vunpack.c.l.b16 %v488
        %v726 = vunpack.c.h.b16 %v488
        %v727 = vunpack.c.l.b16 %v489
        %v728 = vunpack.c.h.b16 %v489
        %v729 = vunpack.c.l.b16 %v490
        %v730 = vunpack.c.h.b16 %v490
        %v731 = vunpack.c.l.b16 %v491
        %v732 = vunpack.c.h.b16 %v491
        %v733 = vunpack.c.l.b16 %v492
        %v734 = vunpack.c.h.b16 %v492
        %v735 = vunpack.c.l.b16 %v493
        %v736 = vunpack.c.h.b16 %v493
        %v737 = vunpack.c.l.b16 %v494
        %v738 = vunpack.c.h.b16 %v494
        %v739 = vunpack.c.l.b16 %v495
        %v740 = vunpack.c.h.b16 %v495
        %v741 = vunpack.c.l.b16 %v496
        %v742 = vunpack.c.h.b16 %v496
        %v743 = vunpack.c.l.b16 %v497
        %v744 = vunpack.c.h.b16 %v497
        %v745 = vunpack.c.l.b16 %v498
        %v746 = vunpack.c.h.b16 %v498
        %v747 = vunpack.c.l.b16 %v499
        %v748 = vunpack.c.h.b16 %v499
        %v749 = vunpack.c.l.b16 %v500
        %v750 = vunpack.c.h.b16 %v500
        %v751 = vunpack.c.l.b16 %v501
        %v752 = vunpack.c.h.b16 %v501
        %v753 = vunpack.c.l.b16 %v502
        %v754 = vunpack.c.h.b16 %v502
        %v755 = vunpack.c.l.b16 %v503
        %v756 = vunpack.c.h.b16 %v503
        %v757 = vunpack.c.l.b16 %v504
        %v758 = vunpack.c.h.b16 %v504
        %v759 = vunpack.c.l.b16 %v505
        %v760 = vunpack.c.h.b16 %v505
        %v761 = vunpack.c.l.b16 %v506
        %v762 = vunpack.c.h.b16 %v506
        %v763 = vunpack.c.l.b16 %v507
        %v764 = vunpack.c.h.b16 %v507
        %v765 = vunpack.c.l.b16 %v508
        %v766 = vunpack.c.h.b16 %v508
        %v767 = vunpack.c.l.b16 %v509
        %v768 = vunpack.c.h.b16 %v509
        %v769 = vunpack.c.l.b16 %v510
        %v770 = vunpack.c.h.b16 %v510
        %v771 = vunpack.c.l.b16 %v511
        %v772 = vunpack.c.h.b16 %v511
        %v773 = vunpack.c.l.b16 %v512
        %v774 = vunpack.c.h.b16 %v512
        %v775 = vunpack.c.l.b16 %v513
        %v776 = vunpack.c.h.b16 %v513
        %v777 = vunpack.c.l.b16 %v514
        %v778 = vunpack.c.h.b16 %v514
        %v779 = vunpack.c.l.b16 %v515
        %v780 = vunpack.c.h.b16 %v515
        %v781 = vunpack.c.l.b16 %v516
        %v782 = vunpack.c.h.b16 %v516
        %v783 = vunpack.c.l.b16 %v517
        %v784 = vunpack.c.h.b16 %v517
        %v785 = vunpack.c.l.b16 %v518
        %v786 = vunpack.c.h.b16 %v518
        %v787 = vunpack.c.l.b16 %v519
        %v788 = vunpack.c.h.b16 %v519
        %v789 = vunpack.c.l.b16 %v520
        %v790 = vunpack.c.h.b16 %v520
        %v791 = vunpack.c.l.b16 %v521
        %v792 = vunpack.c.h.b16 %v521
        %v793 = vunpack.c.l.b16 %v522
        %v794 = vunpack.c.h.b16 %v522
        %v795 = vunpack.c.l.b16 %v523
        %v796 = vunpack.c.h.b16 %v523
        %v797 = vunpack.c.l.b16 %v524
        %v798 = vunpack.c.h.b16 %v524
        %v799 = vunpack.c.l.b16 %v525
        %v800 = vunpack.c.h.b16 %v525
        %v801 = vunpack.c.l.b16 %v526
        %v802 = vunpack.c.h.b16 %v526
        %v803 = vunpack.c.l.b16 %v527
        %v804 = vunpack.c.h.b16 %v527
        %v805 = vunpack.c.l.b16 %v528
        %v806 = vunpack.c.h.b16 %v528
        %v807 = vunpack.c.l.b16 %v529
        %v808 = vunpack.c.h.b16 %v529
        %v809 = vunpack.c.l.b16 %v530
        %v810 = vunpack.c.h.b16 %v530
        %v811 = vunpack.c.l.b16 %v531
        %v812 = vunpack.c.h.b16 %v531
        %v813 = vunpack.c.l.b16 %v532
        %v814 = vunpack.c.h.b16 %v532
        %v815 = vunpack.c.l.b16 %v533
        %v816 = vunpack.c.h.b16 %v533
        %v817 = vunpack.c.l.b16 %v534
        %v818 = vunpack.c.h.b16 %v534
        %v819 = vunpack.c.l.b16 %v535
        %v820 = vunpack.c.h.b16 %v535
        %v821 = vunpack.c.l.b16 %v536
        %v822 = vunpack.c.h.b16 %v536
        %v823 = vunpack.c.l.b16 %v537
        %v824 = vunpack.c.h.b16 %v537
        %v825 = vunpack.c.l.b16 %v538
        %v826 = vunpack.c.h.b16 %v538
        %v827 = vunpack.c.l.b16 %v539
        %v828 = vunpack.c.h.b16 %v539
        %v829 = vunpack.c.l.b16 %v540
        %v830 = vunpack.c.h.b16 %v540
        %v831 = vunpack.c.l.b16 %v541
        %v832 = vunpack.c.h.b16 %v541
        %v833 = vunpack.c.l.b16 %v542
        %v834 = vunpack.c.h.b16 %v542
        %v835 = vunpack.c.l.b16 %v543
        %v836 = vunpack.c.h.b16 %v543
        %v837 = vunpack.c.l.b16 %v544
        %v838 = vunpack.c.h.b16 %v544
        %v839 = vpack.c.b16 %v689, %v679
        %v840 = vpack.c.b16 %v690, %v680
        %v841 = vpack.c.b16 %v691, %v681
        %v842 = vpack.c.b16 %v692, %v682
        %v843 = vpack.c.b16 %v693, %v683
        %v844 = vpack.c.b16 %v694, %v684
        %v845 = vpack.c.b16 %v695, %v685
        %v846 = vpack.c.b16 %v696, %v686
        %v847 = vpack.c.b16 %v697, %v687
        %v848 = vpack.c.b16 %v698, %v688
        %v849 = vpack.c.b16 %v709, %v699
        %v850 = vpack.c.b16 %v710, %v700
        %v851 = vpack.c.b16 %v711, %v701
        %v852 = vpack.c.b16 %v712, %v702
        %v853 = vpack.c.b16 %v713, %v703
        %v854 = vpack.c.b16 %v714, %v704
        %v855 = vpack.c.b16 %v715, %v705
        %v856 = vpack.c.b16 %v716, %v706
        %v857 = vpack.c.b16 %v717, %v707
        %v858 = vpack.c.b16 %v718, %v708
        %v859 = vpack.c.b16 %v729, %v719
        %v860 = vpack.c.b16 %v730, %v720
        %v861 = vpack.c.b16 %v731, %v721
        %v862 = vpack.c.b16 %v732, %v722
        %v863 = vpack.c.b16 %v733, %v723
        %v864 = vpack.c.b16 %v734, %v724
        %v865 = vpack.c.b16 %v735, %v725
        %v866 = vpack.c.b16 %v736, %v726
        %v867 = vpack.c.b16 %v737, %v727
        %v868 = vpack.c.b16 %v738, %v728
        %v869 = vpack.c.b16 %v749, %v739
        %v870 = vpack.c.b16 %v750, %v740
        %v871 = vpack.c.b16 %v751, %v741
        %v872 = vpack.c.b16 %v752, %v742
        %v873 = vpack.c.b16 %v753, %v743
        %v874 = vpack.c.b16 %v754, %v744
        %v875 = vpack.c.b16 %v755, %v745
        %v876 = vpack.c.b16 %v756, %v746
        %v877 = vpack.c.b16 %v757, %v747
        %v878 = vpack.c.b16 %v758, %v748
        %v879 = vpack.c.b16 %v769, %v759
        %v880 = vpack.c.b16 %v770, %v760
        %v881 = vpack.c.b16 %v771, %v761
        %v882 = vpack.c.b16 %v772, %v762
        %v883 = vpack.c.b16 %v773, %v763
        %v884 = vpack.c.b16 %v774, %v764
        %v885 = vpack.c.b16 %v775, %v765
        %v886 = vpack.c.b16 %v776, %v766
        %v887 = vpack.c.b16 %v777, %v767
        %v888 = vpack.c.b16 %v778, %v768
        %v889 = vpack.c.b16 %v789, %v779
        %v890 = vpack.c.b16 %v790, %v780
        %v891 = vpack.c.b16 %v791, %v781
        %v892 = vpack.c.b16 %v792, %v782
        %v893 = vpack.c.b16 %v793, %v783
        %v894 = vpack.c.b16 %v794, %v784
        %v895 = vpack.c.b16 %v795, %v785
        %v896 = vpack.c.b16 %v796, %v786
        %v897 = vpack.c.b16 %v797, %v787
        %v898 = vpack.c.b16 %v798, %v788
        %v899 = vpack.c.b16 %v809, %v799
        %v900 = vpack.c.b16 %v810, %v800
        %v901 = vpack.c.b16 %v811, %v801
        %v902 = vpack.c.b16 %v812, %v802
        %v903 = vpack.c.b16 %v813, %v803
        %v904 = vpack.c.b16 %v814, %v804
        %v905 = vpack.c.b16 %v815, %v805
        %v906 = vpack.c.b16 %v816, %v806
        %v907 = vpack.c.b16 %v817, %v807
        %v908 = vpack.c.b16 %v818, %v808
        %v909 = vpack.c.b16 %v829, %v819
        %v910 = vpack.c.b16 %v830, %v820
        %v911 = vpack.c.b16 %v831, %v821
        %v912 = vpack.c.b16 %v832, %v822
        %v913 = vpack.c.b16 %v833, %v823
        %v914 = vpack.c.b16 %v834, %v824
        %v915 = vpack.c.b16 %v835, %v825
        %v916 = vpack.c.b16 %v836, %v826
        %v917 = vpack.c.b16 %v837, %v827
        %v918 = vpack.c.b16 %v838, %v828
        %999 = vmatprep.subr.bf16.mxu0 %v840
        %1000 = vmatpush1.bf16.msra.mxu0 %v839
        %1001 = vmatprep.subr.bf16.mxu0 %v850
        %1002 = vmatpush1.bf16.msra.mxu0 %v849
        %1003 = vmatprep.subr.bf16.mxu0 %v860
        %1004 = vmatpush1.bf16.msra.mxu0 %v859
        %1005 = vmatprep.subr.bf16.mxu0 %v870
        %1006 = vmatpush1.bf16.msra.mxu0 %v869
        %1007 = vmatprep.subr.bf16.mxu0 %v880
        %1008 = vmatpush1.bf16.msra.mxu0 %v879
        %1009 = vmatprep.subr.bf16.mxu0 %v890
        %1010 = vmatpush1.bf16.msra.mxu0 %v889
        %1011 = vmatprep.subr.bf16.mxu0 %v900
        %1012 = vmatpush1.bf16.msra.mxu0 %v899
        %1013 = vmatprep.subr.bf16.mxu0 %v910
        %1014 = vmatpush1.bf16.msra.mxu0 %v909
        %1015 = vmatprep.subr.bf16.mxu0 0
        %1016 = vmatpush1.bf16.msra.mxu0 0
        %1017 = vmatprep.subr.bf16.mxu0 0
        %1018 = vmatpush1.bf16.msra.mxu0 0
        %1019 = vmatprep.subr.bf16.mxu0 0
        %1020 = vmatpush1.bf16.msra.mxu0 0
        %1021 = vmatprep.subr.bf16.mxu0 0
        %1022 = vmatpush1.bf16.msra.mxu0 0
        %1023 = vmatprep.subr.bf16.mxu0 0
        %1024 = vmatpush1.bf16.msra.mxu0 0
        %1025 = vmatprep.subr.bf16.mxu0 0
        %1026 = vmatpush1.bf16.msra.mxu0 0
        %1027 = vmatprep.subr.bf16.mxu0 0
        %1028 = vmatpush1.bf16.msra.mxu0 0
        %1029 = vmatprep.subr.bf16.mxu0 0
        %1030 = vmatpush1.bf16.msra.mxu0 0
        %1031 = vmatprep.mubr.bf16.mxu0 0
        %1032 = vmatmul.mubr.bf16.gmra.mrb[0].mxu0 %v464
        %v1033 = vpop.f32.mrb[0].mxu0
        %v1034 = vadd.f32 %v552, %v1033
        %v1035 = vpop.f32.mrb[0].mxu0
        %v1036 = vadd.f32 %v556, %v1035
        %v1037 = vpop.f32.mrb[0].mxu0
        %v1038 = vadd.f32 %v552, %v1037
        %v1039 = vpop.f32.mrb[0].mxu0
        %v1040 = vadd.f32 %v556, %v1039
        %1041 = vdwg.mxu0
        %1042 = vmatprep.subr.bf16.mxu0 %v842
        %1043 = vmatpush1.bf16.msra.mxu0 %v841
        %1044 = vmatprep.subr.bf16.mxu0 %v852
        %1045 = vmatpush1.bf16.msra.mxu0 %v851
        %1046 = vmatprep.subr.bf16.mxu0 %v862
        %1047 = vmatpush1.bf16.msra.mxu0 %v861
        %1048 = vmatprep.subr.bf16.mxu0 %v872
        %1049 = vmatpush1.bf16.msra.mxu0 %v871
        %1050 = vmatprep.subr.bf16.mxu0 %v882
        %1051 = vmatpush1.bf16.msra.mxu0 %v881
        %1052 = vmatprep.subr.bf16.mxu0 %v892
        %1053 = vmatpush1.bf16.msra.mxu0 %v891
        %1054 = vmatprep.subr.bf16.mxu0 %v902
        %1055 = vmatpush1.bf16.msra.mxu0 %v901
        %1056 = vmatprep.subr.bf16.mxu0 %v912
        %1057 = vmatpush1.bf16.msra.mxu0 %v911
        %1058 = vmatprep.subr.bf16.mxu0 0
        %1059 = vmatpush1.bf16.msra.mxu0 0
        %1060 = vmatprep.subr.bf16.mxu0 0
        %1061 = vmatpush1.bf16.msra.mxu0 0
        %1062 = vmatprep.subr.bf16.mxu0 0
        %1063 = vmatpush1.bf16.msra.mxu0 0
        %1064 = vmatprep.subr.bf16.mxu0 0
        %1065 = vmatpush1.bf16.msra.mxu0 0
        %1066 = vmatprep.subr.bf16.mxu0 0
        %1067 = vmatpush1.bf16.msra.mxu0 0
        %1068 = vmatprep.subr.bf16.mxu0 0
        %1069 = vmatpush1.bf16.msra.mxu0 0
        %1070 = vmatprep.subr.bf16.mxu0 0
        %1071 = vmatpush1.bf16.msra.mxu0 0
        %1072 = vmatprep.subr.bf16.mxu0 0
        %1073 = vmatpush1.bf16.msra.mxu0 0
        %1074 = vmatprep.mubr.bf16.mxu0 0
        %1075 = vmatmul.mubr.bf16.gmra.mrb[0].mxu0 %v464
        %v1076 = vpop.f32.mrb[0].mxu0
        %v1077 = vadd.f32 %v560, %v1076
        %v1078 = vpop.f32.mrb[0].mxu0
        %v1079 = vadd.f32 %v564, %v1078
        %v1080 = vpop.f32.mrb[0].mxu0
        %v1081 = vadd.f32 %v560, %v1080
        %v1082 = vpop.f32.mrb[0].mxu0
        %v1083 = vadd.f32 %v564, %v1082
        %1084 = vdwg.mxu0
        %1085 = vmatprep.subr.bf16.mxu0 %v844
        %1086 = vmatpush1.bf16.msra.mxu0 %v843
        %1087 = vmatprep.subr.bf16.mxu0 %v854
        %1088 = vmatpush1.bf16.msra.mxu0 %v853
        %1089 = vmatprep.subr.bf16.mxu0 %v864
        %1090 = vmatpush1.bf16.msra.mxu0 %v863
        %1091 = vmatprep.subr.bf16.mxu0 %v874
        %1092 = vmatpush1.bf16.msra.mxu0 %v873
        %1093 = vmatprep.subr.bf16.mxu0 %v884
        %1094 = vmatpush1.bf16.msra.mxu0 %v883
        %1095 = vmatprep.subr.bf16.mxu0 %v894
        %1096 = vmatpush1.bf16.msra.mxu0 %v893
        %1097 = vmatprep.subr.bf16.mxu0 %v904
        %1098 = vmatpush1.bf16.msra.mxu0 %v903
        %1099 = vmatprep.subr.bf16.mxu0 %v914
        %1100 = vmatpush1.bf16.msra.mxu0 %v913
        %1101 = vmatprep.subr.bf16.mxu0 0
        %1102 = vmatpush1.bf16.msra.mxu0 0
        %1103 = vmatprep.subr.bf16.mxu0 0
        %1104 = vmatpush1.bf16.msra.mxu0 0
        %1105 = vmatprep.subr.bf16.mxu0 0
        %1106 = vmatpush1.bf16.msra.mxu0 0
        %1107 = vmatprep.subr.bf16.mxu0 0
        %1108 = vmatpush1.bf16.msra.mxu0 0
        %1109 = vmatprep.subr.bf16.mxu0 0
        %1110 = vmatpush1.bf16.msra.mxu0 0
        %1111 = vmatprep.subr.bf16.mxu0 0
        %1112 = vmatpush1.bf16.msra.mxu0 0
        %1113 = vmatprep.subr.bf16.mxu0 0
        %1114 = vmatpush1.bf16.msra.mxu0 0
        %1115 = vmatprep.subr.bf16.mxu0 0
        %1116 = vmatpush1.bf16.msra.mxu0 0
        %1117 = vmatprep.mubr.bf16.mxu0 0
        %1118 = vmatmul.mubr.bf16.gmra.mrb[0].mxu0 %v464
        %v1119 = vpop.f32.mrb[0].mxu0
        %v1120 = vadd.f32 %v568, %v1119
        %v1121 = vpop.f32.mrb[0].mxu0
        %v1122 = vadd.f32 %v572, %v1121
        %v1123 = vpop.f32.mrb[0].mxu0
        %v1124 = vadd.f32 %v568, %v1123
        %v1125 = vpop.f32.mrb[0].mxu0
        %v1126 = vadd.f32 %v572, %v1125
        %1127 = vdwg.mxu0
        %1128 = vmatprep.subr.bf16.mxu0 %v846
        %1129 = vmatpush1.bf16.msra.mxu0 %v845
        %1130 = vmatprep.subr.bf16.mxu0 %v856
        %1131 = vmatpush1.bf16.msra.mxu0 %v855
        %1132 = vmatprep.subr.bf16.mxu0 %v866
        %1133 = vmatpush1.bf16.msra.mxu0 %v865
        %1134 = vmatprep.subr.bf16.mxu0 %v876
        %1135 = vmatpush1.bf16.msra.mxu0 %v875
        %1136 = vmatprep.subr.bf16.mxu0 %v886
        %1137 = vmatpush1.bf16.msra.mxu0 %v885
        %1138 = vmatprep.subr.bf16.mxu0 %v896
        %1139 = vmatpush1.bf16.msra.mxu0 %v895
        %1140 = vmatprep.subr.bf16.mxu0 %v906
        %1141 = vmatpush1.bf16.msra.mxu0 %v905
        %1142 = vmatprep.subr.bf16.mxu0 %v916
        %1143 = vmatpush1.bf16.msra.mxu0 %v915
        %1144 = vmatprep.subr.bf16.mxu0 0
        %1145 = vmatpush1.bf16.msra.mxu0 0
        %1146 = vmatprep.subr.bf16.mxu0 0
        %1147 = vmatpush1.bf16.msra.mxu0 0
        %1148 = vmatprep.subr.bf16.mxu0 0
        %1149 = vmatpush1.bf16.msra.mxu0 0
        %1150 = vmatprep.subr.bf16.mxu0 0
        %1151 = vmatpush1.bf16.msra.mxu0 0
        %1152 = vmatprep.subr.bf16.mxu0 0
        %1153 = vmatpush1.bf16.msra.mxu0 0
        %1154 = vmatprep.subr.bf16.mxu0 0
        %1155 = vmatpush1.bf16.msra.mxu0 0
        %1156 = vmatprep.subr.bf16.mxu0 0
        %1157 = vmatpush1.bf16.msra.mxu0 0
        %1158 = vmatprep.subr.bf16.mxu0 0
        %1159 = vmatpush1.bf16.msra.mxu0 0
        %1160 = vmatprep.mubr.bf16.mxu0 0
        %1161 = vmatmul.mubr.bf16.gmra.mrb[0].mxu0 %v464
        %v1162 = vpop.f32.mrb[0].mxu0
        %v1163 = vadd.f32 %v576, %v1162
        %v1164 = vpop.f32.mrb[0].mxu0
        %v1165 = vadd.f32 %v580, %v1164
        %v1166 = vpop.f32.mrb[0].mxu0
        %v1167 = vadd.f32 %v576, %v1166
        %v1168 = vpop.f32.mrb[0].mxu0
        %v1169 = vadd.f32 %v580, %v1168
        %1170 = vdwg.mxu0
        %1171 = vmatprep.subr.bf16.mxu0 %v848
        %1172 = vmatpush1.bf16.msra.mxu0 %v847
        %1173 = vmatprep.subr.bf16.mxu0 %v858
        %1174 = vmatpush1.bf16.msra.mxu0 %v857
        %1175 = vmatprep.subr.bf16.mxu0 %v868
        %1176 = vmatpush1.bf16.msra.mxu0 %v867
        %1177 = vmatprep.subr.bf16.mxu0 %v878
        %1178 = vmatpush1.bf16.msra.mxu0 %v877
        %1179 = vmatprep.subr.bf16.mxu0 %v888
        %1180 = vmatpush1.bf16.msra.mxu0 %v887
        %1181 = vmatprep.subr.bf16.mxu0 %v898
        %1182 = vmatpush1.bf16.msra.mxu0 %v897
        %1183 = vmatprep.subr.bf16.mxu0 %v908
        %1184 = vmatpush1.bf16.msra.mxu0 %v907
        %1185 = vmatprep.subr.bf16.mxu0 %v918
        %1186 = vmatpush1.bf16.msra.mxu0 %v917
        %1187 = vmatprep.subr.bf16.mxu0 0
        %1188 = vmatpush1.bf16.msra.mxu0 0
        %1189 = vmatprep.subr.bf16.mxu0 0
        %1190 = vmatpush1.bf16.msra.mxu0 0
        %1191 = vmatprep.subr.bf16.mxu0 0
        %1192 = vmatpush1.bf16.msra.mxu0 0
        %1193 = vmatprep.subr.bf16.mxu0 0
        %1194 = vmatpush1.bf16.msra.mxu0 0
        %1195 = vmatprep.subr.bf16.mxu0 0
        %1196 = vmatpush1.bf16.msra.mxu0 0
        %1197 = vmatprep.subr.bf16.mxu0 0
        %1198 = vmatpush1.bf16.msra.mxu0 0
        %1199 = vmatprep.subr.bf16.mxu0 0
        %1200 = vmatpush1.bf16.msra.mxu0 0
        %1201 = vmatprep.subr.bf16.mxu0 0
        %1202 = vmatpush1.bf16.msra.mxu0 0
        %1203 = vmatprep.mubr.bf16.mxu0 0
        %1204 = vmatmul.mubr.bf16.gmra.mrb[0].mxu0 %v464
        %v1205 = vpop.f32.mrb[0].mxu0
        %v1206 = vadd.f32 %v584, %v1205
        %v1207 = vpop.f32.mrb[0].mxu0
        %v1208 = vadd.f32 %v588, %v1207
        %v1209 = vpop.f32.mrb[0].mxu0
        %v1210 = vadd.f32 %v584, %v1209
        %v1211 = vpop.f32.mrb[0].mxu0
        %v1212 = vadd.f32 %v588, %v1211
        %1213 = vdwg.mxu0
        %v1214 = vmax.f32 %v1034, 0.0
        %v1215 = vmax.f32 %v1036, 0.0
        %v1216 = vmax.f32 %v1077, 0.0
        %v1217 = vmax.f32 %v1079, 0.0
        %v1218 = vmax.f32 %v1120, 0.0
        %v1219 = vmax.f32 %v1122, 0.0
        %v1220 = vmax.f32 %v1163, 0.0
        %v1221 = vmax.f32 %v1165, 0.0
        %v1222 = vmax.f32 %v1206, 0.0
        %v1223 = vmax.f32 %v1208, 0.0
        %v1224 = vmax.f32 %v1038, 0.0
        %v1225 = vmax.f32 %v1040, 0.0
        %v1226 = vmax.f32 %v1081, 0.0
        %v1227 = vmax.f32 %v1083, 0.0
        %v1228 = vmax.f32 %v1124, 0.0
        %v1229 = vmax.f32 %v1126, 0.0
        %v1230 = vmax.f32 %v1167, 0.0
        %v1231 = vmax.f32 %v1169, 0.0
        %v1232 = vmax.f32 %v1210, 0.0
        %v1233 = vmax.f32 %v1212, 0.0
        %v1234 = vpack.c.bf16 %v1224, %v1214
        %v1235 = vpack.c.bf16 %v1225, %v1215
        %v1236 = vpack.c.bf16 %v1226, %v1216
        %v1237 = vpack.c.bf16 %v1227, %v1217
        %v1238 = vpack.c.bf16 %v1228, %v1218
        %v1239 = vpack.c.bf16 %v1229, %v1219
        %v1240 = vpack.c.bf16 %v1230, %v1220
        %v1241 = vpack.c.bf16 %v1231, %v1221
        %v1242 = vpack.c.bf16 %v1232, %v1222
        %v1243 = vpack.c.bf16 %v1233, %v1223
        %v1244 = vld [vmem:[#allocation8] sm:$0xff]
        %v1245 = vld [vmem:[#allocation8 + $0x8] sm:$0xff]
        %v1246 = vld [vmem:[#allocation8 + $0x10] sm:$0xff]
        %v1247 = vld [vmem:[#allocation8 + $0x18] sm:$0xff]
        %v1248 = vld [vmem:[#allocation8 + $0x20] sm:$0xff]
        %v1249 = vld [vmem:[#allocation8 + $0x28] sm:$0xff]
        %v1250 = vld [vmem:[#allocation8 + $0x30] sm:$0xff]
        %v1251 = vld [vmem:[#allocation8 + $0x38] sm:$0xff]
        %v1252 = vld [vmem:[#allocation8 + $0x40] sm:$0xff]
        %v1253 = vld [vmem:[#allocation8 + $0x48] sm:$0xff]
        %v1254 = vld [vmem:[#allocation8 + $0x50] sm:$0xff]
        %v1255 = vld [vmem:[#allocation8 + $0x58] sm:$0xff]
        %v1256 = vld [vmem:[#allocation8 + $0x60] sm:$0xff]
        %v1257 = vld [vmem:[#allocation8 + $0x68] sm:$0xff]
        %v1258 = vld [vmem:[#allocation8 + $0x70] sm:$0xff]
        %v1259 = vld [vmem:[#allocation8 + $0x78] sm:$0xff]
        %v1260 = vld [vmem:[#allocation8 + $0x80] sm:$0xff]
        %v1261 = vld [vmem:[#allocation8 + $0x88] sm:$0xff]
        %v1262 = vld [vmem:[#allocation8 + $0x90] sm:$0xff]
        %v1263 = vld [vmem:[#allocation8 + $0x98] sm:$0xff]
        %v1264 = vld [vmem:[#allocation8 + $0xa0] sm:$0xff]
        %v1265 = vld [vmem:[#allocation8 + $0xa8] sm:$0xff]
        %v1266 = vld [vmem:[#allocation8 + $0xb0] sm:$0xff]
        %v1267 = vld [vmem:[#allocation8 + $0xb8] sm:$0xff]
        %v1268 = vld [vmem:[#allocation8 + $0xc0] sm:$0xff]
        %v1269 = vld [vmem:[#allocation8 + $0xc8] sm:$0xff]
        %v1270 = vld [vmem:[#allocation8 + $0xd0] sm:$0xff]
        %v1271 = vld [vmem:[#allocation8 + $0xd8] sm:$0xff]
        %v1272 = vld [vmem:[#allocation8 + $0xe0] sm:$0xff]
        %v1273 = vld [vmem:[#allocation8 + $0xe8] sm:$0xff]
        %v1274 = vld [vmem:[#allocation8 + $0xf0] sm:$0xff]
        %v1275 = vld [vmem:[#allocation8 + $0xf8] sm:$0xff]
        %v1276 = vld [vmem:[#allocation8 + $0x100] sm:$0xff]
        %v1277 = vld [vmem:[#allocation8 + $0x108] sm:$0xff]
        %v1278 = vld [vmem:[#allocation8 + $0x110] sm:$0xff]
        %v1279 = vld [vmem:[#allocation8 + $0x118] sm:$0xff]
        %v1280 = vld [vmem:[#allocation8 + $0x120] sm:$0xff]
        %v1281 = vld [vmem:[#allocation8 + $0x128] sm:$0xff]
        %v1282 = vld [vmem:[#allocation8 + $0x130] sm:$0xff]
        %v1283 = vld [vmem:[#allocation8 + $0x138] sm:$0xff]
        %v1284 = vld [vmem:[#allocation8 + $0x140] sm:$0xff]
        %v1285 = vld [vmem:[#allocation8 + $0x148] sm:$0xff]
        %v1286 = vld [vmem:[#allocation8 + $0x150] sm:$0xff]
        %v1287 = vld [vmem:[#allocation8 + $0x158] sm:$0xff]
        %v1288 = vld [vmem:[#allocation8 + $0x160] sm:$0xff]
        %v1289 = vld [vmem:[#allocation8 + $0x168] sm:$0xff]
        %v1290 = vld [vmem:[#allocation8 + $0x170] sm:$0xff]
        %v1291 = vld [vmem:[#allocation8 + $0x178] sm:$0xff]
        %v1292 = vld [vmem:[#allocation8 + $0x180] sm:$0xff]
        %v1293 = vld [vmem:[#allocation8 + $0x188] sm:$0xff]
        %v1294 = vld [vmem:[#allocation8 + $0x190] sm:$0xff]
        %v1295 = vld [vmem:[#allocation8 + $0x198] sm:$0xff]
        %v1296 = vld [vmem:[#allocation8 + $0x1a0] sm:$0xff]
        %v1297 = vld [vmem:[#allocation8 + $0x1a8] sm:$0xff]
        %v1298 = vld [vmem:[#allocation8 + $0x1b0] sm:$0xff]
        %v1299 = vld [vmem:[#allocation8 + $0x1b8] sm:$0xff]
        %v1300 = vld [vmem:[#allocation8 + $0x1c0] sm:$0xff]
        %v1301 = vld [vmem:[#allocation8 + $0x1c8] sm:$0xff]
        %v1302 = vld [vmem:[#allocation8 + $0x1d0] sm:$0xff]
        %v1303 = vld [vmem:[#allocation8 + $0x1d8] sm:$0xff]
        %v1304 = vld [vmem:[#allocation8 + $0x1e0] sm:$0xff]
        %v1305 = vld [vmem:[#allocation8 + $0x1e8] sm:$0xff]
        %v1306 = vld [vmem:[#allocation8 + $0x1f0] sm:$0xff]
        %v1307 = vld [vmem:[#allocation8 + $0x1f8] sm:$0xff]
        %v1308 = vld [vmem:[#allocation8 + $0x200] sm:$0xff]
        %v1309 = vld [vmem:[#allocation8 + $0x208] sm:$0xff]
        %v1310 = vld [vmem:[#allocation8 + $0x210] sm:$0xff]
        %v1311 = vld [vmem:[#allocation8 + $0x218] sm:$0xff]
        %v1312 = vld [vmem:[#allocation8 + $0x220] sm:$0xff]
        %v1313 = vld [vmem:[#allocation8 + $0x228] sm:$0xff]
        %v1314 = vld [vmem:[#allocation8 + $0x230] sm:$0xff]
        %v1315 = vld [vmem:[#allocation8 + $0x238] sm:$0xff]
        %v1316 = vld [vmem:[#allocation8 + $0x240] sm:$0xff]
        %v1317 = vld [vmem:[#allocation8 + $0x248] sm:$0xff]
        %v1318 = vld [vmem:[#allocation8 + $0x250] sm:$0xff]
        %v1319 = vld [vmem:[#allocation8 + $0x258] sm:$0xff]
        %v1320 = vld [vmem:[#allocation8 + $0x260] sm:$0xff]
        %v1321 = vld [vmem:[#allocation8 + $0x268] sm:$0xff]
        %v1322 = vld [vmem:[#allocation8 + $0x270] sm:$0xff]
        %v1323 = vld [vmem:[#allocation8 + $0x278] sm:$0xff]
        %v1324 = vld [vmem:[#allocation8 + $0x280] sm:$0xff]
        %v1325 = vld [vmem:[#allocation8 + $0x288] sm:$0xff]
        %v1326 = vld [vmem:[#allocation8 + $0x290] sm:$0xff]
        %v1327 = vld [vmem:[#allocation8 + $0x298] sm:$0xff]
        %v1328 = vld [vmem:[#allocation8 + $0x2a0] sm:$0xff]
        %v1329 = vld [vmem:[#allocation8 + $0x2a8] sm:$0xff]
        %v1330 = vld [vmem:[#allocation8 + $0x2b0] sm:$0xff]
        %v1331 = vld [vmem:[#allocation8 + $0x2b8] sm:$0xff]
        %v1332 = vld [vmem:[#allocation8 + $0x2c0] sm:$0xff]
        %v1333 = vld [vmem:[#allocation8 + $0x2c8] sm:$0xff]
        %v1334 = vld [vmem:[#allocation8 + $0x2d0] sm:$0xff]
        %v1335 = vld [vmem:[#allocation8 + $0x2d8] sm:$0xff]
        %v1336 = vld [vmem:[#allocation8 + $0x2e0] sm:$0xff]
        %v1337 = vld [vmem:[#allocation8 + $0x2e8] sm:$0xff]
        %v1338 = vld [vmem:[#allocation8 + $0x2f0] sm:$0xff]
        %v1339 = vld [vmem:[#allocation8 + $0x2f8] sm:$0xff]
        %v1340 = vld [vmem:[#allocation8 + $0x300] sm:$0xff]
        %v1341 = vld [vmem:[#allocation8 + $0x308] sm:$0xff]
        %v1342 = vld [vmem:[#allocation8 + $0x310] sm:$0xff]
        %v1343 = vld [vmem:[#allocation8 + $0x318] sm:$0xff]
        %v1344 = vld [vmem:[#allocation8 + $0x320] sm:$0xff]
        %v1345 = vld [vmem:[#allocation8 + $0x328] sm:$0xff]
        %v1346 = vld [vmem:[#allocation8 + $0x330] sm:$0xff]
        %v1347 = vld [vmem:[#allocation8 + $0x338] sm:$0xff]
        %v1348 = vld [vmem:[#allocation8 + $0x340] sm:$0xff]
        %v1349 = vld [vmem:[#allocation8 + $0x348] sm:$0xff]
        %v1350 = vld [vmem:[#allocation8 + $0x350] sm:$0xff]
        %v1351 = vld [vmem:[#allocation8 + $0x358] sm:$0xff]
        %v1352 = vld [vmem:[#allocation8 + $0x360] sm:$0xff]
        %v1353 = vld [vmem:[#allocation8 + $0x368] sm:$0xff]
        %v1354 = vld [vmem:[#allocation8 + $0x370] sm:$0xff]
        %v1355 = vld [vmem:[#allocation8 + $0x378] sm:$0xff]
        %v1356 = vld [vmem:[#allocation8 + $0x380] sm:$0xff]
        %v1357 = vld [vmem:[#allocation8 + $0x388] sm:$0xff]
        %v1358 = vld [vmem:[#allocation8 + $0x390] sm:$0xff]
        %v1359 = vld [vmem:[#allocation8 + $0x398] sm:$0xff]
        %v1360 = vld [vmem:[#allocation8 + $0x3a0] sm:$0xff]
        %v1361 = vld [vmem:[#allocation8 + $0x3a8] sm:$0xff]
        %v1362 = vld [vmem:[#allocation8 + $0x3b0] sm:$0xff]
        %v1363 = vld [vmem:[#allocation8 + $0x3b8] sm:$0xff]
        %v1364 = vld [vmem:[#allocation8 + $0x3c0] sm:$0xff]
        %v1365 = vld [vmem:[#allocation8 + $0x3c8] sm:$0xff]
        %v1366 = vld [vmem:[#allocation8 + $0x3d0] sm:$0xff]
        %v1367 = vld [vmem:[#allocation8 + $0x3d8] sm:$0xff]
        %v1368 = vld [vmem:[#allocation8 + $0x3e0] sm:$0xff]
        %v1369 = vld [vmem:[#allocation8 + $0x3e8] sm:$0xff]
        %v1370 = vld [vmem:[#allocation8 + $0x3f0] sm:$0xff]
        %v1371 = vld [vmem:[#allocation8 + $0x3f8] sm:$0xff]
        %v1372 = vld [vmem:[#allocation8 + $0x400] sm:$0xff]
        %v1373 = vld [vmem:[#allocation8 + $0x408] sm:$0xff]
        %v1374 = vld [vmem:[#allocation8 + $0x410] sm:$0xff]
        %v1375 = vld [vmem:[#allocation8 + $0x418] sm:$0xff]
        %v1376 = vld [vmem:[#allocation8 + $0x420] sm:$0xff]
        %v1377 = vld [vmem:[#allocation8 + $0x428] sm:$0xff]
        %v1378 = vld [vmem:[#allocation8 + $0x430] sm:$0xff]
        %v1379 = vld [vmem:[#allocation8 + $0x438] sm:$0xff]
        %v1380 = vld [vmem:[#allocation8 + $0x440] sm:$0xff]
        %v1381 = vld [vmem:[#allocation8 + $0x448] sm:$0xff]
        %v1382 = vld [vmem:[#allocation8 + $0x450] sm:$0xff]
        %v1383 = vld [vmem:[#allocation8 + $0x458] sm:$0xff]
        %v1384 = vld [vmem:[#allocation8 + $0x460] sm:$0xff]
        %v1385 = vld [vmem:[#allocation8 + $0x468] sm:$0xff]
        %v1386 = vld [vmem:[#allocation8 + $0x470] sm:$0xff]
        %v1387 = vld [vmem:[#allocation8 + $0x478] sm:$0xff]
        %v1388 = vld [vmem:[#allocation8 + $0x480] sm:$0xff]
        %v1389 = vld [vmem:[#allocation8 + $0x488] sm:$0xff]
        %v1390 = vld [vmem:[#allocation8 + $0x490] sm:$0xff]
        %v1391 = vld [vmem:[#allocation8 + $0x498] sm:$0xff]
        %v1392 = vld [vmem:[#allocation8 + $0x4a0] sm:$0xff]
        %v1393 = vld [vmem:[#allocation8 + $0x4a8] sm:$0xff]
        %v1394 = vld [vmem:[#allocation8 + $0x4b0] sm:$0xff]
        %v1395 = vld [vmem:[#allocation8 + $0x4b8] sm:$0xff]
        %v1396 = vld [vmem:[#allocation8 + $0x4c0] sm:$0xff]
        %v1397 = vld [vmem:[#allocation8 + $0x4c8] sm:$0xff]
        %v1398 = vld [vmem:[#allocation8 + $0x4d0] sm:$0xff]
        %v1399 = vld [vmem:[#allocation8 + $0x4d8] sm:$0xff]
        %v1400 = vld [vmem:[#allocation8 + $0x4e0] sm:$0xff]
        %v1401 = vld [vmem:[#allocation8 + $0x4e8] sm:$0xff]
        %v1402 = vld [vmem:[#allocation8 + $0x4f0] sm:$0xff]
        %v1403 = vld [vmem:[#allocation8 + $0x4f8] sm:$0xff]
        %v1404 = vld [vmem:[#allocation8 + $0x500] sm:$0xff]
        %v1405 = vld [vmem:[#allocation8 + $0x508] sm:$0xff]
        %v1406 = vld [vmem:[#allocation8 + $0x510] sm:$0xff]
        %v1407 = vld [vmem:[#allocation8 + $0x518] sm:$0xff]
        %v1408 = vld [vmem:[#allocation8 + $0x520] sm:$0xff]
        %v1409 = vld [vmem:[#allocation8 + $0x528] sm:$0xff]
        %v1410 = vld [vmem:[#allocation8 + $0x530] sm:$0xff]
        %v1411 = vld [vmem:[#allocation8 + $0x538] sm:$0xff]
        %v1412 = vld [vmem:[#allocation8 + $0x540] sm:$0xff]
        %v1413 = vld [vmem:[#allocation8 + $0x548] sm:$0xff]
        %v1414 = vld [vmem:[#allocation8 + $0x550] sm:$0xff]
        %v1415 = vld [vmem:[#allocation8 + $0x558] sm:$0xff]
        %v1416 = vld [vmem:[#allocation8 + $0x560] sm:$0xff]
        %v1417 = vld [vmem:[#allocation8 + $0x568] sm:$0xff]
        %v1418 = vld [vmem:[#allocation8 + $0x570] sm:$0xff]
        %v1419 = vld [vmem:[#allocation8 + $0x578] sm:$0xff]
        %v1420 = vld [vmem:[#allocation8 + $0x580] sm:$0xff]
        %v1421 = vld [vmem:[#allocation8 + $0x588] sm:$0xff]
        %v1422 = vld [vmem:[#allocation8 + $0x590] sm:$0xff]
        %v1423 = vld [vmem:[#allocation8 + $0x598] sm:$0xff]
        %v1424 = vld [vmem:[#allocation8 + $0x5a0] sm:$0xff]
        %v1425 = vld [vmem:[#allocation8 + $0x5a8] sm:$0xff]
        %v1426 = vld [vmem:[#allocation8 + $0x5b0] sm:$0xff]
        %v1427 = vld [vmem:[#allocation8 + $0x5b8] sm:$0xff]
        %v1428 = vld [vmem:[#allocation8 + $0x5c0] sm:$0xff]
        %v1429 = vld [vmem:[#allocation8 + $0x5c8] sm:$0xff]
        %v1430 = vld [vmem:[#allocation8 + $0x5d0] sm:$0xff]
        %v1431 = vld [vmem:[#allocation8 + $0x5d8] sm:$0xff]
        %v1432 = vld [vmem:[#allocation8 + $0x5e0] sm:$0xff]
        %v1433 = vld [vmem:[#allocation8 + $0x5e8] sm:$0xff]
        %v1434 = vld [vmem:[#allocation8 + $0x5f0] sm:$0xff]
        %v1435 = vld [vmem:[#allocation8 + $0x5f8] sm:$0xff]
        %v1436 = vld [vmem:[#allocation8 + $0x600] sm:$0xff]
        %v1437 = vld [vmem:[#allocation8 + $0x608] sm:$0xff]
        %v1438 = vld [vmem:[#allocation8 + $0x610] sm:$0xff]
        %v1439 = vld [vmem:[#allocation8 + $0x618] sm:$0xff]
        %v1440 = vld [vmem:[#allocation8 + $0x620] sm:$0xff]
        %v1441 = vld [vmem:[#allocation8 + $0x628] sm:$0xff]
        %v1442 = vld [vmem:[#allocation8 + $0x630] sm:$0xff]
        %v1443 = vld [vmem:[#allocation8 + $0x638] sm:$0xff]
        %v1444 = vld [vmem:[#allocation8 + $0x640] sm:$0xff]
        %v1445 = vld [vmem:[#allocation8 + $0x648] sm:$0xff]
        %v1446 = vld [vmem:[#allocation8 + $0x650] sm:$0xff]
        %v1447 = vld [vmem:[#allocation8 + $0x658] sm:$0xff]
        %v1448 = vld [vmem:[#allocation8 + $0x660] sm:$0xff]
        %v1449 = vld [vmem:[#allocation8 + $0x668] sm:$0xff]
        %v1450 = vld [vmem:[#allocation8 + $0x670] sm:$0xff]
        %v1451 = vld [vmem:[#allocation8 + $0x678] sm:$0xff]
        %v1452 = vld [vmem:[#allocation8 + $0x680] sm:$0xff]
        %v1453 = vld [vmem:[#allocation8 + $0x688] sm:$0xff]
        %v1454 = vld [vmem:[#allocation8 + $0x690] sm:$0xff]
        %v1455 = vld [vmem:[#allocation8 + $0x698] sm:$0xff]
        %v1456 = vld [vmem:[#allocation8 + $0x6a0] sm:$0xff]
        %v1457 = vld [vmem:[#allocation8 + $0x6a8] sm:$0xff]
        %v1458 = vld [vmem:[#allocation8 + $0x6b0] sm:$0xff]
        %v1459 = vld [vmem:[#allocation8 + $0x6b8] sm:$0xff]
        %v1460 = vld [vmem:[#allocation8 + $0x6c0] sm:$0xff]
        %v1461 = vld [vmem:[#allocation8 + $0x6c8] sm:$0xff]
        %v1462 = vld [vmem:[#allocation8 + $0x6d0] sm:$0xff]
        %v1463 = vld [vmem:[#allocation8 + $0x6d8] sm:$0xff]
        %v1464 = vld [vmem:[#allocation8 + $0x6e0] sm:$0xff]
        %v1465 = vld [vmem:[#allocation8 + $0x6e8] sm:$0xff]
        %v1466 = vld [vmem:[#allocation8 + $0x6f0] sm:$0xff]
        %v1467 = vld [vmem:[#allocation8 + $0x6f8] sm:$0xff]
        %v1468 = vld [vmem:[#allocation8 + $0x700] sm:$0xff]
        %v1469 = vld [vmem:[#allocation8 + $0x708] sm:$0xff]
        %v1470 = vld [vmem:[#allocation8 + $0x710] sm:$0xff]
        %v1471 = vld [vmem:[#allocation8 + $0x718] sm:$0xff]
        %v1472 = vld [vmem:[#allocation8 + $0x720] sm:$0xff]
        %v1473 = vld [vmem:[#allocation8 + $0x728] sm:$0xff]
        %v1474 = vld [vmem:[#allocation8 + $0x730] sm:$0xff]
        %v1475 = vld [vmem:[#allocation8 + $0x738] sm:$0xff]
        %v1476 = vld [vmem:[#allocation8 + $0x740] sm:$0xff]
        %v1477 = vld [vmem:[#allocation8 + $0x748] sm:$0xff]
        %v1478 = vld [vmem:[#allocation8 + $0x750] sm:$0xff]
        %v1479 = vld [vmem:[#allocation8 + $0x758] sm:$0xff]
        %v1480 = vld [vmem:[#allocation8 + $0x760] sm:$0xff]
        %v1481 = vld [vmem:[#allocation8 + $0x768] sm:$0xff]
        %v1482 = vld [vmem:[#allocation8 + $0x770] sm:$0xff]
        %v1483 = vld [vmem:[#allocation8 + $0x778] sm:$0xff]
        %v1484 = vld [vmem:[#allocation8 + $0x780] sm:$0xff]
        %v1485 = vld [vmem:[#allocation8 + $0x788] sm:$0xff]
        %v1486 = vld [vmem:[#allocation8 + $0x790] sm:$0xff]
        %v1487 = vld [vmem:[#allocation8 + $0x798] sm:$0xff]
        %v1488 = vld [vmem:[#allocation8 + $0x7a0] sm:$0xff]
        %v1489 = vld [vmem:[#allocation8 + $0x7a8] sm:$0xff]
        %v1490 = vld [vmem:[#allocation8 + $0x7b0] sm:$0xff]
        %v1491 = vld [vmem:[#allocation8 + $0x7b8] sm:$0xff]
        %v1492 = vld [vmem:[#allocation8 + $0x7c0] sm:$0xff]
        %v1493 = vld [vmem:[#allocation8 + $0x7c8] sm:$0xff]
        %v1494 = vld [vmem:[#allocation8 + $0x7d0] sm:$0xff]
        %v1495 = vld [vmem:[#allocation8 + $0x7d8] sm:$0xff]
        %v1496 = vld [vmem:[#allocation8 + $0x7e0] sm:$0xff]
        %v1497 = vld [vmem:[#allocation8 + $0x7e8] sm:$0xff]
        %v1498 = vld [vmem:[#allocation8 + $0x7f0] sm:$0xff]
        %v1499 = vld [vmem:[#allocation8 + $0x7f8] sm:$0xff]
        %v1500 = vld [vmem:[#allocation8 + $0x800] sm:$0xff]
        %v1501 = vld [vmem:[#allocation8 + $0x808] sm:$0xff]
        %v1502 = vld [vmem:[#allocation8 + $0x810] sm:$0xff]
        %v1503 = vld [vmem:[#allocation8 + $0x818] sm:$0xff]
        %v1504 = vld [vmem:[#allocation8 + $0x820] sm:$0xff]
        %v1505 = vld [vmem:[#allocation8 + $0x828] sm:$0xff]
        %v1506 = vld [vmem:[#allocation8 + $0x830] sm:$0xff]
        %v1507 = vld [vmem:[#allocation8 + $0x838] sm:$0xff]
        %v1508 = vld [vmem:[#allocation8 + $0x840] sm:$0xff]
        %v1509 = vld [vmem:[#allocation8 + $0x848] sm:$0xff]
        %v1510 = vld [vmem:[#allocation8 + $0x850] sm:$0xff]
        %v1511 = vld [vmem:[#allocation8 + $0x858] sm:$0xff]
        %v1512 = vld [vmem:[#allocation8 + $0x860] sm:$0xff]
        %v1513 = vld [vmem:[#allocation8 + $0x868] sm:$0xff]
        %v1514 = vld [vmem:[#allocation8 + $0x870] sm:$0xff]
        %v1515 = vld [vmem:[#allocation8 + $0x878] sm:$0xff]
        %v1516 = vld [vmem:[#allocation8 + $0x880] sm:$0xff]
        %v1517 = vld [vmem:[#allocation8 + $0x888] sm:$0xff]
        %v1518 = vld [vmem:[#allocation8 + $0x890] sm:$0xff]
        %v1519 = vld [vmem:[#allocation8 + $0x898] sm:$0xff]
        %v1520 = vld [vmem:[#allocation8 + $0x8a0] sm:$0xff]
        %v1521 = vld [vmem:[#allocation8 + $0x8a8] sm:$0xff]
        %v1522 = vld [vmem:[#allocation8 + $0x8b0] sm:$0xff]
        %v1523 = vld [vmem:[#allocation8 + $0x8b8] sm:$0xff]
        %v1524 = vld [vmem:[#allocation8 + $0x8c0] sm:$0xff]
        %v1525 = vld [vmem:[#allocation8 + $0x8c8] sm:$0xff]
        %v1526 = vld [vmem:[#allocation8 + $0x8d0] sm:$0xff]
        %v1527 = vld [vmem:[#allocation8 + $0x8d8] sm:$0xff]
        %v1528 = vld [vmem:[#allocation8 + $0x8e0] sm:$0xff]
        %v1529 = vld [vmem:[#allocation8 + $0x8e8] sm:$0xff]
        %v1530 = vld [vmem:[#allocation8 + $0x8f0] sm:$0xff]
        %v1531 = vld [vmem:[#allocation8 + $0x8f8] sm:$0xff]
        %v1532 = vld [vmem:[#allocation8 + $0x900] sm:$0xff]
        %v1533 = vld [vmem:[#allocation8 + $0x908] sm:$0xff]
        %v1534 = vld [vmem:[#allocation8 + $0x910] sm:$0xff]
        %v1535 = vld [vmem:[#allocation8 + $0x918] sm:$0xff]
        %v1536 = vld [vmem:[#allocation8 + $0x920] sm:$0xff]
        %v1537 = vld [vmem:[#allocation8 + $0x928] sm:$0xff]
        %v1538 = vld [vmem:[#allocation8 + $0x930] sm:$0xff]
        %v1539 = vld [vmem:[#allocation8 + $0x938] sm:$0xff]
        %v1540 = vld [vmem:[#allocation8 + $0x940] sm:$0xff]
        %v1541 = vld [vmem:[#allocation8 + $0x948] sm:$0xff]
        %v1542 = vld [vmem:[#allocation8 + $0x950] sm:$0xff]
        %v1543 = vld [vmem:[#allocation8 + $0x958] sm:$0xff]
        %v1544 = vld [vmem:[#allocation8 + $0x960] sm:$0xff]
        %v1545 = vld [vmem:[#allocation8 + $0x968] sm:$0xff]
        %v1546 = vld [vmem:[#allocation8 + $0x970] sm:$0xff]
        %v1547 = vld [vmem:[#allocation8 + $0x978] sm:$0xff]
        %v1548 = vld [vmem:[#allocation8 + $0x980] sm:$0xff]
        %v1549 = vld [vmem:[#allocation8 + $0x988] sm:$0xff]
        %v1550 = vld [vmem:[#allocation8 + $0x990] sm:$0xff]
        %v1551 = vld [vmem:[#allocation8 + $0x998] sm:$0xff]
        %v1552 = vld [vmem:[#allocation8 + $0x9a0] sm:$0xff]
        %v1553 = vld [vmem:[#allocation8 + $0x9a8] sm:$0xff]
        %v1554 = vld [vmem:[#allocation8 + $0x9b0] sm:$0xff]
        %v1555 = vld [vmem:[#allocation8 + $0x9b8] sm:$0xff]
        %v1556 = vld [vmem:[#allocation8 + $0x9c0] sm:$0xff]
        %v1557 = vld [vmem:[#allocation8 + $0x9c8] sm:$0xff]
        %v1558 = vld [vmem:[#allocation8 + $0x9d0] sm:$0xff]
        %v1559 = vld [vmem:[#allocation8 + $0x9d8] sm:$0xff]
        %v1560 = vld [vmem:[#allocation8 + $0x9e0] sm:$0xff]
        %v1561 = vld [vmem:[#allocation8 + $0x9e8] sm:$0xff]
        %v1562 = vld [vmem:[#allocation8 + $0x9f0] sm:$0xff]
        %v1563 = vld [vmem:[#allocation8 + $0x9f8] sm:$0xff]
        %v1564 = vld [vmem:[#allocation10] sm:$0xf]
        %v1566 = vlaneseq
        %v1567 = vshrl.u32 %v1566, 7
        %v1568 = vsub.s32 0, %v1567
        %v1569 = vrot.slane %v1564, %v1568
        %v1570 = vlaneseq
        %v1571 = vshrl.u32 %v1570, 7
        %v1572 = vsub.s32 1, %v1571
        %v1573 = vrot.slane %v1564, %v1572
        %v1574 = vlaneseq
        %v1575 = vshrl.u32 %v1574, 7
        %v1576 = vsub.s32 2, %v1575
        %v1577 = vrot.slane %v1564, %v1576
        %v1578 = vlaneseq
        %v1579 = vshrl.u32 %v1578, 7
        %v1580 = vsub.s32 3, %v1579
        %v1581 = vrot.slane %v1564, %v1580
        %v1906 = vunpack.c.l.b16 %v1244
        %v1907 = vunpack.c.h.b16 %v1244
        %v1908 = vunpack.c.l.b16 %v1245
        %v1909 = vunpack.c.h.b16 %v1245
        %v1910 = vunpack.c.l.b16 %v1246
        %v1911 = vunpack.c.h.b16 %v1246
        %v1912 = vunpack.c.l.b16 %v1247
        %v1913 = vunpack.c.h.b16 %v1247
        %v1914 = vunpack.c.l.b16 %v1248
        %v1915 = vunpack.c.h.b16 %v1248
        %v1916 = vunpack.c.l.b16 %v1249
        %v1917 = vunpack.c.h.b16 %v1249
        %v1918 = vunpack.c.l.b16 %v1250
        %v1919 = vunpack.c.h.b16 %v1250
        %v1920 = vunpack.c.l.b16 %v1251
        %v1921 = vunpack.c.h.b16 %v1251
        %v1922 = vunpack.c.l.b16 %v1252
        %v1923 = vunpack.c.h.b16 %v1252
        %v1924 = vunpack.c.l.b16 %v1253
        %v1925 = vunpack.c.h.b16 %v1253
        %v1926 = vunpack.c.l.b16 %v1254
        %v1927 = vunpack.c.h.b16 %v1254
        %v1928 = vunpack.c.l.b16 %v1255
        %v1929 = vunpack.c.h.b16 %v1255
        %v1930 = vunpack.c.l.b16 %v1256
        %v1931 = vunpack.c.h.b16 %v1256
        %v1932 = vunpack.c.l.b16 %v1257
        %v1933 = vunpack.c.h.b16 %v1257
        %v1934 = vunpack.c.l.b16 %v1258
        %v1935 = vunpack.c.h.b16 %v1258
        %v1936 = vunpack.c.l.b16 %v1259
        %v1937 = vunpack.c.h.b16 %v1259
        %v1938 = vunpack.c.l.b16 %v1260
        %v1939 = vunpack.c.h.b16 %v1260
        %v1940 = vunpack.c.l.b16 %v1261
        %v1941 = vunpack.c.h.b16 %v1261
        %v1942 = vunpack.c.l.b16 %v1262
        %v1943 = vunpack.c.h.b16 %v1262
        %v1944 = vunpack.c.l.b16 %v1263
        %v1945 = vunpack.c.h.b16 %v1263
        %v1946 = vunpack.c.l.b16 %v1264
        %v1947 = vunpack.c.h.b16 %v1264
        %v1948 = vunpack.c.l.b16 %v1265
        %v1949 = vunpack.c.h.b16 %v1265
        %v1950 = vunpack.c.l.b16 %v1266
        %v1951 = vunpack.c.h.b16 %v1266
        %v1952 = vunpack.c.l.b16 %v1267
        %v1953 = vunpack.c.h.b16 %v1267
        %v1954 = vunpack.c.l.b16 %v1268
        %v1955 = vunpack.c.h.b16 %v1268
        %v1956 = vunpack.c.l.b16 %v1269
        %v1957 = vunpack.c.h.b16 %v1269
        %v1958 = vunpack.c.l.b16 %v1270
        %v1959 = vunpack.c.h.b16 %v1270
        %v1960 = vunpack.c.l.b16 %v1271
        %v1961 = vunpack.c.h.b16 %v1271
        %v1962 = vunpack.c.l.b16 %v1272
        %v1963 = vunpack.c.h.b16 %v1272
        %v1964 = vunpack.c.l.b16 %v1273
        %v1965 = vunpack.c.h.b16 %v1273
        %v1966 = vunpack.c.l.b16 %v1274
        %v1967 = vunpack.c.h.b16 %v1274
        %v1968 = vunpack.c.l.b16 %v1275
        %v1969 = vunpack.c.h.b16 %v1275
        %v1970 = vunpack.c.l.b16 %v1276
        %v1971 = vunpack.c.h.b16 %v1276
        %v1972 = vunpack.c.l.b16 %v1277
        %v1973 = vunpack.c.h.b16 %v1277
        %v1974 = vunpack.c.l.b16 %v1278
        %v1975 = vunpack.c.h.b16 %v1278
        %v1976 = vunpack.c.l.b16 %v1279
        %v1977 = vunpack.c.h.b16 %v1279
        %v1978 = vunpack.c.l.b16 %v1280
        %v1979 = vunpack.c.h.b16 %v1280
        %v1980 = vunpack.c.l.b16 %v1281
        %v1981 = vunpack.c.h.b16 %v1281
        %v1982 = vunpack.c.l.b16 %v1282
        %v1983 = vunpack.c.h.b16 %v1282
        %v1984 = vunpack.c.l.b16 %v1283
        %v1985 = vunpack.c.h.b16 %v1283
        %v1986 = vunpack.c.l.b16 %v1284
        %v1987 = vunpack.c.h.b16 %v1284
        %v1988 = vunpack.c.l.b16 %v1285
        %v1989 = vunpack.c.h.b16 %v1285
        %v1990 = vunpack.c.l.b16 %v1286
        %v1991 = vunpack.c.h.b16 %v1286
        %v1992 = vunpack.c.l.b16 %v1287
        %v1993 = vunpack.c.h.b16 %v1287
        %v1994 = vunpack.c.l.b16 %v1288
        %v1995 = vunpack.c.h.b16 %v1288
        %v1996 = vunpack.c.l.b16 %v1289
        %v1997 = vunpack.c.h.b16 %v1289
        %v1998 = vunpack.c.l.b16 %v1290
        %v1999 = vunpack.c.h.b16 %v1290
        %v2000 = vunpack.c.l.b16 %v1291
        %v2001 = vunpack.c.h.b16 %v1291
        %v2002 = vunpack.c.l.b16 %v1292
        %v2003 = vunpack.c.h.b16 %v1292
        %v2004 = vunpack.c.l.b16 %v1293
        %v2005 = vunpack.c.h.b16 %v1293
        %v2006 = vunpack.c.l.b16 %v1294
        %v2007 = vunpack.c.h.b16 %v1294
        %v2008 = vunpack.c.l.b16 %v1295
        %v2009 = vunpack.c.h.b16 %v1295
        %v2010 = vunpack.c.l.b16 %v1296
        %v2011 = vunpack.c.h.b16 %v1296
        %v2012 = vunpack.c.l.b16 %v1297
        %v2013 = vunpack.c.h.b16 %v1297
        %v2014 = vunpack.c.l.b16 %v1298
        %v2015 = vunpack.c.h.b16 %v1298
        %v2016 = vunpack.c.l.b16 %v1299
        %v2017 = vunpack.c.h.b16 %v1299
        %v2018 = vunpack.c.l.b16 %v1300
        %v2019 = vunpack.c.h.b16 %v1300
        %v2020 = vunpack.c.l.b16 %v1301
        %v2021 = vunpack.c.h.b16 %v1301
        %v2022 = vunpack.c.l.b16 %v1302
        %v2023 = vunpack.c.h.b16 %v1302
        %v2024 = vunpack.c.l.b16 %v1303
        %v2025 = vunpack.c.h.b16 %v1303
        %v2026 = vunpack.c.l.b16 %v1304
        %v2027 = vunpack.c.h.b16 %v1304
        %v2028 = vunpack.c.l.b16 %v1305
        %v2029 = vunpack.c.h.b16 %v1305
        %v2030 = vunpack.c.l.b16 %v1306
        %v2031 = vunpack.c.h.b16 %v1306
        %v2032 = vunpack.c.l.b16 %v1307
        %v2033 = vunpack.c.h.b16 %v1307
        %v2034 = vunpack.c.l.b16 %v1308
        %v2035 = vunpack.c.h.b16 %v1308
        %v2036 = vunpack.c.l.b16 %v1309
        %v2037 = vunpack.c.h.b16 %v1309
        %v2038 = vunpack.c.l.b16 %v1310
        %v2039 = vunpack.c.h.b16 %v1310
        %v2040 = vunpack.c.l.b16 %v1311
        %v2041 = vunpack.c.h.b16 %v1311
        %v2042 = vunpack.c.l.b16 %v1312
        %v2043 = vunpack.c.h.b16 %v1312
        %v2044 = vunpack.c.l.b16 %v1313
        %v2045 = vunpack.c.h.b16 %v1313
        %v2046 = vunpack.c.l.b16 %v1314
        %v2047 = vunpack.c.h.b16 %v1314
        %v2048 = vunpack.c.l.b16 %v1315
        %v2049 = vunpack.c.h.b16 %v1315
        %v2050 = vunpack.c.l.b16 %v1316
        %v2051 = vunpack.c.h.b16 %v1316
        %v2052 = vunpack.c.l.b16 %v1317
        %v2053 = vunpack.c.h.b16 %v1317
        %v2054 = vunpack.c.l.b16 %v1318
        %v2055 = vunpack.c.h.b16 %v1318
        %v2056 = vunpack.c.l.b16 %v1319
        %v2057 = vunpack.c.h.b16 %v1319
        %v2058 = vunpack.c.l.b16 %v1320
        %v2059 = vunpack.c.h.b16 %v1320
        %v2060 = vunpack.c.l.b16 %v1321
        %v2061 = vunpack.c.h.b16 %v1321
        %v2062 = vunpack.c.l.b16 %v1322
        %v2063 = vunpack.c.h.b16 %v1322
        %v2064 = vunpack.c.l.b16 %v1323
        %v2065 = vunpack.c.h.b16 %v1323
        %v2066 = vunpack.c.l.b16 %v1324
        %v2067 = vunpack.c.h.b16 %v1324
        %v2068 = vunpack.c.l.b16 %v1325
        %v2069 = vunpack.c.h.b16 %v1325
        %v2070 = vunpack.c.l.b16 %v1326
        %v2071 = vunpack.c.h.b16 %v1326
        %v2072 = vunpack.c.l.b16 %v1327
        %v2073 = vunpack.c.h.b16 %v1327
        %v2074 = vunpack.c.l.b16 %v1328
        %v2075 = vunpack.c.h.b16 %v1328
        %v2076 = vunpack.c.l.b16 %v1329
        %v2077 = vunpack.c.h.b16 %v1329
        %v2078 = vunpack.c.l.b16 %v1330
        %v2079 = vunpack.c.h.b16 %v1330
        %v2080 = vunpack.c.l.b16 %v1331
        %v2081 = vunpack.c.h.b16 %v1331
        %v2082 = vunpack.c.l.b16 %v1332
        %v2083 = vunpack.c.h.b16 %v1332
        %v2084 = vunpack.c.l.b16 %v1333
        %v2085 = vunpack.c.h.b16 %v1333
        %v2086 = vunpack.c.l.b16 %v1334
        %v2087 = vunpack.c.h.b16 %v1334
        %v2088 = vunpack.c.l.b16 %v1335
        %v2089 = vunpack.c.h.b16 %v1335
        %v2090 = vunpack.c.l.b16 %v1336
        %v2091 = vunpack.c.h.b16 %v1336
        %v2092 = vunpack.c.l.b16 %v1337
        %v2093 = vunpack.c.h.b16 %v1337
        %v2094 = vunpack.c.l.b16 %v1338
        %v2095 = vunpack.c.h.b16 %v1338
        %v2096 = vunpack.c.l.b16 %v1339
        %v2097 = vunpack.c.h.b16 %v1339
        %v2098 = vunpack.c.l.b16 %v1340
        %v2099 = vunpack.c.h.b16 %v1340
        %v2100 = vunpack.c.l.b16 %v1341
        %v2101 = vunpack.c.h.b16 %v1341
        %v2102 = vunpack.c.l.b16 %v1342
        %v2103 = vunpack.c.h.b16 %v1342
        %v2104 = vunpack.c.l.b16 %v1343
        %v2105 = vunpack.c.h.b16 %v1343
        %v2106 = vunpack.c.l.b16 %v1344
        %v2107 = vunpack.c.h.b16 %v1344
        %v2108 = vunpack.c.l.b16 %v1345
        %v2109 = vunpack.c.h.b16 %v1345
        %v2110 = vunpack.c.l.b16 %v1346
        %v2111 = vunpack.c.h.b16 %v1346
        %v2112 = vunpack.c.l.b16 %v1347
        %v2113 = vunpack.c.h.b16 %v1347
        %v2114 = vunpack.c.l.b16 %v1348
        %v2115 = vunpack.c.h.b16 %v1348
        %v2116 = vunpack.c.l.b16 %v1349
        %v2117 = vunpack.c.h.b16 %v1349
        %v2118 = vunpack.c.l.b16 %v1350
        %v2119 = vunpack.c.h.b16 %v1350
        %v2120 = vunpack.c.l.b16 %v1351
        %v2121 = vunpack.c.h.b16 %v1351
        %v2122 = vunpack.c.l.b16 %v1352
        %v2123 = vunpack.c.h.b16 %v1352
        %v2124 = vunpack.c.l.b16 %v1353
        %v2125 = vunpack.c.h.b16 %v1353
        %v2126 = vunpack.c.l.b16 %v1354
        %v2127 = vunpack.c.h.b16 %v1354
        %v2128 = vunpack.c.l.b16 %v1355
        %v2129 = vunpack.c.h.b16 %v1355
        %v2130 = vunpack.c.l.b16 %v1356
        %v2131 = vunpack.c.h.b16 %v1356
        %v2132 = vunpack.c.l.b16 %v1357
        %v2133 = vunpack.c.h.b16 %v1357
        %v2134 = vunpack.c.l.b16 %v1358
        %v2135 = vunpack.c.h.b16 %v1358
        %v2136 = vunpack.c.l.b16 %v1359
        %v2137 = vunpack.c.h.b16 %v1359
        %v2138 = vunpack.c.l.b16 %v1360
        %v2139 = vunpack.c.h.b16 %v1360
        %v2140 = vunpack.c.l.b16 %v1361
        %v2141 = vunpack.c.h.b16 %v1361
        %v2142 = vunpack.c.l.b16 %v1362
        %v2143 = vunpack.c.h.b16 %v1362
        %v2144 = vunpack.c.l.b16 %v1363
        %v2145 = vunpack.c.h.b16 %v1363
        %v2146 = vunpack.c.l.b16 %v1364
        %v2147 = vunpack.c.h.b16 %v1364
        %v2148 = vunpack.c.l.b16 %v1365
        %v2149 = vunpack.c.h.b16 %v1365
        %v2150 = vunpack.c.l.b16 %v1366
        %v2151 = vunpack.c.h.b16 %v1366
        %v2152 = vunpack.c.l.b16 %v1367
        %v2153 = vunpack.c.h.b16 %v1367
        %v2154 = vunpack.c.l.b16 %v1368
        %v2155 = vunpack.c.h.b16 %v1368
        %v2156 = vunpack.c.l.b16 %v1369
        %v2157 = vunpack.c.h.b16 %v1369
        %v2158 = vunpack.c.l.b16 %v1370
        %v2159 = vunpack.c.h.b16 %v1370
        %v2160 = vunpack.c.l.b16 %v1371
        %v2161 = vunpack.c.h.b16 %v1371
        %v2162 = vunpack.c.l.b16 %v1372
        %v2163 = vunpack.c.h.b16 %v1372
        %v2164 = vunpack.c.l.b16 %v1373
        %v2165 = vunpack.c.h.b16 %v1373
        %v2166 = vunpack.c.l.b16 %v1374
        %v2167 = vunpack.c.h.b16 %v1374
        %v2168 = vunpack.c.l.b16 %v1375
        %v2169 = vunpack.c.h.b16 %v1375
        %v2170 = vunpack.c.l.b16 %v1376
        %v2171 = vunpack.c.h.b16 %v1376
        %v2172 = vunpack.c.l.b16 %v1377
        %v2173 = vunpack.c.h.b16 %v1377
        %v2174 = vunpack.c.l.b16 %v1378
        %v2175 = vunpack.c.h.b16 %v1378
        %v2176 = vunpack.c.l.b16 %v1379
        %v2177 = vunpack.c.h.b16 %v1379
        %v2178 = vunpack.c.l.b16 %v1380
        %v2179 = vunpack.c.h.b16 %v1380
        %v2180 = vunpack.c.l.b16 %v1381
        %v2181 = vunpack.c.h.b16 %v1381
        %v2182 = vunpack.c.l.b16 %v1382
        %v2183 = vunpack.c.h.b16 %v1382
        %v2184 = vunpack.c.l.b16 %v1383
        %v2185 = vunpack.c.h.b16 %v1383
        %v2186 = vunpack.c.l.b16 %v1384
        %v2187 = vunpack.c.h.b16 %v1384
        %v2188 = vunpack.c.l.b16 %v1385
        %v2189 = vunpack.c.h.b16 %v1385
        %v2190 = vunpack.c.l.b16 %v1386
        %v2191 = vunpack.c.h.b16 %v1386
        %v2192 = vunpack.c.l.b16 %v1387
        %v2193 = vunpack.c.h.b16 %v1387
        %v2194 = vunpack.c.l.b16 %v1388
        %v2195 = vunpack.c.h.b16 %v1388
        %v2196 = vunpack.c.l.b16 %v1389
        %v2197 = vunpack.c.h.b16 %v1389
        %v2198 = vunpack.c.l.b16 %v1390
        %v2199 = vunpack.c.h.b16 %v1390
        %v2200 = vunpack.c.l.b16 %v1391
        %v2201 = vunpack.c.h.b16 %v1391
        %v2202 = vunpack.c.l.b16 %v1392
        %v2203 = vunpack.c.h.b16 %v1392
        %v2204 = vunpack.c.l.b16 %v1393
        %v2205 = vunpack.c.h.b16 %v1393
        %v2206 = vunpack.c.l.b16 %v1394
        %v2207 = vunpack.c.h.b16 %v1394
        %v2208 = vunpack.c.l.b16 %v1395
        %v2209 = vunpack.c.h.b16 %v1395
        %v2210 = vunpack.c.l.b16 %v1396
        %v2211 = vunpack.c.h.b16 %v1396
        %v2212 = vunpack.c.l.b16 %v1397
        %v2213 = vunpack.c.h.b16 %v1397
        %v2214 = vunpack.c.l.b16 %v1398
        %v2215 = vunpack.c.h.b16 %v1398
        %v2216 = vunpack.c.l.b16 %v1399
        %v2217 = vunpack.c.h.b16 %v1399
        %v2218 = vunpack.c.l.b16 %v1400
        %v2219 = vunpack.c.h.b16 %v1400
        %v2220 = vunpack.c.l.b16 %v1401
        %v2221 = vunpack.c.h.b16 %v1401
        %v2222 = vunpack.c.l.b16 %v1402
        %v2223 = vunpack.c.h.b16 %v1402
        %v2224 = vunpack.c.l.b16 %v1403
        %v2225 = vunpack.c.h.b16 %v1403
        %v2226 = vunpack.c.l.b16 %v1404
        %v2227 = vunpack.c.h.b16 %v1404
        %v2228 = vunpack.c.l.b16 %v1405
        %v2229 = vunpack.c.h.b16 %v1405
        %v2230 = vunpack.c.l.b16 %v1406
        %v2231 = vunpack.c.h.b16 %v1406
        %v2232 = vunpack.c.l.b16 %v1407
        %v2233 = vunpack.c.h.b16 %v1407
        %v2234 = vunpack.c.l.b16 %v1408
        %v2235 = vunpack.c.h.b16 %v1408
        %v2236 = vunpack.c.l.b16 %v1409
        %v2237 = vunpack.c.h.b16 %v1409
        %v2238 = vunpack.c.l.b16 %v1410
        %v2239 = vunpack.c.h.b16 %v1410
        %v2240 = vunpack.c.l.b16 %v1411
        %v2241 = vunpack.c.h.b16 %v1411
        %v2242 = vunpack.c.l.b16 %v1412
        %v2243 = vunpack.c.h.b16 %v1412
        %v2244 = vunpack.c.l.b16 %v1413
        %v2245 = vunpack.c.h.b16 %v1413
        %v2246 = vunpack.c.l.b16 %v1414
        %v2247 = vunpack.c.h.b16 %v1414
        %v2248 = vunpack.c.l.b16 %v1415
        %v2249 = vunpack.c.h.b16 %v1415
        %v2250 = vunpack.c.l.b16 %v1416
        %v2251 = vunpack.c.h.b16 %v1416
        %v2252 = vunpack.c.l.b16 %v1417
        %v2253 = vunpack.c.h.b16 %v1417
        %v2254 = vunpack.c.l.b16 %v1418
        %v2255 = vunpack.c.h.b16 %v1418
        %v2256 = vunpack.c.l.b16 %v1419
        %v2257 = vunpack.c.h.b16 %v1419
        %v2258 = vunpack.c.l.b16 %v1420
        %v2259 = vunpack.c.h.b16 %v1420
        %v2260 = vunpack.c.l.b16 %v1421
        %v2261 = vunpack.c.h.b16 %v1421
        %v2262 = vunpack.c.l.b16 %v1422
        %v2263 = vunpack.c.h.b16 %v1422
        %v2264 = vunpack.c.l.b16 %v1423
        %v2265 = vunpack.c.h.b16 %v1423
        %v2266 = vunpack.c.l.b16 %v1424
        %v2267 = vunpack.c.h.b16 %v1424
        %v2268 = vunpack.c.l.b16 %v1425
        %v2269 = vunpack.c.h.b16 %v1425
        %v2270 = vunpack.c.l.b16 %v1426
        %v2271 = vunpack.c.h.b16 %v1426
        %v2272 = vunpack.c.l.b16 %v1427
        %v2273 = vunpack.c.h.b16 %v1427
        %v2274 = vunpack.c.l.b16 %v1428
        %v2275 = vunpack.c.h.b16 %v1428
        %v2276 = vunpack.c.l.b16 %v1429
        %v2277 = vunpack.c.h.b16 %v1429
        %v2278 = vunpack.c.l.b16 %v1430
        %v2279 = vunpack.c.h.b16 %v1430
        %v2280 = vunpack.c.l.b16 %v1431
        %v2281 = vunpack.c.h.b16 %v1431
        %v2282 = vunpack.c.l.b16 %v1432
        %v2283 = vunpack.c.h.b16 %v1432
        %v2284 = vunpack.c.l.b16 %v1433
        %v2285 = vunpack.c.h.b16 %v1433
        %v2286 = vunpack.c.l.b16 %v1434
        %v2287 = vunpack.c.h.b16 %v1434
        %v2288 = vunpack.c.l.b16 %v1435
        %v2289 = vunpack.c.h.b16 %v1435
        %v2290 = vunpack.c.l.b16 %v1436
        %v2291 = vunpack.c.h.b16 %v1436
        %v2292 = vunpack.c.l.b16 %v1437
        %v2293 = vunpack.c.h.b16 %v1437
        %v2294 = vunpack.c.l.b16 %v1438
        %v2295 = vunpack.c.h.b16 %v1438
        %v2296 = vunpack.c.l.b16 %v1439
        %v2297 = vunpack.c.h.b16 %v1439
        %v2298 = vunpack.c.l.b16 %v1440
        %v2299 = vunpack.c.h.b16 %v1440
        %v2300 = vunpack.c.l.b16 %v1441
        %v2301 = vunpack.c.h.b16 %v1441
        %v2302 = vunpack.c.l.b16 %v1442
        %v2303 = vunpack.c.h.b16 %v1442
        %v2304 = vunpack.c.l.b16 %v1443
        %v2305 = vunpack.c.h.b16 %v1443
        %v2306 = vunpack.c.l.b16 %v1444
        %v2307 = vunpack.c.h.b16 %v1444
        %v2308 = vunpack.c.l.b16 %v1445
        %v2309 = vunpack.c.h.b16 %v1445
        %v2310 = vunpack.c.l.b16 %v1446
        %v2311 = vunpack.c.h.b16 %v1446
        %v2312 = vunpack.c.l.b16 %v1447
        %v2313 = vunpack.c.h.b16 %v1447
        %v2314 = vunpack.c.l.b16 %v1448
        %v2315 = vunpack.c.h.b16 %v1448
        %v2316 = vunpack.c.l.b16 %v1449
        %v2317 = vunpack.c.h.b16 %v1449
        %v2318 = vunpack.c.l.b16 %v1450
        %v2319 = vunpack.c.h.b16 %v1450
        %v2320 = vunpack.c.l.b16 %v1451
        %v2321 = vunpack.c.h.b16 %v1451
        %v2322 = vunpack.c.l.b16 %v1452
        %v2323 = vunpack.c.h.b16 %v1452
        %v2324 = vunpack.c.l.b16 %v1453
        %v2325 = vunpack.c.h.b16 %v1453
        %v2326 = vunpack.c.l.b16 %v1454
        %v2327 = vunpack.c.h.b16 %v1454
        %v2328 = vunpack.c.l.b16 %v1455
        %v2329 = vunpack.c.h.b16 %v1455
        %v2330 = vunpack.c.l.b16 %v1456
        %v2331 = vunpack.c.h.b16 %v1456
        %v2332 = vunpack.c.l.b16 %v1457
        %v2333 = vunpack.c.h.b16 %v1457
        %v2334 = vunpack.c.l.b16 %v1458
        %v2335 = vunpack.c.h.b16 %v1458
        %v2336 = vunpack.c.l.b16 %v1459
        %v2337 = vunpack.c.h.b16 %v1459
        %v2338 = vunpack.c.l.b16 %v1460
        %v2339 = vunpack.c.h.b16 %v1460
        %v2340 = vunpack.c.l.b16 %v1461
        %v2341 = vunpack.c.h.b16 %v1461
        %v2342 = vunpack.c.l.b16 %v1462
        %v2343 = vunpack.c.h.b16 %v1462
        %v2344 = vunpack.c.l.b16 %v1463
        %v2345 = vunpack.c.h.b16 %v1463
        %v2346 = vunpack.c.l.b16 %v1464
        %v2347 = vunpack.c.h.b16 %v1464
        %v2348 = vunpack.c.l.b16 %v1465
        %v2349 = vunpack.c.h.b16 %v1465
        %v2350 = vunpack.c.l.b16 %v1466
        %v2351 = vunpack.c.h.b16 %v1466
        %v2352 = vunpack.c.l.b16 %v1467
        %v2353 = vunpack.c.h.b16 %v1467
        %v2354 = vunpack.c.l.b16 %v1468
        %v2355 = vunpack.c.h.b16 %v1468
        %v2356 = vunpack.c.l.b16 %v1469
        %v2357 = vunpack.c.h.b16 %v1469
        %v2358 = vunpack.c.l.b16 %v1470
        %v2359 = vunpack.c.h.b16 %v1470
        %v2360 = vunpack.c.l.b16 %v1471
        %v2361 = vunpack.c.h.b16 %v1471
        %v2362 = vunpack.c.l.b16 %v1472
        %v2363 = vunpack.c.h.b16 %v1472
        %v2364 = vunpack.c.l.b16 %v1473
        %v2365 = vunpack.c.h.b16 %v1473
        %v2366 = vunpack.c.l.b16 %v1474
        %v2367 = vunpack.c.h.b16 %v1474
        %v2368 = vunpack.c.l.b16 %v1475
        %v2369 = vunpack.c.h.b16 %v1475
        %v2370 = vunpack.c.l.b16 %v1476
        %v2371 = vunpack.c.h.b16 %v1476
        %v2372 = vunpack.c.l.b16 %v1477
        %v2373 = vunpack.c.h.b16 %v1477
        %v2374 = vunpack.c.l.b16 %v1478
        %v2375 = vunpack.c.h.b16 %v1478
        %v2376 = vunpack.c.l.b16 %v1479
        %v2377 = vunpack.c.h.b16 %v1479
        %v2378 = vunpack.c.l.b16 %v1480
        %v2379 = vunpack.c.h.b16 %v1480
        %v2380 = vunpack.c.l.b16 %v1481
        %v2381 = vunpack.c.h.b16 %v1481
        %v2382 = vunpack.c.l.b16 %v1482
        %v2383 = vunpack.c.h.b16 %v1482
        %v2384 = vunpack.c.l.b16 %v1483
        %v2385 = vunpack.c.h.b16 %v1483
        %v2386 = vunpack.c.l.b16 %v1484
        %v2387 = vunpack.c.h.b16 %v1484
        %v2388 = vunpack.c.l.b16 %v1485
        %v2389 = vunpack.c.h.b16 %v1485
        %v2390 = vunpack.c.l.b16 %v1486
        %v2391 = vunpack.c.h.b16 %v1486
        %v2392 = vunpack.c.l.b16 %v1487
        %v2393 = vunpack.c.h.b16 %v1487
        %v2394 = vunpack.c.l.b16 %v1488
        %v2395 = vunpack.c.h.b16 %v1488
        %v2396 = vunpack.c.l.b16 %v1489
        %v2397 = vunpack.c.h.b16 %v1489
        %v2398 = vunpack.c.l.b16 %v1490
        %v2399 = vunpack.c.h.b16 %v1490
        %v2400 = vunpack.c.l.b16 %v1491
        %v2401 = vunpack.c.h.b16 %v1491
        %v2402 = vunpack.c.l.b16 %v1492
        %v2403 = vunpack.c.h.b16 %v1492
        %v2404 = vunpack.c.l.b16 %v1493
        %v2405 = vunpack.c.h.b16 %v1493
        %v2406 = vunpack.c.l.b16 %v1494
        %v2407 = vunpack.c.h.b16 %v1494
        %v2408 = vunpack.c.l.b16 %v1495
        %v2409 = vunpack.c.h.b16 %v1495
        %v2410 = vunpack.c.l.b16 %v1496
        %v2411 = vunpack.c.h.b16 %v1496
        %v2412 = vunpack.c.l.b16 %v1497
        %v2413 = vunpack.c.h.b16 %v1497
        %v2414 = vunpack.c.l.b16 %v1498
        %v2415 = vunpack.c.h.b16 %v1498
        %v2416 = vunpack.c.l.b16 %v1499
        %v2417 = vunpack.c.h.b16 %v1499
        %v2418 = vunpack.c.l.b16 %v1500
        %v2419 = vunpack.c.h.b16 %v1500
        %v2420 = vunpack.c.l.b16 %v1501
        %v2421 = vunpack.c.h.b16 %v1501
        %v2422 = vunpack.c.l.b16 %v1502
        %v2423 = vunpack.c.h.b16 %v1502
        %v2424 = vunpack.c.l.b16 %v1503
        %v2425 = vunpack.c.h.b16 %v1503
        %v2426 = vunpack.c.l.b16 %v1504
        %v2427 = vunpack.c.h.b16 %v1504
        %v2428 = vunpack.c.l.b16 %v1505
        %v2429 = vunpack.c.h.b16 %v1505
        %v2430 = vunpack.c.l.b16 %v1506
        %v2431 = vunpack.c.h.b16 %v1506
        %v2432 = vunpack.c.l.b16 %v1507
        %v2433 = vunpack.c.h.b16 %v1507
        %v2434 = vunpack.c.l.b16 %v1508
        %v2435 = vunpack.c.h.b16 %v1508
        %v2436 = vunpack.c.l.b16 %v1509
        %v2437 = vunpack.c.h.b16 %v1509
        %v2438 = vunpack.c.l.b16 %v1510
        %v2439 = vunpack.c.h.b16 %v1510
        %v2440 = vunpack.c.l.b16 %v1511
        %v2441 = vunpack.c.h.b16 %v1511
        %v2442 = vunpack.c.l.b16 %v1512
        %v2443 = vunpack.c.h.b16 %v1512
        %v2444 = vunpack.c.l.b16 %v1513
        %v2445 = vunpack.c.h.b16 %v1513
        %v2446 = vunpack.c.l.b16 %v1514
        %v2447 = vunpack.c.h.b16 %v1514
        %v2448 = vunpack.c.l.b16 %v1515
        %v2449 = vunpack.c.h.b16 %v1515
        %v2450 = vunpack.c.l.b16 %v1516
        %v2451 = vunpack.c.h.b16 %v1516
        %v2452 = vunpack.c.l.b16 %v1517
        %v2453 = vunpack.c.h.b16 %v1517
        %v2454 = vunpack.c.l.b16 %v1518
        %v2455 = vunpack.c.h.b16 %v1518
        %v2456 = vunpack.c.l.b16 %v1519
        %v2457 = vunpack.c.h.b16 %v1519
        %v2458 = vunpack.c.l.b16 %v1520
        %v2459 = vunpack.c.h.b16 %v1520
        %v2460 = vunpack.c.l.b16 %v1521
        %v2461 = vunpack.c.h.b16 %v1521
        %v2462 = vunpack.c.l.b16 %v1522
        %v2463 = vunpack.c.h.b16 %v1522
        %v2464 = vunpack.c.l.b16 %v1523
        %v2465 = vunpack.c.h.b16 %v1523
        %v2466 = vunpack.c.l.b16 %v1524
        %v2467 = vunpack.c.h.b16 %v1524
        %v2468 = vunpack.c.l.b16 %v1525
        %v2469 = vunpack.c.h.b16 %v1525
        %v2470 = vunpack.c.l.b16 %v1526
        %v2471 = vunpack.c.h.b16 %v1526
        %v2472 = vunpack.c.l.b16 %v1527
        %v2473 = vunpack.c.h.b16 %v1527
        %v2474 = vunpack.c.l.b16 %v1528
        %v2475 = vunpack.c.h.b16 %v1528
        %v2476 = vunpack.c.l.b16 %v1529
        %v2477 = vunpack.c.h.b16 %v1529
        %v2478 = vunpack.c.l.b16 %v1530
        %v2479 = vunpack.c.h.b16 %v1530
        %v2480 = vunpack.c.l.b16 %v1531
        %v2481 = vunpack.c.h.b16 %v1531
        %v2482 = vunpack.c.l.b16 %v1532
        %v2483 = vunpack.c.h.b16 %v1532
        %v2484 = vunpack.c.l.b16 %v1533
        %v2485 = vunpack.c.h.b16 %v1533
        %v2486 = vunpack.c.l.b16 %v1534
        %v2487 = vunpack.c.h.b16 %v1534
        %v2488 = vunpack.c.l.b16 %v1535
        %v2489 = vunpack.c.h.b16 %v1535
        %v2490 = vunpack.c.l.b16 %v1536
        %v2491 = vunpack.c.h.b16 %v1536
        %v2492 = vunpack.c.l.b16 %v1537
        %v2493 = vunpack.c.h.b16 %v1537
        %v2494 = vunpack.c.l.b16 %v1538
        %v2495 = vunpack.c.h.b16 %v1538
        %v2496 = vunpack.c.l.b16 %v1539
        %v2497 = vunpack.c.h.b16 %v1539
        %v2498 = vunpack.c.l.b16 %v1540
        %v2499 = vunpack.c.h.b16 %v1540
        %v2500 = vunpack.c.l.b16 %v1541
        %v2501 = vunpack.c.h.b16 %v1541
        %v2502 = vunpack.c.l.b16 %v1542
        %v2503 = vunpack.c.h.b16 %v1542
        %v2504 = vunpack.c.l.b16 %v1543
        %v2505 = vunpack.c.h.b16 %v1543
        %v2506 = vunpack.c.l.b16 %v1544
        %v2507 = vunpack.c.h.b16 %v1544
        %v2508 = vunpack.c.l.b16 %v1545
        %v2509 = vunpack.c.h.b16 %v1545
        %v2510 = vunpack.c.l.b16 %v1546
        %v2511 = vunpack.c.h.b16 %v1546
        %v2512 = vunpack.c.l.b16 %v1547
        %v2513 = vunpack.c.h.b16 %v1547
        %v2514 = vunpack.c.l.b16 %v1548
        %v2515 = vunpack.c.h.b16 %v1548
        %v2516 = vunpack.c.l.b16 %v1549
        %v2517 = vunpack.c.h.b16 %v1549
        %v2518 = vunpack.c.l.b16 %v1550
        %v2519 = vunpack.c.h.b16 %v1550
        %v2520 = vunpack.c.l.b16 %v1551
        %v2521 = vunpack.c.h.b16 %v1551
        %v2522 = vunpack.c.l.b16 %v1552
        %v2523 = vunpack.c.h.b16 %v1552
        %v2524 = vunpack.c.l.b16 %v1553
        %v2525 = vunpack.c.h.b16 %v1553
        %v2526 = vunpack.c.l.b16 %v1554
        %v2527 = vunpack.c.h.b16 %v1554
        %v2528 = vunpack.c.l.b16 %v1555
        %v2529 = vunpack.c.h.b16 %v1555
        %v2530 = vunpack.c.l.b16 %v1556
        %v2531 = vunpack.c.h.b16 %v1556
        %v2532 = vunpack.c.l.b16 %v1557
        %v2533 = vunpack.c.h.b16 %v1557
        %v2534 = vunpack.c.l.b16 %v1558
        %v2535 = vunpack.c.h.b16 %v1558
        %v2536 = vunpack.c.l.b16 %v1559
        %v2537 = vunpack.c.h.b16 %v1559
        %v2538 = vunpack.c.l.b16 %v1560
        %v2539 = vunpack.c.h.b16 %v1560
        %v2540 = vunpack.c.l.b16 %v1561
        %v2541 = vunpack.c.h.b16 %v1561
        %v2542 = vunpack.c.l.b16 %v1562
        %v2543 = vunpack.c.h.b16 %v1562
        %v2544 = vunpack.c.l.b16 %v1563
        %v2545 = vunpack.c.h.b16 %v1563
        %v2546 = vpack.c.b16 %v1910, %v1906
        %v2547 = vpack.c.b16 %v1911, %v1907
        %v2548 = vpack.c.b16 %v1912, %v1908
        %v2549 = vpack.c.b16 %v1913, %v1909
        %v2550 = vpack.c.b16 %v1918, %v1914
        %v2551 = vpack.c.b16 %v1919, %v1915
        %v2552 = vpack.c.b16 %v1920, %v1916
        %v2553 = vpack.c.b16 %v1921, %v1917
        %v2554 = vpack.c.b16 %v1926, %v1922
        %v2555 = vpack.c.b16 %v1927, %v1923
        %v2556 = vpack.c.b16 %v1928, %v1924
        %v2557 = vpack.c.b16 %v1929, %v1925
        %v2558 = vpack.c.b16 %v1934, %v1930
        %v2559 = vpack.c.b16 %v1935, %v1931
        %v2560 = vpack.c.b16 %v1936, %v1932
        %v2561 = vpack.c.b16 %v1937, %v1933
        %v2562 = vpack.c.b16 %v1942, %v1938
        %v2563 = vpack.c.b16 %v1943, %v1939
        %v2564 = vpack.c.b16 %v1944, %v1940
        %v2565 = vpack.c.b16 %v1945, %v1941
        %v2566 = vpack.c.b16 %v1950, %v1946
        %v2567 = vpack.c.b16 %v1951, %v1947
        %v2568 = vpack.c.b16 %v1952, %v1948
        %v2569 = vpack.c.b16 %v1953, %v1949
        %v2570 = vpack.c.b16 %v1958, %v1954
        %v2571 = vpack.c.b16 %v1959, %v1955
        %v2572 = vpack.c.b16 %v1960, %v1956
        %v2573 = vpack.c.b16 %v1961, %v1957
        %v2574 = vpack.c.b16 %v1966, %v1962
        %v2575 = vpack.c.b16 %v1967, %v1963
        %v2576 = vpack.c.b16 %v1968, %v1964
        %v2577 = vpack.c.b16 %v1969, %v1965
        %v2578 = vpack.c.b16 %v1974, %v1970
        %v2579 = vpack.c.b16 %v1975, %v1971
        %v2580 = vpack.c.b16 %v1976, %v1972
        %v2581 = vpack.c.b16 %v1977, %v1973
        %v2582 = vpack.c.b16 %v1982, %v1978
        %v2583 = vpack.c.b16 %v1983, %v1979
        %v2584 = vpack.c.b16 %v1984, %v1980
        %v2585 = vpack.c.b16 %v1985, %v1981
        %v2586 = vpack.c.b16 %v1990, %v1986
        %v2587 = vpack.c.b16 %v1991, %v1987
        %v2588 = vpack.c.b16 %v1992, %v1988
        %v2589 = vpack.c.b16 %v1993, %v1989
        %v2590 = vpack.c.b16 %v1998, %v1994
        %v2591 = vpack.c.b16 %v1999, %v1995
        %v2592 = vpack.c.b16 %v2000, %v1996
        %v2593 = vpack.c.b16 %v2001, %v1997
        %v2594 = vpack.c.b16 %v2006, %v2002
        %v2595 = vpack.c.b16 %v2007, %v2003
        %v2596 = vpack.c.b16 %v2008, %v2004
        %v2597 = vpack.c.b16 %v2009, %v2005
        %v2598 = vpack.c.b16 %v2014, %v2010
        %v2599 = vpack.c.b16 %v2015, %v2011
        %v2600 = vpack.c.b16 %v2016, %v2012
        %v2601 = vpack.c.b16 %v2017, %v2013
        %v2602 = vpack.c.b16 %v2022, %v2018
        %v2603 = vpack.c.b16 %v2023, %v2019
        %v2604 = vpack.c.b16 %v2024, %v2020
        %v2605 = vpack.c.b16 %v2025, %v2021
        %v2606 = vpack.c.b16 %v2030, %v2026
        %v2607 = vpack.c.b16 %v2031, %v2027
        %v2608 = vpack.c.b16 %v2032, %v2028
        %v2609 = vpack.c.b16 %v2033, %v2029
        %v2610 = vpack.c.b16 %v2038, %v2034
        %v2611 = vpack.c.b16 %v2039, %v2035
        %v2612 = vpack.c.b16 %v2040, %v2036
        %v2613 = vpack.c.b16 %v2041, %v2037
        %v2614 = vpack.c.b16 %v2046, %v2042
        %v2615 = vpack.c.b16 %v2047, %v2043
        %v2616 = vpack.c.b16 %v2048, %v2044
        %v2617 = vpack.c.b16 %v2049, %v2045
        %v2618 = vpack.c.b16 %v2054, %v2050
        %v2619 = vpack.c.b16 %v2055, %v2051
        %v2620 = vpack.c.b16 %v2056, %v2052
        %v2621 = vpack.c.b16 %v2057, %v2053
        %v2622 = vpack.c.b16 %v2062, %v2058
        %v2623 = vpack.c.b16 %v2063, %v2059
        %v2624 = vpack.c.b16 %v2064, %v2060
        %v2625 = vpack.c.b16 %v2065, %v2061
        %v2626 = vpack.c.b16 %v2070, %v2066
        %v2627 = vpack.c.b16 %v2071, %v2067
        %v2628 = vpack.c.b16 %v2072, %v2068
        %v2629 = vpack.c.b16 %v2073, %v2069
        %v2630 = vpack.c.b16 %v2078, %v2074
        %v2631 = vpack.c.b16 %v2079, %v2075
        %v2632 = vpack.c.b16 %v2080, %v2076
        %v2633 = vpack.c.b16 %v2081, %v2077
        %v2634 = vpack.c.b16 %v2086, %v2082
        %v2635 = vpack.c.b16 %v2087, %v2083
        %v2636 = vpack.c.b16 %v2088, %v2084
        %v2637 = vpack.c.b16 %v2089, %v2085
        %v2638 = vpack.c.b16 %v2094, %v2090
        %v2639 = vpack.c.b16 %v2095, %v2091
        %v2640 = vpack.c.b16 %v2096, %v2092
        %v2641 = vpack.c.b16 %v2097, %v2093
        %v2642 = vpack.c.b16 %v2102, %v2098
        %v2643 = vpack.c.b16 %v2103, %v2099
        %v2644 = vpack.c.b16 %v2104, %v2100
        %v2645 = vpack.c.b16 %v2105, %v2101
        %v2646 = vpack.c.b16 %v2110, %v2106
        %v2647 = vpack.c.b16 %v2111, %v2107
        %v2648 = vpack.c.b16 %v2112, %v2108
        %v2649 = vpack.c.b16 %v2113, %v2109
        %v2650 = vpack.c.b16 %v2118, %v2114
        %v2651 = vpack.c.b16 %v2119, %v2115
        %v2652 = vpack.c.b16 %v2120, %v2116
        %v2653 = vpack.c.b16 %v2121, %v2117
        %v2654 = vpack.c.b16 %v2126, %v2122
        %v2655 = vpack.c.b16 %v2127, %v2123
        %v2656 = vpack.c.b16 %v2128, %v2124
        %v2657 = vpack.c.b16 %v2129, %v2125
        %v2658 = vpack.c.b16 %v2134, %v2130
        %v2659 = vpack.c.b16 %v2135, %v2131
        %v2660 = vpack.c.b16 %v2136, %v2132
        %v2661 = vpack.c.b16 %v2137, %v2133
        %v2662 = vpack.c.b16 %v2142, %v2138
        %v2663 = vpack.c.b16 %v2143, %v2139
        %v2664 = vpack.c.b16 %v2144, %v2140
        %v2665 = vpack.c.b16 %v2145, %v2141
        %v2666 = vpack.c.b16 %v2150, %v2146
        %v2667 = vpack.c.b16 %v2151, %v2147
        %v2668 = vpack.c.b16 %v2152, %v2148
        %v2669 = vpack.c.b16 %v2153, %v2149
        %v2670 = vpack.c.b16 %v2158, %v2154
        %v2671 = vpack.c.b16 %v2159, %v2155
        %v2672 = vpack.c.b16 %v2160, %v2156
        %v2673 = vpack.c.b16 %v2161, %v2157
        %v2674 = vpack.c.b16 %v2166, %v2162
        %v2675 = vpack.c.b16 %v2167, %v2163
        %v2676 = vpack.c.b16 %v2168, %v2164
        %v2677 = vpack.c.b16 %v2169, %v2165
        %v2678 = vpack.c.b16 %v2174, %v2170
        %v2679 = vpack.c.b16 %v2175, %v2171
        %v2680 = vpack.c.b16 %v2176, %v2172
        %v2681 = vpack.c.b16 %v2177, %v2173
        %v2682 = vpack.c.b16 %v2182, %v2178
        %v2683 = vpack.c.b16 %v2183, %v2179
        %v2684 = vpack.c.b16 %v2184, %v2180
        %v2685 = vpack.c.b16 %v2185, %v2181
        %v2686 = vpack.c.b16 %v2190, %v2186
        %v2687 = vpack.c.b16 %v2191, %v2187
        %v2688 = vpack.c.b16 %v2192, %v2188
        %v2689 = vpack.c.b16 %v2193, %v2189
        %v2690 = vpack.c.b16 %v2198, %v2194
        %v2691 = vpack.c.b16 %v2199, %v2195
        %v2692 = vpack.c.b16 %v2200, %v2196
        %v2693 = vpack.c.b16 %v2201, %v2197
        %v2694 = vpack.c.b16 %v2206, %v2202
        %v2695 = vpack.c.b16 %v2207, %v2203
        %v2696 = vpack.c.b16 %v2208, %v2204
        %v2697 = vpack.c.b16 %v2209, %v2205
        %v2698 = vpack.c.b16 %v2214, %v2210
        %v2699 = vpack.c.b16 %v2215, %v2211
        %v2700 = vpack.c.b16 %v2216, %v2212
        %v2701 = vpack.c.b16 %v2217, %v2213
        %v2702 = vpack.c.b16 %v2222, %v2218
        %v2703 = vpack.c.b16 %v2223, %v2219
        %v2704 = vpack.c.b16 %v2224, %v2220
        %v2705 = vpack.c.b16 %v2225, %v2221
        %v2706 = vpack.c.b16 %v2230, %v2226
        %v2707 = vpack.c.b16 %v2231, %v2227
        %v2708 = vpack.c.b16 %v2232, %v2228
        %v2709 = vpack.c.b16 %v2233, %v2229
        %v2710 = vpack.c.b16 %v2238, %v2234
        %v2711 = vpack.c.b16 %v2239, %v2235
        %v2712 = vpack.c.b16 %v2240, %v2236
        %v2713 = vpack.c.b16 %v2241, %v2237
        %v2714 = vpack.c.b16 %v2246, %v2242
        %v2715 = vpack.c.b16 %v2247, %v2243
        %v2716 = vpack.c.b16 %v2248, %v2244
        %v2717 = vpack.c.b16 %v2249, %v2245
        %v2718 = vpack.c.b16 %v2254, %v2250
        %v2719 = vpack.c.b16 %v2255, %v2251
        %v2720 = vpack.c.b16 %v2256, %v2252
        %v2721 = vpack.c.b16 %v2257, %v2253
        %v2722 = vpack.c.b16 %v2262, %v2258
        %v2723 = vpack.c.b16 %v2263, %v2259
        %v2724 = vpack.c.b16 %v2264, %v2260
        %v2725 = vpack.c.b16 %v2265, %v2261
        %v2726 = vpack.c.b16 %v2270, %v2266
        %v2727 = vpack.c.b16 %v2271, %v2267
        %v2728 = vpack.c.b16 %v2272, %v2268
        %v2729 = vpack.c.b16 %v2273, %v2269
        %v2730 = vpack.c.b16 %v2278, %v2274
        %v2731 = vpack.c.b16 %v2279, %v2275
        %v2732 = vpack.c.b16 %v2280, %v2276
        %v2733 = vpack.c.b16 %v2281, %v2277
        %v2734 = vpack.c.b16 %v2286, %v2282
        %v2735 = vpack.c.b16 %v2287, %v2283
        %v2736 = vpack.c.b16 %v2288, %v2284
        %v2737 = vpack.c.b16 %v2289, %v2285
        %v2738 = vpack.c.b16 %v2294, %v2290
        %v2739 = vpack.c.b16 %v2295, %v2291
        %v2740 = vpack.c.b16 %v2296, %v2292
        %v2741 = vpack.c.b16 %v2297, %v2293
        %v2742 = vpack.c.b16 %v2302, %v2298
        %v2743 = vpack.c.b16 %v2303, %v2299
        %v2744 = vpack.c.b16 %v2304, %v2300
        %v2745 = vpack.c.b16 %v2305, %v2301
        %v2746 = vpack.c.b16 %v2310, %v2306
        %v2747 = vpack.c.b16 %v2311, %v2307
        %v2748 = vpack.c.b16 %v2312, %v2308
        %v2749 = vpack.c.b16 %v2313, %v2309
        %v2750 = vpack.c.b16 %v2318, %v2314
        %v2751 = vpack.c.b16 %v2319, %v2315
        %v2752 = vpack.c.b16 %v2320, %v2316
        %v2753 = vpack.c.b16 %v2321, %v2317
        %v2754 = vpack.c.b16 %v2326, %v2322
        %v2755 = vpack.c.b16 %v2327, %v2323
        %v2756 = vpack.c.b16 %v2328, %v2324
        %v2757 = vpack.c.b16 %v2329, %v2325
        %v2758 = vpack.c.b16 %v2334, %v2330
        %v2759 = vpack.c.b16 %v2335, %v2331
        %v2760 = vpack.c.b16 %v2336, %v2332
        %v2761 = vpack.c.b16 %v2337, %v2333
        %v2762 = vpack.c.b16 %v2342, %v2338
        %v2763 = vpack.c.b16 %v2343, %v2339
        %v2764 = vpack.c.b16 %v2344, %v2340
        %v2765 = vpack.c.b16 %v2345, %v2341
        %v2766 = vpack.c.b16 %v2350, %v2346
        %v2767 = vpack.c.b16 %v2351, %v2347
        %v2768 = vpack.c.b16 %v2352, %v2348
        %v2769 = vpack.c.b16 %v2353, %v2349
        %v2770 = vpack.c.b16 %v2358, %v2354
        %v2771 = vpack.c.b16 %v2359, %v2355
        %v2772 = vpack.c.b16 %v2360, %v2356
        %v2773 = vpack.c.b16 %v2361, %v2357
        %v2774 = vpack.c.b16 %v2366, %v2362
        %v2775 = vpack.c.b16 %v2367, %v2363
        %v2776 = vpack.c.b16 %v2368, %v2364
        %v2777 = vpack.c.b16 %v2369, %v2365
        %v2778 = vpack.c.b16 %v2374, %v2370
        %v2779 = vpack.c.b16 %v2375, %v2371
        %v2780 = vpack.c.b16 %v2376, %v2372
        %v2781 = vpack.c.b16 %v2377, %v2373
        %v2782 = vpack.c.b16 %v2382, %v2378
        %v2783 = vpack.c.b16 %v2383, %v2379
        %v2784 = vpack.c.b16 %v2384, %v2380
        %v2785 = vpack.c.b16 %v2385, %v2381
        %v2786 = vpack.c.b16 %v2390, %v2386
        %v2787 = vpack.c.b16 %v2391, %v2387
        %v2788 = vpack.c.b16 %v2392, %v2388
        %v2789 = vpack.c.b16 %v2393, %v2389
        %v2790 = vpack.c.b16 %v2398, %v2394
        %v2791 = vpack.c.b16 %v2399, %v2395
        %v2792 = vpack.c.b16 %v2400, %v2396
        %v2793 = vpack.c.b16 %v2401, %v2397
        %v2794 = vpack.c.b16 %v2406, %v2402
        %v2795 = vpack.c.b16 %v2407, %v2403
        %v2796 = vpack.c.b16 %v2408, %v2404
        %v2797 = vpack.c.b16 %v2409, %v2405
        %v2798 = vpack.c.b16 %v2414, %v2410
        %v2799 = vpack.c.b16 %v2415, %v2411
        %v2800 = vpack.c.b16 %v2416, %v2412
        %v2801 = vpack.c.b16 %v2417, %v2413
        %v2802 = vpack.c.b16 %v2422, %v2418
        %v2803 = vpack.c.b16 %v2423, %v2419
        %v2804 = vpack.c.b16 %v2424, %v2420
        %v2805 = vpack.c.b16 %v2425, %v2421
        %v2806 = vpack.c.b16 %v2430, %v2426
        %v2807 = vpack.c.b16 %v2431, %v2427
        %v2808 = vpack.c.b16 %v2432, %v2428
        %v2809 = vpack.c.b16 %v2433, %v2429
        %v2810 = vpack.c.b16 %v2438, %v2434
        %v2811 = vpack.c.b16 %v2439, %v2435
        %v2812 = vpack.c.b16 %v2440, %v2436
        %v2813 = vpack.c.b16 %v2441, %v2437
        %v2814 = vpack.c.b16 %v2446, %v2442
        %v2815 = vpack.c.b16 %v2447, %v2443
        %v2816 = vpack.c.b16 %v2448, %v2444
        %v2817 = vpack.c.b16 %v2449, %v2445
        %v2818 = vpack.c.b16 %v2454, %v2450
        %v2819 = vpack.c.b16 %v2455, %v2451
        %v2820 = vpack.c.b16 %v2456, %v2452
        %v2821 = vpack.c.b16 %v2457, %v2453
        %v2822 = vpack.c.b16 %v2462, %v2458
        %v2823 = vpack.c.b16 %v2463, %v2459
        %v2824 = vpack.c.b16 %v2464, %v2460
        %v2825 = vpack.c.b16 %v2465, %v2461
        %v2826 = vpack.c.b16 %v2470, %v2466
        %v2827 = vpack.c.b16 %v2471, %v2467
        %v2828 = vpack.c.b16 %v2472, %v2468
        %v2829 = vpack.c.b16 %v2473, %v2469
        %v2830 = vpack.c.b16 %v2478, %v2474
        %v2831 = vpack.c.b16 %v2479, %v2475
        %v2832 = vpack.c.b16 %v2480, %v2476
        %v2833 = vpack.c.b16 %v2481, %v2477
        %v2834 = vpack.c.b16 %v2486, %v2482
        %v2835 = vpack.c.b16 %v2487, %v2483
        %v2836 = vpack.c.b16 %v2488, %v2484
        %v2837 = vpack.c.b16 %v2489, %v2485
        %v2838 = vpack.c.b16 %v2494, %v2490
        %v2839 = vpack.c.b16 %v2495, %v2491
        %v2840 = vpack.c.b16 %v2496, %v2492
        %v2841 = vpack.c.b16 %v2497, %v2493
        %v2842 = vpack.c.b16 %v2502, %v2498
        %v2843 = vpack.c.b16 %v2503, %v2499
        %v2844 = vpack.c.b16 %v2504, %v2500
        %v2845 = vpack.c.b16 %v2505, %v2501
        %v2846 = vpack.c.b16 %v2510, %v2506
        %v2847 = vpack.c.b16 %v2511, %v2507
        %v2848 = vpack.c.b16 %v2512, %v2508
        %v2849 = vpack.c.b16 %v2513, %v2509
        %v2850 = vpack.c.b16 %v2518, %v2514
        %v2851 = vpack.c.b16 %v2519, %v2515
        %v2852 = vpack.c.b16 %v2520, %v2516
        %v2853 = vpack.c.b16 %v2521, %v2517
        %v2854 = vpack.c.b16 %v2526, %v2522
        %v2855 = vpack.c.b16 %v2527, %v2523
        %v2856 = vpack.c.b16 %v2528, %v2524
        %v2857 = vpack.c.b16 %v2529, %v2525
        %v2858 = vpack.c.b16 %v2534, %v2530
        %v2859 = vpack.c.b16 %v2535, %v2531
        %v2860 = vpack.c.b16 %v2536, %v2532
        %v2861 = vpack.c.b16 %v2537, %v2533
        %v2862 = vpack.c.b16 %v2542, %v2538
        %v2863 = vpack.c.b16 %v2543, %v2539
        %v2864 = vpack.c.b16 %v2544, %v2540
        %v2865 = vpack.c.b16 %v2545, %v2541
        %3186 = vmatprep.subr.bf16.mxu0 %v2547
        %3187 = vmatpush1.bf16.msra.mxu0 %v2546
        %3188 = vmatprep.subr.bf16.mxu0 %v2551
        %3189 = vmatpush1.bf16.msra.mxu0 %v2550
        %3190 = vmatprep.subr.bf16.mxu0 %v2555
        %3191 = vmatpush1.bf16.msra.mxu0 %v2554
        %3192 = vmatprep.subr.bf16.mxu0 %v2559
        %3193 = vmatpush1.bf16.msra.mxu0 %v2558
        %3194 = vmatprep.subr.bf16.mxu0 %v2563
        %3195 = vmatpush1.bf16.msra.mxu0 %v2562
        %3196 = vmatprep.subr.bf16.mxu0 %v2567
        %3197 = vmatpush1.bf16.msra.mxu0 %v2566
        %3198 = vmatprep.subr.bf16.mxu0 %v2571
        %3199 = vmatpush1.bf16.msra.mxu0 %v2570
        %3200 = vmatprep.subr.bf16.mxu0 %v2575
        %3201 = vmatpush1.bf16.msra.mxu0 %v2574
        %3202 = vmatprep.subr.bf16.mxu0 %v2579
        %3203 = vmatpush1.bf16.msra.mxu0 %v2578
        %3204 = vmatprep.subr.bf16.mxu0 %v2583
        %3205 = vmatpush1.bf16.msra.mxu0 %v2582
        %3206 = vmatprep.subr.bf16.mxu0 %v2587
        %3207 = vmatpush1.bf16.msra.mxu0 %v2586
        %3208 = vmatprep.subr.bf16.mxu0 %v2591
        %3209 = vmatpush1.bf16.msra.mxu0 %v2590
        %3210 = vmatprep.subr.bf16.mxu0 %v2595
        %3211 = vmatpush1.bf16.msra.mxu0 %v2594
        %3212 = vmatprep.subr.bf16.mxu0 %v2599
        %3213 = vmatpush1.bf16.msra.mxu0 %v2598
        %3214 = vmatprep.subr.bf16.mxu0 %v2603
        %3215 = vmatpush1.bf16.msra.mxu0 %v2602
        %3216 = vmatprep.subr.bf16.mxu0 %v2607
        %3217 = vmatpush1.bf16.msra.mxu0 %v2606
        %3218 = vmatprep.mubr.bf16.mxu0 %v1235
        %3219 = vmatmul.mubr.bf16.gmra.mrb[0].mxu0 %v1234
        %v3220 = vpop.f32.mrb[0].mxu0
        %v3221 = vadd.f32 %v1569, %v3220
        %v3222 = vpop.f32.mrb[0].mxu0
        %v3223 = vadd.f32 %v1573, %v3222
        %v3224 = vpop.f32.mrb[0].mxu0
        %v3225 = vadd.f32 %v1569, %v3224
        %v3226 = vpop.f32.mrb[0].mxu0
        %v3227 = vadd.f32 %v1573, %v3226
        %3228 = vdwg.mxu0
        %3229 = vmatprep.subr.bf16.mxu0 %v2611
        %3230 = vmatpush1.bf16.msra.mxu0 %v2610
        %3231 = vmatprep.subr.bf16.mxu0 %v2615
        %3232 = vmatpush1.bf16.msra.mxu0 %v2614
        %3233 = vmatprep.subr.bf16.mxu0 %v2619
        %3234 = vmatpush1.bf16.msra.mxu0 %v2618
        %3235 = vmatprep.subr.bf16.mxu0 %v2623
        %3236 = vmatpush1.bf16.msra.mxu0 %v2622
        %3237 = vmatprep.subr.bf16.mxu0 %v2627
        %3238 = vmatpush1.bf16.msra.mxu0 %v2626
        %3239 = vmatprep.subr.bf16.mxu0 %v2631
        %3240 = vmatpush1.bf16.msra.mxu0 %v2630
        %3241 = vmatprep.subr.bf16.mxu0 %v2635
        %3242 = vmatpush1.bf16.msra.mxu0 %v2634
        %3243 = vmatprep.subr.bf16.mxu0 %v2639
        %3244 = vmatpush1.bf16.msra.mxu0 %v2638
        %3245 = vmatprep.subr.bf16.mxu0 %v2643
        %3246 = vmatpush1.bf16.msra.mxu0 %v2642
        %3247 = vmatprep.subr.bf16.mxu0 %v2647
        %3248 = vmatpush1.bf16.msra.mxu0 %v2646
        %3249 = vmatprep.subr.bf16.mxu0 %v2651
        %3250 = vmatpush1.bf16.msra.mxu0 %v2650
        %3251 = vmatprep.subr.bf16.mxu0 %v2655
        %3252 = vmatpush1.bf16.msra.mxu0 %v2654
        %3253 = vmatprep.subr.bf16.mxu0 %v2659
        %3254 = vmatpush1.bf16.msra.mxu0 %v2658
        %3255 = vmatprep.subr.bf16.mxu0 %v2663
        %3256 = vmatpush1.bf16.msra.mxu0 %v2662
        %3257 = vmatprep.subr.bf16.mxu0 %v2667
        %3258 = vmatpush1.bf16.msra.mxu0 %v2666
        %3259 = vmatprep.subr.bf16.mxu0 %v2671
        %3260 = vmatpush1.bf16.msra.mxu0 %v2670
        %3261 = vmatprep.mubr.bf16.mxu0 %v1237
        %3262 = vmatmul.mubr.bf16.gmra.mrb[0].mxu0 %v1236
        %v3263 = vpop.f32.mrb[0].mxu0
        %v3264 = vadd.f32 %v3221, %v3263
        %v3265 = vpop.f32.mrb[0].mxu0
        %v3266 = vadd.f32 %v3223, %v3265
        %v3267 = vpop.f32.mrb[0].mxu0
        %v3268 = vadd.f32 %v3225, %v3267
        %v3269 = vpop.f32.mrb[0].mxu0
        %v3270 = vadd.f32 %v3227, %v3269
        %3271 = vdwg.mxu0
        %3272 = vmatprep.subr.bf16.mxu0 %v2675
        %3273 = vmatpush1.bf16.msra.mxu0 %v2674
        %3274 = vmatprep.subr.bf16.mxu0 %v2679
        %3275 = vmatpush1.bf16.msra.mxu0 %v2678
        %3276 = vmatprep.subr.bf16.mxu0 %v2683
        %3277 = vmatpush1.bf16.msra.mxu0 %v2682
        %3278 = vmatprep.subr.bf16.mxu0 %v2687
        %3279 = vmatpush1.bf16.msra.mxu0 %v2686
        %3280 = vmatprep.subr.bf16.mxu0 %v2691
        %3281 = vmatpush1.bf16.msra.mxu0 %v2690
        %3282 = vmatprep.subr.bf16.mxu0 %v2695
        %3283 = vmatpush1.bf16.msra.mxu0 %v2694
        %3284 = vmatprep.subr.bf16.mxu0 %v2699
        %3285 = vmatpush1.bf16.msra.mxu0 %v2698
        %3286 = vmatprep.subr.bf16.mxu0 %v2703
        %3287 = vmatpush1.bf16.msra.mxu0 %v2702
        %3288 = vmatprep.subr.bf16.mxu0 %v2707
        %3289 = vmatpush1.bf16.msra.mxu0 %v2706
        %3290 = vmatprep.subr.bf16.mxu0 %v2711
        %3291 = vmatpush1.bf16.msra.mxu0 %v2710
        %3292 = vmatprep.subr.bf16.mxu0 %v2715
        %3293 = vmatpush1.bf16.msra.mxu0 %v2714
        %3294 = vmatprep.subr.bf16.mxu0 %v2719
        %3295 = vmatpush1.bf16.msra.mxu0 %v2718
        %3296 = vmatprep.subr.bf16.mxu0 %v2723
        %3297 = vmatpush1.bf16.msra.mxu0 %v2722
        %3298 = vmatprep.subr.bf16.mxu0 %v2727
        %3299 = vmatpush1.bf16.msra.mxu0 %v2726
        %3300 = vmatprep.subr.bf16.mxu0 %v2731
        %3301 = vmatpush1.bf16.msra.mxu0 %v2730
        %3302 = vmatprep.subr.bf16.mxu0 %v2735
        %3303 = vmatpush1.bf16.msra.mxu0 %v2734
        %3304 = vmatprep.mubr.bf16.mxu0 %v1239
        %3305 = vmatmul.mubr.bf16.gmra.mrb[0].mxu0 %v1238
        %v3306 = vpop.f32.mrb[0].mxu0
        %v3307 = vadd.f32 %v3264, %v3306
        %v3308 = vpop.f32.mrb[0].mxu0
        %v3309 = vadd.f32 %v3266, %v3308
        %v3310 = vpop.f32.mrb[0].mxu0
        %v3311 = vadd.f32 %v3268, %v3310
        %v3312 = vpop.f32.mrb[0].mxu0
        %v3313 = vadd.f32 %v3270, %v3312
        %3314 = vdwg.mxu0
        %3315 = vmatprep.subr.bf16.mxu0 %v2739
        %3316 = vmatpush1.bf16.msra.mxu0 %v2738
        %3317 = vmatprep.subr.bf16.mxu0 %v2743
        %3318 = vmatpush1.bf16.msra.mxu0 %v2742
        %3319 = vmatprep.subr.bf16.mxu0 %v2747
        %3320 = vmatpush1.bf16.msra.mxu0 %v2746
        %3321 = vmatprep.subr.bf16.mxu0 %v2751
        %3322 = vmatpush1.bf16.msra.mxu0 %v2750
        %3323 = vmatprep.subr.bf16.mxu0 %v2755
        %3324 = vmatpush1.bf16.msra.mxu0 %v2754
        %3325 = vmatprep.subr.bf16.mxu0 %v2759
        %3326 = vmatpush1.bf16.msra.mxu0 %v2758
        %3327 = vmatprep.subr.bf16.mxu0 %v2763
        %3328 = vmatpush1.bf16.msra.mxu0 %v2762
        %3329 = vmatprep.subr.bf16.mxu0 %v2767
        %3330 = vmatpush1.bf16.msra.mxu0 %v2766
        %3331 = vmatprep.subr.bf16.mxu0 %v2771
        %3332 = vmatpush1.bf16.msra.mxu0 %v2770
        %3333 = vmatprep.subr.bf16.mxu0 %v2775
        %3334 = vmatpush1.bf16.msra.mxu0 %v2774
        %3335 = vmatprep.subr.bf16.mxu0 %v2779
        %3336 = vmatpush1.bf16.msra.mxu0 %v2778
        %3337 = vmatprep.subr.bf16.mxu0 %v2783
        %3338 = vmatpush1.bf16.msra.mxu0 %v2782
        %3339 = vmatprep.subr.bf16.mxu0 %v2787
        %3340 = vmatpush1.bf16.msra.mxu0 %v2786
        %3341 = vmatprep.subr.bf16.mxu0 %v2791
        %3342 = vmatpush1.bf16.msra.mxu0 %v2790
        %3343 = vmatprep.subr.bf16.mxu0 %v2795
        %3344 = vmatpush1.bf16.msra.mxu0 %v2794
        %3345 = vmatprep.subr.bf16.mxu0 %v2799
        %3346 = vmatpush1.bf16.msra.mxu0 %v2798
        %3347 = vmatprep.mubr.bf16.mxu0 %v1241
        %3348 = vmatmul.mubr.bf16.gmra.mrb[0].mxu0 %v1240
        %v3349 = vpop.f32.mrb[0].mxu0
        %v3350 = vadd.f32 %v3307, %v3349
        %v3351 = vpop.f32.mrb[0].mxu0
        %v3352 = vadd.f32 %v3309, %v3351
        %v3353 = vpop.f32.mrb[0].mxu0
        %v3354 = vadd.f32 %v3311, %v3353
        %v3355 = vpop.f32.mrb[0].mxu0
        %v3356 = vadd.f32 %v3313, %v3355
        %3357 = vdwg.mxu0
        %3358 = vmatprep.subr.bf16.mxu0 %v2803
        %3359 = vmatpush1.bf16.msra.mxu0 %v2802
        %3360 = vmatprep.subr.bf16.mxu0 %v2807
        %3361 = vmatpush1.bf16.msra.mxu0 %v2806
        %3362 = vmatprep.subr.bf16.mxu0 %v2811
        %3363 = vmatpush1.bf16.msra.mxu0 %v2810
        %3364 = vmatprep.subr.bf16.mxu0 %v2815
        %3365 = vmatpush1.bf16.msra.mxu0 %v2814
        %3366 = vmatprep.subr.bf16.mxu0 %v2819
        %3367 = vmatpush1.bf16.msra.mxu0 %v2818
        %3368 = vmatprep.subr.bf16.mxu0 %v2823
        %3369 = vmatpush1.bf16.msra.mxu0 %v2822
        %3370 = vmatprep.subr.bf16.mxu0 %v2827
        %3371 = vmatpush1.bf16.msra.mxu0 %v2826
        %3372 = vmatprep.subr.bf16.mxu0 %v2831
        %3373 = vmatpush1.bf16.msra.mxu0 %v2830
        %3374 = vmatprep.subr.bf16.mxu0 %v2835
        %3375 = vmatpush1.bf16.msra.mxu0 %v2834
        %3376 = vmatprep.subr.bf16.mxu0 %v2839
        %3377 = vmatpush1.bf16.msra.mxu0 %v2838
        %3378 = vmatprep.subr.bf16.mxu0 %v2843
        %3379 = vmatpush1.bf16.msra.mxu0 %v2842
        %3380 = vmatprep.subr.bf16.mxu0 %v2847
        %3381 = vmatpush1.bf16.msra.mxu0 %v2846
        %3382 = vmatprep.subr.bf16.mxu0 %v2851
        %3383 = vmatpush1.bf16.msra.mxu0 %v2850
        %3384 = vmatprep.subr.bf16.mxu0 %v2855
        %3385 = vmatpush1.bf16.msra.mxu0 %v2854
        %3386 = vmatprep.subr.bf16.mxu0 %v2859
        %3387 = vmatpush1.bf16.msra.mxu0 %v2858
        %3388 = vmatprep.subr.bf16.mxu0 %v2863
        %3389 = vmatpush1.bf16.msra.mxu0 %v2862
        %3390 = vmatprep.mubr.bf16.mxu0 %v1243
        %3391 = vmatmul.mubr.bf16.gmra.mrb[0].mxu0 %v1242
        %v3392 = vpop.f32.mrb[0].mxu0
        %v3393 = vadd.f32 %v3350, %v3392
        %v3394 = vpop.f32.mrb[0].mxu0
        %v3395 = vadd.f32 %v3352, %v3394
        %v3396 = vpop.f32.mrb[0].mxu0
        %v3397 = vadd.f32 %v3354, %v3396
        %v3398 = vpop.f32.mrb[0].mxu0
        %v3399 = vadd.f32 %v3356, %v3398
        %3400 = vdwg.mxu0
        %3401 = vmatprep.subr.bf16.mxu0 %v2549
        %3402 = vmatpush1.bf16.msra.mxu0 %v2548
        %3403 = vmatprep.subr.bf16.mxu0 %v2553
        %3404 = vmatpush1.bf16.msra.mxu0 %v2552
        %3405 = vmatprep.subr.bf16.mxu0 %v2557
        %3406 = vmatpush1.bf16.msra.mxu0 %v2556
        %3407 = vmatprep.subr.bf16.mxu0 %v2561
        %3408 = vmatpush1.bf16.msra.mxu0 %v2560
        %3409 = vmatprep.subr.bf16.mxu0 %v2565
        %3410 = vmatpush1.bf16.msra.mxu0 %v2564
        %3411 = vmatprep.subr.bf16.mxu0 %v2569
        %3412 = vmatpush1.bf16.msra.mxu0 %v2568
        %3413 = vmatprep.subr.bf16.mxu0 %v2573
        %3414 = vmatpush1.bf16.msra.mxu0 %v2572
        %3415 = vmatprep.subr.bf16.mxu0 %v2577
        %3416 = vmatpush1.bf16.msra.mxu0 %v2576
        %3417 = vmatprep.subr.bf16.mxu0 %v2581
        %3418 = vmatpush1.bf16.msra.mxu0 %v2580
        %3419 = vmatprep.subr.bf16.mxu0 %v2585
        %3420 = vmatpush1.bf16.msra.mxu0 %v2584
        %3421 = vmatprep.subr.bf16.mxu0 %v2589
        %3422 = vmatpush1.bf16.msra.mxu0 %v2588
        %3423 = vmatprep.subr.bf16.mxu0 %v2593
        %3424 = vmatpush1.bf16.msra.mxu0 %v2592
        %3425 = vmatprep.subr.bf16.mxu0 %v2597
        %3426 = vmatpush1.bf16.msra.mxu0 %v2596
        %3427 = vmatprep.subr.bf16.mxu0 %v2601
        %3428 = vmatpush1.bf16.msra.mxu0 %v2600
        %3429 = vmatprep.subr.bf16.mxu0 %v2605
        %3430 = vmatpush1.bf16.msra.mxu0 %v2604
        %3431 = vmatprep.subr.bf16.mxu0 %v2609
        %3432 = vmatpush1.bf16.msra.mxu0 %v2608
        %3433 = vmatprep.mubr.bf16.mxu0 %v1235
        %3434 = vmatmul.mubr.bf16.gmra.mrb[0].mxu0 %v1234
        %v3435 = vpop.f32.mrb[0].mxu0
        %v3436 = vadd.f32 %v1577, %v3435
        %v3437 = vpop.f32.mrb[0].mxu0
        %v3438 = vadd.f32 %v1581, %v3437
        %v3439 = vpop.f32.mrb[0].mxu0
        %v3440 = vadd.f32 %v1577, %v3439
        %v3441 = vpop.f32.mrb[0].mxu0
        %v3442 = vadd.f32 %v1581, %v3441
        %3443 = vdwg.mxu0
        %3444 = vmatprep.subr.bf16.mxu0 %v2613
        %3445 = vmatpush1.bf16.msra.mxu0 %v2612
        %3446 = vmatprep.subr.bf16.mxu0 %v2617
        %3447 = vmatpush1.bf16.msra.mxu0 %v2616
        %3448 = vmatprep.subr.bf16.mxu0 %v2621
        %3449 = vmatpush1.bf16.msra.mxu0 %v2620
        %3450 = vmatprep.subr.bf16.mxu0 %v2625
        %3451 = vmatpush1.bf16.msra.mxu0 %v2624
        %3452 = vmatprep.subr.bf16.mxu0 %v2629
        %3453 = vmatpush1.bf16.msra.mxu0 %v2628
        %3454 = vmatprep.subr.bf16.mxu0 %v2633
        %3455 = vmatpush1.bf16.msra.mxu0 %v2632
        %3456 = vmatprep.subr.bf16.mxu0 %v2637
        %3457 = vmatpush1.bf16.msra.mxu0 %v2636
        %3458 = vmatprep.subr.bf16.mxu0 %v2641
        %3459 = vmatpush1.bf16.msra.mxu0 %v2640
        %3460 = vmatprep.subr.bf16.mxu0 %v2645
        %3461 = vmatpush1.bf16.msra.mxu0 %v2644
        %3462 = vmatprep.subr.bf16.mxu0 %v2649
        %3463 = vmatpush1.bf16.msra.mxu0 %v2648
        %3464 = vmatprep.subr.bf16.mxu0 %v2653
        %3465 = vmatpush1.bf16.msra.mxu0 %v2652
        %3466 = vmatprep.subr.bf16.mxu0 %v2657
        %3467 = vmatpush1.bf16.msra.mxu0 %v2656
        %3468 = vmatprep.subr.bf16.mxu0 %v2661
        %3469 = vmatpush1.bf16.msra.mxu0 %v2660
        %3470 = vmatprep.subr.bf16.mxu0 %v2665
        %3471 = vmatpush1.bf16.msra.mxu0 %v2664
        %3472 = vmatprep.subr.bf16.mxu0 %v2669
        %3473 = vmatpush1.bf16.msra.mxu0 %v2668
        %3474 = vmatprep.subr.bf16.mxu0 %v2673
        %3475 = vmatpush1.bf16.msra.mxu0 %v2672
        %3476 = vmatprep.mubr.bf16.mxu0 %v1237
        %3477 = vmatmul.mubr.bf16.gmra.mrb[0].mxu0 %v1236
        %v3478 = vpop.f32.mrb[0].mxu0
        %v3479 = vadd.f32 %v3436, %v3478
        %v3480 = vpop.f32.mrb[0].mxu0
        %v3481 = vadd.f32 %v3438, %v3480
        %v3482 = vpop.f32.mrb[0].mxu0
        %v3483 = vadd.f32 %v3440, %v3482
        %v3484 = vpop.f32.mrb[0].mxu0
        %v3485 = vadd.f32 %v3442, %v3484
        %3486 = vdwg.mxu0
        %3487 = vmatprep.subr.bf16.mxu0 %v2677
        %3488 = vmatpush1.bf16.msra.mxu0 %v2676
        %3489 = vmatprep.subr.bf16.mxu0 %v2681
        %3490 = vmatpush1.bf16.msra.mxu0 %v2680
        %3491 = vmatprep.subr.bf16.mxu0 %v2685
        %3492 = vmatpush1.bf16.msra.mxu0 %v2684
        %3493 = vmatprep.subr.bf16.mxu0 %v2689
        %3494 = vmatpush1.bf16.msra.mxu0 %v2688
        %3495 = vmatprep.subr.bf16.mxu0 %v2693
        %3496 = vmatpush1.bf16.msra.mxu0 %v2692
        %3497 = vmatprep.subr.bf16.mxu0 %v2697
        %3498 = vmatpush1.bf16.msra.mxu0 %v2696
        %3499 = vmatprep.subr.bf16.mxu0 %v2701
        %3500 = vmatpush1.bf16.msra.mxu0 %v2700
        %3501 = vmatprep.subr.bf16.mxu0 %v2705
        %3502 = vmatpush1.bf16.msra.mxu0 %v2704
        %3503 = vmatprep.subr.bf16.mxu0 %v2709
        %3504 = vmatpush1.bf16.msra.mxu0 %v2708
        %3505 = vmatprep.subr.bf16.mxu0 %v2713
        %3506 = vmatpush1.bf16.msra.mxu0 %v2712
        %3507 = vmatprep.subr.bf16.mxu0 %v2717
        %3508 = vmatpush1.bf16.msra.mxu0 %v2716
        %3509 = vmatprep.subr.bf16.mxu0 %v2721
        %3510 = vmatpush1.bf16.msra.mxu0 %v2720
        %3511 = vmatprep.subr.bf16.mxu0 %v2725
        %3512 = vmatpush1.bf16.msra.mxu0 %v2724
        %3513 = vmatprep.subr.bf16.mxu0 %v2729
        %3514 = vmatpush1.bf16.msra.mxu0 %v2728
        %3515 = vmatprep.subr.bf16.mxu0 %v2733
        %3516 = vmatpush1.bf16.msra.mxu0 %v2732
        %3517 = vmatprep.subr.bf16.mxu0 %v2737
        %3518 = vmatpush1.bf16.msra.mxu0 %v2736
        %3519 = vmatprep.mubr.bf16.mxu0 %v1239
        %3520 = vmatmul.mubr.bf16.gmra.mrb[0].mxu0 %v1238
        %v3521 = vpop.f32.mrb[0].mxu0
        %v3522 = vadd.f32 %v3479, %v3521
        %v3523 = vpop.f32.mrb[0].mxu0
        %v3524 = vadd.f32 %v3481, %v3523
        %v3525 = vpop.f32.mrb[0].mxu0
        %v3526 = vadd.f32 %v3483, %v3525
        %v3527 = vpop.f32.mrb[0].mxu0
        %v3528 = vadd.f32 %v3485, %v3527
        %3529 = vdwg.mxu0
        %3530 = vmatprep.subr.bf16.mxu0 %v2741
        %3531 = vmatpush1.bf16.msra.mxu0 %v2740
        %3532 = vmatprep.subr.bf16.mxu0 %v2745
        %3533 = vmatpush1.bf16.msra.mxu0 %v2744
        %3534 = vmatprep.subr.bf16.mxu0 %v2749
        %3535 = vmatpush1.bf16.msra.mxu0 %v2748
        %3536 = vmatprep.subr.bf16.mxu0 %v2753
        %3537 = vmatpush1.bf16.msra.mxu0 %v2752
        %3538 = vmatprep.subr.bf16.mxu0 %v2757
        %3539 = vmatpush1.bf16.msra.mxu0 %v2756
        %3540 = vmatprep.subr.bf16.mxu0 %v2761
        %3541 = vmatpush1.bf16.msra.mxu0 %v2760
        %3542 = vmatprep.subr.bf16.mxu0 %v2765
        %3543 = vmatpush1.bf16.msra.mxu0 %v2764
        %3544 = vmatprep.subr.bf16.mxu0 %v2769
        %3545 = vmatpush1.bf16.msra.mxu0 %v2768
        %3546 = vmatprep.subr.bf16.mxu0 %v2773
        %3547 = vmatpush1.bf16.msra.mxu0 %v2772
        %3548 = vmatprep.subr.bf16.mxu0 %v2777
        %3549 = vmatpush1.bf16.msra.mxu0 %v2776
        %3550 = vmatprep.subr.bf16.mxu0 %v2781
        %3551 = vmatpush1.bf16.msra.mxu0 %v2780
        %3552 = vmatprep.subr.bf16.mxu0 %v2785
        %3553 = vmatpush1.bf16.msra.mxu0 %v2784
        %3554 = vmatprep.subr.bf16.mxu0 %v2789
        %3555 = vmatpush1.bf16.msra.mxu0 %v2788
        %3556 = vmatprep.subr.bf16.mxu0 %v2793
        %3557 = vmatpush1.bf16.msra.mxu0 %v2792
        %3558 = vmatprep.subr.bf16.mxu0 %v2797
        %3559 = vmatpush1.bf16.msra.mxu0 %v2796
        %3560 = vmatprep.subr.bf16.mxu0 %v2801
        %3561 = vmatpush1.bf16.msra.mxu0 %v2800
        %3562 = vmatprep.mubr.bf16.mxu0 %v1241
        %3563 = vmatmul.mubr.bf16.gmra.mrb[0].mxu0 %v1240
        %v3564 = vpop.f32.mrb[0].mxu0
        %v3565 = vadd.f32 %v3522, %v3564
        %v3566 = vpop.f32.mrb[0].mxu0
        %v3567 = vadd.f32 %v3524, %v3566
        %v3568 = vpop.f32.mrb[0].mxu0
        %v3569 = vadd.f32 %v3526, %v3568
        %v3570 = vpop.f32.mrb[0].mxu0
        %v3571 = vadd.f32 %v3528, %v3570
        %3572 = vdwg.mxu0
        %3573 = vmatprep.subr.bf16.mxu0 %v2805
        %3574 = vmatpush1.bf16.msra.mxu0 %v2804
        %3575 = vmatprep.subr.bf16.mxu0 %v2809
        %3576 = vmatpush1.bf16.msra.mxu0 %v2808
        %3577 = vmatprep.subr.bf16.mxu0 %v2813
        %3578 = vmatpush1.bf16.msra.mxu0 %v2812
        %3579 = vmatprep.subr.bf16.mxu0 %v2817
        %3580 = vmatpush1.bf16.msra.mxu0 %v2816
        %3581 = vmatprep.subr.bf16.mxu0 %v2821
        %3582 = vmatpush1.bf16.msra.mxu0 %v2820
        %3583 = vmatprep.subr.bf16.mxu0 %v2825
        %3584 = vmatpush1.bf16.msra.mxu0 %v2824
        %3585 = vmatprep.subr.bf16.mxu0 %v2829
        %3586 = vmatpush1.bf16.msra.mxu0 %v2828
        %3587 = vmatprep.subr.bf16.mxu0 %v2833
        %3588 = vmatpush1.bf16.msra.mxu0 %v2832
        %3589 = vmatprep.subr.bf16.mxu0 %v2837
        %3590 = vmatpush1.bf16.msra.mxu0 %v2836
        %3591 = vmatprep.subr.bf16.mxu0 %v2841
        %3592 = vmatpush1.bf16.msra.mxu0 %v2840
        %3593 = vmatprep.subr.bf16.mxu0 %v2845
        %3594 = vmatpush1.bf16.msra.mxu0 %v2844
        %3595 = vmatprep.subr.bf16.mxu0 %v2849
        %3596 = vmatpush1.bf16.msra.mxu0 %v2848
        %3597 = vmatprep.subr.bf16.mxu0 %v2853
        %3598 = vmatpush1.bf16.msra.mxu0 %v2852
        %3599 = vmatprep.subr.bf16.mxu0 %v2857
        %3600 = vmatpush1.bf16.msra.mxu0 %v2856
        %3601 = vmatprep.subr.bf16.mxu0 %v2861
        %3602 = vmatpush1.bf16.msra.mxu0 %v2860
        %3603 = vmatprep.subr.bf16.mxu0 %v2865
        %3604 = vmatpush1.bf16.msra.mxu0 %v2864
        %3605 = vmatprep.mubr.bf16.mxu0 %v1243
        %3606 = vmatmul.mubr.bf16.gmra.mrb[0].mxu0 %v1242
        %v3607 = vpop.f32.mrb[0].mxu0
        %v3608 = vadd.f32 %v3565, %v3607
        %v3609 = vpop.f32.mrb[0].mxu0
        %v3610 = vadd.f32 %v3567, %v3609
        %v3611 = vpop.f32.mrb[0].mxu0
        %v3612 = vadd.f32 %v3569, %v3611
        %v3613 = vpop.f32.mrb[0].mxu0
        %v3614 = vadd.f32 %v3571, %v3613
        %3615 = vdwg.mxu0
        %v3616 = vmax.f32 %v3393, 0.0
        %v3617 = vmax.f32 %v3395, 0.0
        %v3618 = vmax.f32 %v3608, 0.0
        %v3619 = vmax.f32 %v3610, 0.0
        %v3620 = vmax.f32 %v3397, 0.0
        %v3621 = vmax.f32 %v3399, 0.0
        %v3622 = vmax.f32 %v3612, 0.0
        %v3623 = vmax.f32 %v3614, 0.0
        %v3624 = vpack.c.bf16 %v3620, %v3616
        %v3625 = vpack.c.bf16 %v3621, %v3617
        %v3626 = vpack.c.bf16 %v3622, %v3618
        %v3627 = vpack.c.bf16 %v3623, %v3619
        %v3628 = vld [vmem:[#allocation11] sm:$0xff]
        %v3629 = vld [vmem:[#allocation11 + $0x8] sm:$0xff]
        %v3630 = vld [vmem:[#allocation11 + $0x10] sm:$0xff]
        %v3631 = vld [vmem:[#allocation11 + $0x18] sm:$0xff]
        %v3632 = vld [vmem:[#allocation11 + $0x20] sm:$0xff]
        %v3633 = vld [vmem:[#allocation11 + $0x28] sm:$0xff]
        %v3634 = vld [vmem:[#allocation11 + $0x30] sm:$0xff]
        %v3635 = vld [vmem:[#allocation11 + $0x38] sm:$0xff]
        %v3636 = vld [vmem:[#allocation11 + $0x40] sm:$0xff]
        %v3637 = vld [vmem:[#allocation11 + $0x48] sm:$0xff]
        %v3638 = vld [vmem:[#allocation11 + $0x50] sm:$0xff]
        %v3639 = vld [vmem:[#allocation11 + $0x58] sm:$0xff]
        %v3640 = vld [vmem:[#allocation11 + $0x60] sm:$0xff]
        %v3641 = vld [vmem:[#allocation11 + $0x68] sm:$0xff]
        %v3642 = vld [vmem:[#allocation11 + $0x70] sm:$0xff]
        %v3643 = vld [vmem:[#allocation11 + $0x78] sm:$0xff]
        %v3644 = vld [vmem:[#allocation11 + $0x80] sm:$0xff]
        %v3645 = vld [vmem:[#allocation11 + $0x88] sm:$0xff]
        %v3646 = vld [vmem:[#allocation11 + $0x90] sm:$0xff]
        %v3647 = vld [vmem:[#allocation11 + $0x98] sm:$0xff]
        %v3648 = vld [vmem:[#allocation11 + $0xa0] sm:$0xff]
        %v3649 = vld [vmem:[#allocation11 + $0xa8] sm:$0xff]
        %v3650 = vld [vmem:[#allocation11 + $0xb0] sm:$0xff]
        %v3651 = vld [vmem:[#allocation11 + $0xb8] sm:$0xff]
        %v3652 = vld [vmem:[#allocation11 + $0xc0] sm:$0xff]
        %v3653 = vld [vmem:[#allocation11 + $0xc8] sm:$0xff]
        %v3654 = vld [vmem:[#allocation11 + $0xd0] sm:$0xff]
        %v3655 = vld [vmem:[#allocation11 + $0xd8] sm:$0xff]
        %v3656 = vld [vmem:[#allocation11 + $0xe0] sm:$0xff]
        %v3657 = vld [vmem:[#allocation11 + $0xe8] sm:$0xff]
        %v3658 = vld [vmem:[#allocation11 + $0xf0] sm:$0xff]
        %v3659 = vld [vmem:[#allocation11 + $0xf8] sm:$0xff]
        %v3660 = vld [vmem:[#allocation11 + $0x100] sm:$0xff]
        %v3661 = vld [vmem:[#allocation11 + $0x108] sm:$0xff]
        %v3662 = vld [vmem:[#allocation11 + $0x110] sm:$0xff]
        %v3663 = vld [vmem:[#allocation11 + $0x118] sm:$0xff]
        %v3664 = vld [vmem:[#allocation11 + $0x120] sm:$0xff]
        %v3665 = vld [vmem:[#allocation11 + $0x128] sm:$0xff]
        %v3666 = vld [vmem:[#allocation11 + $0x130] sm:$0xff]
        %v3667 = vld [vmem:[#allocation11 + $0x138] sm:$0xff]
        %v3668 = vld [vmem:[#allocation11 + $0x140] sm:$0xff]
        %v3669 = vld [vmem:[#allocation11 + $0x148] sm:$0xff]
        %v3670 = vld [vmem:[#allocation11 + $0x150] sm:$0xff]
        %v3671 = vld [vmem:[#allocation11 + $0x158] sm:$0xff]
        %v3672 = vld [vmem:[#allocation11 + $0x160] sm:$0xff]
        %v3673 = vld [vmem:[#allocation11 + $0x168] sm:$0xff]
        %v3674 = vld [vmem:[#allocation11 + $0x170] sm:$0xff]
        %v3675 = vld [vmem:[#allocation11 + $0x178] sm:$0xff]
        %v3676 = vld [vmem:[#allocation11 + $0x180] sm:$0xff]
        %v3677 = vld [vmem:[#allocation11 + $0x188] sm:$0xff]
        %v3678 = vld [vmem:[#allocation11 + $0x190] sm:$0xff]
        %v3679 = vld [vmem:[#allocation11 + $0x198] sm:$0xff]
        %v3680 = vld [vmem:[#allocation11 + $0x1a0] sm:$0xff]
        %v3681 = vld [vmem:[#allocation11 + $0x1a8] sm:$0xff]
        %v3682 = vld [vmem:[#allocation11 + $0x1b0] sm:$0xff]
        %v3683 = vld [vmem:[#allocation11 + $0x1b8] sm:$0xff]
        %v3684 = vld [vmem:[#allocation11 + $0x1c0] sm:$0xff]
        %v3685 = vld [vmem:[#allocation11 + $0x1c8] sm:$0xff]
        %v3686 = vld [vmem:[#allocation11 + $0x1d0] sm:$0xff]
        %v3687 = vld [vmem:[#allocation11 + $0x1d8] sm:$0xff]
        %v3688 = vld [vmem:[#allocation11 + $0x1e0] sm:$0xff]
        %v3689 = vld [vmem:[#allocation11 + $0x1e8] sm:$0xff]
        %v3690 = vld [vmem:[#allocation11 + $0x1f0] sm:$0xff]
        %v3691 = vld [vmem:[#allocation11 + $0x1f8] sm:$0xff]
        %v3692 = vld [vmem:[#allocation13] sm:$0x3]
        %v3694 = vlaneseq
        %v3695 = vshrl.u32 %v3694, 7
        %v3696 = vsub.s32 0, %v3695
        %v3697 = vrot.slane %v3692, %v3696
        %v3698 = vlaneseq
        %v3699 = vshrl.u32 %v3698, 7
        %v3700 = vsub.s32 1, %v3699
        %v3701 = vrot.slane %v3692, %v3700
        %v3768 = vunpack.c.l.b16 %v3628
        %v3769 = vunpack.c.h.b16 %v3628
        %v3770 = vunpack.c.l.b16 %v3629
        %v3771 = vunpack.c.h.b16 %v3629
        %v3772 = vunpack.c.l.b16 %v3630
        %v3773 = vunpack.c.h.b16 %v3630
        %v3774 = vunpack.c.l.b16 %v3631
        %v3775 = vunpack.c.h.b16 %v3631
        %v3776 = vunpack.c.l.b16 %v3632
        %v3777 = vunpack.c.h.b16 %v3632
        %v3778 = vunpack.c.l.b16 %v3633
        %v3779 = vunpack.c.h.b16 %v3633
        %v3780 = vunpack.c.l.b16 %v3634
        %v3781 = vunpack.c.h.b16 %v3634
        %v3782 = vunpack.c.l.b16 %v3635
        %v3783 = vunpack.c.h.b16 %v3635
        %v3784 = vunpack.c.l.b16 %v3636
        %v3785 = vunpack.c.h.b16 %v3636
        %v3786 = vunpack.c.l.b16 %v3637
        %v3787 = vunpack.c.h.b16 %v3637
        %v3788 = vunpack.c.l.b16 %v3638
        %v3789 = vunpack.c.h.b16 %v3638
        %v3790 = vunpack.c.l.b16 %v3639
        %v3791 = vunpack.c.h.b16 %v3639
        %v3792 = vunpack.c.l.b16 %v3640
        %v3793 = vunpack.c.h.b16 %v3640
        %v3794 = vunpack.c.l.b16 %v3641
        %v3795 = vunpack.c.h.b16 %v3641
        %v3796 = vunpack.c.l.b16 %v3642
        %v3797 = vunpack.c.h.b16 %v3642
        %v3798 = vunpack.c.l.b16 %v3643
        %v3799 = vunpack.c.h.b16 %v3643
        %v3800 = vunpack.c.l.b16 %v3644
        %v3801 = vunpack.c.h.b16 %v3644
        %v3802 = vunpack.c.l.b16 %v3645
        %v3803 = vunpack.c.h.b16 %v3645
        %v3804 = vunpack.c.l.b16 %v3646
        %v3805 = vunpack.c.h.b16 %v3646
        %v3806 = vunpack.c.l.b16 %v3647
        %v3807 = vunpack.c.h.b16 %v3647
        %v3808 = vunpack.c.l.b16 %v3648
        %v3809 = vunpack.c.h.b16 %v3648
        %v3810 = vunpack.c.l.b16 %v3649
        %v3811 = vunpack.c.h.b16 %v3649
        %v3812 = vunpack.c.l.b16 %v3650
        %v3813 = vunpack.c.h.b16 %v3650
        %v3814 = vunpack.c.l.b16 %v3651
        %v3815 = vunpack.c.h.b16 %v3651
        %v3816 = vunpack.c.l.b16 %v3652
        %v3817 = vunpack.c.h.b16 %v3652
        %v3818 = vunpack.c.l.b16 %v3653
        %v3819 = vunpack.c.h.b16 %v3653
        %v3820 = vunpack.c.l.b16 %v3654
        %v3821 = vunpack.c.h.b16 %v3654
        %v3822 = vunpack.c.l.b16 %v3655
        %v3823 = vunpack.c.h.b16 %v3655
        %v3824 = vunpack.c.l.b16 %v3656
        %v3825 = vunpack.c.h.b16 %v3656
        %v3826 = vunpack.c.l.b16 %v3657
        %v3827 = vunpack.c.h.b16 %v3657
        %v3828 = vunpack.c.l.b16 %v3658
        %v3829 = vunpack.c.h.b16 %v3658
        %v3830 = vunpack.c.l.b16 %v3659
        %v3831 = vunpack.c.h.b16 %v3659
        %v3832 = vunpack.c.l.b16 %v3660
        %v3833 = vunpack.c.h.b16 %v3660
        %v3834 = vunpack.c.l.b16 %v3661
        %v3835 = vunpack.c.h.b16 %v3661
        %v3836 = vunpack.c.l.b16 %v3662
        %v3837 = vunpack.c.h.b16 %v3662
        %v3838 = vunpack.c.l.b16 %v3663
        %v3839 = vunpack.c.h.b16 %v3663
        %v3840 = vunpack.c.l.b16 %v3664
        %v3841 = vunpack.c.h.b16 %v3664
        %v3842 = vunpack.c.l.b16 %v3665
        %v3843 = vunpack.c.h.b16 %v3665
        %v3844 = vunpack.c.l.b16 %v3666
        %v3845 = vunpack.c.h.b16 %v3666
        %v3846 = vunpack.c.l.b16 %v3667
        %v3847 = vunpack.c.h.b16 %v3667
        %v3848 = vunpack.c.l.b16 %v3668
        %v3849 = vunpack.c.h.b16 %v3668
        %v3850 = vunpack.c.l.b16 %v3669
        %v3851 = vunpack.c.h.b16 %v3669
        %v3852 = vunpack.c.l.b16 %v3670
        %v3853 = vunpack.c.h.b16 %v3670
        %v3854 = vunpack.c.l.b16 %v3671
        %v3855 = vunpack.c.h.b16 %v3671
        %v3856 = vunpack.c.l.b16 %v3672
        %v3857 = vunpack.c.h.b16 %v3672
        %v3858 = vunpack.c.l.b16 %v3673
        %v3859 = vunpack.c.h.b16 %v3673
        %v3860 = vunpack.c.l.b16 %v3674
        %v3861 = vunpack.c.h.b16 %v3674
        %v3862 = vunpack.c.l.b16 %v3675
        %v3863 = vunpack.c.h.b16 %v3675
        %v3864 = vunpack.c.l.b16 %v3676
        %v3865 = vunpack.c.h.b16 %v3676
        %v3866 = vunpack.c.l.b16 %v3677
        %v3867 = vunpack.c.h.b16 %v3677
        %v3868 = vunpack.c.l.b16 %v3678
        %v3869 = vunpack.c.h.b16 %v3678
        %v3870 = vunpack.c.l.b16 %v3679
        %v3871 = vunpack.c.h.b16 %v3679
        %v3872 = vunpack.c.l.b16 %v3680
        %v3873 = vunpack.c.h.b16 %v3680
        %v3874 = vunpack.c.l.b16 %v3681
        %v3875 = vunpack.c.h.b16 %v3681
        %v3876 = vunpack.c.l.b16 %v3682
        %v3877 = vunpack.c.h.b16 %v3682
        %v3878 = vunpack.c.l.b16 %v3683
        %v3879 = vunpack.c.h.b16 %v3683
        %v3880 = vunpack.c.l.b16 %v3684
        %v3881 = vunpack.c.h.b16 %v3684
        %v3882 = vunpack.c.l.b16 %v3685
        %v3883 = vunpack.c.h.b16 %v3685
        %v3884 = vunpack.c.l.b16 %v3686
        %v3885 = vunpack.c.h.b16 %v3686
        %v3886 = vunpack.c.l.b16 %v3687
        %v3887 = vunpack.c.h.b16 %v3687
        %v3888 = vunpack.c.l.b16 %v3688
        %v3889 = vunpack.c.h.b16 %v3688
        %v3890 = vunpack.c.l.b16 %v3689
        %v3891 = vunpack.c.h.b16 %v3689
        %v3892 = vunpack.c.l.b16 %v3690
        %v3893 = vunpack.c.h.b16 %v3690
        %v3894 = vunpack.c.l.b16 %v3691
        %v3895 = vunpack.c.h.b16 %v3691
        %v3896 = vpack.c.b16 %v3770, %v3768
        %v3897 = vpack.c.b16 %v3771, %v3769
        %v3898 = vpack.c.b16 %v3774, %v3772
        %v3899 = vpack.c.b16 %v3775, %v3773
        %v3900 = vpack.c.b16 %v3778, %v3776
        %v3901 = vpack.c.b16 %v3779, %v3777
        %v3902 = vpack.c.b16 %v3782, %v3780
        %v3903 = vpack.c.b16 %v3783, %v3781
        %v3904 = vpack.c.b16 %v3786, %v3784
        %v3905 = vpack.c.b16 %v3787, %v3785
        %v3906 = vpack.c.b16 %v3790, %v3788
        %v3907 = vpack.c.b16 %v3791, %v3789
        %v3908 = vpack.c.b16 %v3794, %v3792
        %v3909 = vpack.c.b16 %v3795, %v3793
        %v3910 = vpack.c.b16 %v3798, %v3796
        %v3911 = vpack.c.b16 %v3799, %v3797
        %v3912 = vpack.c.b16 %v3802, %v3800
        %v3913 = vpack.c.b16 %v3803, %v3801
        %v3914 = vpack.c.b16 %v3806, %v3804
        %v3915 = vpack.c.b16 %v3807, %v3805
        %v3916 = vpack.c.b16 %v3810, %v3808
        %v3917 = vpack.c.b16 %v3811, %v3809
        %v3918 = vpack.c.b16 %v3814, %v3812
        %v3919 = vpack.c.b16 %v3815, %v3813
        %v3920 = vpack.c.b16 %v3818, %v3816
        %v3921 = vpack.c.b16 %v3819, %v3817
        %v3922 = vpack.c.b16 %v3822, %v3820
        %v3923 = vpack.c.b16 %v3823, %v3821
        %v3924 = vpack.c.b16 %v3826, %v3824
        %v3925 = vpack.c.b16 %v3827, %v3825
        %v3926 = vpack.c.b16 %v3830, %v3828
        %v3927 = vpack.c.b16 %v3831, %v3829
        %v3928 = vpack.c.b16 %v3834, %v3832
        %v3929 = vpack.c.b16 %v3835, %v3833
        %v3930 = vpack.c.b16 %v3838, %v3836
        %v3931 = vpack.c.b16 %v3839, %v3837
        %v3932 = vpack.c.b16 %v3842, %v3840
        %v3933 = vpack.c.b16 %v3843, %v3841
        %v3934 = vpack.c.b16 %v3846, %v3844
        %v3935 = vpack.c.b16 %v3847, %v3845
        %v3936 = vpack.c.b16 %v3850, %v3848
        %v3937 = vpack.c.b16 %v3851, %v3849
        %v3938 = vpack.c.b16 %v3854, %v3852
        %v3939 = vpack.c.b16 %v3855, %v3853
        %v3940 = vpack.c.b16 %v3858, %v3856
        %v3941 = vpack.c.b16 %v3859, %v3857
        %v3942 = vpack.c.b16 %v3862, %v3860
        %v3943 = vpack.c.b16 %v3863, %v3861
        %v3944 = vpack.c.b16 %v3866, %v3864
        %v3945 = vpack.c.b16 %v3867, %v3865
        %v3946 = vpack.c.b16 %v3870, %v3868
        %v3947 = vpack.c.b16 %v3871, %v3869
        %v3948 = vpack.c.b16 %v3874, %v3872
        %v3949 = vpack.c.b16 %v3875, %v3873
        %v3950 = vpack.c.b16 %v3878, %v3876
        %v3951 = vpack.c.b16 %v3879, %v3877
        %v3952 = vpack.c.b16 %v3882, %v3880
        %v3953 = vpack.c.b16 %v3883, %v3881
        %v3954 = vpack.c.b16 %v3886, %v3884
        %v3955 = vpack.c.b16 %v3887, %v3885
        %v3956 = vpack.c.b16 %v3890, %v3888
        %v3957 = vpack.c.b16 %v3891, %v3889
        %v3958 = vpack.c.b16 %v3894, %v3892
        %v3959 = vpack.c.b16 %v3895, %v3893
        %4024 = vmatprep.subr.bf16.mxu0 %v3897
        %4025 = vmatpush1.bf16.msra.mxu0 %v3896
        %4026 = vmatprep.subr.bf16.mxu0 %v3899
        %4027 = vmatpush1.bf16.msra.mxu0 %v3898
        %4028 = vmatprep.subr.bf16.mxu0 %v3901
        %4029 = vmatpush1.bf16.msra.mxu0 %v3900
        %4030 = vmatprep.subr.bf16.mxu0 %v3903
        %4031 = vmatpush1.bf16.msra.mxu0 %v3902
        %4032 = vmatprep.subr.bf16.mxu0 %v3905
        %4033 = vmatpush1.bf16.msra.mxu0 %v3904
        %4034 = vmatprep.subr.bf16.mxu0 %v3907
        %4035 = vmatpush1.bf16.msra.mxu0 %v3906
        %4036 = vmatprep.subr.bf16.mxu0 %v3909
        %4037 = vmatpush1.bf16.msra.mxu0 %v3908
        %4038 = vmatprep.subr.bf16.mxu0 %v3911
        %4039 = vmatpush1.bf16.msra.mxu0 %v3910
        %4040 = vmatprep.subr.bf16.mxu0 %v3913
        %4041 = vmatpush1.bf16.msra.mxu0 %v3912
        %4042 = vmatprep.subr.bf16.mxu0 %v3915
        %4043 = vmatpush1.bf16.msra.mxu0 %v3914
        %4044 = vmatprep.subr.bf16.mxu0 %v3917
        %4045 = vmatpush1.bf16.msra.mxu0 %v3916
        %4046 = vmatprep.subr.bf16.mxu0 %v3919
        %4047 = vmatpush1.bf16.msra.mxu0 %v3918
        %4048 = vmatprep.subr.bf16.mxu0 %v3921
        %4049 = vmatpush1.bf16.msra.mxu0 %v3920
        %4050 = vmatprep.subr.bf16.mxu0 %v3923
        %4051 = vmatpush1.bf16.msra.mxu0 %v3922
        %4052 = vmatprep.subr.bf16.mxu0 %v3925
        %4053 = vmatpush1.bf16.msra.mxu0 %v3924
        %4054 = vmatprep.subr.bf16.mxu0 %v3927
        %4055 = vmatpush1.bf16.msra.mxu0 %v3926
        %4056 = vmatprep.mubr.bf16.mxu0 %v3625
        %4057 = vmatmul.mubr.bf16.gmra.mrb[0].mxu0 %v3624
        %v4058 = vpop.f32.mrb[0].mxu0
        %v4059 = vadd.f32 %v3697, %v4058
        %v4060 = vpop.f32.mrb[0].mxu0
        %v4061 = vadd.f32 %v3701, %v4060
        %v4062 = vpop.f32.mrb[0].mxu0
        %v4063 = vadd.f32 %v3697, %v4062
        %v4064 = vpop.f32.mrb[0].mxu0
        %v4065 = vadd.f32 %v3701, %v4064
        %4066 = vdwg.mxu0
        %4067 = vmatprep.subr.bf16.mxu0 %v3929
        %4068 = vmatpush1.bf16.msra.mxu0 %v3928
        %4069 = vmatprep.subr.bf16.mxu0 %v3931
        %4070 = vmatpush1.bf16.msra.mxu0 %v3930
        %4071 = vmatprep.subr.bf16.mxu0 %v3933
        %4072 = vmatpush1.bf16.msra.mxu0 %v3932
        %4073 = vmatprep.subr.bf16.mxu0 %v3935
        %4074 = vmatpush1.bf16.msra.mxu0 %v3934
        %4075 = vmatprep.subr.bf16.mxu0 %v3937
        %4076 = vmatpush1.bf16.msra.mxu0 %v3936
        %4077 = vmatprep.subr.bf16.mxu0 %v3939
        %4078 = vmatpush1.bf16.msra.mxu0 %v3938
        %4079 = vmatprep.subr.bf16.mxu0 %v3941
        %4080 = vmatpush1.bf16.msra.mxu0 %v3940
        %4081 = vmatprep.subr.bf16.mxu0 %v3943
        %4082 = vmatpush1.bf16.msra.mxu0 %v3942
        %4083 = vmatprep.subr.bf16.mxu0 %v3945
        %4084 = vmatpush1.bf16.msra.mxu0 %v3944
        %4085 = vmatprep.subr.bf16.mxu0 %v3947
        %4086 = vmatpush1.bf16.msra.mxu0 %v3946
        %4087 = vmatprep.subr.bf16.mxu0 %v3949
        %4088 = vmatpush1.bf16.msra.mxu0 %v3948
        %4089 = vmatprep.subr.bf16.mxu0 %v3951
        %4090 = vmatpush1.bf16.msra.mxu0 %v3950
        %4091 = vmatprep.subr.bf16.mxu0 %v3953
        %4092 = vmatpush1.bf16.msra.mxu0 %v3952
        %4093 = vmatprep.subr.bf16.mxu0 %v3955
        %4094 = vmatpush1.bf16.msra.mxu0 %v3954
        %4095 = vmatprep.subr.bf16.mxu0 %v3957
        %4096 = vmatpush1.bf16.msra.mxu0 %v3956
        %4097 = vmatprep.subr.bf16.mxu0 %v3959
        %4098 = vmatpush1.bf16.msra.mxu0 %v3958
        %4099 = vmatprep.mubr.bf16.mxu0 %v3627
        %4100 = vmatmul.mubr.bf16.gmra.mrb[0].mxu0 %v3626
        %v4101 = vpop.f32.mrb[0].mxu0
        %v4102 = vadd.f32 %v4059, %v4101
        %v4103 = vpop.f32.mrb[0].mxu0
        %v4104 = vadd.f32 %v4061, %v4103
        %v4105 = vpop.f32.mrb[0].mxu0
        %v4106 = vadd.f32 %v4063, %v4105
        %v4107 = vpop.f32.mrb[0].mxu0
        %v4108 = vadd.f32 %v4065, %v4107
        %4109 = vdwg.mxu0
        %v4110 = vmax.f32 %v4102, 0.0
        %v4111 = vmax.f32 %v4104, 0.0
        %v4112 = vmax.f32 %v4106, 0.0
        %v4113 = vmax.f32 %v4108, 0.0
        %v4114 = vpack.c.bf16 %v4112, %v4110
        %v4115 = vpack.c.bf16 %v4113, %v4111
        %v4116 = vld [vmem:[#allocation14] sm:$0xf]
        %v4117 = vld [vmem:[#allocation14 + $0x4] sm:$0xf]
        %v4118 = vld [vmem:[#allocation14 + $0x8] sm:$0xf]
        %v4119 = vld [vmem:[#allocation14 + $0xc] sm:$0xf]
        %v4120 = vld [vmem:[#allocation14 + $0x10] sm:$0xf]
        %v4121 = vld [vmem:[#allocation14 + $0x14] sm:$0xf]
        %v4122 = vld [vmem:[#allocation14 + $0x18] sm:$0xf]
        %v4123 = vld [vmem:[#allocation14 + $0x1c] sm:$0xf]
        %v4124 = vld [vmem:[#allocation14 + $0x20] sm:$0xf]
        %v4125 = vld [vmem:[#allocation14 + $0x24] sm:$0xf]
        %v4126 = vld [vmem:[#allocation14 + $0x28] sm:$0xf]
        %v4127 = vld [vmem:[#allocation14 + $0x2c] sm:$0xf]
        %v4128 = vld [vmem:[#allocation14 + $0x30] sm:$0xf]
        %v4129 = vld [vmem:[#allocation14 + $0x34] sm:$0xf]
        %v4130 = vld [vmem:[#allocation14 + $0x38] sm:$0xf]
        %v4131 = vld [vmem:[#allocation14 + $0x3c] sm:$0xf]
        %v4132 = vld [vmem:[#allocation14 + $0x40] sm:$0xf]
        %v4133 = vld [vmem:[#allocation14 + $0x44] sm:$0xf]
        %v4134 = vld [vmem:[#allocation14 + $0x48] sm:$0xf]
        %v4135 = vld [vmem:[#allocation14 + $0x4c] sm:$0xf]
        %v4136 = vld [vmem:[#allocation14 + $0x50] sm:$0xf]
        %v4137 = vld [vmem:[#allocation14 + $0x54] sm:$0xf]
        %v4138 = vld [vmem:[#allocation14 + $0x58] sm:$0xf]
        %v4139 = vld [vmem:[#allocation14 + $0x5c] sm:$0xf]
        %v4140 = vld [vmem:[#allocation14 + $0x60] sm:$0xf]
        %v4141 = vld [vmem:[#allocation14 + $0x64] sm:$0xf]
        %v4142 = vld [vmem:[#allocation14 + $0x68] sm:$0xf]
        %v4143 = vld [vmem:[#allocation14 + $0x6c] sm:$0xf]
        %v4144 = vld [vmem:[#allocation14 + $0x70] sm:$0xf]
        %v4145 = vld [vmem:[#allocation14 + $0x74] sm:$0xf]
        %v4146 = vld [vmem:[#allocation14 + $0x78] sm:$0xf]
        %v4147 = vld [vmem:[#allocation14 + $0x7c] sm:$0xf]
        %v4148 = vld [vmem:[#allocation16] sm:$0x1]
        %v4150 = vlaneseq
        %v4151 = vshrl.u32 %v4150, 7
        %v4152 = vsub.s32 0, %v4151
        %v4153 = vrot.slane %v4148, %v4152
        %v4187 = vunpack.c.l.b16 %v4116
        %v4188 = vunpack.c.l.b16 %v4117
        %v4189 = vunpack.c.l.b16 %v4118
        %v4190 = vunpack.c.l.b16 %v4119
        %v4191 = vunpack.c.l.b16 %v4120
        %v4192 = vunpack.c.l.b16 %v4121
        %v4193 = vunpack.c.l.b16 %v4122
        %v4194 = vunpack.c.l.b16 %v4123
        %v4195 = vunpack.c.l.b16 %v4124
        %v4196 = vunpack.c.l.b16 %v4125
        %v4197 = vunpack.c.l.b16 %v4126
        %v4198 = vunpack.c.l.b16 %v4127
        %v4199 = vunpack.c.l.b16 %v4128
        %v4200 = vunpack.c.l.b16 %v4129
        %v4201 = vunpack.c.l.b16 %v4130
        %v4202 = vunpack.c.l.b16 %v4131
        %v4203 = vunpack.c.l.b16 %v4132
        %v4204 = vunpack.c.l.b16 %v4133
        %v4205 = vunpack.c.l.b16 %v4134
        %v4206 = vunpack.c.l.b16 %v4135
        %v4207 = vunpack.c.l.b16 %v4136
        %v4208 = vunpack.c.l.b16 %v4137
        %v4209 = vunpack.c.l.b16 %v4138
        %v4210 = vunpack.c.l.b16 %v4139
        %v4211 = vunpack.c.l.b16 %v4140
        %v4212 = vunpack.c.l.b16 %v4141
        %v4213 = vunpack.c.l.b16 %v4142
        %v4214 = vunpack.c.l.b16 %v4143
        %v4215 = vunpack.c.l.b16 %v4144
        %v4216 = vunpack.c.l.b16 %v4145
        %v4217 = vunpack.c.l.b16 %v4146
        %v4218 = vunpack.c.l.b16 %v4147
        %v4219 = vpack.c.b16 %v4188, %v4187
        %v4220 = vpack.c.b16 %v4190, %v4189
        %v4221 = vpack.c.b16 %v4192, %v4191
        %v4222 = vpack.c.b16 %v4194, %v4193
        %v4223 = vpack.c.b16 %v4196, %v4195
        %v4224 = vpack.c.b16 %v4198, %v4197
        %v4225 = vpack.c.b16 %v4200, %v4199
        %v4226 = vpack.c.b16 %v4202, %v4201
        %v4227 = vpack.c.b16 %v4204, %v4203
        %v4228 = vpack.c.b16 %v4206, %v4205
        %v4229 = vpack.c.b16 %v4208, %v4207
        %v4230 = vpack.c.b16 %v4210, %v4209
        %v4231 = vpack.c.b16 %v4212, %v4211
        %v4232 = vpack.c.b16 %v4214, %v4213
        %v4233 = vpack.c.b16 %v4216, %v4215
        %v4234 = vpack.c.b16 %v4218, %v4217
        %4251 = vmatprep.subr.bf16.mxu0 0
        %4252 = vmatpush1.bf16.msra.mxu0 %v4219
        %4253 = vmatprep.subr.bf16.mxu0 0
        %4254 = vmatpush1.bf16.msra.mxu0 %v4220
        %4255 = vmatprep.subr.bf16.mxu0 0
        %4256 = vmatpush1.bf16.msra.mxu0 %v4221
        %4257 = vmatprep.subr.bf16.mxu0 0
        %4258 = vmatpush1.bf16.msra.mxu0 %v4222
        %4259 = vmatprep.subr.bf16.mxu0 0
        %4260 = vmatpush1.bf16.msra.mxu0 %v4223
        %4261 = vmatprep.subr.bf16.mxu0 0
        %4262 = vmatpush1.bf16.msra.mxu0 %v4224
        %4263 = vmatprep.subr.bf16.mxu0 0
        %4264 = vmatpush1.bf16.msra.mxu0 %v4225
        %4265 = vmatprep.subr.bf16.mxu0 0
        %4266 = vmatpush1.bf16.msra.mxu0 %v4226
        %4267 = vmatprep.subr.bf16.mxu0 0
        %4268 = vmatpush1.bf16.msra.mxu0 %v4227
        %4269 = vmatprep.subr.bf16.mxu0 0
        %4270 = vmatpush1.bf16.msra.mxu0 %v4228
        %4271 = vmatprep.subr.bf16.mxu0 0
        %4272 = vmatpush1.bf16.msra.mxu0 %v4229
        %4273 = vmatprep.subr.bf16.mxu0 0
        %4274 = vmatpush1.bf16.msra.mxu0 %v4230
        %4275 = vmatprep.subr.bf16.mxu0 0
        %4276 = vmatpush1.bf16.msra.mxu0 %v4231
        %4277 = vmatprep.subr.bf16.mxu0 0
        %4278 = vmatpush1.bf16.msra.mxu0 %v4232
        %4279 = vmatprep.subr.bf16.mxu0 0
        %4280 = vmatpush1.bf16.msra.mxu0 %v4233
        %4281 = vmatprep.subr.bf16.mxu0 0
        %4282 = vmatpush1.bf16.msra.mxu0 %v4234
        %4283 = vmatprep.mubr.bf16.mxu0 %v4115
        %4284 = vmatmul.mubr.bf16.gmra.mrb[0].mxu0 %v4114
        %v4285 = vpop.f32.mrb[0].mxu0
        %v4286 = vadd.f32 %v4153, %v4285
        %v4287 = vpop.f32.mrb[0].mxu0
        %v4288 = vpop.f32.mrb[0].mxu0
        %v4289 = vadd.f32 %v4153, %v4288
        %v4290 = vpop.f32.mrb[0].mxu0
        %4291 = vdwg.mxu0
        %4292 = vst [vmem:[%s458] sm:$0xff] %v4286
        %4293 = vst [vmem:[%s458 + $0x8] sm:$0xff] %v4289
        %s4294 = sand.u32 %s232, 1
        %s4295 = scalar_lea.sflag [#allocation4], %s4294
        %s4296 = sand.u32 %s232, 1
        %s4297 = smul.addr %s4296, 16
        %s4298 = scalar_lea.vmem [#allocation17], %s4297
        // Predicated region
        $region93: #{tpu_custom_call.1} parent=55 // pred_check
          %p4299 = pneg %p242
        $region94: #{tpu_custom_call.1} parent=55 // pred_check_branch
          %4301 = sbr.rel (%p4299) target = $region96
        $region95: #{tpu_custom_call.1} parent=55 // pred_region
          %s4302 = smul.u32 2, %s30
          %s4304 = ssub.s32 256, 256
          %4305 = vsyncadd %s4295, %s4304
          %s4306 = smul.addr %s4302, 128
          %s4307 = scalar_lea.hbm %s9, %s4306
          %s4308 = sshll.u32 %s4298, 4
          %s4309 = int_to_ptr.vmem [resolvable:$true] %s4308
          %4314 = dma.vmem_to_hbm [thread:$0]  %s4309, 256, %s4307, %s4295, 128, 128, 8
        $region96: #{tpu_custom_call.1} parent=55 // pred_fallthru
          _
      $region56: #{tpu_custom_call.1} parent=5 // pred_fallthru
        _
      %p4315 = scmp.le.s32.totalorder 2, %s25
      // Predicated region
      $region97: #{tpu_custom_call.1} parent=5 // pred_check
        %p4316 = pneg %p4315
      $region98: #{tpu_custom_call.1} parent=5 // pred_check_branch
        %4318 = sbr.rel (%p4316) target = $region100
      $region99: #{tpu_custom_call.1} parent=5 // pred_region
        %s4319 = ssub.s32 %s25, 2
        // Predicated region
        $region101: #{tpu_custom_call.1} parent=99 // pred_check
          %p4320 = pneg %p248
        $region102: #{tpu_custom_call.1} parent=99 // pred_check_branch
          %4322 = sbr.rel (%p4320) target = $region104
        $region103: #{tpu_custom_call.1} parent=99 // pred_region
          %s4323 = sand.u32 %s233, 1
          %s4324 = scalar_lea.sflag [#allocation4], %s4323
          %s4325 = sand.u32 %s233, 1
          %s4326 = smul.addr %s4325, 16
          %s4327 = scalar_lea.vmem [#allocation17], %s4326
          %4328 = dma.done %s4324, 256
        $region104: #{tpu_custom_call.1} parent=99 // pred_fallthru
          _
      $region100: #{tpu_custom_call.1} parent=5 // pred_fallthru
        _
    $region6: #{tpu_custom_call.1} parent=1 // loop_footer
      %s29 = sadd.s32 1, %s25
    $region7: #{tpu_custom_call.1} parent=1 // loop_footer_branch
      %24 = sbr.rel target = $region3
    $region8: #{tpu_custom_call.1} parent=1 // loop_exit
      _
    %4329 = vsyncpa [#allocation3], 1
    %s4330 = scalar_lea.sflag [#allocation3], 1
    %4331 = vsyncpa %s4330, 1
    %4332 = vsyncpa [#allocation6], 1
    %4333 = vsyncpa [#allocation9], 1
    %4334 = vsyncpa [#allocation12], 1
    %4335 = vsyncpa [#allocation15], 1
    %4336 = vsyncpa [#allocation4], 1
    %s4337 = scalar_lea.sflag [#allocation4], 1
    %4338 = vsyncpa %s4337, 1

</llo_original>
